<compile_context>
chip_gen: v7x
topology: tpu7x:2x2x1
jax: 0.10.0
libtpu: 0.0.40
codegen_flags: <defaults>
</compile_context>

<pallas_src>
import functools

import jax
import jax.numpy as jnp
from jax import lax
from jax.experimental import pallas as pl
from jax.experimental.pallas import tpu as pltpu

_BN_EPS = 1e-5
_LANE = 128
_COMPUTE_DTYPE = jnp.bfloat16          # MXU operand / intermediate-activation dtype
_VMEM_LIMIT = 48 * 1024 * 1024          # headroom below v7x's 64 MiB physical VMEM


def _round_up(x, m):
    return (x + m - 1) // m * m


def _tap(d, stride):
    """Kernel tap offset d in {0,1,2} -> (phase index, start offset in padded scratch)."""
    if stride == 1:
        return 0, d
    return (d + 1) % 2, (d + 1) // 2    # stride == 2


def _zero_border(ref, ih, iw, stride):
    """Zero only the padding border of a (sh, sw, C) scratch; interior is
    always fully overwritten afterwards, so this is all the zeroing needed."""
    sh, sw, c = ref.shape
    dt = ref.dtype
    ref[0:1, :, :] = jnp.zeros((1, sw, c), dt)
    ref[:, 0:1, :] = jnp.zeros((sh, 1, c), dt)
    if stride == 1:                      # stride-2 taps never touch the far edge
        ref[ih + 1:ih + 2, :, :] = jnp.zeros((1, sw, c), dt)
        ref[:, iw + 1:iw + 2, :] = jnp.zeros((sh, 1, c), dt)


# ----------------------------------------------------------------------------
# Kernel 1: relu(bn1(x)) -> 3x3 conv (stride) -> relu(bn2(.))
# ----------------------------------------------------------------------------
def _conv1_bn_relu(x_phases, a1, b1, w1, a2, b2, *, stride, Ho, Wo):
    n_phase = stride * stride
    N, ih, iw, cin_p = x_phases[0].shape
    cout_p = w1.shape[-1]
    sh = Ho + (2 if stride == 1 else 1)
    sw = Wo + (2 if stride == 1 else 1)

    def kernel(*args):
        x_refs = args[:n_phase]
        a1_ref, b1_ref, w_ref, a2_ref, b2_ref, h_ref = args[n_phase:n_phase + 6]
        scr = args[n_phase + 6:n_phase + 6 + n_phase]
        acc_ref = args[-1]

        # fused bn1 + relu on the raw input tile (f32 math), zero-padded into VMEM
        a1v = a1_ref[...].reshape(1, 1, cin_p)
        b1v = b1_ref[...].reshape(1, 1, cin_p)
        for p in range(n_phase):
            _zero_border(scr[p], ih, iw, stride)
            act = jnp.maximum(x_refs[p][0].astype(jnp.float32) * a1v + b1v, 0.0)
            scr[p][1:1 + ih, 1:1 + iw, :] = act.astype(scr[p].dtype)

        # 3x3 conv as 9 shifted MXU dots (implicit im2col), f32 accumulator
        first = True
        for dy in range(3):
            py, sy = _tap(dy, stride)
            for dx in range(3):
                px, sx = _tap(dx, stride)
                patch = scr[py * stride + px][sy:sy + Ho, sx:sx + Wo, :]
                d = jnp.dot(patch.reshape(Ho * Wo, cin_p), w_ref[dy, dx],
                            preferred_element_type=jnp.float32)
                if first:
                    acc_ref[...] = d
                    first = False
                else:
                    acc_ref[...] += d

        # fused bn2 + relu epilogue; store lane-dense bf16 tile
        h = jnp.maximum(acc_ref[...] * a2_ref[...] + b2_ref[...], 0.0)
        h_ref[0] = h.reshape(Ho, Wo, cout_p).astype(h_ref.dtype)

    in_specs = [pl.BlockSpec((1, ih, iw, cin_p), lambda n: (n, 0, 0, 0))
                for _ in range(n_phase)]
    in_specs += [pl.BlockSpec((1, cin_p), lambda n: (0, 0)),
                 pl.BlockSpec((1, cin_p), lambda n: (0, 0)),
                 pl.BlockSpec((3, 3, cin_p, cout_p), lambda n: (0, 0, 0, 0)),
                 pl.BlockSpec((1, cout_p), lambda n: (0, 0)),
                 pl.BlockSpec((1, cout_p), lambda n: (0, 0))]

    return pl.pallas_call(
        kernel,
        out_shape=jax.ShapeDtypeStruct((N, Ho, Wo, cout_p), _COMPUTE_DTYPE),
        grid=(N,),
        in_specs=in_specs,
        out_specs=pl.BlockSpec((1, Ho, Wo, cout_p), lambda n: (n, 0, 0, 0)),
        scratch_shapes=[pltpu.VMEM((sh, sw, cin_p), _COMPUTE_DTYPE)
                        for _ in range(n_phase)]
                       + [pltpu.VMEM((Ho * Wo, cout_p), jnp.float32)],
        compiler_params=pltpu.CompilerParams(
            dimension_semantics=("parallel",),
            vmem_limit_bytes=_VMEM_LIMIT),
    )(*x_phases, a1, b1, w1, a2, b2)


# ----------------------------------------------------------------------------
# Kernel 2: 3x3 conv (stride 1) + fused shortcut + bn3 (+ optional relu)
# ----------------------------------------------------------------------------
def _conv2_residual(h, w2, a3, b3, sc, proj, *, apply_relu):
    N, Ho, Wo, cmid_p = h.shape
    cout_p = w2.shape[-1]
    csc_p = sc.shape[-1]
    sh, sw = Ho + 2, Wo + 2
    has_proj = proj is not None

    def kernel(*args):
        if has_proj:
            (h_ref, w2_ref, a3_ref, b3_ref, sc_ref, a1_ref, b1_ref, wsc_ref,
             y_ref, pad_scr, acc_ref) = args
        else:
            h_ref, w2_ref, a3_ref, b3_ref, sc_ref, y_ref, pad_scr, acc_ref = args

        # zero-padded copy of the already-activated conv1 output tile
        _zero_border(pad_scr, Ho, Wo, 1)
        pad_scr[1:1 + Ho, 1:1 + Wo, :] = h_ref[0]

        first = True
        for dy in range(3):
            for dx in range(3):
                patch = pad_scr[dy:dy + Ho, dx:dx + Wo, :]
                d = jnp.dot(patch.reshape(Ho * Wo, cmid_p), w2_ref[dy, dx],
                            preferred_element_type=jnp.float32)
                if first:
                    acc_ref[...] = d
                    first = False
                else:
                    acc_ref[...] += d

        if has_proj:
            # projection shortcut: relu(bn1(x[::s, ::s])) @ w_sc recomputed in-kernel
            act = jnp.maximum(
                sc_ref[0].astype(jnp.float32) * a1_ref[...].reshape(1, 1, csc_p)
                + b1_ref[...].reshape(1, 1, csc_p), 0.0)
            acc_ref[...] += jnp.dot(
                act.reshape(Ho * Wo, csc_p).astype(_COMPUTE_DTYPE), wsc_ref[...],
                preferred_element_type=jnp.float32)
        else:
            # identity shortcut: add the raw (pre-bn1) input tile
            acc_ref[...] += sc_ref[0].astype(jnp.float32).reshape(Ho * Wo, cout_p)

        # fused bn3 (+ optional relu) epilogue
        y = acc_ref[...] * a3_ref[...] + b3_ref[...]
        if apply_relu:
            y = jnp.maximum(y, 0.0)
        y_ref[0] = y.reshape(Ho, Wo, cout_p).astype(y_ref.dtype)

    in_specs = [pl.BlockSpec((1, Ho, Wo, cmid_p), lambda n: (n, 0, 0, 0)),
                pl.BlockSpec((3, 3, cmid_p, cout_p), lambda n: (0, 0, 0, 0)),
                pl.BlockSpec((1, cout_p), lambda n: (0, 0)),
                pl.BlockSpec((1, cout_p), lambda n: (0, 0)),
                pl.BlockSpec((1, Ho, Wo, csc_p), lambda n: (n, 0, 0, 0))]
    inputs = [h, w2, a3, b3, sc]
    if has_proj:
        a1, b1, w_sc = proj
        in_specs += [pl.BlockSpec((1, csc_p), lambda n: (0, 0)),
                     pl.BlockSpec((1, csc_p), lambda n: (0, 0)),
                     pl.BlockSpec((csc_p, cout_p), lambda n: (0, 0))]
        inputs += [a1, b1, w_sc]

    return pl.pallas_call(
        kernel,
        out_shape=jax.ShapeDtypeStruct((N, Ho, Wo, cout_p), jnp.float32),
        grid=(N,),
        in_specs=in_specs,
        out_specs=pl.BlockSpec((1, Ho, Wo, cout_p), lambda n: (n, 0, 0, 0)),
        scratch_shapes=[pltpu.VMEM((sh, sw, cmid_p), _COMPUTE_DTYPE),
                        pltpu.VMEM((Ho * Wo, cout_p), jnp.float32)],
        compiler_params=pltpu.CompilerParams(
            dimension_semantics=("parallel",),
            vmem_limit_bytes=_VMEM_LIMIT),
    )(*inputs)


# ----------------------------------------------------------------------------
# Glue (plain JAX): BN folding, weight layout, channel padding, phase split
# ----------------------------------------------------------------------------
def _fold_bn(gamma, beta, mean, var, c_pad):
    a = gamma / jnp.sqrt(var + _BN_EPS)
    b = beta - mean * a
    a = jnp.pad(a, (0, c_pad - a.shape[0]))
    b = jnp.pad(b, (0, c_pad - b.shape[0]))
    return (a.reshape(1, c_pad).astype(jnp.float32),
            b.reshape(1, c_pad).astype(jnp.float32))


def _prep_w3x3(w_oihw, cin_p, cout_p):
    # (Cout, Cin, 3, 3) -> (3, 3, Cin_p, Cout_p) bf16 MXU operand
    w = jnp.transpose(w_oihw, (2, 3, 1, 0))
    w = jnp.pad(w, ((0, 0), (0, 0),
                    (0, cin_p - w.shape[2]), (0, cout_p - w.shape[3])))
    return w.astype(_COMPUTE_DTYPE)


def _prep_w1x1(w_oihw, cin_p, cout_p):
    # (Cout, Cin, 1, 1) -> (Cin_p, Cout_p)
    w = jnp.transpose(w_oihw[:, :, 0, 0], (1, 0))
    w = jnp.pad(w, ((0, cin_p - w.shape[0]), (0, cout_p - w.shape[1])))
    return w.astype(_COMPUTE_DTYPE)


# ----------------------------------------------------------------------------
# PreActBlock forward (NHWC end-to-end; NCHW wrapper at network boundary)
# ----------------------------------------------------------------------------
@functools.partial(jax.jit, static_argnames=("stride", "remove_last_relu"))
def preact_block_nhwc(x_nhwc, params, *, stride, remove_last_relu=False):
    N, H, W, cin = x_nhwc.shape
    planes = params["w1"].shape[0]
    has_proj = (stride != 1) or (cin != planes)
    cin_p = _round_up(cin, _LANE)
    cout_p = _round_up(planes, _LANE)

    if stride == 1:
        Ho, Wo = H, W
    else:
        assert stride == 2 and H % 2 == 0 and W % 2 == 0, \
            "strided blocks require stride==2 and even H, W"
        Ho, Wo = H // 2, W // 2

    # zero-pad channels to a lane-dense multiple of 128 and cast to bf16
    xp = jnp.pad(x_nhwc.astype(jnp.float32),
                 ((0, 0), (0, 0), (0, 0), (0, cin_p - cin))).astype(_COMPUTE_DTYPE)

    a1, b1 = _fold_bn(*params["bn1"], cin_p)
    a2, b2 = _fold_bn(*params["bn2"], cout_p)
    a3, b3 = _fold_bn(*params["bn3"], cout_p)
    w1 = _prep_w3x3(params["w1"], cin_p, cout_p)
    w2 = _prep_w3x3(params["w2"], cout_p, cout_p)

    if stride == 1:
        x_phases = [xp]
    else:
        # stride-phase split so every in-kernel slice is contiguous; phase (0,0)
        # is also exactly the input the 1x1 projection shortcut needs.
        x_phases = [xp[:, p::2, q::2, :] for p in range(2) for q in range(2)]

    h = _conv1_bn_relu(x_phases, a1, b1, w1, a2, b2, stride=stride, Ho=Ho, Wo=Wo)

    if has_proj:
        w_sc = _prep_w1x1(params["w_sc"], cin_p, cout_p)
        y = _conv2_residual(h, w2, a3, b3, x_phases[0], (a1, b1, w_sc),
                            apply_relu=not remove_last_relu)
    else:
        y = _conv2_residual(h, w2, a3, b3, xp, None,
                            apply_relu=not remove_last_relu)

    return y[..., :planes].astype(x_nhwc.dtype)


def preact_block_forward(x_nchw, params, *, stride, remove_last_relu=False):
    """PyTorch-parity NCHW entry point (layout conversion at the boundary only)."""
    x = jnp.transpose(x_nchw, (0, 2, 3, 1))
    y = preact_block_nhwc(x, params, stride=stride, remove_last_relu=remove_last_relu)
    return jnp.transpose(y, (0, 3, 1, 2))


# ----------------------------------------------------------------------------
# Pure-JAX reference (mirrors the PyTorch forward, inference-mode BN)
# ----------------------------------------------------------------------------
def _reference(x, params, *, stride, remove_last_relu=False):
    def bn(v, g, b, rm, rv):
        g, b, rm, rv = (t[None, :, None, None] for t in (g, b, rm, rv))
        return (v - rm) / jnp.sqrt(rv + _BN_EPS) * g + b

    dn = ("NCHW", "OIHW", "NCHW")
    planes = params["w1"].shape[0]
    in_planes = x.shape[1]

    out = jax.nn.relu(bn(x, *params["bn1"]))
    if stride != 1 or in_planes != planes:
        shortcut = lax.conv_general_dilated(
            out, params["w_sc"], (stride, stride), "VALID", dimension_numbers=dn)
    else:
        shortcut = x
    out = lax.conv_general_dilated(
        out, params["w1"], (stride, stride), ((1, 1), (1, 1)), dimension_numbers=dn)
    out = lax.conv_general_dilated(
        jax.nn.relu(bn(out, *params["bn2"])), params["w2"], (1, 1),
        ((1, 1), (1, 1)), dimension_numbers=dn)
    out = out + shortcut
    out = bn(out, *params["bn3"])
    if not remove_last_relu:
        out = jax.nn.relu(out)
    return out


# ----------------------------------------------------------------------------
# Deterministic parameter construction
# ----------------------------------------------------------------------------
def make_params(key, in_planes, planes, stride):
    ks = jax.random.split(key, 16)

    def bn_params(k, c):
        k1, k2, k3, k4 = jax.random.split(k, 4)
        gamma = 0.5 + jax.random.uniform(k1, (c,), jnp.float32)
        beta = 0.1 * jax.random.normal(k2, (c,), jnp.float32)
        rmean = 0.1 * jax.random.normal(k3, (c,), jnp.float32)
        rvar = 0.5 + jax.random.uniform(k4, (c,), jnp.float32)
        return (gamma, beta, rmean, rvar)

    params = {
        "bn1": bn_params(ks[0], in_planes),
        "w1": 0.1 * jax.random.normal(ks[1], (planes, in_planes, 3, 3), jnp.float32),
        "bn2": bn_params(ks[2], planes),
        "w2": 0.1 * jax.random.normal(ks[3], (planes, planes, 3, 3), jnp.float32),
        "bn3": bn_params(ks[4], planes),
    }
    if stride != 1 or in_planes != planes:
        params["w_sc"] = 0.1 * jax.random.normal(
            ks[5], (planes, in_planes, 1, 1), jnp.float32)
    return params


# ----------------------------------------------------------------------------
if __name__ == "__main__":
    key = jax.random.PRNGKey(0)
    kx, kp1, kp2 = jax.random.split(key, 3)

    # Case 1: downsampling block, projection shortcut (stride=2, 4 -> 8 channels).
    N, C_IN, H, W = 2, 4, 16, 16
    PLANES, STRIDE = 8, 2
    x_nchw = jax.random.normal(kx, (N, C_IN, H, W), jnp.float32)
    params1 = make_params(kp1, C_IN, PLANES, STRIDE)
    # Case 2: identity-shortcut block (stride=1, same channels), no final relu.
    params2 = make_params(kp2, PLANES, PLANES, 1)

    # NHWC end-to-end: convert once at the network boundary and chain the blocks.
    x_nhwc = jnp.transpose(x_nchw, (0, 2, 3, 1))
    y1 = preact_block_nhwc(x_nhwc, params1, stride=STRIDE, remove_last_relu=False)
    y2 = preact_block_nhwc(y1, params2, stride=1, remove_last_relu=True)
    y1, y2 = jax.block_until_ready((y1, y2))

    y1_nchw = jnp.transpose(y1, (0, 3, 1, 2))
    y2_nchw = jnp.transpose(y2, (0, 3, 1, 2))
    assert y1_nchw.shape == (N, PLANES, H // STRIDE, W // STRIDE), y1_nchw.shape
    assert y2_nchw.shape == y1_nchw.shape, y2_nchw.shape

    ref1 = _reference(x_nchw, params1, stride=STRIDE, remove_last_relu=False)
    ref2 = _reference(y1_nchw, params2, stride=1, remove_last_relu=True)

    # bf16 MXU operands (f32 accumulation) -> loose tolerance vs f32 reference.
    err1 = float(jnp.max(jnp.abs(y1_nchw - ref1)))
    err2 = float(jnp.max(jnp.abs(y2_nchw - ref2)))
    assert jnp.allclose(y1_nchw, ref1, rtol=1e-1, atol=1e-1), f"block1 mismatch {err1}"
    assert jnp.allclose(y2_nchw, ref2, rtol=1e-1, atol=1e-1), f"block2 mismatch {err2}"

    print("KERNEL_OK")
</pallas_src>

<mosaic_0001>
module attributes {stable_mosaic.version = 11 : i64} {
  func.func @kernel(%arg0: i32, %arg1: memref<1x8x8x128xbf16, #tpu.memory_space<vmem>>, %arg2: memref<1x8x8x128xbf16, #tpu.memory_space<vmem>>, %arg3: memref<1x8x8x128xbf16, #tpu.memory_space<vmem>>, %arg4: memref<1x8x8x128xbf16, #tpu.memory_space<vmem>>, %arg5: memref<1x128xf32, #tpu.memory_space<vmem>>, %arg6: memref<1x128xf32, #tpu.memory_space<vmem>>, %arg7: memref<3x3x128x128xbf16, #tpu.memory_space<vmem>>, %arg8: memref<1x128xf32, #tpu.memory_space<vmem>>, %arg9: memref<1x128xf32, #tpu.memory_space<vmem>>, %arg10: memref<1x8x8x128xbf16, #tpu.memory_space<vmem>>, %arg11: memref<9x9x128xbf16, #tpu.memory_space<vmem>>, %arg12: memref<9x9x128xbf16, #tpu.memory_space<vmem>>, %arg13: memref<9x9x128xbf16, #tpu.memory_space<vmem>>, %arg14: memref<9x9x128xbf16, #tpu.memory_space<vmem>>, %arg15: memref<64x128xf32, #tpu.memory_space<vmem>>) attributes {dimension_semantics = [#tpu.dimension_semantics<parallel>], iteration_bounds = array<i64: 2>, scalar_prefetch = 0 : i64, scratch_operands = 5 : i64, tpu.core_type = #tpu.core_type<tc>, window_params = [{transform_indices = @transform_0, window_bounds = array<i64: 1, 8, 8, 128>}, {transform_indices = @transform_1, window_bounds = array<i64: 1, 8, 8, 128>}, {transform_indices = @transform_2, window_bounds = array<i64: 1, 8, 8, 128>}, {transform_indices = @transform_3, window_bounds = array<i64: 1, 8, 8, 128>}, {pipeline_mode = #tpu.pipeline_mode<synchronous>, transform_indices = @transform_4, window_bounds = array<i64: 1, 128>}, {pipeline_mode = #tpu.pipeline_mode<synchronous>, transform_indices = @transform_5, window_bounds = array<i64: 1, 128>}, {pipeline_mode = #tpu.pipeline_mode<synchronous>, transform_indices = @transform_6, window_bounds = array<i64: 3, 3, 128, 128>}, {pipeline_mode = #tpu.pipeline_mode<synchronous>, transform_indices = @transform_7, window_bounds = array<i64: 1, 128>}, {pipeline_mode = #tpu.pipeline_mode<synchronous>, transform_indices = @transform_8, window_bounds = array<i64: 1, 128>}, {transform_indices = @transform_9, window_bounds = array<i64: 1, 8, 8, 128>}]} {
    %c0 = arith.constant 0 : index
    %c0_0 = arith.constant 0 : index
    %0 = vector.load %arg5[%c0, %c0_0] : memref<1x128xf32, #tpu.memory_space<vmem>>, vector<1x128xf32>
    %1 = vector.shape_cast %0 : vector<1x128xf32> to vector<1x1x128xf32>
    %c0_1 = arith.constant 0 : index
    %c0_2 = arith.constant 0 : index
    %2 = vector.load %arg6[%c0_1, %c0_2] : memref<1x128xf32, #tpu.memory_space<vmem>>, vector<1x128xf32>
    %3 = vector.shape_cast %2 : vector<1x128xf32> to vector<1x1x128xf32>
    %cst = arith.constant 0.000000e+00 : bf16
    %4 = vector.broadcast %cst : bf16 to vector<1x9x128xbf16>
    %c0_3 = arith.constant 0 : index
    %c0_4 = arith.constant 0 : index
    %c0_5 = arith.constant 0 : index
    %5 = vector.load %arg11[%c0_3, %c0_4, %c0_5] : memref<9x9x128xbf16, #tpu.memory_space<vmem>>, vector<1x9x128xbf16>
    tpu.vector_store %arg11[%c0_3, %c0_4, %c0_5], %4 {strides = array<i32>} : memref<9x9x128xbf16, #tpu.memory_space<vmem>>, vector<1x9x128xbf16>,
    %cst_6 = arith.constant 0.000000e+00 : bf16
    %6 = vector.broadcast %cst_6 : bf16 to vector<9x1x128xbf16>
    %c0_7 = arith.constant 0 : index
    %c0_8 = arith.constant 0 : index
    %c0_9 = arith.constant 0 : index
    %7 = vector.load %arg11[%c0_7, %c0_8, %c0_9] : memref<9x9x128xbf16, #tpu.memory_space<vmem>>, vector<9x1x128xbf16>
    tpu.vector_store %arg11[%c0_7, %c0_8, %c0_9], %6 {strides = array<i32>} : memref<9x9x128xbf16, #tpu.memory_space<vmem>>, vector<9x1x128xbf16>,
    %c0_10 = arith.constant 0 : index
    %c0_11 = arith.constant 0 : index
    %c0_12 = arith.constant 0 : index
    %c0_13 = arith.constant 0 : index
    %8 = vector.load %arg1[%c0_10, %c0_11, %c0_12, %c0_13] : memref<1x8x8x128xbf16, #tpu.memory_space<vmem>>, vector<1x8x8x128xbf16>
    %9 = vector.shape_cast %8 : vector<1x8x8x128xbf16> to vector<8x8x128xbf16>
    %10 = arith.extf %9 : vector<8x8x128xbf16> to vector<8x8x128xf32>
    %11 = vector.broadcast %1 : vector<1x1x128xf32> to vector<8x8x128xf32>
    %12 = arith.mulf %10, %11 : vector<8x8x128xf32>
    %13 = vector.broadcast %3 : vector<1x1x128xf32> to vector<8x8x128xf32>
    %14 = arith.addf %12, %13 : vector<8x8x128xf32>
    %cst_14 = arith.constant 0.000000e+00 : f32
    %15 = vector.broadcast %cst_14 : f32 to vector<8x8x128xf32>
    %16 = arith.maximumf %14, %15 : vector<8x8x128xf32>
    %17 = arith.truncf %16 : vector<8x8x128xf32> to vector<8x8x128xbf16>
    %c1 = arith.constant 1 : index
    %c1_15 = arith.constant 1 : index
    %c0_16 = arith.constant 0 : index
    %18 = vector.load %arg11[%c1, %c1_15, %c0_16] : memref<9x9x128xbf16, #tpu.memory_space<vmem>>, vector<8x8x128xbf16>
    tpu.vector_store %arg11[%c1, %c1_15, %c0_16], %17 {strides = array<i32>} : memref<9x9x128xbf16, #tpu.memory_space<vmem>>, vector<8x8x128xbf16>,
    %cst_17 = arith.constant 0.000000e+00 : bf16
    %19 = vector.broadcast %cst_17 : bf16 to vector<1x9x128xbf16>
    %c0_18 = arith.constant 0 : index
    %c0_19 = arith.constant 0 : index
    %c0_20 = arith.constant 0 : index
    %20 = vector.load %arg12[%c0_18, %c0_19, %c0_20] : memref<9x9x128xbf16, #tpu.memory_space<vmem>>, vector<1x9x128xbf16>
    tpu.vector_store %arg12[%c0_18, %c0_19, %c0_20], %19 {strides = array<i32>} : memref<9x9x128xbf16, #tpu.memory_space<vmem>>, vector<1x9x128xbf16>,
    %cst_21 = arith.constant 0.000000e+00 : bf16
    %21 = vector.broadcast %cst_21 : bf16 to vector<9x1x128xbf16>
    %c0_22 = arith.constant 0 : index
    %c0_23 = arith.constant 0 : index
    %c0_24 = arith.constant 0 : index
    %22 = vector.load %arg12[%c0_22, %c0_23, %c0_24] : memref<9x9x128xbf16, #tpu.memory_space<vmem>>, vector<9x1x128xbf16>
    tpu.vector_store %arg12[%c0_22, %c0_23, %c0_24], %21 {strides = array<i32>} : memref<9x9x128xbf16, #tpu.memory_space<vmem>>, vector<9x1x128xbf16>,
    %c0_25 = arith.constant 0 : index
    %c0_26 = arith.constant 0 : index
    %c0_27 = arith.constant 0 : index
    %c0_28 = arith.constant 0 : index
    %23 = vector.load %arg2[%c0_25, %c0_26, %c0_27, %c0_28] : memref<1x8x8x128xbf16, #tpu.memory_space<vmem>>, vector<1x8x8x128xbf16>
    %24 = vector.shape_cast %23 : vector<1x8x8x128xbf16> to vector<8x8x128xbf16>
    %25 = arith.extf %24 : vector<8x8x128xbf16> to vector<8x8x128xf32>
    %26 = vector.broadcast %1 : vector<1x1x128xf32> to vector<8x8x128xf32>
    %27 = arith.mulf %25, %26 : vector<8x8x128xf32>
    %28 = vector.broadcast %3 : vector<1x1x128xf32> to vector<8x8x128xf32>
    %29 = arith.addf %27, %28 : vector<8x8x128xf32>
    %cst_29 = arith.constant 0.000000e+00 : f32
    %30 = vector.broadcast %cst_29 : f32 to vector<8x8x128xf32>
    %31 = arith.maximumf %29, %30 : vector<8x8x128xf32>
    %32 = arith.truncf %31 : vector<8x8x128xf32> to vector<8x8x128xbf16>
    %c1_30 = arith.constant 1 : index
    %c1_31 = arith.constant 1 : index
    %c0_32 = arith.constant 0 : index
    %33 = vector.load %arg12[%c1_30, %c1_31, %c0_32] : memref<9x9x128xbf16, #tpu.memory_space<vmem>>, vector<8x8x128xbf16>
    tpu.vector_store %arg12[%c1_30, %c1_31, %c0_32], %32 {strides = array<i32>} : memref<9x9x128xbf16, #tpu.memory_space<vmem>>, vector<8x8x128xbf16>,
    %cst_33 = arith.constant 0.000000e+00 : bf16
    %34 = vector.broadcast %cst_33 : bf16 to vector<1x9x128xbf16>
    %c0_34 = arith.constant 0 : index
    %c0_35 = arith.constant 0 : index
    %c0_36 = arith.constant 0 : index
    %35 = vector.load %arg13[%c0_34, %c0_35, %c0_36] : memref<9x9x128xbf16, #tpu.memory_space<vmem>>, vector<1x9x128xbf16>
    tpu.vector_store %arg13[%c0_34, %c0_35, %c0_36], %34 {strides = array<i32>} : memref<9x9x128xbf16, #tpu.memory_space<vmem>>, vector<1x9x128xbf16>,
    %cst_37 = arith.constant 0.000000e+00 : bf16
    %36 = vector.broadcast %cst_37 : bf16 to vector<9x1x128xbf16>
    %c0_38 = arith.constant 0 : index
    %c0_39 = arith.constant 0 : index
    %c0_40 = arith.constant 0 : index
    %37 = vector.load %arg13[%c0_38, %c0_39, %c0_40] : memref<9x9x128xbf16, #tpu.memory_space<vmem>>, vector<9x1x128xbf16>
    tpu.vector_store %arg13[%c0_38, %c0_39, %c0_40], %36 {strides = array<i32>} : memref<9x9x128xbf16, #tpu.memory_space<vmem>>, vector<9x1x128xbf16>,
    %c0_41 = arith.constant 0 : index
    %c0_42 = arith.constant 0 : index
    %c0_43 = arith.constant 0 : index
    %c0_44 = arith.constant 0 : index
    %38 = vector.load %arg3[%c0_41, %c0_42, %c0_43, %c0_44] : memref<1x8x8x128xbf16, #tpu.memory_space<vmem>>, vector<1x8x8x128xbf16>
    %39 = vector.shape_cast %38 : vector<1x8x8x128xbf16> to vector<8x8x128xbf16>
    %40 = arith.extf %39 : vector<8x8x128xbf16> to vector<8x8x128xf32>
    %41 = vector.broadcast %1 : vector<1x1x128xf32> to vector<8x8x128xf32>
    %42 = arith.mulf %40, %41 : vector<8x8x128xf32>
    %43 = vector.broadcast %3 : vector<1x1x128xf32> to vector<8x8x128xf32>
    %44 = arith.addf %42, %43 : vector<8x8x128xf32>
    %cst_45 = arith.constant 0.000000e+00 : f32
    %45 = vector.broadcast %cst_45 : f32 to vector<8x8x128xf32>
    %46 = arith.maximumf %44, %45 : vector<8x8x128xf32>
    %47 = arith.truncf %46 : vector<8x8x128xf32> to vector<8x8x128xbf16>
    %c1_46 = arith.constant 1 : index
    %c1_47 = arith.constant 1 : index
    %c0_48 = arith.constant 0 : index
    %48 = vector.load %arg13[%c1_46, %c1_47, %c0_48] : memref<9x9x128xbf16, #tpu.memory_space<vmem>>, vector<8x8x128xbf16>
    tpu.vector_store %arg13[%c1_46, %c1_47, %c0_48], %47 {strides = array<i32>} : memref<9x9x128xbf16, #tpu.memory_space<vmem>>, vector<8x8x128xbf16>,
    %cst_49 = arith.constant 0.000000e+00 : bf16
    %49 = vector.broadcast %cst_49 : bf16 to vector<1x9x128xbf16>
    %c0_50 = arith.constant 0 : index
    %c0_51 = arith.constant 0 : index
    %c0_52 = arith.constant 0 : index
    %50 = vector.load %arg14[%c0_50, %c0_51, %c0_52] : memref<9x9x128xbf16, #tpu.memory_space<vmem>>, vector<1x9x128xbf16>
    tpu.vector_store %arg14[%c0_50, %c0_51, %c0_52], %49 {strides = array<i32>} : memref<9x9x128xbf16, #tpu.memory_space<vmem>>, vector<1x9x128xbf16>,
    %cst_53 = arith.constant 0.000000e+00 : bf16
    %51 = vector.broadcast %cst_53 : bf16 to vector<9x1x128xbf16>
    %c0_54 = arith.constant 0 : index
    %c0_55 = arith.constant 0 : index
    %c0_56 = arith.constant 0 : index
    %52 = vector.load %arg14[%c0_54, %c0_55, %c0_56] : memref<9x9x128xbf16, #tpu.memory_space<vmem>>, vector<9x1x128xbf16>
    tpu.vector_store %arg14[%c0_54, %c0_55, %c0_56], %51 {strides = array<i32>} : memref<9x9x128xbf16, #tpu.memory_space<vmem>>, vector<9x1x128xbf16>,
    %c0_57 = arith.constant 0 : index
    %c0_58 = arith.constant 0 : index
    %c0_59 = arith.constant 0 : index
    %c0_60 = arith.constant 0 : index
    %53 = vector.load %arg4[%c0_57, %c0_58, %c0_59, %c0_60] : memref<1x8x8x128xbf16, #tpu.memory_space<vmem>>, vector<1x8x8x128xbf16>
    %54 = vector.shape_cast %53 : vector<1x8x8x128xbf16> to vector<8x8x128xbf16>
    %55 = arith.extf %54 : vector<8x8x128xbf16> to vector<8x8x128xf32>
    %56 = vector.broadcast %1 : vector<1x1x128xf32> to vector<8x8x128xf32>
    %57 = arith.mulf %55, %56 : vector<8x8x128xf32>
    %58 = vector.broadcast %3 : vector<1x1x128xf32> to vector<8x8x128xf32>
    %59 = arith.addf %57, %58 : vector<8x8x128xf32>
    %cst_61 = arith.constant 0.000000e+00 : f32
    %60 = vector.broadcast %cst_61 : f32 to vector<8x8x128xf32>
    %61 = arith.maximumf %59, %60 : vector<8x8x128xf32>
    %62 = arith.truncf %61 : vector<8x8x128xf32> to vector<8x8x128xbf16>
    %c1_62 = arith.constant 1 : index
    %c1_63 = arith.constant 1 : index
    %c0_64 = arith.constant 0 : index
    %63 = vector.load %arg14[%c1_62, %c1_63, %c0_64] : memref<9x9x128xbf16, #tpu.memory_space<vmem>>, vector<8x8x128xbf16>
    tpu.vector_store %arg14[%c1_62, %c1_63, %c0_64], %62 {strides = array<i32>} : memref<9x9x128xbf16, #tpu.memory_space<vmem>>, vector<8x8x128xbf16>,
    %c0_65 = arith.constant 0 : index
    %c0_66 = arith.constant 0 : index
    %c0_67 = arith.constant 0 : index
    %64 = vector.load %arg14[%c0_65, %c0_66, %c0_67] : memref<9x9x128xbf16, #tpu.memory_space<vmem>>, vector<8x8x128xbf16>
    %65 = vector.shape_cast %64 : vector<8x8x128xbf16> to vector<64x128xbf16>
    %c0_68 = arith.constant 0 : index
    %c0_69 = arith.constant 0 : index
    %c0_70 = arith.constant 0 : index
    %c0_71 = arith.constant 0 : index
    %66 = vector.load %arg7[%c0_68, %c0_69, %c0_70, %c0_71] : memref<3x3x128x128xbf16, #tpu.memory_space<vmem>>, vector<1x1x128x128xbf16>
    %67 = vector.shape_cast %66 : vector<1x1x128x128xbf16> to vector<128x128xbf16>
    %cst_72 = arith.constant dense<0.000000e+00> : vector<64x128xf32>
    %68 = tpu.matmul %65, %67, %cst_72 {dimension_numbers = #tpu.dot_dimension_numbers<[1], [0], [0], [1], [0, 0, 1, 1], [], []>} : vector<64x128xbf16>, vector<128x128xbf16>, vector<64x128xf32> -> vector<64x128xf32>
    %c0_73 = arith.constant 0 : index
    %c0_74 = arith.constant 0 : index
    %69 = vector.load %arg15[%c0_73, %c0_74] : memref<64x128xf32, #tpu.memory_space<vmem>>, vector<64x128xf32>
    tpu.vector_store %arg15[%c0_73, %c0_74], %68 {strides = array<i32>} : memref<64x128xf32, #tpu.memory_space<vmem>>, vector<64x128xf32>,
    %c0_75 = arith.constant 0 : index
    %c1_76 = arith.constant 1 : index
    %c0_77 = arith.constant 0 : index
    %70 = vector.load %arg13[%c0_75, %c1_76, %c0_77] : memref<9x9x128xbf16, #tpu.memory_space<vmem>>, vector<8x8x128xbf16>
    %71 = vector.shape_cast %70 : vector<8x8x128xbf16> to vector<64x128xbf16>
    %c0_78 = arith.constant 0 : index
    %c1_79 = arith.constant 1 : index
    %c0_80 = arith.constant 0 : index
    %c0_81 = arith.constant 0 : index
    %72 = vector.load %arg7[%c0_78, %c1_79, %c0_80, %c0_81] : memref<3x3x128x128xbf16, #tpu.memory_space<vmem>>, vector<1x1x128x128xbf16>
    %73 = vector.shape_cast %72 : vector<1x1x128x128xbf16> to vector<128x128xbf16>
    %cst_82 = arith.constant dense<0.000000e+00> : vector<64x128xf32>
    %74 = tpu.matmul %71, %73, %cst_82 {dimension_numbers = #tpu.dot_dimension_numbers<[1], [0], [0], [1], [0, 0, 1, 1], [], []>} : vector<64x128xbf16>, vector<128x128xbf16>, vector<64x128xf32> -> vector<64x128xf32>
    %c0_83 = arith.constant 0 : index
    %c0_84 = arith.constant 0 : index
    %75 = vector.load %arg15[%c0_83, %c0_84] : memref<64x128xf32, #tpu.memory_space<vmem>>, vector<64x128xf32>
    %76 = arith.addf %75, %74 : vector<64x128xf32>
    %c0_85 = arith.constant 0 : index
    %c0_86 = arith.constant 0 : index
    %77 = vector.load %arg15[%c0_85, %c0_86] : memref<64x128xf32, #tpu.memory_space<vmem>>, vector<64x128xf32>
    tpu.vector_store %arg15[%c0_85, %c0_86], %76 {strides = array<i32>} : memref<64x128xf32, #tpu.memory_space<vmem>>, vector<64x128xf32>,
    %c0_87 = arith.constant 0 : index
    %c1_88 = arith.constant 1 : index
    %c0_89 = arith.constant 0 : index
    %78 = vector.load %arg14[%c0_87, %c1_88, %c0_89] : memref<9x9x128xbf16, #tpu.memory_space<vmem>>, vector<8x8x128xbf16>
    %79 = vector.shape_cast %78 : vector<8x8x128xbf16> to vector<64x128xbf16>
    %c0_90 = arith.constant 0 : index
    %c2 = arith.constant 2 : index
    %c0_91 = arith.constant 0 : index
    %c0_92 = arith.constant 0 : index
    %80 = vector.load %arg7[%c0_90, %c2, %c0_91, %c0_92] : memref<3x3x128x128xbf16, #tpu.memory_space<vmem>>, vector<1x1x128x128xbf16>
    %81 = vector.shape_cast %80 : vector<1x1x128x128xbf16> to vector<128x128xbf16>
    %cst_93 = arith.constant dense<0.000000e+00> : vector<64x128xf32>
    %82 = tpu.matmul %79, %81, %cst_93 {dimension_numbers = #tpu.dot_dimension_numbers<[1], [0], [0], [1], [0, 0, 1, 1], [], []>} : vector<64x128xbf16>, vector<128x128xbf16>, vector<64x128xf32> -> vector<64x128xf32>
    %c0_94 = arith.constant 0 : index
    %c0_95 = arith.constant 0 : index
    %83 = vector.load %arg15[%c0_94, %c0_95] : memref<64x128xf32, #tpu.memory_space<vmem>>, vector<64x128xf32>
    %84 = arith.addf %83, %82 : vector<64x128xf32>
    %c0_96 = arith.constant 0 : index
    %c0_97 = arith.constant 0 : index
    %85 = vector.load %arg15[%c0_96, %c0_97] : memref<64x128xf32, #tpu.memory_space<vmem>>, vector<64x128xf32>
    tpu.vector_store %arg15[%c0_96, %c0_97], %84 {strides = array<i32>} : memref<64x128xf32, #tpu.memory_space<vmem>>, vector<64x128xf32>,
    %c1_98 = arith.constant 1 : index
    %c0_99 = arith.constant 0 : index
    %c0_100 = arith.constant 0 : index
    %86 = vector.load %arg12[%c1_98, %c0_99, %c0_100] : memref<9x9x128xbf16, #tpu.memory_space<vmem>>, vector<8x8x128xbf16>
    %87 = vector.shape_cast %86 : vector<8x8x128xbf16> to vector<64x128xbf16>
    %c1_101 = arith.constant 1 : index
    %c0_102 = arith.constant 0 : index
    %c0_103 = arith.constant 0 : index
    %c0_104 = arith.constant 0 : index
    %88 = vector.load %arg7[%c1_101, %c0_102, %c0_103, %c0_104] : memref<3x3x128x128xbf16, #tpu.memory_space<vmem>>, vector<1x1x128x128xbf16>
    %89 = vector.shape_cast %88 : vector<1x1x128x128xbf16> to vector<128x128xbf16>
    %cst_105 = arith.constant dense<0.000000e+00> : vector<64x128xf32>
    %90 = tpu.matmul %87, %89, %cst_105 {dimension_numbers = #tpu.dot_dimension_numbers<[1], [0], [0], [1], [0, 0, 1, 1], [], []>} : vector<64x128xbf16>, vector<128x128xbf16>, vector<64x128xf32> -> vector<64x128xf32>
    %c0_106 = arith.constant 0 : index
    %c0_107 = arith.constant 0 : index
    %91 = vector.load %arg15[%c0_106, %c0_107] : memref<64x128xf32, #tpu.memory_space<vmem>>, vector<64x128xf32>
    %92 = arith.addf %91, %90 : vector<64x128xf32>
    %c0_108 = arith.constant 0 : index
    %c0_109 = arith.constant 0 : index
    %93 = vector.load %arg15[%c0_108, %c0_109] : memref<64x128xf32, #tpu.memory_space<vmem>>, vector<64x128xf32>
    tpu.vector_store %arg15[%c0_108, %c0_109], %92 {strides = array<i32>} : memref<64x128xf32, #tpu.memory_space<vmem>>, vector<64x128xf32>,
    %c1_110 = arith.constant 1 : index
    %c1_111 = arith.constant 1 : index
    %c0_112 = arith.constant 0 : index
    %94 = vector.load %arg11[%c1_110, %c1_111, %c0_112] : memref<9x9x128xbf16, #tpu.memory_space<vmem>>, vector<8x8x128xbf16>
    %95 = vector.shape_cast %94 : vector<8x8x128xbf16> to vector<64x128xbf16>
    %c1_113 = arith.constant 1 : index
    %c1_114 = arith.constant 1 : index
    %c0_115 = arith.constant 0 : index
    %c0_116 = arith.constant 0 : index
    %96 = vector.load %arg7[%c1_113, %c1_114, %c0_115, %c0_116] : memref<3x3x128x128xbf16, #tpu.memory_space<vmem>>, vector<1x1x128x128xbf16>
    %97 = vector.shape_cast %96 : vector<1x1x128x128xbf16> to vector<128x128xbf16>
    %cst_117 = arith.constant dense<0.000000e+00> : vector<64x128xf32>
    %98 = tpu.matmul %95, %97, %cst_117 {dimension_numbers = #tpu.dot_dimension_numbers<[1], [0], [0], [1], [0, 0, 1, 1], [], []>} : vector<64x128xbf16>, vector<128x128xbf16>, vector<64x128xf32> -> vector<64x128xf32>
    %c0_118 = arith.constant 0 : index
    %c0_119 = arith.constant 0 : index
    %99 = vector.load %arg15[%c0_118, %c0_119] : memref<64x128xf32, #tpu.memory_space<vmem>>, vector<64x128xf32>
    %100 = arith.addf %99, %98 : vector<64x128xf32>
    %c0_120 = arith.constant 0 : index
    %c0_121 = arith.constant 0 : index
    %101 = vector.load %arg15[%c0_120, %c0_121] : memref<64x128xf32, #tpu.memory_space<vmem>>, vector<64x128xf32>
    tpu.vector_store %arg15[%c0_120, %c0_121], %100 {strides = array<i32>} : memref<64x128xf32, #tpu.memory_space<vmem>>, vector<64x128xf32>,
    %c1_122 = arith.constant 1 : index
    %c1_123 = arith.constant 1 : index
    %c0_124 = arith.constant 0 : index
    %102 = vector.load %arg12[%c1_122, %c1_123, %c0_124] : memref<9x9x128xbf16, #tpu.memory_space<vmem>>, vector<8x8x128xbf16>
    %103 = vector.shape_cast %102 : vector<8x8x128xbf16> to vector<64x128xbf16>
    %c1_125 = arith.constant 1 : index
    %c2_126 = arith.constant 2 : index
    %c0_127 = arith.constant 0 : index
    %c0_128 = arith.constant 0 : index
    %104 = vector.load %arg7[%c1_125, %c2_126, %c0_127, %c0_128] : memref<3x3x128x128xbf16, #tpu.memory_space<vmem>>, vector<1x1x128x128xbf16>
    %105 = vector.shape_cast %104 : vector<1x1x128x128xbf16> to vector<128x128xbf16>
    %cst_129 = arith.constant dense<0.000000e+00> : vector<64x128xf32>
    %106 = tpu.matmul %103, %105, %cst_129 {dimension_numbers = #tpu.dot_dimension_numbers<[1], [0], [0], [1], [0, 0, 1, 1], [], []>} : vector<64x128xbf16>, vector<128x128xbf16>, vector<64x128xf32> -> vector<64x128xf32>
    %c0_130 = arith.constant 0 : index
    %c0_131 = arith.constant 0 : index
    %107 = vector.load %arg15[%c0_130, %c0_131] : memref<64x128xf32, #tpu.memory_space<vmem>>, vector<64x128xf32>
    %108 = arith.addf %107, %106 : vector<64x128xf32>
    %c0_132 = arith.constant 0 : index
    %c0_133 = arith.constant 0 : index
    %109 = vector.load %arg15[%c0_132, %c0_133] : memref<64x128xf32, #tpu.memory_space<vmem>>, vector<64x128xf32>
    tpu.vector_store %arg15[%c0_132, %c0_133], %108 {strides = array<i32>} : memref<64x128xf32, #tpu.memory_space<vmem>>, vector<64x128xf32>,
    %c1_134 = arith.constant 1 : index
    %c0_135 = arith.constant 0 : index
    %c0_136 = arith.constant 0 : index
    %110 = vector.load %arg14[%c1_134, %c0_135, %c0_136] : memref<9x9x128xbf16, #tpu.memory_space<vmem>>, vector<8x8x128xbf16>
    %111 = vector.shape_cast %110 : vector<8x8x128xbf16> to vector<64x128xbf16>
    %c2_137 = arith.constant 2 : index
    %c0_138 = arith.constant 0 : index
    %c0_139 = arith.constant 0 : index
    %c0_140 = arith.constant 0 : index
    %112 = vector.load %arg7[%c2_137, %c0_138, %c0_139, %c0_140] : memref<3x3x128x128xbf16, #tpu.memory_space<vmem>>, vector<1x1x128x128xbf16>
    %113 = vector.shape_cast %112 : vector<1x1x128x128xbf16> to vector<128x128xbf16>
    %cst_141 = arith.constant dense<0.000000e+00> : vector<64x128xf32>
    %114 = tpu.matmul %111, %113, %cst_141 {dimension_numbers = #tpu.dot_dimension_numbers<[1], [0], [0], [1], [0, 0, 1, 1], [], []>} : vector<64x128xbf16>, vector<128x128xbf16>, vector<64x128xf32> -> vector<64x128xf32>
    %c0_142 = arith.constant 0 : index
    %c0_143 = arith.constant 0 : index
    %115 = vector.load %arg15[%c0_142, %c0_143] : memref<64x128xf32, #tpu.memory_space<vmem>>, vector<64x128xf32>
    %116 = arith.addf %115, %114 : vector<64x128xf32>
    %c0_144 = arith.constant 0 : index
    %c0_145 = arith.constant 0 : index
    %117 = vector.load %arg15[%c0_144, %c0_145] : memref<64x128xf32, #tpu.memory_space<vmem>>, vector<64x128xf32>
    tpu.vector_store %arg15[%c0_144, %c0_145], %116 {strides = array<i32>} : memref<64x128xf32, #tpu.memory_space<vmem>>, vector<64x128xf32>,
    %c1_146 = arith.constant 1 : index
    %c1_147 = arith.constant 1 : index
    %c0_148 = arith.constant 0 : index
    %118 = vector.load %arg13[%c1_146, %c1_147, %c0_148] : memref<9x9x128xbf16, #tpu.memory_space<vmem>>, vector<8x8x128xbf16>
    %119 = vector.shape_cast %118 : vector<8x8x128xbf16> to vector<64x128xbf16>
    %c2_149 = arith.constant 2 : index
    %c1_150 = arith.constant 1 : index
    %c0_151 = arith.constant 0 : index
    %c0_152 = arith.constant 0 : index
    %120 = vector.load %arg7[%c2_149, %c1_150, %c0_151, %c0_152] : memref<3x3x128x128xbf16, #tpu.memory_space<vmem>>, vector<1x1x128x128xbf16>
    %121 = vector.shape_cast %120 : vector<1x1x128x128xbf16> to vector<128x128xbf16>
    %cst_153 = arith.constant dense<0.000000e+00> : vector<64x128xf32>
    %122 = tpu.matmul %119, %121, %cst_153 {dimension_numbers = #tpu.dot_dimension_numbers<[1], [0], [0], [1], [0, 0, 1, 1], [], []>} : vector<64x128xbf16>, vector<128x128xbf16>, vector<64x128xf32> -> vector<64x128xf32>
    %c0_154 = arith.constant 0 : index
    %c0_155 = arith.constant 0 : index
    %123 = vector.load %arg15[%c0_154, %c0_155] : memref<64x128xf32, #tpu.memory_space<vmem>>, vector<64x128xf32>
    %124 = arith.addf %123, %122 : vector<64x128xf32>
    %c0_156 = arith.constant 0 : index
    %c0_157 = arith.constant 0 : index
    %125 = vector.load %arg15[%c0_156, %c0_157] : memref<64x128xf32, #tpu.memory_space<vmem>>, vector<64x128xf32>
    tpu.vector_store %arg15[%c0_156, %c0_157], %124 {strides = array<i32>} : memref<64x128xf32, #tpu.memory_space<vmem>>, vector<64x128xf32>,
    %c1_158 = arith.constant 1 : index
    %c1_159 = arith.constant 1 : index
    %c0_160 = arith.constant 0 : index
    %126 = vector.load %arg14[%c1_158, %c1_159, %c0_160] : memref<9x9x128xbf16, #tpu.memory_space<vmem>>, vector<8x8x128xbf16>
    %127 = vector.shape_cast %126 : vector<8x8x128xbf16> to vector<64x128xbf16>
    %c2_161 = arith.constant 2 : index
    %c2_162 = arith.constant 2 : index
    %c0_163 = arith.constant 0 : index
    %c0_164 = arith.constant 0 : index
    %128 = vector.load %arg7[%c2_161, %c2_162, %c0_163, %c0_164] : memref<3x3x128x128xbf16, #tpu.memory_space<vmem>>, vector<1x1x128x128xbf16>
    %129 = vector.shape_cast %128 : vector<1x1x128x128xbf16> to vector<128x128xbf16>
    %cst_165 = arith.constant dense<0.000000e+00> : vector<64x128xf32>
    %130 = tpu.matmul %127, %129, %cst_165 {dimension_numbers = #tpu.dot_dimension_numbers<[1], [0], [0], [1], [0, 0, 1, 1], [], []>} : vector<64x128xbf16>, vector<128x128xbf16>, vector<64x128xf32> -> vector<64x128xf32>
    %c0_166 = arith.constant 0 : index
    %c0_167 = arith.constant 0 : index
    %131 = vector.load %arg15[%c0_166, %c0_167] : memref<64x128xf32, #tpu.memory_space<vmem>>, vector<64x128xf32>
    %132 = arith.addf %131, %130 : vector<64x128xf32>
    %c0_168 = arith.constant 0 : index
    %c0_169 = arith.constant 0 : index
    %133 = vector.load %arg15[%c0_168, %c0_169] : memref<64x128xf32, #tpu.memory_space<vmem>>, vector<64x128xf32>
    tpu.vector_store %arg15[%c0_168, %c0_169], %132 {strides = array<i32>} : memref<64x128xf32, #tpu.memory_space<vmem>>, vector<64x128xf32>,
    %c0_170 = arith.constant 0 : index
    %c0_171 = arith.constant 0 : index
    %134 = vector.load %arg15[%c0_170, %c0_171] : memref<64x128xf32, #tpu.memory_space<vmem>>, vector<64x128xf32>
    %c0_172 = arith.constant 0 : index
    %c0_173 = arith.constant 0 : index
    %135 = vector.load %arg8[%c0_172, %c0_173] : memref<1x128xf32, #tpu.memory_space<vmem>>, vector<1x128xf32>
    %136 = vector.broadcast %135 : vector<1x128xf32> to vector<64x128xf32>
    %137 = arith.mulf %134, %136 : vector<64x128xf32>
    %c0_174 = arith.constant 0 : index
    %c0_175 = arith.constant 0 : index
    %138 = vector.load %arg9[%c0_174, %c0_175] : memref<1x128xf32, #tpu.memory_space<vmem>>, vector<1x128xf32>
    %139 = vector.broadcast %138 : vector<1x128xf32> to vector<64x128xf32>
    %140 = arith.addf %137, %139 : vector<64x128xf32>
    %cst_176 = arith.constant 0.000000e+00 : f32
    %141 = vector.broadcast %cst_176 : f32 to vector<64x128xf32>
    %142 = arith.maximumf %140, %141 : vector<64x128xf32>
    %143 = vector.shape_cast %142 : vector<64x128xf32> to vector<8x8x128xf32>
    %144 = arith.truncf %143 : vector<8x8x128xf32> to vector<8x8x128xbf16>
    %c0_177 = arith.constant 0 : index
    %c0_178 = arith.constant 0 : index
    %c0_179 = arith.constant 0 : index
    %c0_180 = arith.constant 0 : index
    %145 = vector.load %arg10[%c0_177, %c0_178, %c0_179, %c0_180] : memref<1x8x8x128xbf16, #tpu.memory_space<vmem>>, vector<1x8x8x128xbf16>
    %146 = vector.shape_cast %145 : vector<1x8x8x128xbf16> to vector<8x8x128xbf16>
    %147 = vector.shape_cast %144 : vector<8x8x128xbf16> to vector<1x8x8x128xbf16>
    tpu.vector_store %arg10[%c0_177, %c0_178, %c0_179, %c0_180], %147 {strides = array<i32>} : memref<1x8x8x128xbf16, #tpu.memory_space<vmem>>, vector<1x8x8x128xbf16>,
    return
  }
  func.func @transform_0(%arg0: i32) -> (i32, i32, i32, i32) {
    %c0_i32 = arith.constant 0 : i32
    %c0_i32_0 = arith.constant 0 : i32
    %c0_i32_1 = arith.constant 0 : i32
    %c0_i32_2 = arith.constant 0 : i32
    return %arg0, %c0_i32, %c0_i32_0, %c0_i32_1 : i32, i32, i32, i32
  }
  func.func @transform_1(%arg0: i32) -> (i32, i32, i32, i32) {
    %c0_i32 = arith.constant 0 : i32
    %c0_i32_0 = arith.constant 0 : i32
    %c0_i32_1 = arith.constant 0 : i32
    %c0_i32_2 = arith.constant 0 : i32
    return %arg0, %c0_i32, %c0_i32_0, %c0_i32_1 : i32, i32, i32, i32
  }
  func.func @transform_2(%arg0: i32) -> (i32, i32, i32, i32) {
    %c0_i32 = arith.constant 0 : i32
    %c0_i32_0 = arith.constant 0 : i32
    %c0_i32_1 = arith.constant 0 : i32
    %c0_i32_2 = arith.constant 0 : i32
    return %arg0, %c0_i32, %c0_i32_0, %c0_i32_1 : i32, i32, i32, i32
  }
  func.func @transform_3(%arg0: i32) -> (i32, i32, i32, i32) {
    %c0_i32 = arith.constant 0 : i32
    %c0_i32_0 = arith.constant 0 : i32
    %c0_i32_1 = arith.constant 0 : i32
    %c0_i32_2 = arith.constant 0 : i32
    return %arg0, %c0_i32, %c0_i32_0, %c0_i32_1 : i32, i32, i32, i32
  }
  func.func @transform_4(%arg0: i32) -> (i32, i32) {
    %c0_i32 = arith.constant 0 : i32
    %c0_i32_0 = arith.constant 0 : i32
    %c0_i32_1 = arith.constant 0 : i32
    return %c0_i32, %c0_i32_0 : i32, i32
  }
  func.func @transform_5(%arg0: i32) -> (i32, i32) {
    %c0_i32 = arith.constant 0 : i32
    %c0_i32_0 = arith.constant 0 : i32
    %c0_i32_1 = arith.constant 0 : i32
    return %c0_i32, %c0_i32_0 : i32, i32
  }
  func.func @transform_6(%arg0: i32) -> (i32, i32, i32, i32) {
    %c0_i32 = arith.constant 0 : i32
    %c0_i32_0 = arith.constant 0 : i32
    %c0_i32_1 = arith.constant 0 : i32
    %c0_i32_2 = arith.constant 0 : i32
    %c0_i32_3 = arith.constant 0 : i32
    return %c0_i32, %c0_i32_0, %c0_i32_1, %c0_i32_2 : i32, i32, i32, i32
  }
  func.func @transform_7(%arg0: i32) -> (i32, i32) {
    %c0_i32 = arith.constant 0 : i32
    %c0_i32_0 = arith.constant 0 : i32
    %c0_i32_1 = arith.constant 0 : i32
    return %c0_i32, %c0_i32_0 : i32, i32
  }
  func.func @transform_8(%arg0: i32) -> (i32, i32) {
    %c0_i32 = arith.constant 0 : i32
    %c0_i32_0 = arith.constant 0 : i32
    %c0_i32_1 = arith.constant 0 : i32
    return %c0_i32, %c0_i32_0 : i32, i32
  }
  func.func @transform_9(%arg0: i32) -> (i32, i32, i32, i32) {
    %c0_i32 = arith.constant 0 : i32
    %c0_i32_0 = arith.constant 0 : i32
    %c0_i32_1 = arith.constant 0 : i32
    %c0_i32_2 = arith.constant 0 : i32
    return %arg0, %c0_i32, %c0_i32_0, %c0_i32_1 : i32, i32, i32, i32
  }
}

module attributes {stable_mosaic.version = 11 : i64} {
  func.func @kernel(%arg0: i32, %arg1: memref<1x8x8x128xbf16, #tpu.memory_space<vmem>>, %arg2: memref<3x3x128x128xbf16, #tpu.memory_space<vmem>>, %arg3: memref<1x128xf32, #tpu.memory_space<vmem>>, %arg4: memref<1x128xf32, #tpu.memory_space<vmem>>, %arg5: memref<1x8x8x128xbf16, #tpu.memory_space<vmem>>, %arg6: memref<1x128xf32, #tpu.memory_space<vmem>>, %arg7: memref<1x128xf32, #tpu.memory_space<vmem>>, %arg8: memref<128x128xbf16, #tpu.memory_space<vmem>>, %arg9: memref<1x8x8x128xf32, #tpu.memory_space<vmem>>, %arg10: memref<10x10x128xbf16, #tpu.memory_space<vmem>>, %arg11: memref<64x128xf32, #tpu.memory_space<vmem>>) attributes {dimension_semantics = [#tpu.dimension_semantics<parallel>], iteration_bounds = array<i64: 2>, scalar_prefetch = 0 : i64, scratch_operands = 2 : i64, tpu.core_type = #tpu.core_type<tc>, window_params = [{transform_indices = @transform_0, window_bounds = array<i64: 1, 8, 8, 128>}, {pipeline_mode = #tpu.pipeline_mode<synchronous>, transform_indices = @transform_1, window_bounds = array<i64: 3, 3, 128, 128>}, {pipeline_mode = #tpu.pipeline_mode<synchronous>, transform_indices = @transform_2, window_bounds = array<i64: 1, 128>}, {pipeline_mode = #tpu.pipeline_mode<synchronous>, transform_indices = @transform_3, window_bounds = array<i64: 1, 128>}, {transform_indices = @transform_4, window_bounds = array<i64: 1, 8, 8, 128>}, {pipeline_mode = #tpu.pipeline_mode<synchronous>, transform_indices = @transform_5, window_bounds = array<i64: 1, 128>}, {pipeline_mode = #tpu.pipeline_mode<synchronous>, transform_indices = @transform_6, window_bounds = array<i64: 1, 128>}, {pipeline_mode = #tpu.pipeline_mode<synchronous>, transform_indices = @transform_7, window_bounds = array<i64: 128, 128>}, {transform_indices = @transform_8, window_bounds = array<i64: 1, 8, 8, 128>}]} {
    %cst = arith.constant 0.000000e+00 : bf16
    %0 = vector.broadcast %cst : bf16 to vector<1x10x128xbf16>
    %c0 = arith.constant 0 : index
    %c0_0 = arith.constant 0 : index
    %c0_1 = arith.constant 0 : index
    %1 = vector.load %arg10[%c0, %c0_0, %c0_1] : memref<10x10x128xbf16, #tpu.memory_space<vmem>>, vector<1x10x128xbf16>
    tpu.vector_store %arg10[%c0, %c0_0, %c0_1], %0 {strides = array<i32>} : memref<10x10x128xbf16, #tpu.memory_space<vmem>>, vector<1x10x128xbf16>,
    %cst_2 = arith.constant 0.000000e+00 : bf16
    %2 = vector.broadcast %cst_2 : bf16 to vector<10x1x128xbf16>
    %c0_3 = arith.constant 0 : index
    %c0_4 = arith.constant 0 : index
    %c0_5 = arith.constant 0 : index
    %3 = vector.load %arg10[%c0_3, %c0_4, %c0_5] : memref<10x10x128xbf16, #tpu.memory_space<vmem>>, vector<10x1x128xbf16>
    tpu.vector_store %arg10[%c0_3, %c0_4, %c0_5], %2 {strides = array<i32>} : memref<10x10x128xbf16, #tpu.memory_space<vmem>>, vector<10x1x128xbf16>,
    %cst_6 = arith.constant 0.000000e+00 : bf16
    %4 = vector.broadcast %cst_6 : bf16 to vector<1x10x128xbf16>
    %c9 = arith.constant 9 : index
    %c0_7 = arith.constant 0 : index
    %c0_8 = arith.constant 0 : index
    %5 = vector.load %arg10[%c9, %c0_7, %c0_8] : memref<10x10x128xbf16, #tpu.memory_space<vmem>>, vector<1x10x128xbf16>
    tpu.vector_store %arg10[%c9, %c0_7, %c0_8], %4 {strides = array<i32>} : memref<10x10x128xbf16, #tpu.memory_space<vmem>>, vector<1x10x128xbf16>,
    %cst_9 = arith.constant 0.000000e+00 : bf16
    %6 = vector.broadcast %cst_9 : bf16 to vector<10x1x128xbf16>
    %c0_10 = arith.constant 0 : index
    %c9_11 = arith.constant 9 : index
    %c0_12 = arith.constant 0 : index
    %7 = vector.load %arg10[%c0_10, %c9_11, %c0_12] : memref<10x10x128xbf16, #tpu.memory_space<vmem>>, vector<10x1x128xbf16>
    tpu.vector_store %arg10[%c0_10, %c9_11, %c0_12], %6 {strides = array<i32>} : memref<10x10x128xbf16, #tpu.memory_space<vmem>>, vector<10x1x128xbf16>,
    %c0_13 = arith.constant 0 : index
    %c0_14 = arith.constant 0 : index
    %c0_15 = arith.constant 0 : index
    %c0_16 = arith.constant 0 : index
    %8 = vector.load %arg1[%c0_13, %c0_14, %c0_15, %c0_16] : memref<1x8x8x128xbf16, #tpu.memory_space<vmem>>, vector<1x8x8x128xbf16>
    %9 = vector.shape_cast %8 : vector<1x8x8x128xbf16> to vector<8x8x128xbf16>
    %c1 = arith.constant 1 : index
    %c1_17 = arith.constant 1 : index
    %c0_18 = arith.constant 0 : index
    %10 = vector.load %arg10[%c1, %c1_17, %c0_18] : memref<10x10x128xbf16, #tpu.memory_space<vmem>>, vector<8x8x128xbf16>
    tpu.vector_store %arg10[%c1, %c1_17, %c0_18], %9 {strides = array<i32>} : memref<10x10x128xbf16, #tpu.memory_space<vmem>>, vector<8x8x128xbf16>,
    %c0_19 = arith.constant 0 : index
    %c0_20 = arith.constant 0 : index
    %c0_21 = arith.constant 0 : index
    %11 = vector.load %arg10[%c0_19, %c0_20, %c0_21] : memref<10x10x128xbf16, #tpu.memory_space<vmem>>, vector<8x8x128xbf16>
    %12 = vector.shape_cast %11 : vector<8x8x128xbf16> to vector<64x128xbf16>
    %c0_22 = arith.constant 0 : index
    %c0_23 = arith.constant 0 : index
    %c0_24 = arith.constant 0 : index
    %c0_25 = arith.constant 0 : index
    %13 = vector.load %arg2[%c0_22, %c0_23, %c0_24, %c0_25] : memref<3x3x128x128xbf16, #tpu.memory_space<vmem>>, vector<1x1x128x128xbf16>
    %14 = vector.shape_cast %13 : vector<1x1x128x128xbf16> to vector<128x128xbf16>
    %cst_26 = arith.constant dense<0.000000e+00> : vector<64x128xf32>
    %15 = tpu.matmul %12, %14, %cst_26 {dimension_numbers = #tpu.dot_dimension_numbers<[1], [0], [0], [1], [0, 0, 1, 1], [], []>} : vector<64x128xbf16>, vector<128x128xbf16>, vector<64x128xf32> -> vector<64x128xf32>
    %c0_27 = arith.constant 0 : index
    %c0_28 = arith.constant 0 : index
    %16 = vector.load %arg11[%c0_27, %c0_28] : memref<64x128xf32, #tpu.memory_space<vmem>>, vector<64x128xf32>
    tpu.vector_store %arg11[%c0_27, %c0_28], %15 {strides = array<i32>} : memref<64x128xf32, #tpu.memory_space<vmem>>, vector<64x128xf32>,
    %c0_29 = arith.constant 0 : index
    %c1_30 = arith.constant 1 : index
    %c0_31 = arith.constant 0 : index
    %17 = vector.load %arg10[%c0_29, %c1_30, %c0_31] : memref<10x10x128xbf16, #tpu.memory_space<vmem>>, vector<8x8x128xbf16>
    %18 = vector.shape_cast %17 : vector<8x8x128xbf16> to vector<64x128xbf16>
    %c0_32 = arith.constant 0 : index
    %c1_33 = arith.constant 1 : index
    %c0_34 = arith.constant 0 : index
    %c0_35 = arith.constant 0 : index
    %19 = vector.load %arg2[%c0_32, %c1_33, %c0_34, %c0_35] : memref<3x3x128x128xbf16, #tpu.memory_space<vmem>>, vector<1x1x128x128xbf16>
    %20 = vector.shape_cast %19 : vector<1x1x128x128xbf16> to vector<128x128xbf16>
    %cst_36 = arith.constant dense<0.000000e+00> : vector<64x128xf32>
    %21 = tpu.matmul %18, %20, %cst_36 {dimension_numbers = #tpu.dot_dimension_numbers<[1], [0], [0], [1], [0, 0, 1, 1], [], []>} : vector<64x128xbf16>, vector<128x128xbf16>, vector<64x128xf32> -> vector<64x128xf32>
    %c0_37 = arith.constant 0 : index
    %c0_38 = arith.constant 0 : index
    %22 = vector.load %arg11[%c0_37, %c0_38] : memref<64x128xf32, #tpu.memory_space<vmem>>, vector<64x128xf32>
    %23 = arith.addf %22, %21 : vector<64x128xf32>
    %c0_39 = arith.constant 0 : index
    %c0_40 = arith.constant 0 : index
    %24 = vector.load %arg11[%c0_39, %c0_40] : memref<64x128xf32, #tpu.memory_space<vmem>>, vector<64x128xf32>
    tpu.vector_store %arg11[%c0_39, %c0_40], %23 {strides = array<i32>} : memref<64x128xf32, #tpu.memory_space<vmem>>, vector<64x128xf32>,
    %c0_41 = arith.constant 0 : index
    %c2 = arith.constant 2 : index
    %c0_42 = arith.constant 0 : index
    %25 = vector.load %arg10[%c0_41, %c2, %c0_42] : memref<10x10x128xbf16, #tpu.memory_space<vmem>>, vector<8x8x128xbf16>
    %26 = vector.shape_cast %25 : vector<8x8x128xbf16> to vector<64x128xbf16>
    %c0_43 = arith.constant 0 : index
    %c2_44 = arith.constant 2 : index
    %c0_45 = arith.constant 0 : index
    %c0_46 = arith.constant 0 : index
    %27 = vector.load %arg2[%c0_43, %c2_44, %c0_45, %c0_46] : memref<3x3x128x128xbf16, #tpu.memory_space<vmem>>, vector<1x1x128x128xbf16>
    %28 = vector.shape_cast %27 : vector<1x1x128x128xbf16> to vector<128x128xbf16>
    %cst_47 = arith.constant dense<0.000000e+00> : vector<64x128xf32>
    %29 = tpu.matmul %26, %28, %cst_47 {dimension_numbers = #tpu.dot_dimension_numbers<[1], [0], [0], [1], [0, 0, 1, 1], [], []>} : vector<64x128xbf16>, vector<128x128xbf16>, vector<64x128xf32> -> vector<64x128xf32>
    %c0_48 = arith.constant 0 : index
    %c0_49 = arith.constant 0 : index
    %30 = vector.load %arg11[%c0_48, %c0_49] : memref<64x128xf32, #tpu.memory_space<vmem>>, vector<64x128xf32>
    %31 = arith.addf %30, %29 : vector<64x128xf32>
    %c0_50 = arith.constant 0 : index
    %c0_51 = arith.constant 0 : index
    %32 = vector.load %arg11[%c0_50, %c0_51] : memref<64x128xf32, #tpu.memory_space<vmem>>, vector<64x128xf32>
    tpu.vector_store %arg11[%c0_50, %c0_51], %31 {strides = array<i32>} : memref<64x128xf32, #tpu.memory_space<vmem>>, vector<64x128xf32>,
    %c1_52 = arith.constant 1 : index
    %c0_53 = arith.constant 0 : index
    %c0_54 = arith.constant 0 : index
    %33 = vector.load %arg10[%c1_52, %c0_53, %c0_54] : memref<10x10x128xbf16, #tpu.memory_space<vmem>>, vector<8x8x128xbf16>
    %34 = vector.shape_cast %33 : vector<8x8x128xbf16> to vector<64x128xbf16>
    %c1_55 = arith.constant 1 : index
    %c0_56 = arith.constant 0 : index
    %c0_57 = arith.constant 0 : index
    %c0_58 = arith.constant 0 : index
    %35 = vector.load %arg2[%c1_55, %c0_56, %c0_57, %c0_58] : memref<3x3x128x128xbf16, #tpu.memory_space<vmem>>, vector<1x1x128x128xbf16>
    %36 = vector.shape_cast %35 : vector<1x1x128x128xbf16> to vector<128x128xbf16>
    %cst_59 = arith.constant dense<0.000000e+00> : vector<64x128xf32>
    %37 = tpu.matmul %34, %36, %cst_59 {dimension_numbers = #tpu.dot_dimension_numbers<[1], [0], [0], [1], [0, 0, 1, 1], [], []>} : vector<64x128xbf16>, vector<128x128xbf16>, vector<64x128xf32> -> vector<64x128xf32>
    %c0_60 = arith.constant 0 : index
    %c0_61 = arith.constant 0 : index
    %38 = vector.load %arg11[%c0_60, %c0_61] : memref<64x128xf32, #tpu.memory_space<vmem>>, vector<64x128xf32>
    %39 = arith.addf %38, %37 : vector<64x128xf32>
    %c0_62 = arith.constant 0 : index
    %c0_63 = arith.constant 0 : index
    %40 = vector.load %arg11[%c0_62, %c0_63] : memref<64x128xf32, #tpu.memory_space<vmem>>, vector<64x128xf32>
    tpu.vector_store %arg11[%c0_62, %c0_63], %39 {strides = array<i32>} : memref<64x128xf32, #tpu.memory_space<vmem>>, vector<64x128xf32>,
    %c1_64 = arith.constant 1 : index
    %c1_65 = arith.constant 1 : index
    %c0_66 = arith.constant 0 : index
    %41 = vector.load %arg10[%c1_64, %c1_65, %c0_66] : memref<10x10x128xbf16, #tpu.memory_space<vmem>>, vector<8x8x128xbf16>
    %42 = vector.shape_cast %41 : vector<8x8x128xbf16> to vector<64x128xbf16>
    %c1_67 = arith.constant 1 : index
    %c1_68 = arith.constant 1 : index
    %c0_69 = arith.constant 0 : index
    %c0_70 = arith.constant 0 : index
    %43 = vector.load %arg2[%c1_67, %c1_68, %c0_69, %c0_70] : memref<3x3x128x128xbf16, #tpu.memory_space<vmem>>, vector<1x1x128x128xbf16>
    %44 = vector.shape_cast %43 : vector<1x1x128x128xbf16> to vector<128x128xbf16>
    %cst_71 = arith.constant dense<0.000000e+00> : vector<64x128xf32>
    %45 = tpu.matmul %42, %44, %cst_71 {dimension_numbers = #tpu.dot_dimension_numbers<[1], [0], [0], [1], [0, 0, 1, 1], [], []>} : vector<64x128xbf16>, vector<128x128xbf16>, vector<64x128xf32> -> vector<64x128xf32>
    %c0_72 = arith.constant 0 : index
    %c0_73 = arith.constant 0 : index
    %46 = vector.load %arg11[%c0_72, %c0_73] : memref<64x128xf32, #tpu.memory_space<vmem>>, vector<64x128xf32>
    %47 = arith.addf %46, %45 : vector<64x128xf32>
    %c0_74 = arith.constant 0 : index
    %c0_75 = arith.constant 0 : index
    %48 = vector.load %arg11[%c0_74, %c0_75] : memref<64x128xf32, #tpu.memory_space<vmem>>, vector<64x128xf32>
    tpu.vector_store %arg11[%c0_74, %c0_75], %47 {strides = array<i32>} : memref<64x128xf32, #tpu.memory_space<vmem>>, vector<64x128xf32>,
    %c1_76 = arith.constant 1 : index
    %c2_77 = arith.constant 2 : index
    %c0_78 = arith.constant 0 : index
    %49 = vector.load %arg10[%c1_76, %c2_77, %c0_78] : memref<10x10x128xbf16, #tpu.memory_space<vmem>>, vector<8x8x128xbf16>
    %50 = vector.shape_cast %49 : vector<8x8x128xbf16> to vector<64x128xbf16>
    %c1_79 = arith.constant 1 : index
    %c2_80 = arith.constant 2 : index
    %c0_81 = arith.constant 0 : index
    %c0_82 = arith.constant 0 : index
    %51 = vector.load %arg2[%c1_79, %c2_80, %c0_81, %c0_82] : memref<3x3x128x128xbf16, #tpu.memory_space<vmem>>, vector<1x1x128x128xbf16>
    %52 = vector.shape_cast %51 : vector<1x1x128x128xbf16> to vector<128x128xbf16>
    %cst_83 = arith.constant dense<0.000000e+00> : vector<64x128xf32>
    %53 = tpu.matmul %50, %52, %cst_83 {dimension_numbers = #tpu.dot_dimension_numbers<[1], [0], [0], [1], [0, 0, 1, 1], [], []>} : vector<64x128xbf16>, vector<128x128xbf16>, vector<64x128xf32> -> vector<64x128xf32>
    %c0_84 = arith.constant 0 : index
    %c0_85 = arith.constant 0 : index
    %54 = vector.load %arg11[%c0_84, %c0_85] : memref<64x128xf32, #tpu.memory_space<vmem>>, vector<64x128xf32>
    %55 = arith.addf %54, %53 : vector<64x128xf32>
    %c0_86 = arith.constant 0 : index
    %c0_87 = arith.constant 0 : index
    %56 = vector.load %arg11[%c0_86, %c0_87] : memref<64x128xf32, #tpu.memory_space<vmem>>, vector<64x128xf32>
    tpu.vector_store %arg11[%c0_86, %c0_87], %55 {strides = array<i32>} : memref<64x128xf32, #tpu.memory_space<vmem>>, vector<64x128xf32>,
    %c2_88 = arith.constant 2 : index
    %c0_89 = arith.constant 0 : index
    %c0_90 = arith.constant 0 : index
    %57 = vector.load %arg10[%c2_88, %c0_89, %c0_90] : memref<10x10x128xbf16, #tpu.memory_space<vmem>>, vector<8x8x128xbf16>
    %58 = vector.shape_cast %57 : vector<8x8x128xbf16> to vector<64x128xbf16>
    %c2_91 = arith.constant 2 : index
    %c0_92 = arith.constant 0 : index
    %c0_93 = arith.constant 0 : index
    %c0_94 = arith.constant 0 : index
    %59 = vector.load %arg2[%c2_91, %c0_92, %c0_93, %c0_94] : memref<3x3x128x128xbf16, #tpu.memory_space<vmem>>, vector<1x1x128x128xbf16>
    %60 = vector.shape_cast %59 : vector<1x1x128x128xbf16> to vector<128x128xbf16>
    %cst_95 = arith.constant dense<0.000000e+00> : vector<64x128xf32>
    %61 = tpu.matmul %58, %60, %cst_95 {dimension_numbers = #tpu.dot_dimension_numbers<[1], [0], [0], [1], [0, 0, 1, 1], [], []>} : vector<64x128xbf16>, vector<128x128xbf16>, vector<64x128xf32> -> vector<64x128xf32>
    %c0_96 = arith.constant 0 : index
    %c0_97 = arith.constant 0 : index
    %62 = vector.load %arg11[%c0_96, %c0_97] : memref<64x128xf32, #tpu.memory_space<vmem>>, vector<64x128xf32>
    %63 = arith.addf %62, %61 : vector<64x128xf32>
    %c0_98 = arith.constant 0 : index
    %c0_99 = arith.constant 0 : index
    %64 = vector.load %arg11[%c0_98, %c0_99] : memref<64x128xf32, #tpu.memory_space<vmem>>, vector<64x128xf32>
    tpu.vector_store %arg11[%c0_98, %c0_99], %63 {strides = array<i32>} : memref<64x128xf32, #tpu.memory_space<vmem>>, vector<64x128xf32>,
    %c2_100 = arith.constant 2 : index
    %c1_101 = arith.constant 1 : index
    %c0_102 = arith.constant 0 : index
    %65 = vector.load %arg10[%c2_100, %c1_101, %c0_102] : memref<10x10x128xbf16, #tpu.memory_space<vmem>>, vector<8x8x128xbf16>
    %66 = vector.shape_cast %65 : vector<8x8x128xbf16> to vector<64x128xbf16>
    %c2_103 = arith.constant 2 : index
    %c1_104 = arith.constant 1 : index
    %c0_105 = arith.constant 0 : index
    %c0_106 = arith.constant 0 : index
    %67 = vector.load %arg2[%c2_103, %c1_104, %c0_105, %c0_106] : memref<3x3x128x128xbf16, #tpu.memory_space<vmem>>, vector<1x1x128x128xbf16>
    %68 = vector.shape_cast %67 : vector<1x1x128x128xbf16> to vector<128x128xbf16>
    %cst_107 = arith.constant dense<0.000000e+00> : vector<64x128xf32>
    %69 = tpu.matmul %66, %68, %cst_107 {dimension_numbers = #tpu.dot_dimension_numbers<[1], [0], [0], [1], [0, 0, 1, 1], [], []>} : vector<64x128xbf16>, vector<128x128xbf16>, vector<64x128xf32> -> vector<64x128xf32>
    %c0_108 = arith.constant 0 : index
    %c0_109 = arith.constant 0 : index
    %70 = vector.load %arg11[%c0_108, %c0_109] : memref<64x128xf32, #tpu.memory_space<vmem>>, vector<64x128xf32>
    %71 = arith.addf %70, %69 : vector<64x128xf32>
    %c0_110 = arith.constant 0 : index
    %c0_111 = arith.constant 0 : index
    %72 = vector.load %arg11[%c0_110, %c0_111] : memref<64x128xf32, #tpu.memory_space<vmem>>, vector<64x128xf32>
    tpu.vector_store %arg11[%c0_110, %c0_111], %71 {strides = array<i32>} : memref<64x128xf32, #tpu.memory_space<vmem>>, vector<64x128xf32>,
    %c2_112 = arith.constant 2 : index
    %c2_113 = arith.constant 2 : index
    %c0_114 = arith.constant 0 : index
    %73 = vector.load %arg10[%c2_112, %c2_113, %c0_114] : memref<10x10x128xbf16, #tpu.memory_space<vmem>>, vector<8x8x128xbf16>
    %74 = vector.shape_cast %73 : vector<8x8x128xbf16> to vector<64x128xbf16>
    %c2_115 = arith.constant 2 : index
    %c2_116 = arith.constant 2 : index
    %c0_117 = arith.constant 0 : index
    %c0_118 = arith.constant 0 : index
    %75 = vector.load %arg2[%c2_115, %c2_116, %c0_117, %c0_118] : memref<3x3x128x128xbf16, #tpu.memory_space<vmem>>, vector<1x1x128x128xbf16>
    %76 = vector.shape_cast %75 : vector<1x1x128x128xbf16> to vector<128x128xbf16>
    %cst_119 = arith.constant dense<0.000000e+00> : vector<64x128xf32>
    %77 = tpu.matmul %74, %76, %cst_119 {dimension_numbers = #tpu.dot_dimension_numbers<[1], [0], [0], [1], [0, 0, 1, 1], [], []>} : vector<64x128xbf16>, vector<128x128xbf16>, vector<64x128xf32> -> vector<64x128xf32>
    %c0_120 = arith.constant 0 : index
    %c0_121 = arith.constant 0 : index
    %78 = vector.load %arg11[%c0_120, %c0_121] : memref<64x128xf32, #tpu.memory_space<vmem>>, vector<64x128xf32>
    %79 = arith.addf %78, %77 : vector<64x128xf32>
    %c0_122 = arith.constant 0 : index
    %c0_123 = arith.constant 0 : index
    %80 = vector.load %arg11[%c0_122, %c0_123] : memref<64x128xf32, #tpu.memory_space<vmem>>, vector<64x128xf32>
    tpu.vector_store %arg11[%c0_122, %c0_123], %79 {strides = array<i32>} : memref<64x128xf32, #tpu.memory_space<vmem>>, vector<64x128xf32>,
    %c0_124 = arith.constant 0 : index
    %c0_125 = arith.constant 0 : index
    %c0_126 = arith.constant 0 : index
    %c0_127 = arith.constant 0 : index
    %81 = vector.load %arg5[%c0_124, %c0_125, %c0_126, %c0_127] : memref<1x8x8x128xbf16, #tpu.memory_space<vmem>>, vector<1x8x8x128xbf16>
    %82 = vector.shape_cast %81 : vector<1x8x8x128xbf16> to vector<8x8x128xbf16>
    %83 = arith.extf %82 : vector<8x8x128xbf16> to vector<8x8x128xf32>
    %c0_128 = arith.constant 0 : index
    %c0_129 = arith.constant 0 : index
    %84 = vector.load %arg6[%c0_128, %c0_129] : memref<1x128xf32, #tpu.memory_space<vmem>>, vector<1x128xf32>
    %85 = vector.shape_cast %84 : vector<1x128xf32> to vector<1x1x128xf32>
    %86 = vector.broadcast %85 : vector<1x1x128xf32> to vector<8x8x128xf32>
    %87 = arith.mulf %83, %86 : vector<8x8x128xf32>
    %c0_130 = arith.constant 0 : index
    %c0_131 = arith.constant 0 : index
    %88 = vector.load %arg7[%c0_130, %c0_131] : memref<1x128xf32, #tpu.memory_space<vmem>>, vector<1x128xf32>
    %89 = vector.shape_cast %88 : vector<1x128xf32> to vector<1x1x128xf32>
    %90 = vector.broadcast %89 : vector<1x1x128xf32> to vector<8x8x128xf32>
    %91 = arith.addf %87, %90 : vector<8x8x128xf32>
    %cst_132 = arith.constant 0.000000e+00 : f32
    %92 = vector.broadcast %cst_132 : f32 to vector<8x8x128xf32>
    %93 = arith.maximumf %91, %92 : vector<8x8x128xf32>
    %c0_133 = arith.constant 0 : index
    %c0_134 = arith.constant 0 : index
    %94 = vector.load %arg11[%c0_133, %c0_134] : memref<64x128xf32, #tpu.memory_space<vmem>>, vector<64x128xf32>
    %95 = vector.shape_cast %93 : vector<8x8x128xf32> to vector<64x128xf32>
    %96 = arith.truncf %95 : vector<64x128xf32> to vector<64x128xbf16>
    %c0_135 = arith.constant 0 : index
    %c0_136 = arith.constant 0 : index
    %97 = vector.load %arg8[%c0_135, %c0_136] : memref<128x128xbf16, #tpu.memory_space<vmem>>, vector<128x128xbf16>
    %cst_137 = arith.constant dense<0.000000e+00> : vector<64x128xf32>
    %98 = tpu.matmul %96, %97, %cst_137 {dimension_numbers = #tpu.dot_dimension_numbers<[1], [0], [0], [1], [0, 0, 1, 1], [], []>} : vector<64x128xbf16>, vector<128x128xbf16>, vector<64x128xf32> -> vector<64x128xf32>
    %99 = arith.addf %94, %98 : vector<64x128xf32>
    %c0_138 = arith.constant 0 : index
    %c0_139 = arith.constant 0 : index
    %100 = vector.load %arg11[%c0_138, %c0_139] : memref<64x128xf32, #tpu.memory_space<vmem>>, vector<64x128xf32>
    tpu.vector_store %arg11[%c0_138, %c0_139], %99 {strides = array<i32>} : memref<64x128xf32, #tpu.memory_space<vmem>>, vector<64x128xf32>,
    %c0_140 = arith.constant 0 : index
    %c0_141 = arith.constant 0 : index
    %101 = vector.load %arg11[%c0_140, %c0_141] : memref<64x128xf32, #tpu.memory_space<vmem>>, vector<64x128xf32>
    %c0_142 = arith.constant 0 : index
    %c0_143 = arith.constant 0 : index
    %102 = vector.load %arg3[%c0_142, %c0_143] : memref<1x128xf32, #tpu.memory_space<vmem>>, vector<1x128xf32>
    %103 = vector.broadcast %102 : vector<1x128xf32> to vector<64x128xf32>
    %104 = arith.mulf %101, %103 : vector<64x128xf32>
    %c0_144 = arith.constant 0 : index
    %c0_145 = arith.constant 0 : index
    %105 = vector.load %arg4[%c0_144, %c0_145] : memref<1x128xf32, #tpu.memory_space<vmem>>, vector<1x128xf32>
    %106 = vector.broadcast %105 : vector<1x128xf32> to vector<64x128xf32>
    %107 = arith.addf %104, %106 : vector<64x128xf32>
    %cst_146 = arith.constant 0.000000e+00 : f32
    %108 = vector.broadcast %cst_146 : f32 to vector<64x128xf32>
    %109 = arith.maximumf %107, %108 : vector<64x128xf32>
    %110 = vector.shape_cast %109 : vector<64x128xf32> to vector<8x8x128xf32>
    %c0_147 = arith.constant 0 : index
    %c0_148 = arith.constant 0 : index
    %c0_149 = arith.constant 0 : index
    %c0_150 = arith.constant 0 : index
    %111 = vector.load %arg9[%c0_147, %c0_148, %c0_149, %c0_150] : memref<1x8x8x128xf32, #tpu.memory_space<vmem>>, vector<1x8x8x128xf32>
    %112 = vector.shape_cast %111 : vector<1x8x8x128xf32> to vector<8x8x128xf32>
    %113 = vector.shape_cast %110 : vector<8x8x128xf32> to vector<1x8x8x128xf32>
    tpu.vector_store %arg9[%c0_147, %c0_148, %c0_149, %c0_150], %113 {strides = array<i32>} : memref<1x8x8x128xf32, #tpu.memory_space<vmem>>, vector<1x8x8x128xf32>,
    return
  }
  func.func @transform_0(%arg0: i32) -> (i32, i32, i32, i32) {
    %c0_i32 = arith.constant 0 : i32
    %c0_i32_0 = arith.constant 0 : i32
    %c0_i32_1 = arith.constant 0 : i32
    %c0_i32_2 = arith.constant 0 : i32
    return %arg0, %c0_i32, %c0_i32_0, %c0_i32_1 : i32, i32, i32, i32
  }
  func.func @transform_1(%arg0: i32) -> (i32, i32, i32, i32) {
    %c0_i32 = arith.constant 0 : i32
    %c0_i32_0 = arith.constant 0 : i32
    %c0_i32_1 = arith.constant 0 : i32
    %c0_i32_2 = arith.constant 0 : i32
    %c0_i32_3 = arith.constant 0 : i32
    return %c0_i32, %c0_i32_0, %c0_i32_1, %c0_i32_2 : i32, i32, i32, i32
  }
  func.func @transform_2(%arg0: i32) -> (i32, i32) {
    %c0_i32 = arith.constant 0 : i32
    %c0_i32_0 = arith.constant 0 : i32
    %c0_i32_1 = arith.constant 0 : i32
    return %c0_i32, %c0_i32_0 : i32, i32
  }
  func.func @transform_3(%arg0: i32) -> (i32, i32) {
    %c0_i32 = arith.constant 0 : i32
    %c0_i32_0 = arith.constant 0 : i32
    %c0_i32_1 = arith.constant 0 : i32
    return %c0_i32, %c0_i32_0 : i32, i32
  }
  func.func @transform_4(%arg0: i32) -> (i32, i32, i32, i32) {
    %c0_i32 = arith.constant 0 : i32
    %c0_i32_0 = arith.constant 0 : i32
    %c0_i32_1 = arith.constant 0 : i32
    %c0_i32_2 = arith.constant 0 : i32
    return %arg0, %c0_i32, %c0_i32_0, %c0_i32_1 : i32, i32, i32, i32
  }
  func.func @transform_5(%arg0: i32) -> (i32, i32) {
    %c0_i32 = arith.constant 0 : i32
    %c0_i32_0 = arith.constant 0 : i32
    %c0_i32_1 = arith.constant 0 : i32
    return %c0_i32, %c0_i32_0 : i32, i32
  }
  func.func @transform_6(%arg0: i32) -> (i32, i32) {
    %c0_i32 = arith.constant 0 : i32
    %c0_i32_0 = arith.constant 0 : i32
    %c0_i32_1 = arith.constant 0 : i32
    return %c0_i32, %c0_i32_0 : i32, i32
  }
  func.func @transform_7(%arg0: i32) -> (i32, i32) {
    %c0_i32 = arith.constant 0 : i32
    %c0_i32_0 = arith.constant 0 : i32
    %c0_i32_1 = arith.constant 0 : i32
    return %c0_i32, %c0_i32_0 : i32, i32
  }
  func.func @transform_8(%arg0: i32) -> (i32, i32, i32, i32) {
    %c0_i32 = arith.constant 0 : i32
    %c0_i32_0 = arith.constant 0 : i32
    %c0_i32_1 = arith.constant 0 : i32
    %c0_i32_2 = arith.constant 0 : i32
    return %arg0, %c0_i32, %c0_i32_0, %c0_i32_1 : i32, i32, i32, i32
  }
}

</mosaic_0001>

<llo_original>
// kernel: preact_block_nhwc.3
$region0: #{preact_block_nhwc.3}
  #allocation0 [shape = 'u32[]', space=smem, size = 0x4, offset = 0x4, fixed_abs, tag = 'smem constant byte address 0x4 - core index']
  #allocation1 [shape = 'u32[144,128]{1,0:T(1,128)}', space=vmem, size = 0x12000, scoped, tag = 'internal scratch']
  #allocation2 [shape = 'bf16[10,10,128]{2,1,0:T(8,128)(2,1)}', space=vmem, size = 0xa000, scoped, tag = 'scratch operand']
  #allocation3 [shape = 'f32[64,128]{1,0:T(8,128)}', space=vmem, size = 0x8000, scoped, tag = 'scratch operand']
  %s0 = inlined_call_operand.vmem [shape: bf16[2,8,8,128], index: 0, kind: input, shape index: {}]
  %s1 = inlined_call_operand.vmem [shape: bf16[3,3,128,128], index: 1, kind: input, shape index: {}]
  %s2 = inlined_call_operand.vmem [shape: f32[1,128], index: 2, kind: input, shape index: {}]
  %s3 = inlined_call_operand.vmem [shape: f32[1,128], index: 3, kind: input, shape index: {}]
  %s4 = inlined_call_operand.vmem [shape: bf16[2,8,8,128], index: 4, kind: input, shape index: {}]
  %s5 = inlined_call_operand.vmem [shape: f32[1,128], index: 5, kind: input, shape index: {}]
  %s6 = inlined_call_operand.vmem [shape: f32[1,128], index: 6, kind: input, shape index: {}]
  %s7 = inlined_call_operand.vmem [shape: bf16[128,128], index: 7, kind: input, shape index: {}]
  %s8 = inlined_call_operand.hbm [shape: f32[2,8,8,128], index: 8, kind: output, shape index: {}]
  %s9 = sld [smem:[#allocation0]]
  $region65: #{preact_block_nhwc.3} parent=0
    _
  %s11 = ssub.s32 1, %s9
  %s12 = scalar_select 0, %s11, %s9
  $region1: #{preact_block_nhwc.3} parent=0
    #allocation4 [shape = 'u8[65536]{0}', space=vmem, size = 0x10000, scoped, tag = 'output window, operand 0']
    #allocation5 [shape = 's32[2]{0}', space=sflag, size = 0x8, scoped, tag = 'scoped memory for preact_block_nhwc.3']
    %13 = vsyncpa [#allocation5], 0
    %s14 = scalar_lea.sflag [#allocation5], 1
    %15 = vsyncpa %s14, 0
    loop: start=0, step=1, limit=4
    $region2: #{preact_block_nhwc.3} parent=1 // loop_pre_header
      _
    $region3: #{preact_block_nhwc.3} parent=1 // loop_header
      %s17 = sphi 0, %s21
      %p18 = scmp.ge.s32.totalorder %s17, 4
      %s27 = sphi 0, %s29
      %s30 = sphi 0, %s27
      %s31 = sphi 0, %s30
      %s47 = sphi 0, %s31
      %s51 = sphi 0, %s51
      %s53 = sphi 0, %s51
      %s54 = sphi 0, %s53
      %s68 = sphi 0, %s54
      %s72 = sphi 0, %s72
      %s74 = sphi 0, %s72
      %s75 = sphi 0, %s74
      %s89 = sphi 0, %s75
      %s93 = sphi 0, %s93
      %s95 = sphi 0, %s93
      %s96 = sphi 0, %s95
      %s110 = sphi 0, %s96
      %s116 = sphi 0, %s118
      %s119 = sphi 0, %s116
      %s120 = sphi 0, %s119
      %s136 = sphi 0, %s120
      %s140 = sphi 0, %s140
      %s142 = sphi 0, %s140
      %s143 = sphi 0, %s142
      %s157 = sphi 0, %s143
      %s161 = sphi 0, %s161
      %s163 = sphi 0, %s161
      %s164 = sphi 0, %s163
      %s178 = sphi 0, %s164
      %s182 = sphi 0, %s182
      %s184 = sphi 0, %s182
      %s185 = sphi 0, %s184
      %s199 = sphi 0, %s185
      %s205 = sphi 0, %s207
      %s208 = sphi 0, %s205
      %s209 = sphi 0, %s208
      %s225 = sphi 0, %s209
    $region4: #{preact_block_nhwc.3} parent=1 // loop_header_branch
      %20 = sbr.rel (%p18) target = $region8
    $region5: #{preact_block_nhwc.3} parent=1 // loop_body
      %s22 = ssub.s32 %s17, 1
      %s23 = ssub.s32 %s17, 2
      %s24 = sadd.s32 %s17, 1
      %s25 = ssub.s32 %s17, %s24
      %p26 = scmp.eq.s32.totalorder %s25, 0
      %s28 = sadd.s32 %s27, 1
      %s29 = scalar_select %p26, %s27, %s28
      %p32 = pneg %p26
      %p33 = scmp.eq.s32.totalorder %s17, 1
      %p34 = por %p32, %p33
      %p35 = scmp.ne.s32.totalorder %s27, %s30
      %p36 = scmp.eq.s32.totalorder %s17, 0
      %p37 = por %p35, %p36
      %p38 = scmp.ne.s32.totalorder %s27, %s30
      %p39 = scmp.eq.s32.totalorder %s22, 1
      %p40 = por %p38, %p39
      %p41 = scmp.ne.s32.totalorder %s30, %s31
      %p42 = scmp.eq.s32.totalorder %s22, 0
      %p43 = por %p41, %p42
      %p44 = scmp.ne.s32.totalorder %s30, %s31
      %p45 = scmp.eq.s32.totalorder %s23, 1
      %p46 = por %p44, %p45
      %p48 = scmp.ne.s32.totalorder %s31, %s47
      %p49 = scmp.eq.s32.totalorder %s23, 0
      %p50 = por %p48, %p49
      %s52 = sadd.s32 %s51, 1
      %p55 = scmp.eq.s32.totalorder %s17, 1
      %p56 = scmp.ne.s32.totalorder %s51, %s53
      %p57 = scmp.eq.s32.totalorder %s17, 0
      %p58 = por %p56, %p57
      %p59 = scmp.ne.s32.totalorder %s51, %s53
      %p60 = scmp.eq.s32.totalorder %s22, 1
      %p61 = por %p59, %p60
      %p62 = scmp.ne.s32.totalorder %s53, %s54
      %p63 = scmp.eq.s32.totalorder %s22, 0
      %p64 = por %p62, %p63
      %p65 = scmp.ne.s32.totalorder %s53, %s54
      %p66 = scmp.eq.s32.totalorder %s23, 1
      %p67 = por %p65, %p66
      %p69 = scmp.ne.s32.totalorder %s54, %s68
      %p70 = scmp.eq.s32.totalorder %s23, 0
      %p71 = por %p69, %p70
      %s73 = sadd.s32 %s72, 1
      %p76 = scmp.eq.s32.totalorder %s17, 1
      %p77 = scmp.ne.s32.totalorder %s72, %s74
      %p78 = scmp.eq.s32.totalorder %s17, 0
      %p79 = por %p77, %p78
      %p80 = scmp.ne.s32.totalorder %s72, %s74
      %p81 = scmp.eq.s32.totalorder %s22, 1
      %p82 = por %p80, %p81
      %p83 = scmp.ne.s32.totalorder %s74, %s75
      %p84 = scmp.eq.s32.totalorder %s22, 0
      %p85 = por %p83, %p84
      %p86 = scmp.ne.s32.totalorder %s74, %s75
      %p87 = scmp.eq.s32.totalorder %s23, 1
      %p88 = por %p86, %p87
      %p90 = scmp.ne.s32.totalorder %s75, %s89
      %p91 = scmp.eq.s32.totalorder %s23, 0
      %p92 = por %p90, %p91
      %s94 = sadd.s32 %s93, 1
      %p97 = scmp.eq.s32.totalorder %s17, 1
      %p98 = scmp.ne.s32.totalorder %s93, %s95
      %p99 = scmp.eq.s32.totalorder %s17, 0
      %p100 = por %p98, %p99
      %p101 = scmp.ne.s32.totalorder %s93, %s95
      %p102 = scmp.eq.s32.totalorder %s22, 1
      %p103 = por %p101, %p102
      %p104 = scmp.ne.s32.totalorder %s95, %s96
      %p105 = scmp.eq.s32.totalorder %s22, 0
      %p106 = por %p104, %p105
      %p107 = scmp.ne.s32.totalorder %s95, %s96
      %p108 = scmp.eq.s32.totalorder %s23, 1
      %p109 = por %p107, %p108
      %p111 = scmp.ne.s32.totalorder %s96, %s110
      %p112 = scmp.eq.s32.totalorder %s23, 0
      %p113 = por %p111, %p112
      %s114 = ssub.s32 %s17, %s24
      %p115 = scmp.eq.s32.totalorder %s114, 0
      %s117 = sadd.s32 %s116, 1
      %s118 = scalar_select %p115, %s116, %s117
      %p121 = pneg %p115
      %p122 = scmp.eq.s32.totalorder %s17, 1
      %p123 = por %p121, %p122
      %p124 = scmp.ne.s32.totalorder %s116, %s119
      %p125 = scmp.eq.s32.totalorder %s17, 0
      %p126 = por %p124, %p125
      %p127 = scmp.ne.s32.totalorder %s116, %s119
      %p128 = scmp.eq.s32.totalorder %s22, 1
      %p129 = por %p127, %p128
      %p130 = scmp.ne.s32.totalorder %s119, %s120
      %p131 = scmp.eq.s32.totalorder %s22, 0
      %p132 = por %p130, %p131
      %p133 = scmp.ne.s32.totalorder %s119, %s120
      %p134 = scmp.eq.s32.totalorder %s23, 1
      %p135 = por %p133, %p134
      %p137 = scmp.ne.s32.totalorder %s120, %s136
      %p138 = scmp.eq.s32.totalorder %s23, 0
      %p139 = por %p137, %p138
      %s141 = sadd.s32 %s140, 1
      %p144 = scmp.eq.s32.totalorder %s17, 1
      %p145 = scmp.ne.s32.totalorder %s140, %s142
      %p146 = scmp.eq.s32.totalorder %s17, 0
      %p147 = por %p145, %p146
      %p148 = scmp.ne.s32.totalorder %s140, %s142
      %p149 = scmp.eq.s32.totalorder %s22, 1
      %p150 = por %p148, %p149
      %p151 = scmp.ne.s32.totalorder %s142, %s143
      %p152 = scmp.eq.s32.totalorder %s22, 0
      %p153 = por %p151, %p152
      %p154 = scmp.ne.s32.totalorder %s142, %s143
      %p155 = scmp.eq.s32.totalorder %s23, 1
      %p156 = por %p154, %p155
      %p158 = scmp.ne.s32.totalorder %s143, %s157
      %p159 = scmp.eq.s32.totalorder %s23, 0
      %p160 = por %p158, %p159
      %s162 = sadd.s32 %s161, 1
      %p165 = scmp.eq.s32.totalorder %s17, 1
      %p166 = scmp.ne.s32.totalorder %s161, %s163
      %p167 = scmp.eq.s32.totalorder %s17, 0
      %p168 = por %p166, %p167
      %p169 = scmp.ne.s32.totalorder %s161, %s163
      %p170 = scmp.eq.s32.totalorder %s22, 1
      %p171 = por %p169, %p170
      %p172 = scmp.ne.s32.totalorder %s163, %s164
      %p173 = scmp.eq.s32.totalorder %s22, 0
      %p174 = por %p172, %p173
      %p175 = scmp.ne.s32.totalorder %s163, %s164
      %p176 = scmp.eq.s32.totalorder %s23, 1
      %p177 = por %p175, %p176
      %p179 = scmp.ne.s32.totalorder %s164, %s178
      %p180 = scmp.eq.s32.totalorder %s23, 0
      %p181 = por %p179, %p180
      %s183 = sadd.s32 %s182, 1
      %p186 = scmp.eq.s32.totalorder %s17, 1
      %p187 = scmp.ne.s32.totalorder %s182, %s184
      %p188 = scmp.eq.s32.totalorder %s17, 0
      %p189 = por %p187, %p188
      %p190 = scmp.ne.s32.totalorder %s182, %s184
      %p191 = scmp.eq.s32.totalorder %s22, 1
      %p192 = por %p190, %p191
      %p193 = scmp.ne.s32.totalorder %s184, %s185
      %p194 = scmp.eq.s32.totalorder %s22, 0
      %p195 = por %p193, %p194
      %p196 = scmp.ne.s32.totalorder %s184, %s185
      %p197 = scmp.eq.s32.totalorder %s23, 1
      %p198 = por %p196, %p197
      %p200 = scmp.ne.s32.totalorder %s185, %s199
      %p201 = scmp.eq.s32.totalorder %s23, 0
      %p202 = por %p200, %p201
      %s203 = ssub.s32 %s17, %s24
      %p204 = scmp.eq.s32.totalorder %s203, 0
      %s206 = sadd.s32 %s205, 1
      %s207 = scalar_select %p204, %s205, %s206
      %p210 = pneg %p204
      %p211 = scmp.eq.s32.totalorder %s17, 1
      %p212 = por %p210, %p211
      %p213 = scmp.ne.s32.totalorder %s205, %s208
      %p214 = scmp.eq.s32.totalorder %s17, 0
      %p215 = por %p213, %p214
      %p216 = scmp.ne.s32.totalorder %s205, %s208
      %p217 = scmp.eq.s32.totalorder %s22, 1
      %p218 = por %p216, %p217
      %p219 = scmp.ne.s32.totalorder %s208, %s209
      %p220 = scmp.eq.s32.totalorder %s22, 0
      %p221 = por %p219, %p220
      %p222 = scmp.ne.s32.totalorder %s208, %s209
      %p223 = scmp.eq.s32.totalorder %s23, 1
      %p224 = por %p222, %p223
      %p226 = scmp.ne.s32.totalorder %s209, %s225
      %p227 = scmp.eq.s32.totalorder %s23, 0
      %p228 = por %p226, %p227
      %p229 = scmp.le.s32.totalorder 1, %s17
      %p230 = scmp.lt.s32.totalorder %s17, 3
      %p231 = pnand %p229, %p230
      %p232 = pneg %p231
      // Predicated region
      $region9: #{preact_block_nhwc.3} parent=5 // pred_check
        _
      $region10: #{preact_block_nhwc.3} parent=5 // pred_check_branch
        %234 = sbr.rel (%p231) target = $region12
      $region11: #{preact_block_nhwc.3} parent=5 // pred_region
        %s235 = ssub.s32 %s17, 1
        // Predicated region
        $region13: #{preact_block_nhwc.3} parent=11 // pred_check
          %p236 = pneg %p64
        $region14: #{preact_block_nhwc.3} parent=11 // pred_check_branch
          %238 = sbr.rel (%p236) target = $region16
        $region15: #{preact_block_nhwc.3} parent=11 // pred_region
          _
        $region16: #{preact_block_nhwc.3} parent=11 // pred_fallthru
          _
        // Predicated region
        $region17: #{preact_block_nhwc.3} parent=11 // pred_check
          %p239 = pneg %p85
        $region18: #{preact_block_nhwc.3} parent=11 // pred_check_branch
          %241 = sbr.rel (%p239) target = $region20
        $region19: #{preact_block_nhwc.3} parent=11 // pred_region
          _
        $region20: #{preact_block_nhwc.3} parent=11 // pred_fallthru
          _
        // Predicated region
        $region21: #{preact_block_nhwc.3} parent=11 // pred_check
          %p242 = pneg %p106
        $region22: #{preact_block_nhwc.3} parent=11 // pred_check_branch
          %244 = sbr.rel (%p242) target = $region24
        $region23: #{preact_block_nhwc.3} parent=11 // pred_region
          _
        $region24: #{preact_block_nhwc.3} parent=11 // pred_fallthru
          _
        // Predicated region
        $region25: #{preact_block_nhwc.3} parent=11 // pred_check
          %p245 = pneg %p153
        $region26: #{preact_block_nhwc.3} parent=11 // pred_check_branch
          %247 = sbr.rel (%p245) target = $region28
        $region27: #{preact_block_nhwc.3} parent=11 // pred_region
          _
        $region28: #{preact_block_nhwc.3} parent=11 // pred_fallthru
          _
        // Predicated region
        $region29: #{preact_block_nhwc.3} parent=11 // pred_check
          %p248 = pneg %p174
        $region30: #{preact_block_nhwc.3} parent=11 // pred_check_branch
          %250 = sbr.rel (%p248) target = $region32
        $region31: #{preact_block_nhwc.3} parent=11 // pred_region
          _
        $region32: #{preact_block_nhwc.3} parent=11 // pred_fallthru
          _
        // Predicated region
        $region33: #{preact_block_nhwc.3} parent=11 // pred_check
          %p251 = pneg %p195
        $region34: #{preact_block_nhwc.3} parent=11 // pred_check_branch
          %253 = sbr.rel (%p251) target = $region36
        $region35: #{preact_block_nhwc.3} parent=11 // pred_region
          _
        $region36: #{preact_block_nhwc.3} parent=11 // pred_fallthru
          _
      $region12: #{preact_block_nhwc.3} parent=5 // pred_fallthru
        _
      %p254 = scmp.lt.s32.totalorder %s17, 2
      // Predicated region
      $region37: #{preact_block_nhwc.3} parent=5 // pred_check
        %p255 = pneg %p254
      $region38: #{preact_block_nhwc.3} parent=5 // pred_check_branch
        %257 = sbr.rel (%p255) target = $region40
      $region39: #{preact_block_nhwc.3} parent=5 // pred_region
        // Predicated region
        $region41: #{preact_block_nhwc.3} parent=39 // pred_check
          %p258 = pneg %p37
        $region42: #{preact_block_nhwc.3} parent=39 // pred_check_branch
          %260 = sbr.rel (%p258) target = $region44
        $region43: #{preact_block_nhwc.3} parent=39 // pred_region
          %p261 = scmp.lt.s32.totalorder %s17, 1
          %s262 = scalar_select %p261, %s17, 1
          %s263 = smul.addr %s262, 8
          %s264 = smul.addr %s263, 4
          %s265 = scalar_lea.vmem %s0, %s264
        $region44: #{preact_block_nhwc.3} parent=39 // pred_fallthru
          _
        // Predicated region
        $region45: #{preact_block_nhwc.3} parent=39 // pred_check
          %p266 = pneg %p126
        $region46: #{preact_block_nhwc.3} parent=39 // pred_check_branch
          %268 = sbr.rel (%p266) target = $region48
        $region47: #{preact_block_nhwc.3} parent=39 // pred_region
          %p269 = scmp.lt.s32.totalorder %s17, 1
          %s270 = scalar_select %p269, %s17, 1
          %s271 = smul.addr %s270, 8
          %s272 = smul.addr %s271, 4
          %s273 = scalar_lea.vmem %s4, %s272
        $region48: #{preact_block_nhwc.3} parent=39 // pred_fallthru
          _
      $region40: #{preact_block_nhwc.3} parent=5 // pred_fallthru
        _
      %p274 = scmp.le.s32.totalorder 1, %s17
      %p275 = scmp.lt.s32.totalorder %s17, 3
      %p276 = pnand %p274, %p275
      %p277 = pneg %p276
      // Predicated region
      $region49: #{preact_block_nhwc.3} parent=5 // pred_check
        _
      $region50: #{preact_block_nhwc.3} parent=5 // pred_check_branch
        %279 = sbr.rel (%p276) target = $region52
      $region51: #{preact_block_nhwc.3} parent=5 // pred_region
        %s280 = ssub.s32 %s17, 1
        %p281 = scmp.lt.s32.totalorder %s22, 1
        %s282 = scalar_select %p281, %s22, 1
        %s283 = smul.addr %s282, 8
        %s284 = smul.addr %s283, 4
        %s285 = scalar_lea.vmem %s0, %s284
        %p286 = pneg %p43
        %p287 = pneg %p40
        %p288 = pneg %p64
        %p289 = pneg %p61
        %p290 = pneg %p85
        %p291 = pneg %p82
        %p292 = pneg %p106
        %p293 = pneg %p103
        %p294 = scmp.lt.s32.totalorder %s22, 1
        %s295 = scalar_select %p294, %s22, 1
        %s296 = smul.addr %s295, 8
        %s297 = smul.addr %s296, 4
        %s298 = scalar_lea.vmem %s4, %s297
        %p299 = pneg %p132
        %p300 = pneg %p129
        %p301 = pneg %p153
        %p302 = pneg %p150
        %p303 = pneg %p174
        %p304 = pneg %p171
        %p305 = pneg %p195
        %p306 = pneg %p192
        %p307 = pneg %p221
        %p308 = pneg %p218
        %s309 = sand.u32 %s208, 1
        %s310 = scalar_lea.sflag [#allocation5], %s309
        %s311 = sand.u32 %s208, 1
        %s312 = smul.addr %s311, 64
        %s313 = scalar_lea.vmem [#allocation4], %s312
        %p314 = scmp.lt.s32.totalorder %s22, 1
        %s315 = scalar_select %p314, %s22, 1
        %s316 = smul.addr %s315, 8
        %s317 = smul.addr %s316, 4
        %s318 = scalar_lea.vmem %s0, %s317
        %p319 = scmp.lt.s32.totalorder %s22, 1
        %s320 = scalar_select %p319, %s22, 1
        %s321 = smul.addr %s320, 8
        %s322 = smul.addr %s321, 4
        %s323 = scalar_lea.vmem %s4, %s322
        %325 = vst [vmem:[#allocation2] sm:$0xf] 0
        %326 = vst [vmem:[#allocation2 + $0x4] sm:$0x1] 0
        %vm327 = vcmask 1040384
        %vm328 = vsmask.f32 256
        %vm329 = vmand %vm327, %vm328
        %v330 = vld [vmem:[#allocation2] sm:$0x1]
        %v331 = vsel %vm329, 0, %v330
        %332 = vst [vmem:[#allocation2] sm:$0x1] %v331
        %v333 = vld [vmem:[#allocation2 + $0x8] sm:$0x1]
        %v334 = vsel %vm329, 0, %v333
        %335 = vst [vmem:[#allocation2 + $0x8] sm:$0x1] %v334
        %v336 = vld [vmem:[#allocation2 + $0x10] sm:$0x1]
        %v337 = vsel %vm329, 0, %v336
        %338 = vst [vmem:[#allocation2 + $0x10] sm:$0x1] %v337
        %v339 = vld [vmem:[#allocation2 + $0x18] sm:$0x1]
        %v340 = vsel %vm329, 0, %v339
        %341 = vst [vmem:[#allocation2 + $0x18] sm:$0x1] %v340
        %v342 = vld [vmem:[#allocation2 + $0x20] sm:$0x1]
        %v343 = vsel %vm329, 0, %v342
        %344 = vst [vmem:[#allocation2 + $0x20] sm:$0x1] %v343
        %v345 = vld [vmem:[#allocation2 + $0x28] sm:$0x1]
        %v346 = vsel %vm329, 0, %v345
        %347 = vst [vmem:[#allocation2 + $0x28] sm:$0x1] %v346
        %v348 = vld [vmem:[#allocation2 + $0x30] sm:$0x1]
        %v349 = vsel %vm329, 0, %v348
        %350 = vst [vmem:[#allocation2 + $0x30] sm:$0x1] %v349
        %v351 = vld [vmem:[#allocation2 + $0x38] sm:$0x1]
        %v352 = vsel %vm329, 0, %v351
        %353 = vst [vmem:[#allocation2 + $0x38] sm:$0x1] %v352
        %v354 = vld [vmem:[#allocation2 + $0x40] sm:$0x1]
        %v355 = vsel %vm329, 0, %v354
        %356 = vst [vmem:[#allocation2 + $0x40] sm:$0x1] %v355
        %v357 = vld [vmem:[#allocation2 + $0x48] sm:$0x1]
        %v358 = vsel %vm329, 0, %v357
        %359 = vst [vmem:[#allocation2 + $0x48] sm:$0x1] %v358
        %s360 = scalar_lea.vmem [#allocation2], 72
        %361 = vst [vmem:[%s360] sm:$0xf] 0
        %362 = vst [vmem:[%s360 + $0x4] sm:$0x1] 0
        %vm363 = vsmask.f32 7938
        %vm364 = vmand %vm327, %vm363
        %v365 = vld [vmem:[#allocation2 + $0x4] sm:$0x1]
        %v366 = vsel %vm364, 0, %v365
        %367 = vst [vmem:[#allocation2 + $0x4] sm:$0x1] %v366
        %v368 = vld [vmem:[#allocation2 + $0xc] sm:$0x1]
        %v369 = vsel %vm364, 0, %v368
        %370 = vst [vmem:[#allocation2 + $0xc] sm:$0x1] %v369
        %v371 = vld [vmem:[#allocation2 + $0x14] sm:$0x1]
        %v372 = vsel %vm364, 0, %v371
        %373 = vst [vmem:[#allocation2 + $0x14] sm:$0x1] %v372
        %v374 = vld [vmem:[#allocation2 + $0x1c] sm:$0x1]
        %v375 = vsel %vm364, 0, %v374
        %376 = vst [vmem:[#allocation2 + $0x1c] sm:$0x1] %v375
        %v377 = vld [vmem:[#allocation2 + $0x24] sm:$0x1]
        %v378 = vsel %vm364, 0, %v377
        %379 = vst [vmem:[#allocation2 + $0x24] sm:$0x1] %v378
        %v380 = vld [vmem:[#allocation2 + $0x2c] sm:$0x1]
        %v381 = vsel %vm364, 0, %v380
        %382 = vst [vmem:[#allocation2 + $0x2c] sm:$0x1] %v381
        %v383 = vld [vmem:[#allocation2 + $0x34] sm:$0x1]
        %v384 = vsel %vm364, 0, %v383
        %385 = vst [vmem:[#allocation2 + $0x34] sm:$0x1] %v384
        %v386 = vld [vmem:[#allocation2 + $0x3c] sm:$0x1]
        %v387 = vsel %vm364, 0, %v386
        %388 = vst [vmem:[#allocation2 + $0x3c] sm:$0x1] %v387
        %v389 = vld [vmem:[#allocation2 + $0x44] sm:$0x1]
        %v390 = vsel %vm364, 0, %v389
        %391 = vst [vmem:[#allocation2 + $0x44] sm:$0x1] %v390
        %v392 = vld [vmem:[#allocation2 + $0x4c] sm:$0x1]
        %v393 = vsel %vm364, 0, %v392
        %394 = vst [vmem:[#allocation2 + $0x4c] sm:$0x1] %v393
        %v395 = vld [vmem:[%s318] sm:$0xf]
        %v396 = vld [vmem:[%s318 + $0x4] sm:$0xf]
        %v397 = vld [vmem:[%s318 + $0x8] sm:$0xf]
        %v398 = vld [vmem:[%s318 + $0xc] sm:$0xf]
        %v399 = vld [vmem:[%s318 + $0x10] sm:$0xf]
        %v400 = vld [vmem:[%s318 + $0x14] sm:$0xf]
        %v401 = vld [vmem:[%s318 + $0x18] sm:$0xf]
        %v402 = vld [vmem:[%s318 + $0x1c] sm:$0xf]
        %v404 = vshrl.u32 %v395, 16
        %v406 = vrot.slane %v404, 7
        %v407 = vshll.u32 %v395, 16
        %v409 = vor.u32 %v406, %v407
        %v410 = vrot.slane %v406, 4
        %v412 = vshrl.u32 %v396, 16
        %v414 = vrot.slane %v412, 7
        %v415 = vshll.u32 %v396, 16
        %v417 = vor.u32 %v414, %v415
        %v418 = vrot.slane %v414, 4
        %v420 = vshrl.u32 %v397, 16
        %v422 = vrot.slane %v420, 7
        %v423 = vshll.u32 %v397, 16
        %v425 = vor.u32 %v422, %v423
        %v426 = vrot.slane %v422, 4
        %v428 = vshrl.u32 %v398, 16
        %v430 = vrot.slane %v428, 7
        %v431 = vshll.u32 %v398, 16
        %v433 = vor.u32 %v430, %v431
        %v434 = vrot.slane %v430, 4
        %v436 = vshrl.u32 %v399, 16
        %v438 = vrot.slane %v436, 7
        %v439 = vshll.u32 %v399, 16
        %v441 = vor.u32 %v438, %v439
        %v442 = vrot.slane %v438, 4
        %v444 = vshrl.u32 %v400, 16
        %v446 = vrot.slane %v444, 7
        %v447 = vshll.u32 %v400, 16
        %v449 = vor.u32 %v446, %v447
        %v450 = vrot.slane %v446, 4
        %v452 = vshrl.u32 %v401, 16
        %v454 = vrot.slane %v452, 7
        %v455 = vshll.u32 %v401, 16
        %v457 = vor.u32 %v454, %v455
        %v458 = vrot.slane %v454, 4
        %v460 = vshrl.u32 %v402, 16
        %v462 = vrot.slane %v460, 7
        %v463 = vshll.u32 %v402, 16
        %v465 = vor.u32 %v462, %v463
        %v466 = vrot.slane %v462, 4
        %s483 = scalar_lea.vmem [#allocation2], 8
        %vm484 = vcmask 1043456
        %vm485 = vmand %vm484, %vm363
        %v486 = vld [vmem:[%s483] sm:$0xf]
        %v487 = vsel %vm485, %v409, %v486
        %488 = vst [vmem:[%s483] sm:$0xf] %v487
        %v489 = vld [vmem:[%s483 + $0x4] sm:$0x1]
        %v490 = vsel %vm329, %v410, %v489
        %491 = vst [vmem:[%s483 + $0x4] sm:$0x1] %v490
        %v492 = vld [vmem:[%s483 + $0x8] sm:$0xf]
        %v493 = vsel %vm485, %v417, %v492
        %494 = vst [vmem:[%s483 + $0x8] sm:$0xf] %v493
        %v495 = vld [vmem:[%s483 + $0xc] sm:$0x1]
        %v496 = vsel %vm329, %v418, %v495
        %497 = vst [vmem:[%s483 + $0xc] sm:$0x1] %v496
        %v498 = vld [vmem:[%s483 + $0x10] sm:$0xf]
        %v499 = vsel %vm485, %v425, %v498
        %500 = vst [vmem:[%s483 + $0x10] sm:$0xf] %v499
        %v501 = vld [vmem:[%s483 + $0x14] sm:$0x1]
        %v502 = vsel %vm329, %v426, %v501
        %503 = vst [vmem:[%s483 + $0x14] sm:$0x1] %v502
        %v504 = vld [vmem:[%s483 + $0x18] sm:$0xf]
        %v505 = vsel %vm485, %v433, %v504
        %506 = vst [vmem:[%s483 + $0x18] sm:$0xf] %v505
        %v507 = vld [vmem:[%s483 + $0x1c] sm:$0x1]
        %v508 = vsel %vm329, %v434, %v507
        %509 = vst [vmem:[%s483 + $0x1c] sm:$0x1] %v508
        %v510 = vld [vmem:[%s483 + $0x20] sm:$0xf]
        %v511 = vsel %vm485, %v441, %v510
        %512 = vst [vmem:[%s483 + $0x20] sm:$0xf] %v511
        %v513 = vld [vmem:[%s483 + $0x24] sm:$0x1]
        %v514 = vsel %vm329, %v442, %v513
        %515 = vst [vmem:[%s483 + $0x24] sm:$0x1] %v514
        %v516 = vld [vmem:[%s483 + $0x28] sm:$0xf]
        %v517 = vsel %vm485, %v449, %v516
        %518 = vst [vmem:[%s483 + $0x28] sm:$0xf] %v517
        %v519 = vld [vmem:[%s483 + $0x2c] sm:$0x1]
        %v520 = vsel %vm329, %v450, %v519
        %521 = vst [vmem:[%s483 + $0x2c] sm:$0x1] %v520
        %v522 = vld [vmem:[%s483 + $0x30] sm:$0xf]
        %v523 = vsel %vm485, %v457, %v522
        %524 = vst [vmem:[%s483 + $0x30] sm:$0xf] %v523
        %v525 = vld [vmem:[%s483 + $0x34] sm:$0x1]
        %v526 = vsel %vm329, %v458, %v525
        %527 = vst [vmem:[%s483 + $0x34] sm:$0x1] %v526
        %v528 = vld [vmem:[%s483 + $0x38] sm:$0xf]
        %v529 = vsel %vm485, %v465, %v528
        %530 = vst [vmem:[%s483 + $0x38] sm:$0xf] %v529
        %v531 = vld [vmem:[%s483 + $0x3c] sm:$0x1]
        %v532 = vsel %vm329, %v466, %v531
        %533 = vst [vmem:[%s483 + $0x3c] sm:$0x1] %v532
        %v534 = vld [vmem:[#allocation2] sm:$0xf]
        %v535 = vld [vmem:[#allocation2 + $0x8] sm:$0xf]
        %v536 = vld [vmem:[#allocation2 + $0x10] sm:$0xf]
        %v537 = vld [vmem:[#allocation2 + $0x18] sm:$0xf]
        %v538 = vld [vmem:[#allocation2 + $0x20] sm:$0xf]
        %v539 = vld [vmem:[#allocation2 + $0x28] sm:$0xf]
        %v540 = vld [vmem:[#allocation2 + $0x30] sm:$0xf]
        %v541 = vld [vmem:[#allocation2 + $0x38] sm:$0xf]
        %v542 = vld [vmem:[%s1] sm:$0xf]
        %v543 = vld [vmem:[%s1 + $0x4] sm:$0xf]
        %v544 = vld [vmem:[%s1 + $0x8] sm:$0xf]
        %v545 = vld [vmem:[%s1 + $0xc] sm:$0xf]
        %v546 = vld [vmem:[%s1 + $0x10] sm:$0xf]
        %v547 = vld [vmem:[%s1 + $0x14] sm:$0xf]
        %v548 = vld [vmem:[%s1 + $0x18] sm:$0xf]
        %v549 = vld [vmem:[%s1 + $0x1c] sm:$0xf]
        %v550 = vld [vmem:[%s1 + $0x20] sm:$0xf]
        %v551 = vld [vmem:[%s1 + $0x24] sm:$0xf]
        %v552 = vld [vmem:[%s1 + $0x28] sm:$0xf]
        %v553 = vld [vmem:[%s1 + $0x2c] sm:$0xf]
        %v554 = vld [vmem:[%s1 + $0x30] sm:$0xf]
        %v555 = vld [vmem:[%s1 + $0x34] sm:$0xf]
        %v556 = vld [vmem:[%s1 + $0x38] sm:$0xf]
        %v557 = vld [vmem:[%s1 + $0x3c] sm:$0xf]
        %v566 = vunpack.c.l.b16 %v534
        %v567 = vunpack.c.l.b16 %v535
        %v568 = vunpack.c.l.b16 %v536
        %v569 = vunpack.c.l.b16 %v537
        %v570 = vunpack.c.l.b16 %v538
        %v571 = vunpack.c.l.b16 %v539
        %v572 = vunpack.c.l.b16 %v540
        %v573 = vunpack.c.l.b16 %v541
        %v574 = vpack.c.b16 %v567, %v566
        %v575 = vpack.c.b16 %v569, %v568
        %v576 = vpack.c.b16 %v571, %v570
        %v577 = vpack.c.b16 %v573, %v572
        %v598 = vunpack.c.l.b16 %v542
        %v599 = vunpack.c.l.b16 %v543
        %v600 = vunpack.c.l.b16 %v544
        %v601 = vunpack.c.l.b16 %v545
        %v602 = vunpack.c.l.b16 %v546
        %v603 = vunpack.c.l.b16 %v547
        %v604 = vunpack.c.l.b16 %v548
        %v605 = vunpack.c.l.b16 %v549
        %v606 = vunpack.c.l.b16 %v550
        %v607 = vunpack.c.l.b16 %v551
        %v608 = vunpack.c.l.b16 %v552
        %v609 = vunpack.c.l.b16 %v553
        %v610 = vunpack.c.l.b16 %v554
        %v611 = vunpack.c.l.b16 %v555
        %v612 = vunpack.c.l.b16 %v556
        %v613 = vunpack.c.l.b16 %v557
        %v614 = vpack.c.b16 %v599, %v598
        %v615 = vpack.c.b16 %v601, %v600
        %v616 = vpack.c.b16 %v603, %v602
        %v617 = vpack.c.b16 %v605, %v604
        %v618 = vpack.c.b16 %v607, %v606
        %v619 = vpack.c.b16 %v609, %v608
        %v620 = vpack.c.b16 %v611, %v610
        %v621 = vpack.c.b16 %v613, %v612
        %630 = vmatprep.subr.bf16.mxu0 0
        %631 = vmatpush1.bf16.msra.mxu0 %v614
        %632 = vmatprep.subr.bf16.mxu0 0
        %633 = vmatpush1.bf16.msra.mxu0 %v615
        %634 = vmatprep.subr.bf16.mxu0 0
        %635 = vmatpush1.bf16.msra.mxu0 %v616
        %636 = vmatprep.subr.bf16.mxu0 0
        %637 = vmatpush1.bf16.msra.mxu0 %v617
        %638 = vmatprep.subr.bf16.mxu0 0
        %639 = vmatpush1.bf16.msra.mxu0 %v618
        %640 = vmatprep.subr.bf16.mxu0 0
        %641 = vmatpush1.bf16.msra.mxu0 %v619
        %642 = vmatprep.subr.bf16.mxu0 0
        %643 = vmatpush1.bf16.msra.mxu0 %v620
        %644 = vmatprep.subr.bf16.mxu0 0
        %645 = vmatpush1.bf16.msra.mxu0 %v621
        %646 = vmatprep.subr.bf16.mxu0 0
        %647 = vmatpush1.bf16.msra.mxu0 0
        %648 = vmatprep.subr.bf16.mxu0 0
        %649 = vmatpush1.bf16.msra.mxu0 0
        %650 = vmatprep.subr.bf16.mxu0 0
        %651 = vmatpush1.bf16.msra.mxu0 0
        %652 = vmatprep.subr.bf16.mxu0 0
        %653 = vmatpush1.bf16.msra.mxu0 0
        %654 = vmatprep.subr.bf16.mxu0 0
        %655 = vmatpush1.bf16.msra.mxu0 0
        %656 = vmatprep.subr.bf16.mxu0 0
        %657 = vmatpush1.bf16.msra.mxu0 0
        %658 = vmatprep.subr.bf16.mxu0 0
        %659 = vmatpush1.bf16.msra.mxu0 0
        %660 = vmatprep.subr.bf16.mxu0 0
        %661 = vmatpush1.bf16.msra.mxu0 0
        %662 = vmatprep.mubr.bf16.mxu0 0
        %663 = vmatmul.mubr.bf16.gmra.mrb[0].mxu0 %v574
        %v664 = vpop.f32.mrb[0].mxu0
        %v665 = vadd.f32 0.0, %v664
        %v666 = vpop.f32.mrb[0].mxu0
        %v667 = vpop.f32.mrb[0].mxu0
        %v668 = vadd.f32 0.0, %v667
        %v669 = vpop.f32.mrb[0].mxu0
        %670 = vmatprep.mubr.bf16.mxu0 0
        %671 = vmatmul.mubr.bf16.gmra.mrb[0].mxu0 %v575
        %v672 = vpop.f32.mrb[0].mxu0
        %v673 = vadd.f32 0.0, %v672
        %v674 = vpop.f32.mrb[0].mxu0
        %v675 = vpop.f32.mrb[0].mxu0
        %v676 = vadd.f32 0.0, %v675
        %v677 = vpop.f32.mrb[0].mxu0
        %678 = vmatprep.mubr.bf16.mxu0 0
        %679 = vmatmul.mubr.bf16.gmra.mrb[0].mxu0 %v576
        %v680 = vpop.f32.mrb[0].mxu0
        %v681 = vadd.f32 0.0, %v680
        %v682 = vpop.f32.mrb[0].mxu0
        %v683 = vpop.f32.mrb[0].mxu0
        %v684 = vadd.f32 0.0, %v683
        %v685 = vpop.f32.mrb[0].mxu0
        %686 = vmatprep.mubr.bf16.mxu0 0
        %687 = vmatmul.mubr.bf16.gmra.mrb[0].mxu0 %v577
        %v688 = vpop.f32.mrb[0].mxu0
        %v689 = vadd.f32 0.0, %v688
        %v690 = vpop.f32.mrb[0].mxu0
        %v691 = vpop.f32.mrb[0].mxu0
        %v692 = vadd.f32 0.0, %v691
        %v693 = vpop.f32.mrb[0].mxu0
        %694 = vdwg.mxu0
        %695 = vst [vmem:[#allocation3] sm:$0xff] %v665
        %696 = vst [vmem:[#allocation3 + $0x8] sm:$0xff] %v668
        %697 = vst [vmem:[#allocation3 + $0x10] sm:$0xff] %v673
        %698 = vst [vmem:[#allocation3 + $0x18] sm:$0xff] %v676
        %699 = vst [vmem:[#allocation3 + $0x20] sm:$0xff] %v681
        %700 = vst [vmem:[#allocation3 + $0x28] sm:$0xff] %v684
        %701 = vst [vmem:[#allocation3 + $0x30] sm:$0xff] %v689
        %702 = vst [vmem:[#allocation3 + $0x38] sm:$0xff] %v692
        %v703 = vld [vmem:[#allocation2] sm:$0xf]
        %v704 = vld [vmem:[#allocation2 + $0x4] sm:$0x1]
        %v705 = vld [vmem:[#allocation2 + $0x8] sm:$0xf]
        %v706 = vld [vmem:[#allocation2 + $0xc] sm:$0x1]
        %v707 = vld [vmem:[#allocation2 + $0x10] sm:$0xf]
        %v708 = vld [vmem:[#allocation2 + $0x14] sm:$0x1]
        %v709 = vld [vmem:[#allocation2 + $0x18] sm:$0xf]
        %v710 = vld [vmem:[#allocation2 + $0x1c] sm:$0x1]
        %v711 = vld [vmem:[#allocation2 + $0x20] sm:$0xf]
        %v712 = vld [vmem:[#allocation2 + $0x24] sm:$0x1]
        %v713 = vld [vmem:[#allocation2 + $0x28] sm:$0xf]
        %v714 = vld [vmem:[#allocation2 + $0x2c] sm:$0x1]
        %v715 = vld [vmem:[#allocation2 + $0x30] sm:$0xf]
        %v716 = vld [vmem:[#allocation2 + $0x34] sm:$0x1]
        %v717 = vld [vmem:[#allocation2 + $0x38] sm:$0xf]
        %v718 = vld [vmem:[#allocation2 + $0x3c] sm:$0x1]
        %vm719 = vsmask.f32 3328
        %vm720 = vsmask.f32 7440
        %vm721 = vmor %vm719, %vm720
        %v723 = vshrl.u32 %v703, 16
        %v725 = vrot.slane %v723, 4
        %v726 = vshll.u32 %v703, 16
        %v728 = vrot.slane %v726, 5
        %v729 = vor.u32 %v725, %v728
        %v730 = vrot.slane %v729, 4
        %v732 = vshll.u32 %v704, 16
        %v734 = vrot.slane %v732, 5
        %v735 = vsel %vm721, %v730, %v734
        %v737 = vshrl.u32 %v705, 16
        %v739 = vrot.slane %v737, 4
        %v740 = vshll.u32 %v705, 16
        %v742 = vrot.slane %v740, 5
        %v743 = vor.u32 %v739, %v742
        %v744 = vrot.slane %v743, 4
        %v746 = vshll.u32 %v706, 16
        %v748 = vrot.slane %v746, 5
        %v749 = vsel %vm721, %v744, %v748
        %v751 = vshrl.u32 %v707, 16
        %v753 = vrot.slane %v751, 4
        %v754 = vshll.u32 %v707, 16
        %v756 = vrot.slane %v754, 5
        %v757 = vor.u32 %v753, %v756
        %v758 = vrot.slane %v757, 4
        %v760 = vshll.u32 %v708, 16
        %v762 = vrot.slane %v760, 5
        %v763 = vsel %vm721, %v758, %v762
        %v765 = vshrl.u32 %v709, 16
        %v767 = vrot.slane %v765, 4
        %v768 = vshll.u32 %v709, 16
        %v770 = vrot.slane %v768, 5
        %v771 = vor.u32 %v767, %v770
        %v772 = vrot.slane %v771, 4
        %v774 = vshll.u32 %v710, 16
        %v776 = vrot.slane %v774, 5
        %v777 = vsel %vm721, %v772, %v776
        %v779 = vshrl.u32 %v711, 16
        %v781 = vrot.slane %v779, 4
        %v782 = vshll.u32 %v711, 16
        %v784 = vrot.slane %v782, 5
        %v785 = vor.u32 %v781, %v784
        %v786 = vrot.slane %v785, 4
        %v788 = vshll.u32 %v712, 16
        %v790 = vrot.slane %v788, 5
        %v791 = vsel %vm721, %v786, %v790
        %v793 = vshrl.u32 %v713, 16
        %v795 = vrot.slane %v793, 4
        %v796 = vshll.u32 %v713, 16
        %v798 = vrot.slane %v796, 5
        %v799 = vor.u32 %v795, %v798
        %v800 = vrot.slane %v799, 4
        %v802 = vshll.u32 %v714, 16
        %v804 = vrot.slane %v802, 5
        %v805 = vsel %vm721, %v800, %v804
        %v807 = vshrl.u32 %v715, 16
        %v809 = vrot.slane %v807, 4
        %v810 = vshll.u32 %v715, 16
        %v812 = vrot.slane %v810, 5
        %v813 = vor.u32 %v809, %v812
        %v814 = vrot.slane %v813, 4
        %v816 = vshll.u32 %v716, 16
        %v818 = vrot.slane %v816, 5
        %v819 = vsel %vm721, %v814, %v818
        %v821 = vshrl.u32 %v717, 16
        %v823 = vrot.slane %v821, 4
        %v824 = vshll.u32 %v717, 16
        %v826 = vrot.slane %v824, 5
        %v827 = vor.u32 %v823, %v826
        %v828 = vrot.slane %v827, 4
        %v830 = vshll.u32 %v718, 16
        %v832 = vrot.slane %v830, 5
        %v833 = vsel %vm721, %v828, %v832
        %s834 = scalar_lea.vmem %s1, 64
        %v835 = vld [vmem:[%s834] sm:$0xf]
        %v836 = vld [vmem:[%s834 + $0x4] sm:$0xf]
        %v837 = vld [vmem:[%s834 + $0x8] sm:$0xf]
        %v838 = vld [vmem:[%s834 + $0xc] sm:$0xf]
        %v839 = vld [vmem:[%s834 + $0x10] sm:$0xf]
        %v840 = vld [vmem:[%s834 + $0x14] sm:$0xf]
        %v841 = vld [vmem:[%s834 + $0x18] sm:$0xf]
        %v842 = vld [vmem:[%s834 + $0x1c] sm:$0xf]
        %v843 = vld [vmem:[%s834 + $0x20] sm:$0xf]
        %v844 = vld [vmem:[%s834 + $0x24] sm:$0xf]
        %v845 = vld [vmem:[%s834 + $0x28] sm:$0xf]
        %v846 = vld [vmem:[%s834 + $0x2c] sm:$0xf]
        %v847 = vld [vmem:[%s834 + $0x30] sm:$0xf]
        %v848 = vld [vmem:[%s834 + $0x34] sm:$0xf]
        %v849 = vld [vmem:[%s834 + $0x38] sm:$0xf]
        %v850 = vld [vmem:[%s834 + $0x3c] sm:$0xf]
        %v851 = vunpack.c.l.b16 %v735
        %v852 = vunpack.c.l.b16 %v749
        %v853 = vunpack.c.l.b16 %v763
        %v854 = vunpack.c.l.b16 %v777
        %v855 = vunpack.c.l.b16 %v791
        %v856 = vunpack.c.l.b16 %v805
        %v857 = vunpack.c.l.b16 %v819
        %v858 = vunpack.c.l.b16 %v833
        %v859 = vpack.c.b16 %v852, %v851
        %v860 = vpack.c.b16 %v854, %v853
        %v861 = vpack.c.b16 %v856, %v855
        %v862 = vpack.c.b16 %v858, %v857
        %v883 = vunpack.c.l.b16 %v835
        %v884 = vunpack.c.l.b16 %v836
        %v885 = vunpack.c.l.b16 %v837
        %v886 = vunpack.c.l.b16 %v838
        %v887 = vunpack.c.l.b16 %v839
        %v888 = vunpack.c.l.b16 %v840
        %v889 = vunpack.c.l.b16 %v841
        %v890 = vunpack.c.l.b16 %v842
        %v891 = vunpack.c.l.b16 %v843
        %v892 = vunpack.c.l.b16 %v844
        %v893 = vunpack.c.l.b16 %v845
        %v894 = vunpack.c.l.b16 %v846
        %v895 = vunpack.c.l.b16 %v847
        %v896 = vunpack.c.l.b16 %v848
        %v897 = vunpack.c.l.b16 %v849
        %v898 = vunpack.c.l.b16 %v850
        %v899 = vpack.c.b16 %v884, %v883
        %v900 = vpack.c.b16 %v886, %v885
        %v901 = vpack.c.b16 %v888, %v887
        %v902 = vpack.c.b16 %v890, %v889
        %v903 = vpack.c.b16 %v892, %v891
        %v904 = vpack.c.b16 %v894, %v893
        %v905 = vpack.c.b16 %v896, %v895
        %v906 = vpack.c.b16 %v898, %v897
        %915 = vmatprep.subr.bf16.mxu0 0
        %916 = vmatpush1.bf16.msra.mxu0 %v899
        %917 = vmatprep.subr.bf16.mxu0 0
        %918 = vmatpush1.bf16.msra.mxu0 %v900
        %919 = vmatprep.subr.bf16.mxu0 0
        %920 = vmatpush1.bf16.msra.mxu0 %v901
        %921 = vmatprep.subr.bf16.mxu0 0
        %922 = vmatpush1.bf16.msra.mxu0 %v902
        %923 = vmatprep.subr.bf16.mxu0 0
        %924 = vmatpush1.bf16.msra.mxu0 %v903
        %925 = vmatprep.subr.bf16.mxu0 0
        %926 = vmatpush1.bf16.msra.mxu0 %v904
        %927 = vmatprep.subr.bf16.mxu0 0
        %928 = vmatpush1.bf16.msra.mxu0 %v905
        %929 = vmatprep.subr.bf16.mxu0 0
        %930 = vmatpush1.bf16.msra.mxu0 %v906
        %931 = vmatprep.subr.bf16.mxu0 0
        %932 = vmatpush1.bf16.msra.mxu0 0
        %933 = vmatprep.subr.bf16.mxu0 0
        %934 = vmatpush1.bf16.msra.mxu0 0
        %935 = vmatprep.subr.bf16.mxu0 0
        %936 = vmatpush1.bf16.msra.mxu0 0
        %937 = vmatprep.subr.bf16.mxu0 0
        %938 = vmatpush1.bf16.msra.mxu0 0
        %939 = vmatprep.subr.bf16.mxu0 0
        %940 = vmatpush1.bf16.msra.mxu0 0
        %941 = vmatprep.subr.bf16.mxu0 0
        %942 = vmatpush1.bf16.msra.mxu0 0
        %943 = vmatprep.subr.bf16.mxu0 0
        %944 = vmatpush1.bf16.msra.mxu0 0
        %945 = vmatprep.subr.bf16.mxu0 0
        %946 = vmatpush1.bf16.msra.mxu0 0
        %947 = vmatprep.mubr.bf16.mxu0 0
        %948 = vmatmul.mubr.bf16.gmra.mrb[0].mxu0 %v859
        %v949 = vpop.f32.mrb[0].mxu0
        %v950 = vadd.f32 0.0, %v949
        %v951 = vpop.f32.mrb[0].mxu0
        %v952 = vpop.f32.mrb[0].mxu0
        %v953 = vadd.f32 0.0, %v952
        %v954 = vpop.f32.mrb[0].mxu0
        %955 = vmatprep.mubr.bf16.mxu0 0
        %956 = vmatmul.mubr.bf16.gmra.mrb[0].mxu0 %v860
        %v957 = vpop.f32.mrb[0].mxu0
        %v958 = vadd.f32 0.0, %v957
        %v959 = vpop.f32.mrb[0].mxu0
        %v960 = vpop.f32.mrb[0].mxu0
        %v961 = vadd.f32 0.0, %v960
        %v962 = vpop.f32.mrb[0].mxu0
        %963 = vmatprep.mubr.bf16.mxu0 0
        %964 = vmatmul.mubr.bf16.gmra.mrb[0].mxu0 %v861
        %v965 = vpop.f32.mrb[0].mxu0
        %v966 = vadd.f32 0.0, %v965
        %v967 = vpop.f32.mrb[0].mxu0
        %v968 = vpop.f32.mrb[0].mxu0
        %v969 = vadd.f32 0.0, %v968
        %v970 = vpop.f32.mrb[0].mxu0
        %971 = vmatprep.mubr.bf16.mxu0 0
        %972 = vmatmul.mubr.bf16.gmra.mrb[0].mxu0 %v862
        %v973 = vpop.f32.mrb[0].mxu0
        %v974 = vadd.f32 0.0, %v973
        %v975 = vpop.f32.mrb[0].mxu0
        %v976 = vpop.f32.mrb[0].mxu0
        %v977 = vadd.f32 0.0, %v976
        %v978 = vpop.f32.mrb[0].mxu0
        %979 = vdwg.mxu0
        %v980 = vld [vmem:[#allocation3] sm:$0xff]
        %v981 = vld [vmem:[#allocation3 + $0x8] sm:$0xff]
        %v982 = vld [vmem:[#allocation3 + $0x10] sm:$0xff]
        %v983 = vld [vmem:[#allocation3 + $0x18] sm:$0xff]
        %v984 = vld [vmem:[#allocation3 + $0x20] sm:$0xff]
        %v985 = vld [vmem:[#allocation3 + $0x28] sm:$0xff]
        %v986 = vld [vmem:[#allocation3 + $0x30] sm:$0xff]
        %v987 = vld [vmem:[#allocation3 + $0x38] sm:$0xff]
        %v988 = vadd.f32 %v980, %v950
        %v989 = vadd.f32 %v981, %v953
        %v990 = vadd.f32 %v982, %v958
        %v991 = vadd.f32 %v983, %v961
        %v992 = vadd.f32 %v984, %v966
        %v993 = vadd.f32 %v985, %v969
        %v994 = vadd.f32 %v986, %v974
        %v995 = vadd.f32 %v987, %v977
        %996 = vst [vmem:[#allocation3] sm:$0xff] %v988
        %997 = vst [vmem:[#allocation3 + $0x8] sm:$0xff] %v989
        %998 = vst [vmem:[#allocation3 + $0x10] sm:$0xff] %v990
        %999 = vst [vmem:[#allocation3 + $0x18] sm:$0xff] %v991
        %1000 = vst [vmem:[#allocation3 + $0x20] sm:$0xff] %v992
        %1001 = vst [vmem:[#allocation3 + $0x28] sm:$0xff] %v993
        %1002 = vst [vmem:[#allocation3 + $0x30] sm:$0xff] %v994
        %1003 = vst [vmem:[#allocation3 + $0x38] sm:$0xff] %v995
        %v1004 = vld [vmem:[#allocation2] sm:$0xe]
        %v1005 = vld [vmem:[#allocation2 + $0x4] sm:$0x1]
        %v1006 = vld [vmem:[#allocation2 + $0x8] sm:$0xe]
        %v1007 = vld [vmem:[#allocation2 + $0xc] sm:$0x1]
        %v1008 = vld [vmem:[#allocation2 + $0x10] sm:$0xe]
        %v1009 = vld [vmem:[#allocation2 + $0x14] sm:$0x1]
        %v1010 = vld [vmem:[#allocation2 + $0x18] sm:$0xe]
        %v1011 = vld [vmem:[#allocation2 + $0x1c] sm:$0x1]
        %v1012 = vld [vmem:[#allocation2 + $0x20] sm:$0xe]
        %v1013 = vld [vmem:[#allocation2 + $0x24] sm:$0x1]
        %v1014 = vld [vmem:[#allocation2 + $0x28] sm:$0xe]
        %v1015 = vld [vmem:[#allocation2 + $0x2c] sm:$0x1]
        %v1016 = vld [vmem:[#allocation2 + $0x30] sm:$0xe]
        %v1017 = vld [vmem:[#allocation2 + $0x34] sm:$0x1]
        %v1018 = vld [vmem:[#allocation2 + $0x38] sm:$0xe]
        %v1019 = vld [vmem:[#allocation2 + $0x3c] sm:$0x1]
        %vm1036 = vcmask 1042432
        %vm1037 = vcmask 1046532
        %vm1038 = vmor %vm1036, %vm1037
        %v1039 = vrot.slane %v1004, 5
        %v1040 = vrot.slane %v1039, 4
        %v1041 = vrot.slane %v1005, 5
        %v1042 = vsel %vm1038, %v1040, %v1041
        %v1043 = vrot.slane %v1006, 5
        %v1044 = vrot.slane %v1043, 4
        %v1045 = vrot.slane %v1007, 5
        %v1046 = vsel %vm1038, %v1044, %v1045
        %v1047 = vrot.slane %v1008, 5
        %v1048 = vrot.slane %v1047, 4
        %v1049 = vrot.slane %v1009, 5
        %v1050 = vsel %vm1038, %v1048, %v1049
        %v1051 = vrot.slane %v1010, 5
        %v1052 = vrot.slane %v1051, 4
        %v1053 = vrot.slane %v1011, 5
        %v1054 = vsel %vm1038, %v1052, %v1053
        %v1055 = vrot.slane %v1012, 5
        %v1056 = vrot.slane %v1055, 4
        %v1057 = vrot.slane %v1013, 5
        %v1058 = vsel %vm1038, %v1056, %v1057
        %v1059 = vrot.slane %v1014, 5
        %v1060 = vrot.slane %v1059, 4
        %v1061 = vrot.slane %v1015, 5
        %v1062 = vsel %vm1038, %v1060, %v1061
        %v1063 = vrot.slane %v1016, 5
        %v1064 = vrot.slane %v1063, 4
        %v1065 = vrot.slane %v1017, 5
        %v1066 = vsel %vm1038, %v1064, %v1065
        %v1067 = vrot.slane %v1018, 5
        %v1068 = vrot.slane %v1067, 4
        %v1069 = vrot.slane %v1019, 5
        %v1070 = vsel %vm1038, %v1068, %v1069
        %s1071 = scalar_lea.vmem %s1, 128
        %v1072 = vld [vmem:[%s1071] sm:$0xf]
        %v1073 = vld [vmem:[%s1071 + $0x4] sm:$0xf]
        %v1074 = vld [vmem:[%s1071 + $0x8] sm:$0xf]
        %v1075 = vld [vmem:[%s1071 + $0xc] sm:$0xf]
        %v1076 = vld [vmem:[%s1071 + $0x10] sm:$0xf]
        %v1077 = vld [vmem:[%s1071 + $0x14] sm:$0xf]
        %v1078 = vld [vmem:[%s1071 + $0x18] sm:$0xf]
        %v1079 = vld [vmem:[%s1071 + $0x1c] sm:$0xf]
        %v1080 = vld [vmem:[%s1071 + $0x20] sm:$0xf]
        %v1081 = vld [vmem:[%s1071 + $0x24] sm:$0xf]
        %v1082 = vld [vmem:[%s1071 + $0x28] sm:$0xf]
        %v1083 = vld [vmem:[%s1071 + $0x2c] sm:$0xf]
        %v1084 = vld [vmem:[%s1071 + $0x30] sm:$0xf]
        %v1085 = vld [vmem:[%s1071 + $0x34] sm:$0xf]
        %v1086 = vld [vmem:[%s1071 + $0x38] sm:$0xf]
        %v1087 = vld [vmem:[%s1071 + $0x3c] sm:$0xf]
        %v1088 = vunpack.c.l.b16 %v1042
        %v1089 = vunpack.c.l.b16 %v1046
        %v1090 = vunpack.c.l.b16 %v1050
        %v1091 = vunpack.c.l.b16 %v1054
        %v1092 = vunpack.c.l.b16 %v1058
        %v1093 = vunpack.c.l.b16 %v1062
        %v1094 = vunpack.c.l.b16 %v1066
        %v1095 = vunpack.c.l.b16 %v1070
        %v1096 = vpack.c.b16 %v1089, %v1088
        %v1097 = vpack.c.b16 %v1091, %v1090
        %v1098 = vpack.c.b16 %v1093, %v1092
        %v1099 = vpack.c.b16 %v1095, %v1094
        %v1120 = vunpack.c.l.b16 %v1072
        %v1121 = vunpack.c.l.b16 %v1073
        %v1122 = vunpack.c.l.b16 %v1074
        %v1123 = vunpack.c.l.b16 %v1075
        %v1124 = vunpack.c.l.b16 %v1076
        %v1125 = vunpack.c.l.b16 %v1077
        %v1126 = vunpack.c.l.b16 %v1078
        %v1127 = vunpack.c.l.b16 %v1079
        %v1128 = vunpack.c.l.b16 %v1080
        %v1129 = vunpack.c.l.b16 %v1081
        %v1130 = vunpack.c.l.b16 %v1082
        %v1131 = vunpack.c.l.b16 %v1083
        %v1132 = vunpack.c.l.b16 %v1084
        %v1133 = vunpack.c.l.b16 %v1085
        %v1134 = vunpack.c.l.b16 %v1086
        %v1135 = vunpack.c.l.b16 %v1087
        %v1136 = vpack.c.b16 %v1121, %v1120
        %v1137 = vpack.c.b16 %v1123, %v1122
        %v1138 = vpack.c.b16 %v1125, %v1124
        %v1139 = vpack.c.b16 %v1127, %v1126
        %v1140 = vpack.c.b16 %v1129, %v1128
        %v1141 = vpack.c.b16 %v1131, %v1130
        %v1142 = vpack.c.b16 %v1133, %v1132
        %v1143 = vpack.c.b16 %v1135, %v1134
        %1152 = vmatprep.subr.bf16.mxu0 0
        %1153 = vmatpush1.bf16.msra.mxu0 %v1136
        %1154 = vmatprep.subr.bf16.mxu0 0
        %1155 = vmatpush1.bf16.msra.mxu0 %v1137
        %1156 = vmatprep.subr.bf16.mxu0 0
        %1157 = vmatpush1.bf16.msra.mxu0 %v1138
        %1158 = vmatprep.subr.bf16.mxu0 0
        %1159 = vmatpush1.bf16.msra.mxu0 %v1139
        %1160 = vmatprep.subr.bf16.mxu0 0
        %1161 = vmatpush1.bf16.msra.mxu0 %v1140
        %1162 = vmatprep.subr.bf16.mxu0 0
        %1163 = vmatpush1.bf16.msra.mxu0 %v1141
        %1164 = vmatprep.subr.bf16.mxu0 0
        %1165 = vmatpush1.bf16.msra.mxu0 %v1142
        %1166 = vmatprep.subr.bf16.mxu0 0
        %1167 = vmatpush1.bf16.msra.mxu0 %v1143
        %1168 = vmatprep.subr.bf16.mxu0 0
        %1169 = vmatpush1.bf16.msra.mxu0 0
        %1170 = vmatprep.subr.bf16.mxu0 0
        %1171 = vmatpush1.bf16.msra.mxu0 0
        %1172 = vmatprep.subr.bf16.mxu0 0
        %1173 = vmatpush1.bf16.msra.mxu0 0
        %1174 = vmatprep.subr.bf16.mxu0 0
        %1175 = vmatpush1.bf16.msra.mxu0 0
        %1176 = vmatprep.subr.bf16.mxu0 0
        %1177 = vmatpush1.bf16.msra.mxu0 0
        %1178 = vmatprep.subr.bf16.mxu0 0
        %1179 = vmatpush1.bf16.msra.mxu0 0
        %1180 = vmatprep.subr.bf16.mxu0 0
        %1181 = vmatpush1.bf16.msra.mxu0 0
        %1182 = vmatprep.subr.bf16.mxu0 0
        %1183 = vmatpush1.bf16.msra.mxu0 0
        %1184 = vmatprep.mubr.bf16.mxu0 0
        %1185 = vmatmul.mubr.bf16.gmra.mrb[0].mxu0 %v1096
        %v1186 = vpop.f32.mrb[0].mxu0
        %v1187 = vadd.f32 0.0, %v1186
        %v1188 = vpop.f32.mrb[0].mxu0
        %v1189 = vpop.f32.mrb[0].mxu0
        %v1190 = vadd.f32 0.0, %v1189
        %v1191 = vpop.f32.mrb[0].mxu0
        %1192 = vmatprep.mubr.bf16.mxu0 0
        %1193 = vmatmul.mubr.bf16.gmra.mrb[0].mxu0 %v1097
        %v1194 = vpop.f32.mrb[0].mxu0
        %v1195 = vadd.f32 0.0, %v1194
        %v1196 = vpop.f32.mrb[0].mxu0
        %v1197 = vpop.f32.mrb[0].mxu0
        %v1198 = vadd.f32 0.0, %v1197
        %v1199 = vpop.f32.mrb[0].mxu0
        %1200 = vmatprep.mubr.bf16.mxu0 0
        %1201 = vmatmul.mubr.bf16.gmra.mrb[0].mxu0 %v1098
        %v1202 = vpop.f32.mrb[0].mxu0
        %v1203 = vadd.f32 0.0, %v1202
        %v1204 = vpop.f32.mrb[0].mxu0
        %v1205 = vpop.f32.mrb[0].mxu0
        %v1206 = vadd.f32 0.0, %v1205
        %v1207 = vpop.f32.mrb[0].mxu0
        %1208 = vmatprep.mubr.bf16.mxu0 0
        %1209 = vmatmul.mubr.bf16.gmra.mrb[0].mxu0 %v1099
        %v1210 = vpop.f32.mrb[0].mxu0
        %v1211 = vadd.f32 0.0, %v1210
        %v1212 = vpop.f32.mrb[0].mxu0
        %v1213 = vpop.f32.mrb[0].mxu0
        %v1214 = vadd.f32 0.0, %v1213
        %v1215 = vpop.f32.mrb[0].mxu0
        %1216 = vdwg.mxu0
        %v1217 = vld [vmem:[#allocation3] sm:$0xff]
        %v1218 = vld [vmem:[#allocation3 + $0x8] sm:$0xff]
        %v1219 = vld [vmem:[#allocation3 + $0x10] sm:$0xff]
        %v1220 = vld [vmem:[#allocation3 + $0x18] sm:$0xff]
        %v1221 = vld [vmem:[#allocation3 + $0x20] sm:$0xff]
        %v1222 = vld [vmem:[#allocation3 + $0x28] sm:$0xff]
        %v1223 = vld [vmem:[#allocation3 + $0x30] sm:$0xff]
        %v1224 = vld [vmem:[#allocation3 + $0x38] sm:$0xff]
        %v1225 = vadd.f32 %v1217, %v1187
        %v1226 = vadd.f32 %v1218, %v1190
        %v1227 = vadd.f32 %v1219, %v1195
        %v1228 = vadd.f32 %v1220, %v1198
        %v1229 = vadd.f32 %v1221, %v1203
        %v1230 = vadd.f32 %v1222, %v1206
        %v1231 = vadd.f32 %v1223, %v1211
        %v1232 = vadd.f32 %v1224, %v1214
        %1233 = vst [vmem:[#allocation3] sm:$0xff] %v1225
        %1234 = vst [vmem:[#allocation3 + $0x8] sm:$0xff] %v1226
        %1235 = vst [vmem:[#allocation3 + $0x10] sm:$0xff] %v1227
        %1236 = vst [vmem:[#allocation3 + $0x18] sm:$0xff] %v1228
        %1237 = vst [vmem:[#allocation3 + $0x20] sm:$0xff] %v1229
        %1238 = vst [vmem:[#allocation3 + $0x28] sm:$0xff] %v1230
        %1239 = vst [vmem:[#allocation3 + $0x30] sm:$0xff] %v1231
        %1240 = vst [vmem:[#allocation3 + $0x38] sm:$0xff] %v1232
        %v1241 = vld [vmem:[%s483] sm:$0xf]
        %v1242 = vld [vmem:[%s483 + $0x8] sm:$0xf]
        %v1243 = vld [vmem:[%s483 + $0x10] sm:$0xf]
        %v1244 = vld [vmem:[%s483 + $0x18] sm:$0xf]
        %v1245 = vld [vmem:[%s483 + $0x20] sm:$0xf]
        %v1246 = vld [vmem:[%s483 + $0x28] sm:$0xf]
        %v1247 = vld [vmem:[%s483 + $0x30] sm:$0xf]
        %v1248 = vld [vmem:[%s483 + $0x38] sm:$0xf]
        %s1249 = scalar_lea.vmem %s1, 192
        %v1250 = vld [vmem:[%s1249] sm:$0xf]
        %v1251 = vld [vmem:[%s1249 + $0x4] sm:$0xf]
        %v1252 = vld [vmem:[%s1249 + $0x8] sm:$0xf]
        %v1253 = vld [vmem:[%s1249 + $0xc] sm:$0xf]
        %v1254 = vld [vmem:[%s1249 + $0x10] sm:$0xf]
        %v1255 = vld [vmem:[%s1249 + $0x14] sm:$0xf]
        %v1256 = vld [vmem:[%s1249 + $0x18] sm:$0xf]
        %v1257 = vld [vmem:[%s1249 + $0x1c] sm:$0xf]
        %v1258 = vld [vmem:[%s1249 + $0x20] sm:$0xf]
        %v1259 = vld [vmem:[%s1249 + $0x24] sm:$0xf]
        %v1260 = vld [vmem:[%s1249 + $0x28] sm:$0xf]
        %v1261 = vld [vmem:[%s1249 + $0x2c] sm:$0xf]
        %v1262 = vld [vmem:[%s1249 + $0x30] sm:$0xf]
        %v1263 = vld [vmem:[%s1249 + $0x34] sm:$0xf]
        %v1264 = vld [vmem:[%s1249 + $0x38] sm:$0xf]
        %v1265 = vld [vmem:[%s1249 + $0x3c] sm:$0xf]
        %v1274 = vunpack.c.l.b16 %v1241
        %v1275 = vunpack.c.l.b16 %v1242
        %v1276 = vunpack.c.l.b16 %v1243
        %v1277 = vunpack.c.l.b16 %v1244
        %v1278 = vunpack.c.l.b16 %v1245
        %v1279 = vunpack.c.l.b16 %v1246
        %v1280 = vunpack.c.l.b16 %v1247
        %v1281 = vunpack.c.l.b16 %v1248
        %v1282 = vpack.c.b16 %v1275, %v1274
        %v1283 = vpack.c.b16 %v1277, %v1276
        %v1284 = vpack.c.b16 %v1279, %v1278
        %v1285 = vpack.c.b16 %v1281, %v1280
        %v1306 = vunpack.c.l.b16 %v1250
        %v1307 = vunpack.c.l.b16 %v1251
        %v1308 = vunpack.c.l.b16 %v1252
        %v1309 = vunpack.c.l.b16 %v1253
        %v1310 = vunpack.c.l.b16 %v1254
        %v1311 = vunpack.c.l.b16 %v1255
        %v1312 = vunpack.c.l.b16 %v1256
        %v1313 = vunpack.c.l.b16 %v1257
        %v1314 = vunpack.c.l.b16 %v1258
        %v1315 = vunpack.c.l.b16 %v1259
        %v1316 = vunpack.c.l.b16 %v1260
        %v1317 = vunpack.c.l.b16 %v1261
        %v1318 = vunpack.c.l.b16 %v1262
        %v1319 = vunpack.c.l.b16 %v1263
        %v1320 = vunpack.c.l.b16 %v1264
        %v1321 = vunpack.c.l.b16 %v1265
        %v1322 = vpack.c.b16 %v1307, %v1306
        %v1323 = vpack.c.b16 %v1309, %v1308
        %v1324 = vpack.c.b16 %v1311, %v1310
        %v1325 = vpack.c.b16 %v1313, %v1312
        %v1326 = vpack.c.b16 %v1315, %v1314
        %v1327 = vpack.c.b16 %v1317, %v1316
        %v1328 = vpack.c.b16 %v1319, %v1318
        %v1329 = vpack.c.b16 %v1321, %v1320
        %1338 = vmatprep.subr.bf16.mxu0 0
        %1339 = vmatpush1.bf16.msra.mxu0 %v1322
        %1340 = vmatprep.subr.bf16.mxu0 0
        %1341 = vmatpush1.bf16.msra.mxu0 %v1323
        %1342 = vmatprep.subr.bf16.mxu0 0
        %1343 = vmatpush1.bf16.msra.mxu0 %v1324
        %1344 = vmatprep.subr.bf16.mxu0 0
        %1345 = vmatpush1.bf16.msra.mxu0 %v1325
        %1346 = vmatprep.subr.bf16.mxu0 0
        %1347 = vmatpush1.bf16.msra.mxu0 %v1326
        %1348 = vmatprep.subr.bf16.mxu0 0
        %1349 = vmatpush1.bf16.msra.mxu0 %v1327
        %1350 = vmatprep.subr.bf16.mxu0 0
        %1351 = vmatpush1.bf16.msra.mxu0 %v1328
        %1352 = vmatprep.subr.bf16.mxu0 0
        %1353 = vmatpush1.bf16.msra.mxu0 %v1329
        %1354 = vmatprep.subr.bf16.mxu0 0
        %1355 = vmatpush1.bf16.msra.mxu0 0
        %1356 = vmatprep.subr.bf16.mxu0 0
        %1357 = vmatpush1.bf16.msra.mxu0 0
        %1358 = vmatprep.subr.bf16.mxu0 0
        %1359 = vmatpush1.bf16.msra.mxu0 0
        %1360 = vmatprep.subr.bf16.mxu0 0
        %1361 = vmatpush1.bf16.msra.mxu0 0
        %1362 = vmatprep.subr.bf16.mxu0 0
        %1363 = vmatpush1.bf16.msra.mxu0 0
        %1364 = vmatprep.subr.bf16.mxu0 0
        %1365 = vmatpush1.bf16.msra.mxu0 0
        %1366 = vmatprep.subr.bf16.mxu0 0
        %1367 = vmatpush1.bf16.msra.mxu0 0
        %1368 = vmatprep.subr.bf16.mxu0 0
        %1369 = vmatpush1.bf16.msra.mxu0 0
        %1370 = vmatprep.mubr.bf16.mxu0 0
        %1371 = vmatmul.mubr.bf16.gmra.mrb[0].mxu0 %v1282
        %v1372 = vpop.f32.mrb[0].mxu0
        %v1373 = vadd.f32 0.0, %v1372
        %v1374 = vpop.f32.mrb[0].mxu0
        %v1375 = vpop.f32.mrb[0].mxu0
        %v1376 = vadd.f32 0.0, %v1375
        %v1377 = vpop.f32.mrb[0].mxu0
        %1378 = vmatprep.mubr.bf16.mxu0 0
        %1379 = vmatmul.mubr.bf16.gmra.mrb[0].mxu0 %v1283
        %v1380 = vpop.f32.mrb[0].mxu0
        %v1381 = vadd.f32 0.0, %v1380
        %v1382 = vpop.f32.mrb[0].mxu0
        %v1383 = vpop.f32.mrb[0].mxu0
        %v1384 = vadd.f32 0.0, %v1383
        %v1385 = vpop.f32.mrb[0].mxu0
        %1386 = vmatprep.mubr.bf16.mxu0 0
        %1387 = vmatmul.mubr.bf16.gmra.mrb[0].mxu0 %v1284
        %v1388 = vpop.f32.mrb[0].mxu0
        %v1389 = vadd.f32 0.0, %v1388
        %v1390 = vpop.f32.mrb[0].mxu0
        %v1391 = vpop.f32.mrb[0].mxu0
        %v1392 = vadd.f32 0.0, %v1391
        %v1393 = vpop.f32.mrb[0].mxu0
        %1394 = vmatprep.mubr.bf16.mxu0 0
        %1395 = vmatmul.mubr.bf16.gmra.mrb[0].mxu0 %v1285
        %v1396 = vpop.f32.mrb[0].mxu0
        %v1397 = vadd.f32 0.0, %v1396
        %v1398 = vpop.f32.mrb[0].mxu0
        %v1399 = vpop.f32.mrb[0].mxu0
        %v1400 = vadd.f32 0.0, %v1399
        %v1401 = vpop.f32.mrb[0].mxu0
        %1402 = vdwg.mxu0
        %v1403 = vld [vmem:[#allocation3] sm:$0xff]
        %v1404 = vld [vmem:[#allocation3 + $0x8] sm:$0xff]
        %v1405 = vld [vmem:[#allocation3 + $0x10] sm:$0xff]
        %v1406 = vld [vmem:[#allocation3 + $0x18] sm:$0xff]
        %v1407 = vld [vmem:[#allocation3 + $0x20] sm:$0xff]
        %v1408 = vld [vmem:[#allocation3 + $0x28] sm:$0xff]
        %v1409 = vld [vmem:[#allocation3 + $0x30] sm:$0xff]
        %v1410 = vld [vmem:[#allocation3 + $0x38] sm:$0xff]
        %v1411 = vadd.f32 %v1403, %v1373
        %v1412 = vadd.f32 %v1404, %v1376
        %v1413 = vadd.f32 %v1405, %v1381
        %v1414 = vadd.f32 %v1406, %v1384
        %v1415 = vadd.f32 %v1407, %v1389
        %v1416 = vadd.f32 %v1408, %v1392
        %v1417 = vadd.f32 %v1409, %v1397
        %v1418 = vadd.f32 %v1410, %v1400
        %1419 = vst [vmem:[#allocation3] sm:$0xff] %v1411
        %1420 = vst [vmem:[#allocation3 + $0x8] sm:$0xff] %v1412
        %1421 = vst [vmem:[#allocation3 + $0x10] sm:$0xff] %v1413
        %1422 = vst [vmem:[#allocation3 + $0x18] sm:$0xff] %v1414
        %1423 = vst [vmem:[#allocation3 + $0x20] sm:$0xff] %v1415
        %1424 = vst [vmem:[#allocation3 + $0x28] sm:$0xff] %v1416
        %1425 = vst [vmem:[#allocation3 + $0x30] sm:$0xff] %v1417
        %1426 = vst [vmem:[#allocation3 + $0x38] sm:$0xff] %v1418
        %v1427 = vld [vmem:[%s483] sm:$0xf]
        %v1428 = vld [vmem:[%s483 + $0x4] sm:$0x1]
        %v1429 = vld [vmem:[%s483 + $0x8] sm:$0xf]
        %v1430 = vld [vmem:[%s483 + $0xc] sm:$0x1]
        %v1431 = vld [vmem:[%s483 + $0x10] sm:$0xf]
        %v1432 = vld [vmem:[%s483 + $0x14] sm:$0x1]
        %v1433 = vld [vmem:[%s483 + $0x18] sm:$0xf]
        %v1434 = vld [vmem:[%s483 + $0x1c] sm:$0x1]
        %v1435 = vld [vmem:[%s483 + $0x20] sm:$0xf]
        %v1436 = vld [vmem:[%s483 + $0x24] sm:$0x1]
        %v1437 = vld [vmem:[%s483 + $0x28] sm:$0xf]
        %v1438 = vld [vmem:[%s483 + $0x2c] sm:$0x1]
        %v1439 = vld [vmem:[%s483 + $0x30] sm:$0xf]
        %v1440 = vld [vmem:[%s483 + $0x34] sm:$0x1]
        %v1441 = vld [vmem:[%s483 + $0x38] sm:$0xf]
        %v1442 = vld [vmem:[%s483 + $0x3c] sm:$0x1]
        %v1444 = vshrl.u32 %v1427, 16
        %v1446 = vrot.slane %v1444, 4
        %v1447 = vshll.u32 %v1427, 16
        %v1449 = vrot.slane %v1447, 5
        %v1450 = vor.u32 %v1446, %v1449
        %v1451 = vrot.slane %v1450, 4
        %v1453 = vshll.u32 %v1428, 16
        %v1455 = vrot.slane %v1453, 5
        %v1456 = vsel %vm721, %v1451, %v1455
        %v1458 = vshrl.u32 %v1429, 16
        %v1460 = vrot.slane %v1458, 4
        %v1461 = vshll.u32 %v1429, 16
        %v1463 = vrot.slane %v1461, 5
        %v1464 = vor.u32 %v1460, %v1463
        %v1465 = vrot.slane %v1464, 4
        %v1467 = vshll.u32 %v1430, 16
        %v1469 = vrot.slane %v1467, 5
        %v1470 = vsel %vm721, %v1465, %v1469
        %v1472 = vshrl.u32 %v1431, 16
        %v1474 = vrot.slane %v1472, 4
        %v1475 = vshll.u32 %v1431, 16
        %v1477 = vrot.slane %v1475, 5
        %v1478 = vor.u32 %v1474, %v1477
        %v1479 = vrot.slane %v1478, 4
        %v1481 = vshll.u32 %v1432, 16
        %v1483 = vrot.slane %v1481, 5
        %v1484 = vsel %vm721, %v1479, %v1483
        %v1486 = vshrl.u32 %v1433, 16
        %v1488 = vrot.slane %v1486, 4
        %v1489 = vshll.u32 %v1433, 16
        %v1491 = vrot.slane %v1489, 5
        %v1492 = vor.u32 %v1488, %v1491
        %v1493 = vrot.slane %v1492, 4
        %v1495 = vshll.u32 %v1434, 16
        %v1497 = vrot.slane %v1495, 5
        %v1498 = vsel %vm721, %v1493, %v1497
        %v1500 = vshrl.u32 %v1435, 16
        %v1502 = vrot.slane %v1500, 4
        %v1503 = vshll.u32 %v1435, 16
        %v1505 = vrot.slane %v1503, 5
        %v1506 = vor.u32 %v1502, %v1505
        %v1507 = vrot.slane %v1506, 4
        %v1509 = vshll.u32 %v1436, 16
        %v1511 = vrot.slane %v1509, 5
        %v1512 = vsel %vm721, %v1507, %v1511
        %v1514 = vshrl.u32 %v1437, 16
        %v1516 = vrot.slane %v1514, 4
        %v1517 = vshll.u32 %v1437, 16
        %v1519 = vrot.slane %v1517, 5
        %v1520 = vor.u32 %v1516, %v1519
        %v1521 = vrot.slane %v1520, 4
        %v1523 = vshll.u32 %v1438, 16
        %v1525 = vrot.slane %v1523, 5
        %v1526 = vsel %vm721, %v1521, %v1525
        %v1528 = vshrl.u32 %v1439, 16
        %v1530 = vrot.slane %v1528, 4
        %v1531 = vshll.u32 %v1439, 16
        %v1533 = vrot.slane %v1531, 5
        %v1534 = vor.u32 %v1530, %v1533
        %v1535 = vrot.slane %v1534, 4
        %v1537 = vshll.u32 %v1440, 16
        %v1539 = vrot.slane %v1537, 5
        %v1540 = vsel %vm721, %v1535, %v1539
        %v1542 = vshrl.u32 %v1441, 16
        %v1544 = vrot.slane %v1542, 4
        %v1545 = vshll.u32 %v1441, 16
        %v1547 = vrot.slane %v1545, 5
        %v1548 = vor.u32 %v1544, %v1547
        %v1549 = vrot.slane %v1548, 4
        %v1551 = vshll.u32 %v1442, 16
        %v1553 = vrot.slane %v1551, 5
        %v1554 = vsel %vm721, %v1549, %v1553
        %s1555 = scalar_lea.vmem %s1, 256
        %v1556 = vld [vmem:[%s1555] sm:$0xf]
        %v1557 = vld [vmem:[%s1555 + $0x4] sm:$0xf]
        %v1558 = vld [vmem:[%s1555 + $0x8] sm:$0xf]
        %v1559 = vld [vmem:[%s1555 + $0xc] sm:$0xf]
        %v1560 = vld [vmem:[%s1555 + $0x10] sm:$0xf]
        %v1561 = vld [vmem:[%s1555 + $0x14] sm:$0xf]
        %v1562 = vld [vmem:[%s1555 + $0x18] sm:$0xf]
        %v1563 = vld [vmem:[%s1555 + $0x1c] sm:$0xf]
        %v1564 = vld [vmem:[%s1555 + $0x20] sm:$0xf]
        %v1565 = vld [vmem:[%s1555 + $0x24] sm:$0xf]
        %v1566 = vld [vmem:[%s1555 + $0x28] sm:$0xf]
        %v1567 = vld [vmem:[%s1555 + $0x2c] sm:$0xf]
        %v1568 = vld [vmem:[%s1555 + $0x30] sm:$0xf]
        %v1569 = vld [vmem:[%s1555 + $0x34] sm:$0xf]
        %v1570 = vld [vmem:[%s1555 + $0x38] sm:$0xf]
        %v1571 = vld [vmem:[%s1555 + $0x3c] sm:$0xf]
        %v1572 = vunpack.c.l.b16 %v1456
        %v1573 = vunpack.c.l.b16 %v1470
        %v1574 = vunpack.c.l.b16 %v1484
        %v1575 = vunpack.c.l.b16 %v1498
        %v1576 = vunpack.c.l.b16 %v1512
        %v1577 = vunpack.c.l.b16 %v1526
        %v1578 = vunpack.c.l.b16 %v1540
        %v1579 = vunpack.c.l.b16 %v1554
        %v1580 = vpack.c.b16 %v1573, %v1572
        %v1581 = vpack.c.b16 %v1575, %v1574
        %v1582 = vpack.c.b16 %v1577, %v1576
        %v1583 = vpack.c.b16 %v1579, %v1578
        %v1604 = vunpack.c.l.b16 %v1556
        %v1605 = vunpack.c.l.b16 %v1557
        %v1606 = vunpack.c.l.b16 %v1558
        %v1607 = vunpack.c.l.b16 %v1559
        %v1608 = vunpack.c.l.b16 %v1560
        %v1609 = vunpack.c.l.b16 %v1561
        %v1610 = vunpack.c.l.b16 %v1562
        %v1611 = vunpack.c.l.b16 %v1563
        %v1612 = vunpack.c.l.b16 %v1564
        %v1613 = vunpack.c.l.b16 %v1565
        %v1614 = vunpack.c.l.b16 %v1566
        %v1615 = vunpack.c.l.b16 %v1567
        %v1616 = vunpack.c.l.b16 %v1568
        %v1617 = vunpack.c.l.b16 %v1569
        %v1618 = vunpack.c.l.b16 %v1570
        %v1619 = vunpack.c.l.b16 %v1571
        %v1620 = vpack.c.b16 %v1605, %v1604
        %v1621 = vpack.c.b16 %v1607, %v1606
        %v1622 = vpack.c.b16 %v1609, %v1608
        %v1623 = vpack.c.b16 %v1611, %v1610
        %v1624 = vpack.c.b16 %v1613, %v1612
        %v1625 = vpack.c.b16 %v1615, %v1614
        %v1626 = vpack.c.b16 %v1617, %v1616
        %v1627 = vpack.c.b16 %v1619, %v1618
        %1636 = vmatprep.subr.bf16.mxu0 0
        %1637 = vmatpush1.bf16.msra.mxu0 %v1620
        %1638 = vmatprep.subr.bf16.mxu0 0
        %1639 = vmatpush1.bf16.msra.mxu0 %v1621
        %1640 = vmatprep.subr.bf16.mxu0 0
        %1641 = vmatpush1.bf16.msra.mxu0 %v1622
        %1642 = vmatprep.subr.bf16.mxu0 0
        %1643 = vmatpush1.bf16.msra.mxu0 %v1623
        %1644 = vmatprep.subr.bf16.mxu0 0
        %1645 = vmatpush1.bf16.msra.mxu0 %v1624
        %1646 = vmatprep.subr.bf16.mxu0 0
        %1647 = vmatpush1.bf16.msra.mxu0 %v1625
        %1648 = vmatprep.subr.bf16.mxu0 0
        %1649 = vmatpush1.bf16.msra.mxu0 %v1626
        %1650 = vmatprep.subr.bf16.mxu0 0
        %1651 = vmatpush1.bf16.msra.mxu0 %v1627
        %1652 = vmatprep.subr.bf16.mxu0 0
        %1653 = vmatpush1.bf16.msra.mxu0 0
        %1654 = vmatprep.subr.bf16.mxu0 0
        %1655 = vmatpush1.bf16.msra.mxu0 0
        %1656 = vmatprep.subr.bf16.mxu0 0
        %1657 = vmatpush1.bf16.msra.mxu0 0
        %1658 = vmatprep.subr.bf16.mxu0 0
        %1659 = vmatpush1.bf16.msra.mxu0 0
        %1660 = vmatprep.subr.bf16.mxu0 0
        %1661 = vmatpush1.bf16.msra.mxu0 0
        %1662 = vmatprep.subr.bf16.mxu0 0
        %1663 = vmatpush1.bf16.msra.mxu0 0
        %1664 = vmatprep.subr.bf16.mxu0 0
        %1665 = vmatpush1.bf16.msra.mxu0 0
        %1666 = vmatprep.subr.bf16.mxu0 0
        %1667 = vmatpush1.bf16.msra.mxu0 0
        %1668 = vmatprep.mubr.bf16.mxu0 0
        %1669 = vmatmul.mubr.bf16.gmra.mrb[0].mxu0 %v1580
        %v1670 = vpop.f32.mrb[0].mxu0
        %v1671 = vadd.f32 0.0, %v1670
        %v1672 = vpop.f32.mrb[0].mxu0
        %v1673 = vpop.f32.mrb[0].mxu0
        %v1674 = vadd.f32 0.0, %v1673
        %v1675 = vpop.f32.mrb[0].mxu0
        %1676 = vmatprep.mubr.bf16.mxu0 0
        %1677 = vmatmul.mubr.bf16.gmra.mrb[0].mxu0 %v1581
        %v1678 = vpop.f32.mrb[0].mxu0
        %v1679 = vadd.f32 0.0, %v1678
        %v1680 = vpop.f32.mrb[0].mxu0
        %v1681 = vpop.f32.mrb[0].mxu0
        %v1682 = vadd.f32 0.0, %v1681
        %v1683 = vpop.f32.mrb[0].mxu0
        %1684 = vmatprep.mubr.bf16.mxu0 0
        %1685 = vmatmul.mubr.bf16.gmra.mrb[0].mxu0 %v1582
        %v1686 = vpop.f32.mrb[0].mxu0
        %v1687 = vadd.f32 0.0, %v1686
        %v1688 = vpop.f32.mrb[0].mxu0
        %v1689 = vpop.f32.mrb[0].mxu0
        %v1690 = vadd.f32 0.0, %v1689
        %v1691 = vpop.f32.mrb[0].mxu0
        %1692 = vmatprep.mubr.bf16.mxu0 0
        %1693 = vmatmul.mubr.bf16.gmra.mrb[0].mxu0 %v1583
        %v1694 = vpop.f32.mrb[0].mxu0
        %v1695 = vadd.f32 0.0, %v1694
        %v1696 = vpop.f32.mrb[0].mxu0
        %v1697 = vpop.f32.mrb[0].mxu0
        %v1698 = vadd.f32 0.0, %v1697
        %v1699 = vpop.f32.mrb[0].mxu0
        %1700 = vdwg.mxu0
        %v1701 = vld [vmem:[#allocation3] sm:$0xff]
        %v1702 = vld [vmem:[#allocation3 + $0x8] sm:$0xff]
        %v1703 = vld [vmem:[#allocation3 + $0x10] sm:$0xff]
        %v1704 = vld [vmem:[#allocation3 + $0x18] sm:$0xff]
        %v1705 = vld [vmem:[#allocation3 + $0x20] sm:$0xff]
        %v1706 = vld [vmem:[#allocation3 + $0x28] sm:$0xff]
        %v1707 = vld [vmem:[#allocation3 + $0x30] sm:$0xff]
        %v1708 = vld [vmem:[#allocation3 + $0x38] sm:$0xff]
        %v1709 = vadd.f32 %v1701, %v1671
        %v1710 = vadd.f32 %v1702, %v1674
        %v1711 = vadd.f32 %v1703, %v1679
        %v1712 = vadd.f32 %v1704, %v1682
        %v1713 = vadd.f32 %v1705, %v1687
        %v1714 = vadd.f32 %v1706, %v1690
        %v1715 = vadd.f32 %v1707, %v1695
        %v1716 = vadd.f32 %v1708, %v1698
        %1717 = vst [vmem:[#allocation3] sm:$0xff] %v1709
        %1718 = vst [vmem:[#allocation3 + $0x8] sm:$0xff] %v1710
        %1719 = vst [vmem:[#allocation3 + $0x10] sm:$0xff] %v1711
        %1720 = vst [vmem:[#allocation3 + $0x18] sm:$0xff] %v1712
        %1721 = vst [vmem:[#allocation3 + $0x20] sm:$0xff] %v1713
        %1722 = vst [vmem:[#allocation3 + $0x28] sm:$0xff] %v1714
        %1723 = vst [vmem:[#allocation3 + $0x30] sm:$0xff] %v1715
        %1724 = vst [vmem:[#allocation3 + $0x38] sm:$0xff] %v1716
        %v1725 = vld [vmem:[%s483] sm:$0xe]
        %v1726 = vld [vmem:[%s483 + $0x4] sm:$0x1]
        %v1727 = vld [vmem:[%s483 + $0x8] sm:$0xe]
        %v1728 = vld [vmem:[%s483 + $0xc] sm:$0x1]
        %v1729 = vld [vmem:[%s483 + $0x10] sm:$0xe]
        %v1730 = vld [vmem:[%s483 + $0x14] sm:$0x1]
        %v1731 = vld [vmem:[%s483 + $0x18] sm:$0xe]
        %v1732 = vld [vmem:[%s483 + $0x1c] sm:$0x1]
        %v1733 = vld [vmem:[%s483 + $0x20] sm:$0xe]
        %v1734 = vld [vmem:[%s483 + $0x24] sm:$0x1]
        %v1735 = vld [vmem:[%s483 + $0x28] sm:$0xe]
        %v1736 = vld [vmem:[%s483 + $0x2c] sm:$0x1]
        %v1737 = vld [vmem:[%s483 + $0x30] sm:$0xe]
        %v1738 = vld [vmem:[%s483 + $0x34] sm:$0x1]
        %v1739 = vld [vmem:[%s483 + $0x38] sm:$0xe]
        %v1740 = vld [vmem:[%s483 + $0x3c] sm:$0x1]
        %v1757 = vrot.slane %v1725, 5
        %v1758 = vrot.slane %v1757, 4
        %v1759 = vrot.slane %v1726, 5
        %v1760 = vsel %vm1038, %v1758, %v1759
        %v1761 = vrot.slane %v1727, 5
        %v1762 = vrot.slane %v1761, 4
        %v1763 = vrot.slane %v1728, 5
        %v1764 = vsel %vm1038, %v1762, %v1763
        %v1765 = vrot.slane %v1729, 5
        %v1766 = vrot.slane %v1765, 4
        %v1767 = vrot.slane %v1730, 5
        %v1768 = vsel %vm1038, %v1766, %v1767
        %v1769 = vrot.slane %v1731, 5
        %v1770 = vrot.slane %v1769, 4
        %v1771 = vrot.slane %v1732, 5
        %v1772 = vsel %vm1038, %v1770, %v1771
        %v1773 = vrot.slane %v1733, 5
        %v1774 = vrot.slane %v1773, 4
        %v1775 = vrot.slane %v1734, 5
        %v1776 = vsel %vm1038, %v1774, %v1775
        %v1777 = vrot.slane %v1735, 5
        %v1778 = vrot.slane %v1777, 4
        %v1779 = vrot.slane %v1736, 5
        %v1780 = vsel %vm1038, %v1778, %v1779
        %v1781 = vrot.slane %v1737, 5
        %v1782 = vrot.slane %v1781, 4
        %v1783 = vrot.slane %v1738, 5
        %v1784 = vsel %vm1038, %v1782, %v1783
        %v1785 = vrot.slane %v1739, 5
        %v1786 = vrot.slane %v1785, 4
        %v1787 = vrot.slane %v1740, 5
        %v1788 = vsel %vm1038, %v1786, %v1787
        %s1789 = scalar_lea.vmem %s1, 320
        %v1790 = vld [vmem:[%s1789] sm:$0xf]
        %v1791 = vld [vmem:[%s1789 + $0x4] sm:$0xf]
        %v1792 = vld [vmem:[%s1789 + $0x8] sm:$0xf]
        %v1793 = vld [vmem:[%s1789 + $0xc] sm:$0xf]
        %v1794 = vld [vmem:[%s1789 + $0x10] sm:$0xf]
        %v1795 = vld [vmem:[%s1789 + $0x14] sm:$0xf]
        %v1796 = vld [vmem:[%s1789 + $0x18] sm:$0xf]
        %v1797 = vld [vmem:[%s1789 + $0x1c] sm:$0xf]
        %v1798 = vld [vmem:[%s1789 + $0x20] sm:$0xf]
        %v1799 = vld [vmem:[%s1789 + $0x24] sm:$0xf]
        %v1800 = vld [vmem:[%s1789 + $0x28] sm:$0xf]
        %v1801 = vld [vmem:[%s1789 + $0x2c] sm:$0xf]
        %v1802 = vld [vmem:[%s1789 + $0x30] sm:$0xf]
        %v1803 = vld [vmem:[%s1789 + $0x34] sm:$0xf]
        %v1804 = vld [vmem:[%s1789 + $0x38] sm:$0xf]
        %v1805 = vld [vmem:[%s1789 + $0x3c] sm:$0xf]
        %v1806 = vunpack.c.l.b16 %v1760
        %v1807 = vunpack.c.l.b16 %v1764
        %v1808 = vunpack.c.l.b16 %v1768
        %v1809 = vunpack.c.l.b16 %v1772
        %v1810 = vunpack.c.l.b16 %v1776
        %v1811 = vunpack.c.l.b16 %v1780
        %v1812 = vunpack.c.l.b16 %v1784
        %v1813 = vunpack.c.l.b16 %v1788
        %v1814 = vpack.c.b16 %v1807, %v1806
        %v1815 = vpack.c.b16 %v1809, %v1808
        %v1816 = vpack.c.b16 %v1811, %v1810
        %v1817 = vpack.c.b16 %v1813, %v1812
        %v1838 = vunpack.c.l.b16 %v1790
        %v1839 = vunpack.c.l.b16 %v1791
        %v1840 = vunpack.c.l.b16 %v1792
        %v1841 = vunpack.c.l.b16 %v1793
        %v1842 = vunpack.c.l.b16 %v1794
        %v1843 = vunpack.c.l.b16 %v1795
        %v1844 = vunpack.c.l.b16 %v1796
        %v1845 = vunpack.c.l.b16 %v1797
        %v1846 = vunpack.c.l.b16 %v1798
        %v1847 = vunpack.c.l.b16 %v1799
        %v1848 = vunpack.c.l.b16 %v1800
        %v1849 = vunpack.c.l.b16 %v1801
        %v1850 = vunpack.c.l.b16 %v1802
        %v1851 = vunpack.c.l.b16 %v1803
        %v1852 = vunpack.c.l.b16 %v1804
        %v1853 = vunpack.c.l.b16 %v1805
        %v1854 = vpack.c.b16 %v1839, %v1838
        %v1855 = vpack.c.b16 %v1841, %v1840
        %v1856 = vpack.c.b16 %v1843, %v1842
        %v1857 = vpack.c.b16 %v1845, %v1844
        %v1858 = vpack.c.b16 %v1847, %v1846
        %v1859 = vpack.c.b16 %v1849, %v1848
        %v1860 = vpack.c.b16 %v1851, %v1850
        %v1861 = vpack.c.b16 %v1853, %v1852
        %1870 = vmatprep.subr.bf16.mxu0 0
        %1871 = vmatpush1.bf16.msra.mxu0 %v1854
        %1872 = vmatprep.subr.bf16.mxu0 0
        %1873 = vmatpush1.bf16.msra.mxu0 %v1855
        %1874 = vmatprep.subr.bf16.mxu0 0
        %1875 = vmatpush1.bf16.msra.mxu0 %v1856
        %1876 = vmatprep.subr.bf16.mxu0 0
        %1877 = vmatpush1.bf16.msra.mxu0 %v1857
        %1878 = vmatprep.subr.bf16.mxu0 0
        %1879 = vmatpush1.bf16.msra.mxu0 %v1858
        %1880 = vmatprep.subr.bf16.mxu0 0
        %1881 = vmatpush1.bf16.msra.mxu0 %v1859
        %1882 = vmatprep.subr.bf16.mxu0 0
        %1883 = vmatpush1.bf16.msra.mxu0 %v1860
        %1884 = vmatprep.subr.bf16.mxu0 0
        %1885 = vmatpush1.bf16.msra.mxu0 %v1861
        %1886 = vmatprep.subr.bf16.mxu0 0
        %1887 = vmatpush1.bf16.msra.mxu0 0
        %1888 = vmatprep.subr.bf16.mxu0 0
        %1889 = vmatpush1.bf16.msra.mxu0 0
        %1890 = vmatprep.subr.bf16.mxu0 0
        %1891 = vmatpush1.bf16.msra.mxu0 0
        %1892 = vmatprep.subr.bf16.mxu0 0
        %1893 = vmatpush1.bf16.msra.mxu0 0
        %1894 = vmatprep.subr.bf16.mxu0 0
        %1895 = vmatpush1.bf16.msra.mxu0 0
        %1896 = vmatprep.subr.bf16.mxu0 0
        %1897 = vmatpush1.bf16.msra.mxu0 0
        %1898 = vmatprep.subr.bf16.mxu0 0
        %1899 = vmatpush1.bf16.msra.mxu0 0
        %1900 = vmatprep.subr.bf16.mxu0 0
        %1901 = vmatpush1.bf16.msra.mxu0 0
        %1902 = vmatprep.mubr.bf16.mxu0 0
        %1903 = vmatmul.mubr.bf16.gmra.mrb[0].mxu0 %v1814
        %v1904 = vpop.f32.mrb[0].mxu0
        %v1905 = vadd.f32 0.0, %v1904
        %v1906 = vpop.f32.mrb[0].mxu0
        %v1907 = vpop.f32.mrb[0].mxu0
        %v1908 = vadd.f32 0.0, %v1907
        %v1909 = vpop.f32.mrb[0].mxu0
        %1910 = vmatprep.mubr.bf16.mxu0 0
        %1911 = vmatmul.mubr.bf16.gmra.mrb[0].mxu0 %v1815
        %v1912 = vpop.f32.mrb[0].mxu0
        %v1913 = vadd.f32 0.0, %v1912
        %v1914 = vpop.f32.mrb[0].mxu0
        %v1915 = vpop.f32.mrb[0].mxu0
        %v1916 = vadd.f32 0.0, %v1915
        %v1917 = vpop.f32.mrb[0].mxu0
        %1918 = vmatprep.mubr.bf16.mxu0 0
        %1919 = vmatmul.mubr.bf16.gmra.mrb[0].mxu0 %v1816
        %v1920 = vpop.f32.mrb[0].mxu0
        %v1921 = vadd.f32 0.0, %v1920
        %v1922 = vpop.f32.mrb[0].mxu0
        %v1923 = vpop.f32.mrb[0].mxu0
        %v1924 = vadd.f32 0.0, %v1923
        %v1925 = vpop.f32.mrb[0].mxu0
        %1926 = vmatprep.mubr.bf16.mxu0 0
        %1927 = vmatmul.mubr.bf16.gmra.mrb[0].mxu0 %v1817
        %v1928 = vpop.f32.mrb[0].mxu0
        %v1929 = vadd.f32 0.0, %v1928
        %v1930 = vpop.f32.mrb[0].mxu0
        %v1931 = vpop.f32.mrb[0].mxu0
        %v1932 = vadd.f32 0.0, %v1931
        %v1933 = vpop.f32.mrb[0].mxu0
        %1934 = vdwg.mxu0
        %v1935 = vld [vmem:[#allocation3] sm:$0xff]
        %v1936 = vld [vmem:[#allocation3 + $0x8] sm:$0xff]
        %v1937 = vld [vmem:[#allocation3 + $0x10] sm:$0xff]
        %v1938 = vld [vmem:[#allocation3 + $0x18] sm:$0xff]
        %v1939 = vld [vmem:[#allocation3 + $0x20] sm:$0xff]
        %v1940 = vld [vmem:[#allocation3 + $0x28] sm:$0xff]
        %v1941 = vld [vmem:[#allocation3 + $0x30] sm:$0xff]
        %v1942 = vld [vmem:[#allocation3 + $0x38] sm:$0xff]
        %v1943 = vadd.f32 %v1935, %v1905
        %v1944 = vadd.f32 %v1936, %v1908
        %v1945 = vadd.f32 %v1937, %v1913
        %v1946 = vadd.f32 %v1938, %v1916
        %v1947 = vadd.f32 %v1939, %v1921
        %v1948 = vadd.f32 %v1940, %v1924
        %v1949 = vadd.f32 %v1941, %v1929
        %v1950 = vadd.f32 %v1942, %v1932
        %1951 = vst [vmem:[#allocation3] sm:$0xff] %v1943
        %1952 = vst [vmem:[#allocation3 + $0x8] sm:$0xff] %v1944
        %1953 = vst [vmem:[#allocation3 + $0x10] sm:$0xff] %v1945
        %1954 = vst [vmem:[#allocation3 + $0x18] sm:$0xff] %v1946
        %1955 = vst [vmem:[#allocation3 + $0x20] sm:$0xff] %v1947
        %1956 = vst [vmem:[#allocation3 + $0x28] sm:$0xff] %v1948
        %1957 = vst [vmem:[#allocation3 + $0x30] sm:$0xff] %v1949
        %1958 = vst [vmem:[#allocation3 + $0x38] sm:$0xff] %v1950
        %s1959 = scalar_lea.vmem [#allocation2], 16
        %v1960 = vld [vmem:[%s1959] sm:$0xf]
        %v1961 = vld [vmem:[%s1959 + $0x8] sm:$0xf]
        %v1962 = vld [vmem:[%s1959 + $0x10] sm:$0xf]
        %v1963 = vld [vmem:[%s1959 + $0x18] sm:$0xf]
        %v1964 = vld [vmem:[%s1959 + $0x20] sm:$0xf]
        %v1965 = vld [vmem:[%s1959 + $0x28] sm:$0xf]
        %v1966 = vld [vmem:[%s1959 + $0x30] sm:$0xf]
        %v1967 = vld [vmem:[%s1959 + $0x38] sm:$0xf]
        %s1968 = scalar_lea.vmem %s1, 384
        %v1969 = vld [vmem:[%s1968] sm:$0xf]
        %v1970 = vld [vmem:[%s1968 + $0x4] sm:$0xf]
        %v1971 = vld [vmem:[%s1968 + $0x8] sm:$0xf]
        %v1972 = vld [vmem:[%s1968 + $0xc] sm:$0xf]
        %v1973 = vld [vmem:[%s1968 + $0x10] sm:$0xf]
        %v1974 = vld [vmem:[%s1968 + $0x14] sm:$0xf]
        %v1975 = vld [vmem:[%s1968 + $0x18] sm:$0xf]
        %v1976 = vld [vmem:[%s1968 + $0x1c] sm:$0xf]
        %v1977 = vld [vmem:[%s1968 + $0x20] sm:$0xf]
        %v1978 = vld [vmem:[%s1968 + $0x24] sm:$0xf]
        %v1979 = vld [vmem:[%s1968 + $0x28] sm:$0xf]
        %v1980 = vld [vmem:[%s1968 + $0x2c] sm:$0xf]
        %v1981 = vld [vmem:[%s1968 + $0x30] sm:$0xf]
        %v1982 = vld [vmem:[%s1968 + $0x34] sm:$0xf]
        %v1983 = vld [vmem:[%s1968 + $0x38] sm:$0xf]
        %v1984 = vld [vmem:[%s1968 + $0x3c] sm:$0xf]
        %v1993 = vunpack.c.l.b16 %v1960
        %v1994 = vunpack.c.l.b16 %v1961
        %v1995 = vunpack.c.l.b16 %v1962
        %v1996 = vunpack.c.l.b16 %v1963
        %v1997 = vunpack.c.l.b16 %v1964
        %v1998 = vunpack.c.l.b16 %v1965
        %v1999 = vunpack.c.l.b16 %v1966
        %v2000 = vunpack.c.l.b16 %v1967
        %v2001 = vpack.c.b16 %v1994, %v1993
        %v2002 = vpack.c.b16 %v1996, %v1995
        %v2003 = vpack.c.b16 %v1998, %v1997
        %v2004 = vpack.c.b16 %v2000, %v1999
        %v2025 = vunpack.c.l.b16 %v1969
        %v2026 = vunpack.c.l.b16 %v1970
        %v2027 = vunpack.c.l.b16 %v1971
        %v2028 = vunpack.c.l.b16 %v1972
        %v2029 = vunpack.c.l.b16 %v1973
        %v2030 = vunpack.c.l.b16 %v1974
        %v2031 = vunpack.c.l.b16 %v1975
        %v2032 = vunpack.c.l.b16 %v1976
        %v2033 = vunpack.c.l.b16 %v1977
        %v2034 = vunpack.c.l.b16 %v1978
        %v2035 = vunpack.c.l.b16 %v1979
        %v2036 = vunpack.c.l.b16 %v1980
        %v2037 = vunpack.c.l.b16 %v1981
        %v2038 = vunpack.c.l.b16 %v1982
        %v2039 = vunpack.c.l.b16 %v1983
        %v2040 = vunpack.c.l.b16 %v1984
        %v2041 = vpack.c.b16 %v2026, %v2025
        %v2042 = vpack.c.b16 %v2028, %v2027
        %v2043 = vpack.c.b16 %v2030, %v2029
        %v2044 = vpack.c.b16 %v2032, %v2031
        %v2045 = vpack.c.b16 %v2034, %v2033
        %v2046 = vpack.c.b16 %v2036, %v2035
        %v2047 = vpack.c.b16 %v2038, %v2037
        %v2048 = vpack.c.b16 %v2040, %v2039
        %2057 = vmatprep.subr.bf16.mxu0 0
        %2058 = vmatpush1.bf16.msra.mxu0 %v2041
        %2059 = vmatprep.subr.bf16.mxu0 0
        %2060 = vmatpush1.bf16.msra.mxu0 %v2042
        %2061 = vmatprep.subr.bf16.mxu0 0
        %2062 = vmatpush1.bf16.msra.mxu0 %v2043
        %2063 = vmatprep.subr.bf16.mxu0 0
        %2064 = vmatpush1.bf16.msra.mxu0 %v2044
        %2065 = vmatprep.subr.bf16.mxu0 0
        %2066 = vmatpush1.bf16.msra.mxu0 %v2045
        %2067 = vmatprep.subr.bf16.mxu0 0
        %2068 = vmatpush1.bf16.msra.mxu0 %v2046
        %2069 = vmatprep.subr.bf16.mxu0 0
        %2070 = vmatpush1.bf16.msra.mxu0 %v2047
        %2071 = vmatprep.subr.bf16.mxu0 0
        %2072 = vmatpush1.bf16.msra.mxu0 %v2048
        %2073 = vmatprep.subr.bf16.mxu0 0
        %2074 = vmatpush1.bf16.msra.mxu0 0
        %2075 = vmatprep.subr.bf16.mxu0 0
        %2076 = vmatpush1.bf16.msra.mxu0 0
        %2077 = vmatprep.subr.bf16.mxu0 0
        %2078 = vmatpush1.bf16.msra.mxu0 0
        %2079 = vmatprep.subr.bf16.mxu0 0
        %2080 = vmatpush1.bf16.msra.mxu0 0
        %2081 = vmatprep.subr.bf16.mxu0 0
        %2082 = vmatpush1.bf16.msra.mxu0 0
        %2083 = vmatprep.subr.bf16.mxu0 0
        %2084 = vmatpush1.bf16.msra.mxu0 0
        %2085 = vmatprep.subr.bf16.mxu0 0
        %2086 = vmatpush1.bf16.msra.mxu0 0
        %2087 = vmatprep.subr.bf16.mxu0 0
        %2088 = vmatpush1.bf16.msra.mxu0 0
        %2089 = vmatprep.mubr.bf16.mxu0 0
        %2090 = vmatmul.mubr.bf16.gmra.mrb[0].mxu0 %v2001
        %v2091 = vpop.f32.mrb[0].mxu0
        %v2092 = vadd.f32 0.0, %v2091
        %v2093 = vpop.f32.mrb[0].mxu0
        %v2094 = vpop.f32.mrb[0].mxu0
        %v2095 = vadd.f32 0.0, %v2094
        %v2096 = vpop.f32.mrb[0].mxu0
        %2097 = vmatprep.mubr.bf16.mxu0 0
        %2098 = vmatmul.mubr.bf16.gmra.mrb[0].mxu0 %v2002
        %v2099 = vpop.f32.mrb[0].mxu0
        %v2100 = vadd.f32 0.0, %v2099
        %v2101 = vpop.f32.mrb[0].mxu0
        %v2102 = vpop.f32.mrb[0].mxu0
        %v2103 = vadd.f32 0.0, %v2102
        %v2104 = vpop.f32.mrb[0].mxu0
        %2105 = vmatprep.mubr.bf16.mxu0 0
        %2106 = vmatmul.mubr.bf16.gmra.mrb[0].mxu0 %v2003
        %v2107 = vpop.f32.mrb[0].mxu0
        %v2108 = vadd.f32 0.0, %v2107
        %v2109 = vpop.f32.mrb[0].mxu0
        %v2110 = vpop.f32.mrb[0].mxu0
        %v2111 = vadd.f32 0.0, %v2110
        %v2112 = vpop.f32.mrb[0].mxu0
        %2113 = vmatprep.mubr.bf16.mxu0 0
        %2114 = vmatmul.mubr.bf16.gmra.mrb[0].mxu0 %v2004
        %v2115 = vpop.f32.mrb[0].mxu0
        %v2116 = vadd.f32 0.0, %v2115
        %v2117 = vpop.f32.mrb[0].mxu0
        %v2118 = vpop.f32.mrb[0].mxu0
        %v2119 = vadd.f32 0.0, %v2118
        %v2120 = vpop.f32.mrb[0].mxu0
        %2121 = vdwg.mxu0
        %v2122 = vld [vmem:[#allocation3] sm:$0xff]
        %v2123 = vld [vmem:[#allocation3 + $0x8] sm:$0xff]
        %v2124 = vld [vmem:[#allocation3 + $0x10] sm:$0xff]
        %v2125 = vld [vmem:[#allocation3 + $0x18] sm:$0xff]
        %v2126 = vld [vmem:[#allocation3 + $0x20] sm:$0xff]
        %v2127 = vld [vmem:[#allocation3 + $0x28] sm:$0xff]
        %v2128 = vld [vmem:[#allocation3 + $0x30] sm:$0xff]
        %v2129 = vld [vmem:[#allocation3 + $0x38] sm:$0xff]
        %v2130 = vadd.f32 %v2122, %v2092
        %v2131 = vadd.f32 %v2123, %v2095
        %v2132 = vadd.f32 %v2124, %v2100
        %v2133 = vadd.f32 %v2125, %v2103
        %v2134 = vadd.f32 %v2126, %v2108
        %v2135 = vadd.f32 %v2127, %v2111
        %v2136 = vadd.f32 %v2128, %v2116
        %v2137 = vadd.f32 %v2129, %v2119
        %2138 = vst [vmem:[#allocation3] sm:$0xff] %v2130
        %2139 = vst [vmem:[#allocation3 + $0x8] sm:$0xff] %v2131
        %2140 = vst [vmem:[#allocation3 + $0x10] sm:$0xff] %v2132
        %2141 = vst [vmem:[#allocation3 + $0x18] sm:$0xff] %v2133
        %2142 = vst [vmem:[#allocation3 + $0x20] sm:$0xff] %v2134
        %2143 = vst [vmem:[#allocation3 + $0x28] sm:$0xff] %v2135
        %2144 = vst [vmem:[#allocation3 + $0x30] sm:$0xff] %v2136
        %2145 = vst [vmem:[#allocation3 + $0x38] sm:$0xff] %v2137
        %v2146 = vld [vmem:[%s1959] sm:$0xf]
        %v2147 = vld [vmem:[%s1959 + $0x4] sm:$0x1]
        %v2148 = vld [vmem:[%s1959 + $0x8] sm:$0xf]
        %v2149 = vld [vmem:[%s1959 + $0xc] sm:$0x1]
        %v2150 = vld [vmem:[%s1959 + $0x10] sm:$0xf]
        %v2151 = vld [vmem:[%s1959 + $0x14] sm:$0x1]
        %v2152 = vld [vmem:[%s1959 + $0x18] sm:$0xf]
        %v2153 = vld [vmem:[%s1959 + $0x1c] sm:$0x1]
        %v2154 = vld [vmem:[%s1959 + $0x20] sm:$0xf]
        %v2155 = vld [vmem:[%s1959 + $0x24] sm:$0x1]
        %v2156 = vld [vmem:[%s1959 + $0x28] sm:$0xf]
        %v2157 = vld [vmem:[%s1959 + $0x2c] sm:$0x1]
        %v2158 = vld [vmem:[%s1959 + $0x30] sm:$0xf]
        %v2159 = vld [vmem:[%s1959 + $0x34] sm:$0x1]
        %v2160 = vld [vmem:[%s1959 + $0x38] sm:$0xf]
        %v2161 = vld [vmem:[%s1959 + $0x3c] sm:$0x1]
        %v2163 = vshrl.u32 %v2146, 16
        %v2165 = vrot.slane %v2163, 4
        %v2166 = vshll.u32 %v2146, 16
        %v2168 = vrot.slane %v2166, 5
        %v2169 = vor.u32 %v2165, %v2168
        %v2170 = vrot.slane %v2169, 4
        %v2172 = vshll.u32 %v2147, 16
        %v2174 = vrot.slane %v2172, 5
        %v2175 = vsel %vm721, %v2170, %v2174
        %v2177 = vshrl.u32 %v2148, 16
        %v2179 = vrot.slane %v2177, 4
        %v2180 = vshll.u32 %v2148, 16
        %v2182 = vrot.slane %v2180, 5
        %v2183 = vor.u32 %v2179, %v2182
        %v2184 = vrot.slane %v2183, 4
        %v2186 = vshll.u32 %v2149, 16
        %v2188 = vrot.slane %v2186, 5
        %v2189 = vsel %vm721, %v2184, %v2188
        %v2191 = vshrl.u32 %v2150, 16
        %v2193 = vrot.slane %v2191, 4
        %v2194 = vshll.u32 %v2150, 16
        %v2196 = vrot.slane %v2194, 5
        %v2197 = vor.u32 %v2193, %v2196
        %v2198 = vrot.slane %v2197, 4
        %v2200 = vshll.u32 %v2151, 16
        %v2202 = vrot.slane %v2200, 5
        %v2203 = vsel %vm721, %v2198, %v2202
        %v2205 = vshrl.u32 %v2152, 16
        %v2207 = vrot.slane %v2205, 4
        %v2208 = vshll.u32 %v2152, 16
        %v2210 = vrot.slane %v2208, 5
        %v2211 = vor.u32 %v2207, %v2210
        %v2212 = vrot.slane %v2211, 4
        %v2214 = vshll.u32 %v2153, 16
        %v2216 = vrot.slane %v2214, 5
        %v2217 = vsel %vm721, %v2212, %v2216
        %v2219 = vshrl.u32 %v2154, 16
        %v2221 = vrot.slane %v2219, 4
        %v2222 = vshll.u32 %v2154, 16
        %v2224 = vrot.slane %v2222, 5
        %v2225 = vor.u32 %v2221, %v2224
        %v2226 = vrot.slane %v2225, 4
        %v2228 = vshll.u32 %v2155, 16
        %v2230 = vrot.slane %v2228, 5
        %v2231 = vsel %vm721, %v2226, %v2230
        %v2233 = vshrl.u32 %v2156, 16
        %v2235 = vrot.slane %v2233, 4
        %v2236 = vshll.u32 %v2156, 16
        %v2238 = vrot.slane %v2236, 5
        %v2239 = vor.u32 %v2235, %v2238
        %v2240 = vrot.slane %v2239, 4
        %v2242 = vshll.u32 %v2157, 16
        %v2244 = vrot.slane %v2242, 5
        %v2245 = vsel %vm721, %v2240, %v2244
        %v2247 = vshrl.u32 %v2158, 16
        %v2249 = vrot.slane %v2247, 4
        %v2250 = vshll.u32 %v2158, 16
        %v2252 = vrot.slane %v2250, 5
        %v2253 = vor.u32 %v2249, %v2252
        %v2254 = vrot.slane %v2253, 4
        %v2256 = vshll.u32 %v2159, 16
        %v2258 = vrot.slane %v2256, 5
        %v2259 = vsel %vm721, %v2254, %v2258
        %v2261 = vshrl.u32 %v2160, 16
        %v2263 = vrot.slane %v2261, 4
        %v2264 = vshll.u32 %v2160, 16
        %v2266 = vrot.slane %v2264, 5
        %v2267 = vor.u32 %v2263, %v2266
        %v2268 = vrot.slane %v2267, 4
        %v2270 = vshll.u32 %v2161, 16
        %v2272 = vrot.slane %v2270, 5
        %v2273 = vsel %vm721, %v2268, %v2272
        %s2274 = scalar_lea.vmem %s1, 448
        %v2275 = vld [vmem:[%s2274] sm:$0xf]
        %v2276 = vld [vmem:[%s2274 + $0x4] sm:$0xf]
        %v2277 = vld [vmem:[%s2274 + $0x8] sm:$0xf]
        %v2278 = vld [vmem:[%s2274 + $0xc] sm:$0xf]
        %v2279 = vld [vmem:[%s2274 + $0x10] sm:$0xf]
        %v2280 = vld [vmem:[%s2274 + $0x14] sm:$0xf]
        %v2281 = vld [vmem:[%s2274 + $0x18] sm:$0xf]
        %v2282 = vld [vmem:[%s2274 + $0x1c] sm:$0xf]
        %v2283 = vld [vmem:[%s2274 + $0x20] sm:$0xf]
        %v2284 = vld [vmem:[%s2274 + $0x24] sm:$0xf]
        %v2285 = vld [vmem:[%s2274 + $0x28] sm:$0xf]
        %v2286 = vld [vmem:[%s2274 + $0x2c] sm:$0xf]
        %v2287 = vld [vmem:[%s2274 + $0x30] sm:$0xf]
        %v2288 = vld [vmem:[%s2274 + $0x34] sm:$0xf]
        %v2289 = vld [vmem:[%s2274 + $0x38] sm:$0xf]
        %v2290 = vld [vmem:[%s2274 + $0x3c] sm:$0xf]
        %v2291 = vunpack.c.l.b16 %v2175
        %v2292 = vunpack.c.l.b16 %v2189
        %v2293 = vunpack.c.l.b16 %v2203
        %v2294 = vunpack.c.l.b16 %v2217
        %v2295 = vunpack.c.l.b16 %v2231
        %v2296 = vunpack.c.l.b16 %v2245
        %v2297 = vunpack.c.l.b16 %v2259
        %v2298 = vunpack.c.l.b16 %v2273
        %v2299 = vpack.c.b16 %v2292, %v2291
        %v2300 = vpack.c.b16 %v2294, %v2293
        %v2301 = vpack.c.b16 %v2296, %v2295
        %v2302 = vpack.c.b16 %v2298, %v2297
        %v2323 = vunpack.c.l.b16 %v2275
        %v2324 = vunpack.c.l.b16 %v2276
        %v2325 = vunpack.c.l.b16 %v2277
        %v2326 = vunpack.c.l.b16 %v2278
        %v2327 = vunpack.c.l.b16 %v2279
        %v2328 = vunpack.c.l.b16 %v2280
        %v2329 = vunpack.c.l.b16 %v2281
        %v2330 = vunpack.c.l.b16 %v2282
        %v2331 = vunpack.c.l.b16 %v2283
        %v2332 = vunpack.c.l.b16 %v2284
        %v2333 = vunpack.c.l.b16 %v2285
        %v2334 = vunpack.c.l.b16 %v2286
        %v2335 = vunpack.c.l.b16 %v2287
        %v2336 = vunpack.c.l.b16 %v2288
        %v2337 = vunpack.c.l.b16 %v2289
        %v2338 = vunpack.c.l.b16 %v2290
        %v2339 = vpack.c.b16 %v2324, %v2323
        %v2340 = vpack.c.b16 %v2326, %v2325
        %v2341 = vpack.c.b16 %v2328, %v2327
        %v2342 = vpack.c.b16 %v2330, %v2329
        %v2343 = vpack.c.b16 %v2332, %v2331
        %v2344 = vpack.c.b16 %v2334, %v2333
        %v2345 = vpack.c.b16 %v2336, %v2335
        %v2346 = vpack.c.b16 %v2338, %v2337
        %2355 = vmatprep.subr.bf16.mxu0 0
        %2356 = vmatpush1.bf16.msra.mxu0 %v2339
        %2357 = vmatprep.subr.bf16.mxu0 0
        %2358 = vmatpush1.bf16.msra.mxu0 %v2340
        %2359 = vmatprep.subr.bf16.mxu0 0
        %2360 = vmatpush1.bf16.msra.mxu0 %v2341
        %2361 = vmatprep.subr.bf16.mxu0 0
        %2362 = vmatpush1.bf16.msra.mxu0 %v2342
        %2363 = vmatprep.subr.bf16.mxu0 0
        %2364 = vmatpush1.bf16.msra.mxu0 %v2343
        %2365 = vmatprep.subr.bf16.mxu0 0
        %2366 = vmatpush1.bf16.msra.mxu0 %v2344
        %2367 = vmatprep.subr.bf16.mxu0 0
        %2368 = vmatpush1.bf16.msra.mxu0 %v2345
        %2369 = vmatprep.subr.bf16.mxu0 0
        %2370 = vmatpush1.bf16.msra.mxu0 %v2346
        %2371 = vmatprep.subr.bf16.mxu0 0
        %2372 = vmatpush1.bf16.msra.mxu0 0
        %2373 = vmatprep.subr.bf16.mxu0 0
        %2374 = vmatpush1.bf16.msra.mxu0 0
        %2375 = vmatprep.subr.bf16.mxu0 0
        %2376 = vmatpush1.bf16.msra.mxu0 0
        %2377 = vmatprep.subr.bf16.mxu0 0
        %2378 = vmatpush1.bf16.msra.mxu0 0
        %2379 = vmatprep.subr.bf16.mxu0 0
        %2380 = vmatpush1.bf16.msra.mxu0 0
        %2381 = vmatprep.subr.bf16.mxu0 0
        %2382 = vmatpush1.bf16.msra.mxu0 0
        %2383 = vmatprep.subr.bf16.mxu0 0
        %2384 = vmatpush1.bf16.msra.mxu0 0
        %2385 = vmatprep.subr.bf16.mxu0 0
        %2386 = vmatpush1.bf16.msra.mxu0 0
        %2387 = vmatprep.mubr.bf16.mxu0 0
        %2388 = vmatmul.mubr.bf16.gmra.mrb[0].mxu0 %v2299
        %v2389 = vpop.f32.mrb[0].mxu0
        %v2390 = vadd.f32 0.0, %v2389
        %v2391 = vpop.f32.mrb[0].mxu0
        %v2392 = vpop.f32.mrb[0].mxu0
        %v2393 = vadd.f32 0.0, %v2392
        %v2394 = vpop.f32.mrb[0].mxu0
        %2395 = vmatprep.mubr.bf16.mxu0 0
        %2396 = vmatmul.mubr.bf16.gmra.mrb[0].mxu0 %v2300
        %v2397 = vpop.f32.mrb[0].mxu0
        %v2398 = vadd.f32 0.0, %v2397
        %v2399 = vpop.f32.mrb[0].mxu0
        %v2400 = vpop.f32.mrb[0].mxu0
        %v2401 = vadd.f32 0.0, %v2400
        %v2402 = vpop.f32.mrb[0].mxu0
        %2403 = vmatprep.mubr.bf16.mxu0 0
        %2404 = vmatmul.mubr.bf16.gmra.mrb[0].mxu0 %v2301
        %v2405 = vpop.f32.mrb[0].mxu0
        %v2406 = vadd.f32 0.0, %v2405
        %v2407 = vpop.f32.mrb[0].mxu0
        %v2408 = vpop.f32.mrb[0].mxu0
        %v2409 = vadd.f32 0.0, %v2408
        %v2410 = vpop.f32.mrb[0].mxu0
        %2411 = vmatprep.mubr.bf16.mxu0 0
        %2412 = vmatmul.mubr.bf16.gmra.mrb[0].mxu0 %v2302
        %v2413 = vpop.f32.mrb[0].mxu0
        %v2414 = vadd.f32 0.0, %v2413
        %v2415 = vpop.f32.mrb[0].mxu0
        %v2416 = vpop.f32.mrb[0].mxu0
        %v2417 = vadd.f32 0.0, %v2416
        %v2418 = vpop.f32.mrb[0].mxu0
        %2419 = vdwg.mxu0
        %v2420 = vld [vmem:[#allocation3] sm:$0xff]
        %v2421 = vld [vmem:[#allocation3 + $0x8] sm:$0xff]
        %v2422 = vld [vmem:[#allocation3 + $0x10] sm:$0xff]
        %v2423 = vld [vmem:[#allocation3 + $0x18] sm:$0xff]
        %v2424 = vld [vmem:[#allocation3 + $0x20] sm:$0xff]
        %v2425 = vld [vmem:[#allocation3 + $0x28] sm:$0xff]
        %v2426 = vld [vmem:[#allocation3 + $0x30] sm:$0xff]
        %v2427 = vld [vmem:[#allocation3 + $0x38] sm:$0xff]
        %v2428 = vadd.f32 %v2420, %v2390
        %v2429 = vadd.f32 %v2421, %v2393
        %v2430 = vadd.f32 %v2422, %v2398
        %v2431 = vadd.f32 %v2423, %v2401
        %v2432 = vadd.f32 %v2424, %v2406
        %v2433 = vadd.f32 %v2425, %v2409
        %v2434 = vadd.f32 %v2426, %v2414
        %v2435 = vadd.f32 %v2427, %v2417
        %2436 = vst [vmem:[#allocation3] sm:$0xff] %v2428
        %2437 = vst [vmem:[#allocation3 + $0x8] sm:$0xff] %v2429
        %2438 = vst [vmem:[#allocation3 + $0x10] sm:$0xff] %v2430
        %2439 = vst [vmem:[#allocation3 + $0x18] sm:$0xff] %v2431
        %2440 = vst [vmem:[#allocation3 + $0x20] sm:$0xff] %v2432
        %2441 = vst [vmem:[#allocation3 + $0x28] sm:$0xff] %v2433
        %2442 = vst [vmem:[#allocation3 + $0x30] sm:$0xff] %v2434
        %2443 = vst [vmem:[#allocation3 + $0x38] sm:$0xff] %v2435
        %v2444 = vld [vmem:[%s1959] sm:$0xe]
        %v2445 = vld [vmem:[%s1959 + $0x4] sm:$0x1]
        %v2446 = vld [vmem:[%s1959 + $0x8] sm:$0xe]
        %v2447 = vld [vmem:[%s1959 + $0xc] sm:$0x1]
        %v2448 = vld [vmem:[%s1959 + $0x10] sm:$0xe]
        %v2449 = vld [vmem:[%s1959 + $0x14] sm:$0x1]
        %v2450 = vld [vmem:[%s1959 + $0x18] sm:$0xe]
        %v2451 = vld [vmem:[%s1959 + $0x1c] sm:$0x1]
        %v2452 = vld [vmem:[%s1959 + $0x20] sm:$0xe]
        %v2453 = vld [vmem:[%s1959 + $0x24] sm:$0x1]
        %v2454 = vld [vmem:[%s1959 + $0x28] sm:$0xe]
        %v2455 = vld [vmem:[%s1959 + $0x2c] sm:$0x1]
        %v2456 = vld [vmem:[%s1959 + $0x30] sm:$0xe]
        %v2457 = vld [vmem:[%s1959 + $0x34] sm:$0x1]
        %v2458 = vld [vmem:[%s1959 + $0x38] sm:$0xe]
        %v2459 = vld [vmem:[%s1959 + $0x3c] sm:$0x1]
        %v2476 = vrot.slane %v2444, 5
        %v2477 = vrot.slane %v2476, 4
        %v2478 = vrot.slane %v2445, 5
        %v2479 = vsel %vm1038, %v2477, %v2478
        %v2480 = vrot.slane %v2446, 5
        %v2481 = vrot.slane %v2480, 4
        %v2482 = vrot.slane %v2447, 5
        %v2483 = vsel %vm1038, %v2481, %v2482
        %v2484 = vrot.slane %v2448, 5
        %v2485 = vrot.slane %v2484, 4
        %v2486 = vrot.slane %v2449, 5
        %v2487 = vsel %vm1038, %v2485, %v2486
        %v2488 = vrot.slane %v2450, 5
        %v2489 = vrot.slane %v2488, 4
        %v2490 = vrot.slane %v2451, 5
        %v2491 = vsel %vm1038, %v2489, %v2490
        %v2492 = vrot.slane %v2452, 5
        %v2493 = vrot.slane %v2492, 4
        %v2494 = vrot.slane %v2453, 5
        %v2495 = vsel %vm1038, %v2493, %v2494
        %v2496 = vrot.slane %v2454, 5
        %v2497 = vrot.slane %v2496, 4
        %v2498 = vrot.slane %v2455, 5
        %v2499 = vsel %vm1038, %v2497, %v2498
        %v2500 = vrot.slane %v2456, 5
        %v2501 = vrot.slane %v2500, 4
        %v2502 = vrot.slane %v2457, 5
        %v2503 = vsel %vm1038, %v2501, %v2502
        %v2504 = vrot.slane %v2458, 5
        %v2505 = vrot.slane %v2504, 4
        %v2506 = vrot.slane %v2459, 5
        %v2507 = vsel %vm1038, %v2505, %v2506
        %s2508 = scalar_lea.vmem %s1, 512
        %v2509 = vld [vmem:[%s2508] sm:$0xf]
        %v2510 = vld [vmem:[%s2508 + $0x4] sm:$0xf]
        %v2511 = vld [vmem:[%s2508 + $0x8] sm:$0xf]
        %v2512 = vld [vmem:[%s2508 + $0xc] sm:$0xf]
        %v2513 = vld [vmem:[%s2508 + $0x10] sm:$0xf]
        %v2514 = vld [vmem:[%s2508 + $0x14] sm:$0xf]
        %v2515 = vld [vmem:[%s2508 + $0x18] sm:$0xf]
        %v2516 = vld [vmem:[%s2508 + $0x1c] sm:$0xf]
        %v2517 = vld [vmem:[%s2508 + $0x20] sm:$0xf]
        %v2518 = vld [vmem:[%s2508 + $0x24] sm:$0xf]
        %v2519 = vld [vmem:[%s2508 + $0x28] sm:$0xf]
        %v2520 = vld [vmem:[%s2508 + $0x2c] sm:$0xf]
        %v2521 = vld [vmem:[%s2508 + $0x30] sm:$0xf]
        %v2522 = vld [vmem:[%s2508 + $0x34] sm:$0xf]
        %v2523 = vld [vmem:[%s2508 + $0x38] sm:$0xf]
        %v2524 = vld [vmem:[%s2508 + $0x3c] sm:$0xf]
        %v2525 = vunpack.c.l.b16 %v2479
        %v2526 = vunpack.c.l.b16 %v2483
        %v2527 = vunpack.c.l.b16 %v2487
        %v2528 = vunpack.c.l.b16 %v2491
        %v2529 = vunpack.c.l.b16 %v2495
        %v2530 = vunpack.c.l.b16 %v2499
        %v2531 = vunpack.c.l.b16 %v2503
        %v2532 = vunpack.c.l.b16 %v2507
        %v2533 = vpack.c.b16 %v2526, %v2525
        %v2534 = vpack.c.b16 %v2528, %v2527
        %v2535 = vpack.c.b16 %v2530, %v2529
        %v2536 = vpack.c.b16 %v2532, %v2531
        %v2557 = vunpack.c.l.b16 %v2509
        %v2558 = vunpack.c.l.b16 %v2510
        %v2559 = vunpack.c.l.b16 %v2511
        %v2560 = vunpack.c.l.b16 %v2512
        %v2561 = vunpack.c.l.b16 %v2513
        %v2562 = vunpack.c.l.b16 %v2514
        %v2563 = vunpack.c.l.b16 %v2515
        %v2564 = vunpack.c.l.b16 %v2516
        %v2565 = vunpack.c.l.b16 %v2517
        %v2566 = vunpack.c.l.b16 %v2518
        %v2567 = vunpack.c.l.b16 %v2519
        %v2568 = vunpack.c.l.b16 %v2520
        %v2569 = vunpack.c.l.b16 %v2521
        %v2570 = vunpack.c.l.b16 %v2522
        %v2571 = vunpack.c.l.b16 %v2523
        %v2572 = vunpack.c.l.b16 %v2524
        %v2573 = vpack.c.b16 %v2558, %v2557
        %v2574 = vpack.c.b16 %v2560, %v2559
        %v2575 = vpack.c.b16 %v2562, %v2561
        %v2576 = vpack.c.b16 %v2564, %v2563
        %v2577 = vpack.c.b16 %v2566, %v2565
        %v2578 = vpack.c.b16 %v2568, %v2567
        %v2579 = vpack.c.b16 %v2570, %v2569
        %v2580 = vpack.c.b16 %v2572, %v2571
        %2589 = vmatprep.subr.bf16.mxu0 0
        %2590 = vmatpush1.bf16.msra.mxu0 %v2573
        %2591 = vmatprep.subr.bf16.mxu0 0
        %2592 = vmatpush1.bf16.msra.mxu0 %v2574
        %2593 = vmatprep.subr.bf16.mxu0 0
        %2594 = vmatpush1.bf16.msra.mxu0 %v2575
        %2595 = vmatprep.subr.bf16.mxu0 0
        %2596 = vmatpush1.bf16.msra.mxu0 %v2576
        %2597 = vmatprep.subr.bf16.mxu0 0
        %2598 = vmatpush1.bf16.msra.mxu0 %v2577
        %2599 = vmatprep.subr.bf16.mxu0 0
        %2600 = vmatpush1.bf16.msra.mxu0 %v2578
        %2601 = vmatprep.subr.bf16.mxu0 0
        %2602 = vmatpush1.bf16.msra.mxu0 %v2579
        %2603 = vmatprep.subr.bf16.mxu0 0
        %2604 = vmatpush1.bf16.msra.mxu0 %v2580
        %2605 = vmatprep.subr.bf16.mxu0 0
        %2606 = vmatpush1.bf16.msra.mxu0 0
        %2607 = vmatprep.subr.bf16.mxu0 0
        %2608 = vmatpush1.bf16.msra.mxu0 0
        %2609 = vmatprep.subr.bf16.mxu0 0
        %2610 = vmatpush1.bf16.msra.mxu0 0
        %2611 = vmatprep.subr.bf16.mxu0 0
        %2612 = vmatpush1.bf16.msra.mxu0 0
        %2613 = vmatprep.subr.bf16.mxu0 0
        %2614 = vmatpush1.bf16.msra.mxu0 0
        %2615 = vmatprep.subr.bf16.mxu0 0
        %2616 = vmatpush1.bf16.msra.mxu0 0
        %2617 = vmatprep.subr.bf16.mxu0 0
        %2618 = vmatpush1.bf16.msra.mxu0 0
        %2619 = vmatprep.subr.bf16.mxu0 0
        %2620 = vmatpush1.bf16.msra.mxu0 0
        %2621 = vmatprep.mubr.bf16.mxu0 0
        %2622 = vmatmul.mubr.bf16.gmra.mrb[0].mxu0 %v2533
        %v2623 = vpop.f32.mrb[0].mxu0
        %v2624 = vadd.f32 0.0, %v2623
        %v2625 = vpop.f32.mrb[0].mxu0
        %v2626 = vpop.f32.mrb[0].mxu0
        %v2627 = vadd.f32 0.0, %v2626
        %v2628 = vpop.f32.mrb[0].mxu0
        %2629 = vmatprep.mubr.bf16.mxu0 0
        %2630 = vmatmul.mubr.bf16.gmra.mrb[0].mxu0 %v2534
        %v2631 = vpop.f32.mrb[0].mxu0
        %v2632 = vadd.f32 0.0, %v2631
        %v2633 = vpop.f32.mrb[0].mxu0
        %v2634 = vpop.f32.mrb[0].mxu0
        %v2635 = vadd.f32 0.0, %v2634
        %v2636 = vpop.f32.mrb[0].mxu0
        %2637 = vmatprep.mubr.bf16.mxu0 0
        %2638 = vmatmul.mubr.bf16.gmra.mrb[0].mxu0 %v2535
        %v2639 = vpop.f32.mrb[0].mxu0
        %v2640 = vadd.f32 0.0, %v2639
        %v2641 = vpop.f32.mrb[0].mxu0
        %v2642 = vpop.f32.mrb[0].mxu0
        %v2643 = vadd.f32 0.0, %v2642
        %v2644 = vpop.f32.mrb[0].mxu0
        %2645 = vmatprep.mubr.bf16.mxu0 0
        %2646 = vmatmul.mubr.bf16.gmra.mrb[0].mxu0 %v2536
        %v2647 = vpop.f32.mrb[0].mxu0
        %v2648 = vadd.f32 0.0, %v2647
        %v2649 = vpop.f32.mrb[0].mxu0
        %v2650 = vpop.f32.mrb[0].mxu0
        %v2651 = vadd.f32 0.0, %v2650
        %v2652 = vpop.f32.mrb[0].mxu0
        %2653 = vdwg.mxu0
        %v2654 = vld [vmem:[#allocation3] sm:$0xff]
        %v2655 = vld [vmem:[#allocation3 + $0x8] sm:$0xff]
        %v2656 = vld [vmem:[#allocation3 + $0x10] sm:$0xff]
        %v2657 = vld [vmem:[#allocation3 + $0x18] sm:$0xff]
        %v2658 = vld [vmem:[#allocation3 + $0x20] sm:$0xff]
        %v2659 = vld [vmem:[#allocation3 + $0x28] sm:$0xff]
        %v2660 = vld [vmem:[#allocation3 + $0x30] sm:$0xff]
        %v2661 = vld [vmem:[#allocation3 + $0x38] sm:$0xff]
        %v2662 = vadd.f32 %v2654, %v2624
        %v2663 = vadd.f32 %v2655, %v2627
        %v2664 = vadd.f32 %v2656, %v2632
        %v2665 = vadd.f32 %v2657, %v2635
        %v2666 = vadd.f32 %v2658, %v2640
        %v2667 = vadd.f32 %v2659, %v2643
        %v2668 = vadd.f32 %v2660, %v2648
        %v2669 = vadd.f32 %v2661, %v2651
        %2670 = vst [vmem:[#allocation3] sm:$0xff] %v2662
        %2671 = vst [vmem:[#allocation3 + $0x8] sm:$0xff] %v2663
        %2672 = vst [vmem:[#allocation3 + $0x10] sm:$0xff] %v2664
        %2673 = vst [vmem:[#allocation3 + $0x18] sm:$0xff] %v2665
        %2674 = vst [vmem:[#allocation3 + $0x20] sm:$0xff] %v2666
        %2675 = vst [vmem:[#allocation3 + $0x28] sm:$0xff] %v2667
        %2676 = vst [vmem:[#allocation3 + $0x30] sm:$0xff] %v2668
        %2677 = vst [vmem:[#allocation3 + $0x38] sm:$0xff] %v2669
        %v2678 = vld [vmem:[%s323] sm:$0xf]
        %v2679 = vld [vmem:[%s323 + $0x4] sm:$0xf]
        %v2680 = vld [vmem:[%s323 + $0x8] sm:$0xf]
        %v2681 = vld [vmem:[%s323 + $0xc] sm:$0xf]
        %v2682 = vld [vmem:[%s323 + $0x10] sm:$0xf]
        %v2683 = vld [vmem:[%s323 + $0x14] sm:$0xf]
        %v2684 = vld [vmem:[%s323 + $0x18] sm:$0xf]
        %v2685 = vld [vmem:[%s323 + $0x1c] sm:$0xf]
        %v2686 = vunpack.c.l.bf16 %v2678
        %v2687 = vunpack.c.l.bf16 %v2679
        %v2688 = vunpack.c.l.bf16 %v2680
        %v2689 = vunpack.c.l.bf16 %v2681
        %v2690 = vunpack.c.l.bf16 %v2682
        %v2691 = vunpack.c.l.bf16 %v2683
        %v2692 = vunpack.c.l.bf16 %v2684
        %v2693 = vunpack.c.l.bf16 %v2685
        %v2694 = vld [vmem:[%s5] sm:$0x1]
        %v2696 = vlaneseq
        %v2697 = vshrl.u32 %v2696, 7
        %v2698 = vsub.s32 0, %v2697
        %v2699 = vrot.slane %v2694, %v2698
        %v2701 = vmul.f32 %v2686, %v2699
        %v2702 = vmul.f32 %v2687, %v2699
        %v2703 = vmul.f32 %v2688, %v2699
        %v2704 = vmul.f32 %v2689, %v2699
        %v2705 = vmul.f32 %v2690, %v2699
        %v2706 = vmul.f32 %v2691, %v2699
        %v2707 = vmul.f32 %v2692, %v2699
        %v2708 = vmul.f32 %v2693, %v2699
        %v2709 = vld [vmem:[%s6] sm:$0x1]
        %v2711 = vlaneseq
        %v2712 = vshrl.u32 %v2711, 7
        %v2713 = vsub.s32 0, %v2712
        %v2714 = vrot.slane %v2709, %v2713
        %v2716 = vadd.f32 %v2701, %v2714
        %v2717 = vadd.f32 %v2702, %v2714
        %v2718 = vadd.f32 %v2703, %v2714
        %v2719 = vadd.f32 %v2704, %v2714
        %v2720 = vadd.f32 %v2705, %v2714
        %v2721 = vadd.f32 %v2706, %v2714
        %v2722 = vadd.f32 %v2707, %v2714
        %v2723 = vadd.f32 %v2708, %v2714
        %v2724 = vmax.f32 %v2716, 0.0
        %v2725 = vmax.f32 %v2717, 0.0
        %v2726 = vmax.f32 %v2718, 0.0
        %v2727 = vmax.f32 %v2719, 0.0
        %v2728 = vmax.f32 %v2720, 0.0
        %v2729 = vmax.f32 %v2721, 0.0
        %v2730 = vmax.f32 %v2722, 0.0
        %v2731 = vmax.f32 %v2723, 0.0
        %v2732 = vld [vmem:[#allocation3] sm:$0xff]
        %v2733 = vld [vmem:[#allocation3 + $0x8] sm:$0xff]
        %v2734 = vld [vmem:[#allocation3 + $0x10] sm:$0xff]
        %v2735 = vld [vmem:[#allocation3 + $0x18] sm:$0xff]
        %v2736 = vld [vmem:[#allocation3 + $0x20] sm:$0xff]
        %v2737 = vld [vmem:[#allocation3 + $0x28] sm:$0xff]
        %v2738 = vld [vmem:[#allocation3 + $0x30] sm:$0xff]
        %v2739 = vld [vmem:[#allocation3 + $0x38] sm:$0xff]
        %v2740 = vpack.c.bf16 %v2725, %v2724
        %v2741 = vpack.c.bf16 %v2727, %v2726
        %v2742 = vpack.c.bf16 %v2729, %v2728
        %v2743 = vpack.c.bf16 %v2731, %v2730
        %v2744 = vld [vmem:[%s7] sm:$0xf]
        %v2745 = vld [vmem:[%s7 + $0x4] sm:$0xf]
        %v2746 = vld [vmem:[%s7 + $0x8] sm:$0xf]
        %v2747 = vld [vmem:[%s7 + $0xc] sm:$0xf]
        %v2748 = vld [vmem:[%s7 + $0x10] sm:$0xf]
        %v2749 = vld [vmem:[%s7 + $0x14] sm:$0xf]
        %v2750 = vld [vmem:[%s7 + $0x18] sm:$0xf]
        %v2751 = vld [vmem:[%s7 + $0x1c] sm:$0xf]
        %v2752 = vld [vmem:[%s7 + $0x20] sm:$0xf]
        %v2753 = vld [vmem:[%s7 + $0x24] sm:$0xf]
        %v2754 = vld [vmem:[%s7 + $0x28] sm:$0xf]
        %v2755 = vld [vmem:[%s7 + $0x2c] sm:$0xf]
        %v2756 = vld [vmem:[%s7 + $0x30] sm:$0xf]
        %v2757 = vld [vmem:[%s7 + $0x34] sm:$0xf]
        %v2758 = vld [vmem:[%s7 + $0x38] sm:$0xf]
        %v2759 = vld [vmem:[%s7 + $0x3c] sm:$0xf]
        %v2776 = vunpack.c.l.b16 %v2744
        %v2777 = vunpack.c.l.b16 %v2745
        %v2778 = vunpack.c.l.b16 %v2746
        %v2779 = vunpack.c.l.b16 %v2747
        %v2780 = vunpack.c.l.b16 %v2748
        %v2781 = vunpack.c.l.b16 %v2749
        %v2782 = vunpack.c.l.b16 %v2750
        %v2783 = vunpack.c.l.b16 %v2751
        %v2784 = vunpack.c.l.b16 %v2752
        %v2785 = vunpack.c.l.b16 %v2753
        %v2786 = vunpack.c.l.b16 %v2754
        %v2787 = vunpack.c.l.b16 %v2755
        %v2788 = vunpack.c.l.b16 %v2756
        %v2789 = vunpack.c.l.b16 %v2757
        %v2790 = vunpack.c.l.b16 %v2758
        %v2791 = vunpack.c.l.b16 %v2759
        %v2792 = vpack.c.b16 %v2777, %v2776
        %v2793 = vpack.c.b16 %v2779, %v2778
        %v2794 = vpack.c.b16 %v2781, %v2780
        %v2795 = vpack.c.b16 %v2783, %v2782
        %v2796 = vpack.c.b16 %v2785, %v2784
        %v2797 = vpack.c.b16 %v2787, %v2786
        %v2798 = vpack.c.b16 %v2789, %v2788
        %v2799 = vpack.c.b16 %v2791, %v2790
        %2808 = vmatprep.subr.bf16.mxu0 0
        %2809 = vmatpush1.bf16.msra.mxu0 %v2792
        %2810 = vmatprep.subr.bf16.mxu0 0
        %2811 = vmatpush1.bf16.msra.mxu0 %v2793
        %2812 = vmatprep.subr.bf16.mxu0 0
        %2813 = vmatpush1.bf16.msra.mxu0 %v2794
        %2814 = vmatprep.subr.bf16.mxu0 0
        %2815 = vmatpush1.bf16.msra.mxu0 %v2795
        %2816 = vmatprep.subr.bf16.mxu0 0
        %2817 = vmatpush1.bf16.msra.mxu0 %v2796
        %2818 = vmatprep.subr.bf16.mxu0 0
        %2819 = vmatpush1.bf16.msra.mxu0 %v2797
        %2820 = vmatprep.subr.bf16.mxu0 0
        %2821 = vmatpush1.bf16.msra.mxu0 %v2798
        %2822 = vmatprep.subr.bf16.mxu0 0
        %2823 = vmatpush1.bf16.msra.mxu0 %v2799
        %2824 = vmatprep.subr.bf16.mxu0 0
        %2825 = vmatpush1.bf16.msra.mxu0 0
        %2826 = vmatprep.subr.bf16.mxu0 0
        %2827 = vmatpush1.bf16.msra.mxu0 0
        %2828 = vmatprep.subr.bf16.mxu0 0
        %2829 = vmatpush1.bf16.msra.mxu0 0
        %2830 = vmatprep.subr.bf16.mxu0 0
        %2831 = vmatpush1.bf16.msra.mxu0 0
        %2832 = vmatprep.subr.bf16.mxu0 0
        %2833 = vmatpush1.bf16.msra.mxu0 0
        %2834 = vmatprep.subr.bf16.mxu0 0
        %2835 = vmatpush1.bf16.msra.mxu0 0
        %2836 = vmatprep.subr.bf16.mxu0 0
        %2837 = vmatpush1.bf16.msra.mxu0 0
        %2838 = vmatprep.subr.bf16.mxu0 0
        %2839 = vmatpush1.bf16.msra.mxu0 0
        %2840 = vmatprep.mubr.bf16.mxu0 0
        %2841 = vmatmul.mubr.bf16.gmra.mrb[0].mxu0 %v2740
        %v2842 = vpop.f32.mrb[0].mxu0
        %v2843 = vadd.f32 0.0, %v2842
        %v2844 = vpop.f32.mrb[0].mxu0
        %v2845 = vpop.f32.mrb[0].mxu0
        %v2846 = vadd.f32 0.0, %v2845
        %v2847 = vpop.f32.mrb[0].mxu0
        %2848 = vmatprep.mubr.bf16.mxu0 0
        %2849 = vmatmul.mubr.bf16.gmra.mrb[0].mxu0 %v2741
        %v2850 = vpop.f32.mrb[0].mxu0
        %v2851 = vadd.f32 0.0, %v2850
        %v2852 = vpop.f32.mrb[0].mxu0
        %v2853 = vpop.f32.mrb[0].mxu0
        %v2854 = vadd.f32 0.0, %v2853
        %v2855 = vpop.f32.mrb[0].mxu0
        %2856 = vmatprep.mubr.bf16.mxu0 0
        %2857 = vmatmul.mubr.bf16.gmra.mrb[0].mxu0 %v2742
        %v2858 = vpop.f32.mrb[0].mxu0
        %v2859 = vadd.f32 0.0, %v2858
        %v2860 = vpop.f32.mrb[0].mxu0
        %v2861 = vpop.f32.mrb[0].mxu0
        %v2862 = vadd.f32 0.0, %v2861
        %v2863 = vpop.f32.mrb[0].mxu0
        %2864 = vmatprep.mubr.bf16.mxu0 0
        %2865 = vmatmul.mubr.bf16.gmra.mrb[0].mxu0 %v2743
        %v2866 = vpop.f32.mrb[0].mxu0
        %v2867 = vadd.f32 0.0, %v2866
        %v2868 = vpop.f32.mrb[0].mxu0
        %v2869 = vpop.f32.mrb[0].mxu0
        %v2870 = vadd.f32 0.0, %v2869
        %v2871 = vpop.f32.mrb[0].mxu0
        %2872 = vdwg.mxu0
        %v2873 = vadd.f32 %v2732, %v2843
        %v2874 = vadd.f32 %v2733, %v2846
        %v2875 = vadd.f32 %v2734, %v2851
        %v2876 = vadd.f32 %v2735, %v2854
        %v2877 = vadd.f32 %v2736, %v2859
        %v2878 = vadd.f32 %v2737, %v2862
        %v2879 = vadd.f32 %v2738, %v2867
        %v2880 = vadd.f32 %v2739, %v2870
        %2881 = vst [vmem:[#allocation3] sm:$0xff] %v2873
        %2882 = vst [vmem:[#allocation3 + $0x8] sm:$0xff] %v2874
        %2883 = vst [vmem:[#allocation3 + $0x10] sm:$0xff] %v2875
        %2884 = vst [vmem:[#allocation3 + $0x18] sm:$0xff] %v2876
        %2885 = vst [vmem:[#allocation3 + $0x20] sm:$0xff] %v2877
        %2886 = vst [vmem:[#allocation3 + $0x28] sm:$0xff] %v2878
        %2887 = vst [vmem:[#allocation3 + $0x30] sm:$0xff] %v2879
        %2888 = vst [vmem:[#allocation3 + $0x38] sm:$0xff] %v2880
        %v2889 = vld [vmem:[#allocation3] sm:$0xff]
        %v2890 = vld [vmem:[#allocation3 + $0x8] sm:$0xff]
        %v2891 = vld [vmem:[#allocation3 + $0x10] sm:$0xff]
        %v2892 = vld [vmem:[#allocation3 + $0x18] sm:$0xff]
        %v2893 = vld [vmem:[#allocation3 + $0x20] sm:$0xff]
        %v2894 = vld [vmem:[#allocation3 + $0x28] sm:$0xff]
        %v2895 = vld [vmem:[#allocation3 + $0x30] sm:$0xff]
        %v2896 = vld [vmem:[#allocation3 + $0x38] sm:$0xff]
        %v2897 = vld [vmem:[%s2] sm:$0x1]
        %v2899 = vlaneseq
        %v2900 = vshrl.u32 %v2899, 7
        %v2901 = vsub.s32 0, %v2900
        %v2902 = vrot.slane %v2897, %v2901
        %v2904 = vmul.f32 %v2889, %v2902
        %v2905 = vmul.f32 %v2890, %v2902
        %v2906 = vmul.f32 %v2891, %v2902
        %v2907 = vmul.f32 %v2892, %v2902
        %v2908 = vmul.f32 %v2893, %v2902
        %v2909 = vmul.f32 %v2894, %v2902
        %v2910 = vmul.f32 %v2895, %v2902
        %v2911 = vmul.f32 %v2896, %v2902
        %v2912 = vld [vmem:[%s3] sm:$0x1]
        %v2914 = vlaneseq
        %v2915 = vshrl.u32 %v2914, 7
        %v2916 = vsub.s32 0, %v2915
        %v2917 = vrot.slane %v2912, %v2916
        %v2919 = vadd.f32 %v2904, %v2917
        %v2920 = vadd.f32 %v2905, %v2917
        %v2921 = vadd.f32 %v2906, %v2917
        %v2922 = vadd.f32 %v2907, %v2917
        %v2923 = vadd.f32 %v2908, %v2917
        %v2924 = vadd.f32 %v2909, %v2917
        %v2925 = vadd.f32 %v2910, %v2917
        %v2926 = vadd.f32 %v2911, %v2917
        %v2927 = vmax.f32 %v2919, 0.0
        %v2928 = vmax.f32 %v2920, 0.0
        %v2929 = vmax.f32 %v2921, 0.0
        %v2930 = vmax.f32 %v2922, 0.0
        %v2931 = vmax.f32 %v2923, 0.0
        %v2932 = vmax.f32 %v2924, 0.0
        %v2933 = vmax.f32 %v2925, 0.0
        %v2934 = vmax.f32 %v2926, 0.0
        %2935 = vst [vmem:[%s313] sm:$0xff] %v2927
        %2936 = vst [vmem:[%s313 + $0x8] sm:$0xff] %v2928
        %2937 = vst [vmem:[%s313 + $0x10] sm:$0xff] %v2929
        %2938 = vst [vmem:[%s313 + $0x18] sm:$0xff] %v2930
        %2939 = vst [vmem:[%s313 + $0x20] sm:$0xff] %v2931
        %2940 = vst [vmem:[%s313 + $0x28] sm:$0xff] %v2932
        %2941 = vst [vmem:[%s313 + $0x30] sm:$0xff] %v2933
        %2942 = vst [vmem:[%s313 + $0x38] sm:$0xff] %v2934
        %s2943 = sand.u32 %s208, 1
        %s2944 = scalar_lea.sflag [#allocation5], %s2943
        %s2945 = sand.u32 %s208, 1
        %s2946 = smul.addr %s2945, 64
        %s2947 = scalar_lea.vmem [#allocation4], %s2946
        // Predicated region
        $region53: #{preact_block_nhwc.3} parent=51 // pred_check
          %p2948 = pneg %p218
        $region54: #{preact_block_nhwc.3} parent=51 // pred_check_branch
          %2950 = sbr.rel (%p2948) target = $region56
        $region55: #{preact_block_nhwc.3} parent=51 // pred_region
          %s2952 = ssub.s32 1024, 1024
          %2953 = vsyncadd %s2944, %s2952
          %s2954 = smul.addr %s22, 8
          %s2955 = smul.addr %s2954, 128
          %s2956 = scalar_lea.hbm %s8, %s2955
          %s2957 = sshll.u32 %s2947, 4
          %s2958 = int_to_ptr.vmem [resolvable:$true] %s2957
          %2963 = dma.vmem_to_hbm [thread:$0]  %s2958, 1024, %s2956, %s2944, 128, 128, 8
        $region56: #{preact_block_nhwc.3} parent=51 // pred_fallthru
          _
      $region52: #{preact_block_nhwc.3} parent=5 // pred_fallthru
        _
      %p2964 = scmp.le.s32.totalorder 2, %s17
      // Predicated region
      $region57: #{preact_block_nhwc.3} parent=5 // pred_check
        %p2965 = pneg %p2964
      $region58: #{preact_block_nhwc.3} parent=5 // pred_check_branch
        %2967 = sbr.rel (%p2965) target = $region60
      $region59: #{preact_block_nhwc.3} parent=5 // pred_region
        %s2968 = ssub.s32 %s17, 2
        // Predicated region
        $region61: #{preact_block_nhwc.3} parent=59 // pred_check
          %p2969 = pneg %p224
        $region62: #{preact_block_nhwc.3} parent=59 // pred_check_branch
          %2971 = sbr.rel (%p2969) target = $region64
        $region63: #{preact_block_nhwc.3} parent=59 // pred_region
          %s2972 = sand.u32 %s209, 1
          %s2973 = scalar_lea.sflag [#allocation5], %s2972
          %s2974 = sand.u32 %s209, 1
          %s2975 = smul.addr %s2974, 64
          %s2976 = scalar_lea.vmem [#allocation4], %s2975
          %2977 = dma.done %s2973, 1024
        $region64: #{preact_block_nhwc.3} parent=59 // pred_fallthru
          _
      $region60: #{preact_block_nhwc.3} parent=5 // pred_fallthru
        _
    $region6: #{preact_block_nhwc.3} parent=1 // loop_footer
      %s21 = sadd.s32 1, %s17
    $region7: #{preact_block_nhwc.3} parent=1 // loop_footer_branch
      %16 = sbr.rel target = $region3
    $region8: #{preact_block_nhwc.3} parent=1 // loop_exit
      _
    %2978 = vsyncpa [#allocation5], 1
    %s2979 = scalar_lea.sflag [#allocation5], 1
    %2980 = vsyncpa %s2979, 1

// kernel: preact_block_nhwc.2
$region0: #{preact_block_nhwc.2}
  #allocation0 [shape = 'u32[]', space=smem, size = 0x4, offset = 0x4, fixed_abs, tag = 'smem constant byte address 0x4 - core index']
  #allocation1 [shape = 'u32[144,128]{1,0:T(1,128)}', space=vmem, size = 0x12000, scoped, tag = 'internal scratch']
  #allocation2 [shape = 'bf16[9,9,128]{2,1,0:T(8,128)(2,1)}', space=vmem, size = 0x9000, scoped, tag = 'scratch operand']
  #allocation3 [shape = 'bf16[9,9,128]{2,1,0:T(8,128)(2,1)}', space=vmem, size = 0x9000, scoped, tag = 'scratch operand']
  #allocation4 [shape = 'bf16[9,9,128]{2,1,0:T(8,128)(2,1)}', space=vmem, size = 0x9000, scoped, tag = 'scratch operand']
  #allocation5 [shape = 'bf16[9,9,128]{2,1,0:T(8,128)(2,1)}', space=vmem, size = 0x9000, scoped, tag = 'scratch operand']
  #allocation6 [shape = 'f32[64,128]{1,0:T(8,128)}', space=vmem, size = 0x8000, scoped, tag = 'scratch operand']
  %s0 = inlined_call_operand.vmem [shape: bf16[2,8,8,128], index: 0, kind: input, shape index: {}]
  %s1 = inlined_call_operand.vmem [shape: bf16[2,8,8,128], index: 1, kind: input, shape index: {}]
  %s2 = inlined_call_operand.vmem [shape: bf16[2,8,8,128], index: 2, kind: input, shape index: {}]
  %s3 = inlined_call_operand.vmem [shape: bf16[2,8,8,128], index: 3, kind: input, shape index: {}]
  %s4 = inlined_call_operand.vmem [shape: f32[1,128], index: 4, kind: input, shape index: {}]
  %s5 = inlined_call_operand.vmem [shape: f32[1,128], index: 5, kind: input, shape index: {}]
  %s6 = inlined_call_operand.vmem [shape: bf16[3,3,128,128], index: 6, kind: input, shape index: {}]
  %s7 = inlined_call_operand.vmem [shape: f32[1,128], index: 7, kind: input, shape index: {}]
  %s8 = inlined_call_operand.vmem [shape: f32[1,128], index: 8, kind: input, shape index: {}]
  %s9 = inlined_call_operand.vmem [shape: bf16[2,8,8,128], index: 9, kind: output, shape index: {}]
  %s10 = sld [smem:[#allocation0]]
  $region69: #{preact_block_nhwc.2} parent=0
    _
  %s12 = ssub.s32 1, %s10
  %s13 = scalar_select 0, %s12, %s10
  loop: start=0, step=1, limit=4
  $region2: #{preact_block_nhwc.2} parent=0 // loop_pre_header
    _
  $region3: #{preact_block_nhwc.2} parent=0 // loop_header
    %s15 = sphi 0, %s19
    %p16 = scmp.ge.s32.totalorder %s15, 4
    %s25 = sphi 0, %s27
    %s28 = sphi 0, %s25
    %s29 = sphi 0, %s28
    %s45 = sphi 0, %s29
    %s51 = sphi 0, %s53
    %s54 = sphi 0, %s51
    %s55 = sphi 0, %s54
    %s71 = sphi 0, %s55
    %s77 = sphi 0, %s79
    %s80 = sphi 0, %s77
    %s81 = sphi 0, %s80
    %s97 = sphi 0, %s81
    %s103 = sphi 0, %s105
    %s106 = sphi 0, %s103
    %s107 = sphi 0, %s106
    %s123 = sphi 0, %s107
    %s127 = sphi 0, %s127
    %s129 = sphi 0, %s127
    %s130 = sphi 0, %s129
    %s144 = sphi 0, %s130
    %s148 = sphi 0, %s148
    %s150 = sphi 0, %s148
    %s151 = sphi 0, %s150
    %s165 = sphi 0, %s151
    %s169 = sphi 0, %s169
    %s171 = sphi 0, %s169
    %s172 = sphi 0, %s171
    %s186 = sphi 0, %s172
    %s190 = sphi 0, %s190
    %s192 = sphi 0, %s190
    %s193 = sphi 0, %s192
    %s207 = sphi 0, %s193
    %s211 = sphi 0, %s211
    %s213 = sphi 0, %s211
    %s214 = sphi 0, %s213
    %s228 = sphi 0, %s214
    %s234 = sphi 0, %s236
    %s237 = sphi 0, %s234
    %s238 = sphi 0, %s237
    %s254 = sphi 0, %s238
  $region4: #{preact_block_nhwc.2} parent=0 // loop_header_branch
    %18 = sbr.rel (%p16) target = $region8
  $region5: #{preact_block_nhwc.2} parent=0 // loop_body
    %s20 = ssub.s32 %s15, 1
    %s21 = ssub.s32 %s15, 2
    %s22 = sadd.s32 %s15, 1
    %s23 = ssub.s32 %s15, %s22
    %p24 = scmp.eq.s32.totalorder %s23, 0
    %s26 = sadd.s32 %s25, 1
    %s27 = scalar_select %p24, %s25, %s26
    %p30 = pneg %p24
    %p31 = scmp.eq.s32.totalorder %s15, 1
    %p32 = por %p30, %p31
    %p33 = scmp.ne.s32.totalorder %s25, %s28
    %p34 = scmp.eq.s32.totalorder %s15, 0
    %p35 = por %p33, %p34
    %p36 = scmp.ne.s32.totalorder %s25, %s28
    %p37 = scmp.eq.s32.totalorder %s20, 1
    %p38 = por %p36, %p37
    %p39 = scmp.ne.s32.totalorder %s28, %s29
    %p40 = scmp.eq.s32.totalorder %s20, 0
    %p41 = por %p39, %p40
    %p42 = scmp.ne.s32.totalorder %s28, %s29
    %p43 = scmp.eq.s32.totalorder %s21, 1
    %p44 = por %p42, %p43
    %p46 = scmp.ne.s32.totalorder %s29, %s45
    %p47 = scmp.eq.s32.totalorder %s21, 0
    %p48 = por %p46, %p47
    %s49 = ssub.s32 %s15, %s22
    %p50 = scmp.eq.s32.totalorder %s49, 0
    %s52 = sadd.s32 %s51, 1
    %s53 = scalar_select %p50, %s51, %s52
    %p56 = pneg %p50
    %p57 = scmp.eq.s32.totalorder %s15, 1
    %p58 = por %p56, %p57
    %p59 = scmp.ne.s32.totalorder %s51, %s54
    %p60 = scmp.eq.s32.totalorder %s15, 0
    %p61 = por %p59, %p60
    %p62 = scmp.ne.s32.totalorder %s51, %s54
    %p63 = scmp.eq.s32.totalorder %s20, 1
    %p64 = por %p62, %p63
    %p65 = scmp.ne.s32.totalorder %s54, %s55
    %p66 = scmp.eq.s32.totalorder %s20, 0
    %p67 = por %p65, %p66
    %p68 = scmp.ne.s32.totalorder %s54, %s55
    %p69 = scmp.eq.s32.totalorder %s21, 1
    %p70 = por %p68, %p69
    %p72 = scmp.ne.s32.totalorder %s55, %s71
    %p73 = scmp.eq.s32.totalorder %s21, 0
    %p74 = por %p72, %p73
    %s75 = ssub.s32 %s15, %s22
    %p76 = scmp.eq.s32.totalorder %s75, 0
    %s78 = sadd.s32 %s77, 1
    %s79 = scalar_select %p76, %s77, %s78
    %p82 = pneg %p76
    %p83 = scmp.eq.s32.totalorder %s15, 1
    %p84 = por %p82, %p83
    %p85 = scmp.ne.s32.totalorder %s77, %s80
    %p86 = scmp.eq.s32.totalorder %s15, 0
    %p87 = por %p85, %p86
    %p88 = scmp.ne.s32.totalorder %s77, %s80
    %p89 = scmp.eq.s32.totalorder %s20, 1
    %p90 = por %p88, %p89
    %p91 = scmp.ne.s32.totalorder %s80, %s81
    %p92 = scmp.eq.s32.totalorder %s20, 0
    %p93 = por %p91, %p92
    %p94 = scmp.ne.s32.totalorder %s80, %s81
    %p95 = scmp.eq.s32.totalorder %s21, 1
    %p96 = por %p94, %p95
    %p98 = scmp.ne.s32.totalorder %s81, %s97
    %p99 = scmp.eq.s32.totalorder %s21, 0
    %p100 = por %p98, %p99
    %s101 = ssub.s32 %s15, %s22
    %p102 = scmp.eq.s32.totalorder %s101, 0
    %s104 = sadd.s32 %s103, 1
    %s105 = scalar_select %p102, %s103, %s104
    %p108 = pneg %p102
    %p109 = scmp.eq.s32.totalorder %s15, 1
    %p110 = por %p108, %p109
    %p111 = scmp.ne.s32.totalorder %s103, %s106
    %p112 = scmp.eq.s32.totalorder %s15, 0
    %p113 = por %p111, %p112
    %p114 = scmp.ne.s32.totalorder %s103, %s106
    %p115 = scmp.eq.s32.totalorder %s20, 1
    %p116 = por %p114, %p115
    %p117 = scmp.ne.s32.totalorder %s106, %s107
    %p118 = scmp.eq.s32.totalorder %s20, 0
    %p119 = por %p117, %p118
    %p120 = scmp.ne.s32.totalorder %s106, %s107
    %p121 = scmp.eq.s32.totalorder %s21, 1
    %p122 = por %p120, %p121
    %p124 = scmp.ne.s32.totalorder %s107, %s123
    %p125 = scmp.eq.s32.totalorder %s21, 0
    %p126 = por %p124, %p125
    %s128 = sadd.s32 %s127, 1
    %p131 = scmp.eq.s32.totalorder %s15, 1
    %p132 = scmp.ne.s32.totalorder %s127, %s129
    %p133 = scmp.eq.s32.totalorder %s15, 0
    %p134 = por %p132, %p133
    %p135 = scmp.ne.s32.totalorder %s127, %s129
    %p136 = scmp.eq.s32.totalorder %s20, 1
    %p137 = por %p135, %p136
    %p138 = scmp.ne.s32.totalorder %s129, %s130
    %p139 = scmp.eq.s32.totalorder %s20, 0
    %p140 = por %p138, %p139
    %p141 = scmp.ne.s32.totalorder %s129, %s130
    %p142 = scmp.eq.s32.totalorder %s21, 1
    %p143 = por %p141, %p142
    %p145 = scmp.ne.s32.totalorder %s130, %s144
    %p146 = scmp.eq.s32.totalorder %s21, 0
    %p147 = por %p145, %p146
    %s149 = sadd.s32 %s148, 1
    %p152 = scmp.eq.s32.totalorder %s15, 1
    %p153 = scmp.ne.s32.totalorder %s148, %s150
    %p154 = scmp.eq.s32.totalorder %s15, 0
    %p155 = por %p153, %p154
    %p156 = scmp.ne.s32.totalorder %s148, %s150
    %p157 = scmp.eq.s32.totalorder %s20, 1
    %p158 = por %p156, %p157
    %p159 = scmp.ne.s32.totalorder %s150, %s151
    %p160 = scmp.eq.s32.totalorder %s20, 0
    %p161 = por %p159, %p160
    %p162 = scmp.ne.s32.totalorder %s150, %s151
    %p163 = scmp.eq.s32.totalorder %s21, 1
    %p164 = por %p162, %p163
    %p166 = scmp.ne.s32.totalorder %s151, %s165
    %p167 = scmp.eq.s32.totalorder %s21, 0
    %p168 = por %p166, %p167
    %s170 = sadd.s32 %s169, 1
    %p173 = scmp.eq.s32.totalorder %s15, 1
    %p174 = scmp.ne.s32.totalorder %s169, %s171
    %p175 = scmp.eq.s32.totalorder %s15, 0
    %p176 = por %p174, %p175
    %p177 = scmp.ne.s32.totalorder %s169, %s171
    %p178 = scmp.eq.s32.totalorder %s20, 1
    %p179 = por %p177, %p178
    %p180 = scmp.ne.s32.totalorder %s171, %s172
    %p181 = scmp.eq.s32.totalorder %s20, 0
    %p182 = por %p180, %p181
    %p183 = scmp.ne.s32.totalorder %s171, %s172
    %p184 = scmp.eq.s32.totalorder %s21, 1
    %p185 = por %p183, %p184
    %p187 = scmp.ne.s32.totalorder %s172, %s186
    %p188 = scmp.eq.s32.totalorder %s21, 0
    %p189 = por %p187, %p188
    %s191 = sadd.s32 %s190, 1
    %p194 = scmp.eq.s32.totalorder %s15, 1
    %p195 = scmp.ne.s32.totalorder %s190, %s192
    %p196 = scmp.eq.s32.totalorder %s15, 0
    %p197 = por %p195, %p196
    %p198 = scmp.ne.s32.totalorder %s190, %s192
    %p199 = scmp.eq.s32.totalorder %s20, 1
    %p200 = por %p198, %p199
    %p201 = scmp.ne.s32.totalorder %s192, %s193
    %p202 = scmp.eq.s32.totalorder %s20, 0
    %p203 = por %p201, %p202
    %p204 = scmp.ne.s32.totalorder %s192, %s193
    %p205 = scmp.eq.s32.totalorder %s21, 1
    %p206 = por %p204, %p205
    %p208 = scmp.ne.s32.totalorder %s193, %s207
    %p209 = scmp.eq.s32.totalorder %s21, 0
    %p210 = por %p208, %p209
    %s212 = sadd.s32 %s211, 1
    %p215 = scmp.eq.s32.totalorder %s15, 1
    %p216 = scmp.ne.s32.totalorder %s211, %s213
    %p217 = scmp.eq.s32.totalorder %s15, 0
    %p218 = por %p216, %p217
    %p219 = scmp.ne.s32.totalorder %s211, %s213
    %p220 = scmp.eq.s32.totalorder %s20, 1
    %p221 = por %p219, %p220
    %p222 = scmp.ne.s32.totalorder %s213, %s214
    %p223 = scmp.eq.s32.totalorder %s20, 0
    %p224 = por %p222, %p223
    %p225 = scmp.ne.s32.totalorder %s213, %s214
    %p226 = scmp.eq.s32.totalorder %s21, 1
    %p227 = por %p225, %p226
    %p229 = scmp.ne.s32.totalorder %s214, %s228
    %p230 = scmp.eq.s32.totalorder %s21, 0
    %p231 = por %p229, %p230
    %s232 = ssub.s32 %s15, %s22
    %p233 = scmp.eq.s32.totalorder %s232, 0
    %s235 = sadd.s32 %s234, 1
    %s236 = scalar_select %p233, %s234, %s235
    %p239 = pneg %p233
    %p240 = scmp.eq.s32.totalorder %s15, 1
    %p241 = por %p239, %p240
    %p242 = scmp.ne.s32.totalorder %s234, %s237
    %p243 = scmp.eq.s32.totalorder %s15, 0
    %p244 = por %p242, %p243
    %p245 = scmp.ne.s32.totalorder %s234, %s237
    %p246 = scmp.eq.s32.totalorder %s20, 1
    %p247 = por %p245, %p246
    %p248 = scmp.ne.s32.totalorder %s237, %s238
    %p249 = scmp.eq.s32.totalorder %s20, 0
    %p250 = por %p248, %p249
    %p251 = scmp.ne.s32.totalorder %s237, %s238
    %p252 = scmp.eq.s32.totalorder %s21, 1
    %p253 = por %p251, %p252
    %p255 = scmp.ne.s32.totalorder %s238, %s254
    %p256 = scmp.eq.s32.totalorder %s21, 0
    %p257 = por %p255, %p256
    %p258 = scmp.le.s32.totalorder 1, %s15
    %p259 = scmp.lt.s32.totalorder %s15, 3
    %p260 = pnand %p258, %p259
    %p261 = pneg %p260
    // Predicated region
    $region9: #{preact_block_nhwc.2} parent=5 // pred_check
      _
    $region10: #{preact_block_nhwc.2} parent=5 // pred_check_branch
      %263 = sbr.rel (%p260) target = $region12
    $region11: #{preact_block_nhwc.2} parent=5 // pred_region
      %s264 = ssub.s32 %s15, 1
      // Predicated region
      $region13: #{preact_block_nhwc.2} parent=11 // pred_check
        %p265 = pneg %p140
      $region14: #{preact_block_nhwc.2} parent=11 // pred_check_branch
        %267 = sbr.rel (%p265) target = $region16
      $region15: #{preact_block_nhwc.2} parent=11 // pred_region
        _
      $region16: #{preact_block_nhwc.2} parent=11 // pred_fallthru
        _
      // Predicated region
      $region17: #{preact_block_nhwc.2} parent=11 // pred_check
        %p268 = pneg %p161
      $region18: #{preact_block_nhwc.2} parent=11 // pred_check_branch
        %270 = sbr.rel (%p268) target = $region20
      $region19: #{preact_block_nhwc.2} parent=11 // pred_region
        _
      $region20: #{preact_block_nhwc.2} parent=11 // pred_fallthru
        _
      // Predicated region
      $region21: #{preact_block_nhwc.2} parent=11 // pred_check
        %p271 = pneg %p182
      $region22: #{preact_block_nhwc.2} parent=11 // pred_check_branch
        %273 = sbr.rel (%p271) target = $region24
      $region23: #{preact_block_nhwc.2} parent=11 // pred_region
        _
      $region24: #{preact_block_nhwc.2} parent=11 // pred_fallthru
        _
      // Predicated region
      $region25: #{preact_block_nhwc.2} parent=11 // pred_check
        %p274 = pneg %p203
      $region26: #{preact_block_nhwc.2} parent=11 // pred_check_branch
        %276 = sbr.rel (%p274) target = $region28
      $region27: #{preact_block_nhwc.2} parent=11 // pred_region
        _
      $region28: #{preact_block_nhwc.2} parent=11 // pred_fallthru
        _
      // Predicated region
      $region29: #{preact_block_nhwc.2} parent=11 // pred_check
        %p277 = pneg %p224
      $region30: #{preact_block_nhwc.2} parent=11 // pred_check_branch
        %279 = sbr.rel (%p277) target = $region32
      $region31: #{preact_block_nhwc.2} parent=11 // pred_region
        _
      $region32: #{preact_block_nhwc.2} parent=11 // pred_fallthru
        _
    $region12: #{preact_block_nhwc.2} parent=5 // pred_fallthru
      _
    %p280 = scmp.lt.s32.totalorder %s15, 2
    // Predicated region
    $region33: #{preact_block_nhwc.2} parent=5 // pred_check
      %p281 = pneg %p280
    $region34: #{preact_block_nhwc.2} parent=5 // pred_check_branch
      %283 = sbr.rel (%p281) target = $region36
    $region35: #{preact_block_nhwc.2} parent=5 // pred_region
      // Predicated region
      $region37: #{preact_block_nhwc.2} parent=35 // pred_check
        %p284 = pneg %p35
      $region38: #{preact_block_nhwc.2} parent=35 // pred_check_branch
        %286 = sbr.rel (%p284) target = $region40
      $region39: #{preact_block_nhwc.2} parent=35 // pred_region
        %p287 = scmp.lt.s32.totalorder %s15, 1
        %s288 = scalar_select %p287, %s15, 1
        %s289 = smul.addr %s288, 8
        %s290 = smul.addr %s289, 4
        %s291 = scalar_lea.vmem %s0, %s290
      $region40: #{preact_block_nhwc.2} parent=35 // pred_fallthru
        _
      // Predicated region
      $region41: #{preact_block_nhwc.2} parent=35 // pred_check
        %p292 = pneg %p61
      $region42: #{preact_block_nhwc.2} parent=35 // pred_check_branch
        %294 = sbr.rel (%p292) target = $region44
      $region43: #{preact_block_nhwc.2} parent=35 // pred_region
        %p295 = scmp.lt.s32.totalorder %s15, 1
        %s296 = scalar_select %p295, %s15, 1
        %s297 = smul.addr %s296, 8
        %s298 = smul.addr %s297, 4
        %s299 = scalar_lea.vmem %s1, %s298
      $region44: #{preact_block_nhwc.2} parent=35 // pred_fallthru
        _
      // Predicated region
      $region45: #{preact_block_nhwc.2} parent=35 // pred_check
        %p300 = pneg %p87
      $region46: #{preact_block_nhwc.2} parent=35 // pred_check_branch
        %302 = sbr.rel (%p300) target = $region48
      $region47: #{preact_block_nhwc.2} parent=35 // pred_region
        %p303 = scmp.lt.s32.totalorder %s15, 1
        %s304 = scalar_select %p303, %s15, 1
        %s305 = smul.addr %s304, 8
        %s306 = smul.addr %s305, 4
        %s307 = scalar_lea.vmem %s2, %s306
      $region48: #{preact_block_nhwc.2} parent=35 // pred_fallthru
        _
      // Predicated region
      $region49: #{preact_block_nhwc.2} parent=35 // pred_check
        %p308 = pneg %p113
      $region50: #{preact_block_nhwc.2} parent=35 // pred_check_branch
        %310 = sbr.rel (%p308) target = $region52
      $region51: #{preact_block_nhwc.2} parent=35 // pred_region
        %p311 = scmp.lt.s32.totalorder %s15, 1
        %s312 = scalar_select %p311, %s15, 1
        %s313 = smul.addr %s312, 8
        %s314 = smul.addr %s313, 4
        %s315 = scalar_lea.vmem %s3, %s314
      $region52: #{preact_block_nhwc.2} parent=35 // pred_fallthru
        _
    $region36: #{preact_block_nhwc.2} parent=5 // pred_fallthru
      _
    %p316 = scmp.le.s32.totalorder 1, %s15
    %p317 = scmp.lt.s32.totalorder %s15, 3
    %p318 = pnand %p316, %p317
    %p319 = pneg %p318
    // Predicated region
    $region53: #{preact_block_nhwc.2} parent=5 // pred_check
      _
    $region54: #{preact_block_nhwc.2} parent=5 // pred_check_branch
      %321 = sbr.rel (%p318) target = $region56
    $region55: #{preact_block_nhwc.2} parent=5 // pred_region
      %s322 = ssub.s32 %s15, 1
      %p323 = scmp.lt.s32.totalorder %s20, 1
      %s324 = scalar_select %p323, %s20, 1
      %s325 = smul.addr %s324, 8
      %s326 = smul.addr %s325, 4
      %s327 = scalar_lea.vmem %s0, %s326
      %p328 = pneg %p41
      %p329 = pneg %p38
      %p330 = scmp.lt.s32.totalorder %s20, 1
      %s331 = scalar_select %p330, %s20, 1
      %s332 = smul.addr %s331, 8
      %s333 = smul.addr %s332, 4
      %s334 = scalar_lea.vmem %s1, %s333
      %p335 = pneg %p67
      %p336 = pneg %p64
      %p337 = scmp.lt.s32.totalorder %s20, 1
      %s338 = scalar_select %p337, %s20, 1
      %s339 = smul.addr %s338, 8
      %s340 = smul.addr %s339, 4
      %s341 = scalar_lea.vmem %s2, %s340
      %p342 = pneg %p93
      %p343 = pneg %p90
      %p344 = scmp.lt.s32.totalorder %s20, 1
      %s345 = scalar_select %p344, %s20, 1
      %s346 = smul.addr %s345, 8
      %s347 = smul.addr %s346, 4
      %s348 = scalar_lea.vmem %s3, %s347
      %p349 = pneg %p119
      %p350 = pneg %p116
      %p351 = pneg %p140
      %p352 = pneg %p137
      %p353 = pneg %p161
      %p354 = pneg %p158
      %p355 = pneg %p182
      %p356 = pneg %p179
      %p357 = pneg %p203
      %p358 = pneg %p200
      %p359 = pneg %p224
      %p360 = pneg %p221
      %p361 = pneg %p250
      %p362 = pneg %p247
      %p363 = scmp.lt.s32.totalorder %s20, 1
      %s364 = scalar_select %p363, %s20, 1
      %s365 = smul.addr %s364, 8
      %s366 = smul.addr %s365, 4
      %s367 = scalar_lea.vmem %s9, %s366
      %p368 = scmp.lt.s32.totalorder %s20, 1
      %s369 = scalar_select %p368, %s20, 1
      %s370 = smul.addr %s369, 8
      %s371 = smul.addr %s370, 4
      %s372 = scalar_lea.vmem %s0, %s371
      %p373 = scmp.lt.s32.totalorder %s20, 1
      %s374 = scalar_select %p373, %s20, 1
      %s375 = smul.addr %s374, 8
      %s376 = smul.addr %s375, 4
      %s377 = scalar_lea.vmem %s1, %s376
      %p378 = scmp.lt.s32.totalorder %s20, 1
      %s379 = scalar_select %p378, %s20, 1
      %s380 = smul.addr %s379, 8
      %s381 = smul.addr %s380, 4
      %s382 = scalar_lea.vmem %s2, %s381
      %p383 = scmp.lt.s32.totalorder %s20, 1
      %s384 = scalar_select %p383, %s20, 1
      %s385 = smul.addr %s384, 8
      %s386 = smul.addr %s385, 4
      %s387 = scalar_lea.vmem %s3, %s386
      %p388 = scmp.lt.s32.totalorder %s20, 1
      %s389 = scalar_select %p388, %s20, 1
      %s390 = smul.addr %s389, 8
      %s391 = smul.addr %s390, 4
      %s392 = scalar_lea.vmem %s9, %s391
      %v394 = vld [vmem:[%s4] sm:$0x1]
      %v395 = vld [vmem:[%s5] sm:$0x1]
      %396 = vst [vmem:[#allocation2] sm:$0xf] 0
      %vm397 = vcmask 1040384
      %vm398 = vsmask.f32 256
      %vm399 = vmand %vm397, %vm398
      %v400 = vld [vmem:[#allocation2 + $0x4] sm:$0x1]
      %v401 = vsel %vm399, 0, %v400
      %402 = vst [vmem:[#allocation2 + $0x4] sm:$0x1] %v401
      %v403 = vld [vmem:[#allocation2] sm:$0x1]
      %v404 = vsel %vm399, 0, %v403
      %405 = vst [vmem:[#allocation2] sm:$0x1] %v404
      %v406 = vld [vmem:[#allocation2 + $0x8] sm:$0x1]
      %v407 = vsel %vm399, 0, %v406
      %408 = vst [vmem:[#allocation2 + $0x8] sm:$0x1] %v407
      %v409 = vld [vmem:[#allocation2 + $0x10] sm:$0x1]
      %v410 = vsel %vm399, 0, %v409
      %411 = vst [vmem:[#allocation2 + $0x10] sm:$0x1] %v410
      %v412 = vld [vmem:[#allocation2 + $0x18] sm:$0x1]
      %v413 = vsel %vm399, 0, %v412
      %414 = vst [vmem:[#allocation2 + $0x18] sm:$0x1] %v413
      %v415 = vld [vmem:[#allocation2 + $0x20] sm:$0x1]
      %v416 = vsel %vm399, 0, %v415
      %417 = vst [vmem:[#allocation2 + $0x20] sm:$0x1] %v416
      %v418 = vld [vmem:[#allocation2 + $0x28] sm:$0x1]
      %v419 = vsel %vm399, 0, %v418
      %420 = vst [vmem:[#allocation2 + $0x28] sm:$0x1] %v419
      %v421 = vld [vmem:[#allocation2 + $0x30] sm:$0x1]
      %v422 = vsel %vm399, 0, %v421
      %423 = vst [vmem:[#allocation2 + $0x30] sm:$0x1] %v422
      %v424 = vld [vmem:[#allocation2 + $0x38] sm:$0x1]
      %v425 = vsel %vm399, 0, %v424
      %426 = vst [vmem:[#allocation2 + $0x38] sm:$0x1] %v425
      %v427 = vld [vmem:[#allocation2 + $0x40] sm:$0x1]
      %v428 = vsel %vm399, 0, %v427
      %429 = vst [vmem:[#allocation2 + $0x40] sm:$0x1] %v428
      %v430 = vld [vmem:[%s372] sm:$0xf]
      %v431 = vld [vmem:[%s372 + $0x4] sm:$0xf]
      %v432 = vld [vmem:[%s372 + $0x8] sm:$0xf]
      %v433 = vld [vmem:[%s372 + $0xc] sm:$0xf]
      %v434 = vld [vmem:[%s372 + $0x10] sm:$0xf]
      %v435 = vld [vmem:[%s372 + $0x14] sm:$0xf]
      %v436 = vld [vmem:[%s372 + $0x18] sm:$0xf]
      %v437 = vld [vmem:[%s372 + $0x1c] sm:$0xf]
      %v438 = vunpack.c.l.bf16 %v430
      %v439 = vunpack.c.l.bf16 %v431
      %v440 = vunpack.c.l.bf16 %v432
      %v441 = vunpack.c.l.bf16 %v433
      %v442 = vunpack.c.l.bf16 %v434
      %v443 = vunpack.c.l.bf16 %v435
      %v444 = vunpack.c.l.bf16 %v436
      %v445 = vunpack.c.l.bf16 %v437
      %v447 = vlaneseq
      %v448 = vshrl.u32 %v447, 7
      %v449 = vsub.s32 0, %v448
      %v450 = vrot.slane %v394, %v449
      %v452 = vmul.f32 %v438, %v450
      %v453 = vmul.f32 %v439, %v450
      %v454 = vmul.f32 %v440, %v450
      %v455 = vmul.f32 %v441, %v450
      %v456 = vmul.f32 %v442, %v450
      %v457 = vmul.f32 %v443, %v450
      %v458 = vmul.f32 %v444, %v450
      %v459 = vmul.f32 %v445, %v450
      %v461 = vlaneseq
      %v462 = vshrl.u32 %v461, 7
      %v463 = vsub.s32 0, %v462
      %v464 = vrot.slane %v395, %v463
      %v466 = vadd.f32 %v452, %v464
      %v467 = vadd.f32 %v453, %v464
      %v468 = vadd.f32 %v454, %v464
      %v469 = vadd.f32 %v455, %v464
      %v470 = vadd.f32 %v456, %v464
      %v471 = vadd.f32 %v457, %v464
      %v472 = vadd.f32 %v458, %v464
      %v473 = vadd.f32 %v459, %v464
      %v474 = vmax.f32 %v466, 0.0
      %v475 = vmax.f32 %v467, 0.0
      %v476 = vmax.f32 %v468, 0.0
      %v477 = vmax.f32 %v469, 0.0
      %v478 = vmax.f32 %v470, 0.0
      %v479 = vmax.f32 %v471, 0.0
      %v480 = vmax.f32 %v472, 0.0
      %v481 = vmax.f32 %v473, 0.0
      %v482 = vpack.c.bf16 %v474, %v474
      %v483 = vpack.c.bf16 %v475, %v475
      %v484 = vpack.c.bf16 %v476, %v476
      %v485 = vpack.c.bf16 %v477, %v477
      %v486 = vpack.c.bf16 %v478, %v478
      %v487 = vpack.c.bf16 %v479, %v479
      %v488 = vpack.c.bf16 %v480, %v480
      %v489 = vpack.c.bf16 %v481, %v481
      %v498 = vunpack.c.l.b16 %v482
      %v499 = vunpack.c.l.b16 %v483
      %v500 = vunpack.c.l.b16 %v484
      %v501 = vunpack.c.l.b16 %v485
      %v502 = vunpack.c.l.b16 %v486
      %v503 = vunpack.c.l.b16 %v487
      %v504 = vunpack.c.l.b16 %v488
      %v505 = vunpack.c.l.b16 %v489
      %v506 = vpack.c.b16 %v498, %v498
      %v507 = vpack.c.b16 %v499, %v499
      %v508 = vpack.c.b16 %v500, %v500
      %v509 = vpack.c.b16 %v501, %v501
      %v510 = vpack.c.b16 %v502, %v502
      %v511 = vpack.c.b16 %v503, %v503
      %v512 = vpack.c.b16 %v504, %v504
      %v513 = vpack.c.b16 %v505, %v505
      %v515 = vshrl.u32 %v506, 16
      %v517 = vrot.slane %v515, 7
      %v518 = vshll.u32 %v506, 16
      %v520 = vor.u32 %v517, %v518
      %v521 = vrot.slane %v517, 4
      %v523 = vshrl.u32 %v507, 16
      %v525 = vrot.slane %v523, 7
      %v526 = vshll.u32 %v507, 16
      %v528 = vor.u32 %v525, %v526
      %v529 = vrot.slane %v525, 4
      %v531 = vshrl.u32 %v508, 16
      %v533 = vrot.slane %v531, 7
      %v534 = vshll.u32 %v508, 16
      %v536 = vor.u32 %v533, %v534
      %v537 = vrot.slane %v533, 4
      %v539 = vshrl.u32 %v509, 16
      %v541 = vrot.slane %v539, 7
      %v542 = vshll.u32 %v509, 16
      %v544 = vor.u32 %v541, %v542
      %v545 = vrot.slane %v541, 4
      %v547 = vshrl.u32 %v510, 16
      %v549 = vrot.slane %v547, 7
      %v550 = vshll.u32 %v510, 16
      %v552 = vor.u32 %v549, %v550
      %v553 = vrot.slane %v549, 4
      %v555 = vshrl.u32 %v511, 16
      %v557 = vrot.slane %v555, 7
      %v558 = vshll.u32 %v511, 16
      %v560 = vor.u32 %v557, %v558
      %v561 = vrot.slane %v557, 4
      %v563 = vshrl.u32 %v512, 16
      %v565 = vrot.slane %v563, 7
      %v566 = vshll.u32 %v512, 16
      %v568 = vor.u32 %v565, %v566
      %v569 = vrot.slane %v565, 4
      %v571 = vshrl.u32 %v513, 16
      %v573 = vrot.slane %v571, 7
      %v574 = vshll.u32 %v513, 16
      %v576 = vor.u32 %v573, %v574
      %v577 = vrot.slane %v573, 4
      %s594 = scalar_lea.vmem [#allocation2], 8
      %vm595 = vcmask 1043456
      %vm596 = vsmask.f32 7938
      %vm597 = vmand %vm595, %vm596
      %v598 = vld [vmem:[%s594] sm:$0xf]
      %v599 = vsel %vm597, %v520, %v598
      %600 = vst [vmem:[%s594] sm:$0xf] %v599
      %v601 = vld [vmem:[%s594 + $0x4] sm:$0x1]
      %v602 = vsel %vm399, %v521, %v601
      %603 = vst [vmem:[%s594 + $0x4] sm:$0x1] %v602
      %v604 = vld [vmem:[%s594 + $0x8] sm:$0xf]
      %v605 = vsel %vm597, %v528, %v604
      %606 = vst [vmem:[%s594 + $0x8] sm:$0xf] %v605
      %v607 = vld [vmem:[%s594 + $0xc] sm:$0x1]
      %v608 = vsel %vm399, %v529, %v607
      %609 = vst [vmem:[%s594 + $0xc] sm:$0x1] %v608
      %v610 = vld [vmem:[%s594 + $0x10] sm:$0xf]
      %v611 = vsel %vm597, %v536, %v610
      %612 = vst [vmem:[%s594 + $0x10] sm:$0xf] %v611
      %v613 = vld [vmem:[%s594 + $0x14] sm:$0x1]
      %v614 = vsel %vm399, %v537, %v613
      %615 = vst [vmem:[%s594 + $0x14] sm:$0x1] %v614
      %v616 = vld [vmem:[%s594 + $0x18] sm:$0xf]
      %v617 = vsel %vm597, %v544, %v616
      %618 = vst [vmem:[%s594 + $0x18] sm:$0xf] %v617
      %v619 = vld [vmem:[%s594 + $0x1c] sm:$0x1]
      %v620 = vsel %vm399, %v545, %v619
      %621 = vst [vmem:[%s594 + $0x1c] sm:$0x1] %v620
      %v622 = vld [vmem:[%s594 + $0x20] sm:$0xf]
      %v623 = vsel %vm597, %v552, %v622
      %624 = vst [vmem:[%s594 + $0x20] sm:$0xf] %v623
      %v625 = vld [vmem:[%s594 + $0x24] sm:$0x1]
      %v626 = vsel %vm399, %v553, %v625
      %627 = vst [vmem:[%s594 + $0x24] sm:$0x1] %v626
      %v628 = vld [vmem:[%s594 + $0x28] sm:$0xf]
      %v629 = vsel %vm597, %v560, %v628
      %630 = vst [vmem:[%s594 + $0x28] sm:$0xf] %v629
      %v631 = vld [vmem:[%s594 + $0x2c] sm:$0x1]
      %v632 = vsel %vm399, %v561, %v631
      %633 = vst [vmem:[%s594 + $0x2c] sm:$0x1] %v632
      %v634 = vld [vmem:[%s594 + $0x30] sm:$0xf]
      %v635 = vsel %vm597, %v568, %v634
      %636 = vst [vmem:[%s594 + $0x30] sm:$0xf] %v635
      %v637 = vld [vmem:[%s594 + $0x34] sm:$0x1]
      %v638 = vsel %vm399, %v569, %v637
      %639 = vst [vmem:[%s594 + $0x34] sm:$0x1] %v638
      %v640 = vld [vmem:[%s594 + $0x38] sm:$0xf]
      %v641 = vsel %vm597, %v576, %v640
      %642 = vst [vmem:[%s594 + $0x38] sm:$0xf] %v641
      %v643 = vld [vmem:[%s594 + $0x3c] sm:$0x1]
      %v644 = vsel %vm399, %v577, %v643
      %645 = vst [vmem:[%s594 + $0x3c] sm:$0x1] %v644
      %646 = vst [vmem:[#allocation3] sm:$0xf] 0
      %v647 = vld [vmem:[#allocation3 + $0x4] sm:$0x1]
      %v648 = vsel %vm399, 0, %v647
      %649 = vst [vmem:[#allocation3 + $0x4] sm:$0x1] %v648
      %v650 = vld [vmem:[#allocation3] sm:$0x1]
      %v651 = vsel %vm399, 0, %v650
      %652 = vst [vmem:[#allocation3] sm:$0x1] %v651
      %v653 = vld [vmem:[#allocation3 + $0x8] sm:$0x1]
      %v654 = vsel %vm399, 0, %v653
      %655 = vst [vmem:[#allocation3 + $0x8] sm:$0x1] %v654
      %v656 = vld [vmem:[#allocation3 + $0x10] sm:$0x1]
      %v657 = vsel %vm399, 0, %v656
      %658 = vst [vmem:[#allocation3 + $0x10] sm:$0x1] %v657
      %v659 = vld [vmem:[#allocation3 + $0x18] sm:$0x1]
      %v660 = vsel %vm399, 0, %v659
      %661 = vst [vmem:[#allocation3 + $0x18] sm:$0x1] %v660
      %v662 = vld [vmem:[#allocation3 + $0x20] sm:$0x1]
      %v663 = vsel %vm399, 0, %v662
      %664 = vst [vmem:[#allocation3 + $0x20] sm:$0x1] %v663
      %v665 = vld [vmem:[#allocation3 + $0x28] sm:$0x1]
      %v666 = vsel %vm399, 0, %v665
      %667 = vst [vmem:[#allocation3 + $0x28] sm:$0x1] %v666
      %v668 = vld [vmem:[#allocation3 + $0x30] sm:$0x1]
      %v669 = vsel %vm399, 0, %v668
      %670 = vst [vmem:[#allocation3 + $0x30] sm:$0x1] %v669
      %v671 = vld [vmem:[#allocation3 + $0x38] sm:$0x1]
      %v672 = vsel %vm399, 0, %v671
      %673 = vst [vmem:[#allocation3 + $0x38] sm:$0x1] %v672
      %v674 = vld [vmem:[#allocation3 + $0x40] sm:$0x1]
      %v675 = vsel %vm399, 0, %v674
      %676 = vst [vmem:[#allocation3 + $0x40] sm:$0x1] %v675
      %v677 = vld [vmem:[%s377] sm:$0xf]
      %v678 = vld [vmem:[%s377 + $0x4] sm:$0xf]
      %v679 = vld [vmem:[%s377 + $0x8] sm:$0xf]
      %v680 = vld [vmem:[%s377 + $0xc] sm:$0xf]
      %v681 = vld [vmem:[%s377 + $0x10] sm:$0xf]
      %v682 = vld [vmem:[%s377 + $0x14] sm:$0xf]
      %v683 = vld [vmem:[%s377 + $0x18] sm:$0xf]
      %v684 = vld [vmem:[%s377 + $0x1c] sm:$0xf]
      %v685 = vunpack.c.l.bf16 %v677
      %v686 = vunpack.c.l.bf16 %v678
      %v687 = vunpack.c.l.bf16 %v679
      %v688 = vunpack.c.l.bf16 %v680
      %v689 = vunpack.c.l.bf16 %v681
      %v690 = vunpack.c.l.bf16 %v682
      %v691 = vunpack.c.l.bf16 %v683
      %v692 = vunpack.c.l.bf16 %v684
      %v693 = vmul.f32 %v685, %v450
      %v694 = vmul.f32 %v686, %v450
      %v695 = vmul.f32 %v687, %v450
      %v696 = vmul.f32 %v688, %v450
      %v697 = vmul.f32 %v689, %v450
      %v698 = vmul.f32 %v690, %v450
      %v699 = vmul.f32 %v691, %v450
      %v700 = vmul.f32 %v692, %v450
      %v701 = vadd.f32 %v693, %v464
      %v702 = vadd.f32 %v694, %v464
      %v703 = vadd.f32 %v695, %v464
      %v704 = vadd.f32 %v696, %v464
      %v705 = vadd.f32 %v697, %v464
      %v706 = vadd.f32 %v698, %v464
      %v707 = vadd.f32 %v699, %v464
      %v708 = vadd.f32 %v700, %v464
      %v709 = vmax.f32 %v701, 0.0
      %v710 = vmax.f32 %v702, 0.0
      %v711 = vmax.f32 %v703, 0.0
      %v712 = vmax.f32 %v704, 0.0
      %v713 = vmax.f32 %v705, 0.0
      %v714 = vmax.f32 %v706, 0.0
      %v715 = vmax.f32 %v707, 0.0
      %v716 = vmax.f32 %v708, 0.0
      %v717 = vpack.c.bf16 %v709, %v709
      %v718 = vpack.c.bf16 %v710, %v710
      %v719 = vpack.c.bf16 %v711, %v711
      %v720 = vpack.c.bf16 %v712, %v712
      %v721 = vpack.c.bf16 %v713, %v713
      %v722 = vpack.c.bf16 %v714, %v714
      %v723 = vpack.c.bf16 %v715, %v715
      %v724 = vpack.c.bf16 %v716, %v716
      %v733 = vunpack.c.l.b16 %v717
      %v734 = vunpack.c.l.b16 %v718
      %v735 = vunpack.c.l.b16 %v719
      %v736 = vunpack.c.l.b16 %v720
      %v737 = vunpack.c.l.b16 %v721
      %v738 = vunpack.c.l.b16 %v722
      %v739 = vunpack.c.l.b16 %v723
      %v740 = vunpack.c.l.b16 %v724
      %v741 = vpack.c.b16 %v733, %v733
      %v742 = vpack.c.b16 %v734, %v734
      %v743 = vpack.c.b16 %v735, %v735
      %v744 = vpack.c.b16 %v736, %v736
      %v745 = vpack.c.b16 %v737, %v737
      %v746 = vpack.c.b16 %v738, %v738
      %v747 = vpack.c.b16 %v739, %v739
      %v748 = vpack.c.b16 %v740, %v740
      %v750 = vshrl.u32 %v741, 16
      %v752 = vrot.slane %v750, 7
      %v753 = vshll.u32 %v741, 16
      %v755 = vor.u32 %v752, %v753
      %v756 = vrot.slane %v752, 4
      %v758 = vshrl.u32 %v742, 16
      %v760 = vrot.slane %v758, 7
      %v761 = vshll.u32 %v742, 16
      %v763 = vor.u32 %v760, %v761
      %v764 = vrot.slane %v760, 4
      %v766 = vshrl.u32 %v743, 16
      %v768 = vrot.slane %v766, 7
      %v769 = vshll.u32 %v743, 16
      %v771 = vor.u32 %v768, %v769
      %v772 = vrot.slane %v768, 4
      %v774 = vshrl.u32 %v744, 16
      %v776 = vrot.slane %v774, 7
      %v777 = vshll.u32 %v744, 16
      %v779 = vor.u32 %v776, %v777
      %v780 = vrot.slane %v776, 4
      %v782 = vshrl.u32 %v745, 16
      %v784 = vrot.slane %v782, 7
      %v785 = vshll.u32 %v745, 16
      %v787 = vor.u32 %v784, %v785
      %v788 = vrot.slane %v784, 4
      %v790 = vshrl.u32 %v746, 16
      %v792 = vrot.slane %v790, 7
      %v793 = vshll.u32 %v746, 16
      %v795 = vor.u32 %v792, %v793
      %v796 = vrot.slane %v792, 4
      %v798 = vshrl.u32 %v747, 16
      %v800 = vrot.slane %v798, 7
      %v801 = vshll.u32 %v747, 16
      %v803 = vor.u32 %v800, %v801
      %v804 = vrot.slane %v800, 4
      %v806 = vshrl.u32 %v748, 16
      %v808 = vrot.slane %v806, 7
      %v809 = vshll.u32 %v748, 16
      %v811 = vor.u32 %v808, %v809
      %v812 = vrot.slane %v808, 4
      %s829 = scalar_lea.vmem [#allocation3], 8
      %v830 = vld [vmem:[%s829] sm:$0xf]
      %v831 = vsel %vm597, %v755, %v830
      %832 = vst [vmem:[%s829] sm:$0xf] %v831
      %v833 = vld [vmem:[%s829 + $0x4] sm:$0x1]
      %v834 = vsel %vm399, %v756, %v833
      %835 = vst [vmem:[%s829 + $0x4] sm:$0x1] %v834
      %v836 = vld [vmem:[%s829 + $0x8] sm:$0xf]
      %v837 = vsel %vm597, %v763, %v836
      %838 = vst [vmem:[%s829 + $0x8] sm:$0xf] %v837
      %v839 = vld [vmem:[%s829 + $0xc] sm:$0x1]
      %v840 = vsel %vm399, %v764, %v839
      %841 = vst [vmem:[%s829 + $0xc] sm:$0x1] %v840
      %v842 = vld [vmem:[%s829 + $0x10] sm:$0xf]
      %v843 = vsel %vm597, %v771, %v842
      %844 = vst [vmem:[%s829 + $0x10] sm:$0xf] %v843
      %v845 = vld [vmem:[%s829 + $0x14] sm:$0x1]
      %v846 = vsel %vm399, %v772, %v845
      %847 = vst [vmem:[%s829 + $0x14] sm:$0x1] %v846
      %v848 = vld [vmem:[%s829 + $0x18] sm:$0xf]
      %v849 = vsel %vm597, %v779, %v848
      %850 = vst [vmem:[%s829 + $0x18] sm:$0xf] %v849
      %v851 = vld [vmem:[%s829 + $0x1c] sm:$0x1]
      %v852 = vsel %vm399, %v780, %v851
      %853 = vst [vmem:[%s829 + $0x1c] sm:$0x1] %v852
      %v854 = vld [vmem:[%s829 + $0x20] sm:$0xf]
      %v855 = vsel %vm597, %v787, %v854
      %856 = vst [vmem:[%s829 + $0x20] sm:$0xf] %v855
      %v857 = vld [vmem:[%s829 + $0x24] sm:$0x1]
      %v858 = vsel %vm399, %v788, %v857
      %859 = vst [vmem:[%s829 + $0x24] sm:$0x1] %v858
      %v860 = vld [vmem:[%s829 + $0x28] sm:$0xf]
      %v861 = vsel %vm597, %v795, %v860
      %862 = vst [vmem:[%s829 + $0x28] sm:$0xf] %v861
      %v863 = vld [vmem:[%s829 + $0x2c] sm:$0x1]
      %v864 = vsel %vm399, %v796, %v863
      %865 = vst [vmem:[%s829 + $0x2c] sm:$0x1] %v864
      %v866 = vld [vmem:[%s829 + $0x30] sm:$0xf]
      %v867 = vsel %vm597, %v803, %v866
      %868 = vst [vmem:[%s829 + $0x30] sm:$0xf] %v867
      %v869 = vld [vmem:[%s829 + $0x34] sm:$0x1]
      %v870 = vsel %vm399, %v804, %v869
      %871 = vst [vmem:[%s829 + $0x34] sm:$0x1] %v870
      %v872 = vld [vmem:[%s829 + $0x38] sm:$0xf]
      %v873 = vsel %vm597, %v811, %v872
      %874 = vst [vmem:[%s829 + $0x38] sm:$0xf] %v873
      %v875 = vld [vmem:[%s829 + $0x3c] sm:$0x1]
      %v876 = vsel %vm399, %v812, %v875
      %877 = vst [vmem:[%s829 + $0x3c] sm:$0x1] %v876
      %878 = vst [vmem:[#allocation4] sm:$0xf] 0
      %v879 = vld [vmem:[#allocation4 + $0x4] sm:$0x1]
      %v880 = vsel %vm399, 0, %v879
      %881 = vst [vmem:[#allocation4 + $0x4] sm:$0x1] %v880
      %v882 = vld [vmem:[#allocation4] sm:$0x1]
      %v883 = vsel %vm399, 0, %v882
      %884 = vst [vmem:[#allocation4] sm:$0x1] %v883
      %v885 = vld [vmem:[#allocation4 + $0x8] sm:$0x1]
      %v886 = vsel %vm399, 0, %v885
      %887 = vst [vmem:[#allocation4 + $0x8] sm:$0x1] %v886
      %v888 = vld [vmem:[#allocation4 + $0x10] sm:$0x1]
      %v889 = vsel %vm399, 0, %v888
      %890 = vst [vmem:[#allocation4 + $0x10] sm:$0x1] %v889
      %v891 = vld [vmem:[#allocation4 + $0x18] sm:$0x1]
      %v892 = vsel %vm399, 0, %v891
      %893 = vst [vmem:[#allocation4 + $0x18] sm:$0x1] %v892
      %v894 = vld [vmem:[#allocation4 + $0x20] sm:$0x1]
      %v895 = vsel %vm399, 0, %v894
      %896 = vst [vmem:[#allocation4 + $0x20] sm:$0x1] %v895
      %v897 = vld [vmem:[#allocation4 + $0x28] sm:$0x1]
      %v898 = vsel %vm399, 0, %v897
      %899 = vst [vmem:[#allocation4 + $0x28] sm:$0x1] %v898
      %v900 = vld [vmem:[#allocation4 + $0x30] sm:$0x1]
      %v901 = vsel %vm399, 0, %v900
      %902 = vst [vmem:[#allocation4 + $0x30] sm:$0x1] %v901
      %v903 = vld [vmem:[#allocation4 + $0x38] sm:$0x1]
      %v904 = vsel %vm399, 0, %v903
      %905 = vst [vmem:[#allocation4 + $0x38] sm:$0x1] %v904
      %v906 = vld [vmem:[#allocation4 + $0x40] sm:$0x1]
      %v907 = vsel %vm399, 0, %v906
      %908 = vst [vmem:[#allocation4 + $0x40] sm:$0x1] %v907
      %v909 = vld [vmem:[%s382] sm:$0xf]
      %v910 = vld [vmem:[%s382 + $0x4] sm:$0xf]
      %v911 = vld [vmem:[%s382 + $0x8] sm:$0xf]
      %v912 = vld [vmem:[%s382 + $0xc] sm:$0xf]
      %v913 = vld [vmem:[%s382 + $0x10] sm:$0xf]
      %v914 = vld [vmem:[%s382 + $0x14] sm:$0xf]
      %v915 = vld [vmem:[%s382 + $0x18] sm:$0xf]
      %v916 = vld [vmem:[%s382 + $0x1c] sm:$0xf]
      %v917 = vunpack.c.l.bf16 %v909
      %v918 = vunpack.c.l.bf16 %v910
      %v919 = vunpack.c.l.bf16 %v911
      %v920 = vunpack.c.l.bf16 %v912
      %v921 = vunpack.c.l.bf16 %v913
      %v922 = vunpack.c.l.bf16 %v914
      %v923 = vunpack.c.l.bf16 %v915
      %v924 = vunpack.c.l.bf16 %v916
      %v925 = vmul.f32 %v917, %v450
      %v926 = vmul.f32 %v918, %v450
      %v927 = vmul.f32 %v919, %v450
      %v928 = vmul.f32 %v920, %v450
      %v929 = vmul.f32 %v921, %v450
      %v930 = vmul.f32 %v922, %v450
      %v931 = vmul.f32 %v923, %v450
      %v932 = vmul.f32 %v924, %v450
      %v933 = vadd.f32 %v925, %v464
      %v934 = vadd.f32 %v926, %v464
      %v935 = vadd.f32 %v927, %v464
      %v936 = vadd.f32 %v928, %v464
      %v937 = vadd.f32 %v929, %v464
      %v938 = vadd.f32 %v930, %v464
      %v939 = vadd.f32 %v931, %v464
      %v940 = vadd.f32 %v932, %v464
      %v941 = vmax.f32 %v933, 0.0
      %v942 = vmax.f32 %v934, 0.0
      %v943 = vmax.f32 %v935, 0.0
      %v944 = vmax.f32 %v936, 0.0
      %v945 = vmax.f32 %v937, 0.0
      %v946 = vmax.f32 %v938, 0.0
      %v947 = vmax.f32 %v939, 0.0
      %v948 = vmax.f32 %v940, 0.0
      %v949 = vpack.c.bf16 %v941, %v941
      %v950 = vpack.c.bf16 %v942, %v942
      %v951 = vpack.c.bf16 %v943, %v943
      %v952 = vpack.c.bf16 %v944, %v944
      %v953 = vpack.c.bf16 %v945, %v945
      %v954 = vpack.c.bf16 %v946, %v946
      %v955 = vpack.c.bf16 %v947, %v947
      %v956 = vpack.c.bf16 %v948, %v948
      %v965 = vunpack.c.l.b16 %v949
      %v966 = vunpack.c.l.b16 %v950
      %v967 = vunpack.c.l.b16 %v951
      %v968 = vunpack.c.l.b16 %v952
      %v969 = vunpack.c.l.b16 %v953
      %v970 = vunpack.c.l.b16 %v954
      %v971 = vunpack.c.l.b16 %v955
      %v972 = vunpack.c.l.b16 %v956
      %v973 = vpack.c.b16 %v965, %v965
      %v974 = vpack.c.b16 %v966, %v966
      %v975 = vpack.c.b16 %v967, %v967
      %v976 = vpack.c.b16 %v968, %v968
      %v977 = vpack.c.b16 %v969, %v969
      %v978 = vpack.c.b16 %v970, %v970
      %v979 = vpack.c.b16 %v971, %v971
      %v980 = vpack.c.b16 %v972, %v972
      %v982 = vshrl.u32 %v973, 16
      %v984 = vrot.slane %v982, 7
      %v985 = vshll.u32 %v973, 16
      %v987 = vor.u32 %v984, %v985
      %v988 = vrot.slane %v984, 4
      %v990 = vshrl.u32 %v974, 16
      %v992 = vrot.slane %v990, 7
      %v993 = vshll.u32 %v974, 16
      %v995 = vor.u32 %v992, %v993
      %v996 = vrot.slane %v992, 4
      %v998 = vshrl.u32 %v975, 16
      %v1000 = vrot.slane %v998, 7
      %v1001 = vshll.u32 %v975, 16
      %v1003 = vor.u32 %v1000, %v1001
      %v1004 = vrot.slane %v1000, 4
      %v1006 = vshrl.u32 %v976, 16
      %v1008 = vrot.slane %v1006, 7
      %v1009 = vshll.u32 %v976, 16
      %v1011 = vor.u32 %v1008, %v1009
      %v1012 = vrot.slane %v1008, 4
      %v1014 = vshrl.u32 %v977, 16
      %v1016 = vrot.slane %v1014, 7
      %v1017 = vshll.u32 %v977, 16
      %v1019 = vor.u32 %v1016, %v1017
      %v1020 = vrot.slane %v1016, 4
      %v1022 = vshrl.u32 %v978, 16
      %v1024 = vrot.slane %v1022, 7
      %v1025 = vshll.u32 %v978, 16
      %v1027 = vor.u32 %v1024, %v1025
      %v1028 = vrot.slane %v1024, 4
      %v1030 = vshrl.u32 %v979, 16
      %v1032 = vrot.slane %v1030, 7
      %v1033 = vshll.u32 %v979, 16
      %v1035 = vor.u32 %v1032, %v1033
      %v1036 = vrot.slane %v1032, 4
      %v1038 = vshrl.u32 %v980, 16
      %v1040 = vrot.slane %v1038, 7
      %v1041 = vshll.u32 %v980, 16
      %v1043 = vor.u32 %v1040, %v1041
      %v1044 = vrot.slane %v1040, 4
      %s1061 = scalar_lea.vmem [#allocation4], 8
      %v1062 = vld [vmem:[%s1061] sm:$0xf]
      %v1063 = vsel %vm597, %v987, %v1062
      %1064 = vst [vmem:[%s1061] sm:$0xf] %v1063
      %v1065 = vld [vmem:[%s1061 + $0x4] sm:$0x1]
      %v1066 = vsel %vm399, %v988, %v1065
      %1067 = vst [vmem:[%s1061 + $0x4] sm:$0x1] %v1066
      %v1068 = vld [vmem:[%s1061 + $0x8] sm:$0xf]
      %v1069 = vsel %vm597, %v995, %v1068
      %1070 = vst [vmem:[%s1061 + $0x8] sm:$0xf] %v1069
      %v1071 = vld [vmem:[%s1061 + $0xc] sm:$0x1]
      %v1072 = vsel %vm399, %v996, %v1071
      %1073 = vst [vmem:[%s1061 + $0xc] sm:$0x1] %v1072
      %v1074 = vld [vmem:[%s1061 + $0x10] sm:$0xf]
      %v1075 = vsel %vm597, %v1003, %v1074
      %1076 = vst [vmem:[%s1061 + $0x10] sm:$0xf] %v1075
      %v1077 = vld [vmem:[%s1061 + $0x14] sm:$0x1]
      %v1078 = vsel %vm399, %v1004, %v1077
      %1079 = vst [vmem:[%s1061 + $0x14] sm:$0x1] %v1078
      %v1080 = vld [vmem:[%s1061 + $0x18] sm:$0xf]
      %v1081 = vsel %vm597, %v1011, %v1080
      %1082 = vst [vmem:[%s1061 + $0x18] sm:$0xf] %v1081
      %v1083 = vld [vmem:[%s1061 + $0x1c] sm:$0x1]
      %v1084 = vsel %vm399, %v1012, %v1083
      %1085 = vst [vmem:[%s1061 + $0x1c] sm:$0x1] %v1084
      %v1086 = vld [vmem:[%s1061 + $0x20] sm:$0xf]
      %v1087 = vsel %vm597, %v1019, %v1086
      %1088 = vst [vmem:[%s1061 + $0x20] sm:$0xf] %v1087
      %v1089 = vld [vmem:[%s1061 + $0x24] sm:$0x1]
      %v1090 = vsel %vm399, %v1020, %v1089
      %1091 = vst [vmem:[%s1061 + $0x24] sm:$0x1] %v1090
      %v1092 = vld [vmem:[%s1061 + $0x28] sm:$0xf]
      %v1093 = vsel %vm597, %v1027, %v1092
      %1094 = vst [vmem:[%s1061 + $0x28] sm:$0xf] %v1093
      %v1095 = vld [vmem:[%s1061 + $0x2c] sm:$0x1]
      %v1096 = vsel %vm399, %v1028, %v1095
      %1097 = vst [vmem:[%s1061 + $0x2c] sm:$0x1] %v1096
      %v1098 = vld [vmem:[%s1061 + $0x30] sm:$0xf]
      %v1099 = vsel %vm597, %v1035, %v1098
      %1100 = vst [vmem:[%s1061 + $0x30] sm:$0xf] %v1099
      %v1101 = vld [vmem:[%s1061 + $0x34] sm:$0x1]
      %v1102 = vsel %vm399, %v1036, %v1101
      %1103 = vst [vmem:[%s1061 + $0x34] sm:$0x1] %v1102
      %v1104 = vld [vmem:[%s1061 + $0x38] sm:$0xf]
      %v1105 = vsel %vm597, %v1043, %v1104
      %1106 = vst [vmem:[%s1061 + $0x38] sm:$0xf] %v1105
      %v1107 = vld [vmem:[%s1061 + $0x3c] sm:$0x1]
      %v1108 = vsel %vm399, %v1044, %v1107
      %1109 = vst [vmem:[%s1061 + $0x3c] sm:$0x1] %v1108
      %1110 = vst [vmem:[#allocation5] sm:$0xf] 0
      %v1111 = vld [vmem:[#allocation5 + $0x4] sm:$0x1]
      %v1112 = vsel %vm399, 0, %v1111
      %1113 = vst [vmem:[#allocation5 + $0x4] sm:$0x1] %v1112
      %v1114 = vld [vmem:[#allocation5] sm:$0x1]
      %v1115 = vsel %vm399, 0, %v1114
      %1116 = vst [vmem:[#allocation5] sm:$0x1] %v1115
      %v1117 = vld [vmem:[#allocation5 + $0x8] sm:$0x1]
      %v1118 = vsel %vm399, 0, %v1117
      %1119 = vst [vmem:[#allocation5 + $0x8] sm:$0x1] %v1118
      %v1120 = vld [vmem:[#allocation5 + $0x10] sm:$0x1]
      %v1121 = vsel %vm399, 0, %v1120
      %1122 = vst [vmem:[#allocation5 + $0x10] sm:$0x1] %v1121
      %v1123 = vld [vmem:[#allocation5 + $0x18] sm:$0x1]
      %v1124 = vsel %vm399, 0, %v1123
      %1125 = vst [vmem:[#allocation5 + $0x18] sm:$0x1] %v1124
      %v1126 = vld [vmem:[#allocation5 + $0x20] sm:$0x1]
      %v1127 = vsel %vm399, 0, %v1126
      %1128 = vst [vmem:[#allocation5 + $0x20] sm:$0x1] %v1127
      %v1129 = vld [vmem:[#allocation5 + $0x28] sm:$0x1]
      %v1130 = vsel %vm399, 0, %v1129
      %1131 = vst [vmem:[#allocation5 + $0x28] sm:$0x1] %v1130
      %v1132 = vld [vmem:[#allocation5 + $0x30] sm:$0x1]
      %v1133 = vsel %vm399, 0, %v1132
      %1134 = vst [vmem:[#allocation5 + $0x30] sm:$0x1] %v1133
      %v1135 = vld [vmem:[#allocation5 + $0x38] sm:$0x1]
      %v1136 = vsel %vm399, 0, %v1135
      %1137 = vst [vmem:[#allocation5 + $0x38] sm:$0x1] %v1136
      %v1138 = vld [vmem:[#allocation5 + $0x40] sm:$0x1]
      %v1139 = vsel %vm399, 0, %v1138
      %1140 = vst [vmem:[#allocation5 + $0x40] sm:$0x1] %v1139
      %v1141 = vld [vmem:[%s387] sm:$0xf]
      %v1142 = vld [vmem:[%s387 + $0x4] sm:$0xf]
      %v1143 = vld [vmem:[%s387 + $0x8] sm:$0xf]
      %v1144 = vld [vmem:[%s387 + $0xc] sm:$0xf]
      %v1145 = vld [vmem:[%s387 + $0x10] sm:$0xf]
      %v1146 = vld [vmem:[%s387 + $0x14] sm:$0xf]
      %v1147 = vld [vmem:[%s387 + $0x18] sm:$0xf]
      %v1148 = vld [vmem:[%s387 + $0x1c] sm:$0xf]
      %v1149 = vunpack.c.l.bf16 %v1141
      %v1150 = vunpack.c.l.bf16 %v1142
      %v1151 = vunpack.c.l.bf16 %v1143
      %v1152 = vunpack.c.l.bf16 %v1144
      %v1153 = vunpack.c.l.bf16 %v1145
      %v1154 = vunpack.c.l.bf16 %v1146
      %v1155 = vunpack.c.l.bf16 %v1147
      %v1156 = vunpack.c.l.bf16 %v1148
      %v1157 = vmul.f32 %v1149, %v450
      %v1158 = vmul.f32 %v1150, %v450
      %v1159 = vmul.f32 %v1151, %v450
      %v1160 = vmul.f32 %v1152, %v450
      %v1161 = vmul.f32 %v1153, %v450
      %v1162 = vmul.f32 %v1154, %v450
      %v1163 = vmul.f32 %v1155, %v450
      %v1164 = vmul.f32 %v1156, %v450
      %v1165 = vadd.f32 %v1157, %v464
      %v1166 = vadd.f32 %v1158, %v464
      %v1167 = vadd.f32 %v1159, %v464
      %v1168 = vadd.f32 %v1160, %v464
      %v1169 = vadd.f32 %v1161, %v464
      %v1170 = vadd.f32 %v1162, %v464
      %v1171 = vadd.f32 %v1163, %v464
      %v1172 = vadd.f32 %v1164, %v464
      %v1173 = vmax.f32 %v1165, 0.0
      %v1174 = vmax.f32 %v1166, 0.0
      %v1175 = vmax.f32 %v1167, 0.0
      %v1176 = vmax.f32 %v1168, 0.0
      %v1177 = vmax.f32 %v1169, 0.0
      %v1178 = vmax.f32 %v1170, 0.0
      %v1179 = vmax.f32 %v1171, 0.0
      %v1180 = vmax.f32 %v1172, 0.0
      %v1181 = vpack.c.bf16 %v1173, %v1173
      %v1182 = vpack.c.bf16 %v1174, %v1174
      %v1183 = vpack.c.bf16 %v1175, %v1175
      %v1184 = vpack.c.bf16 %v1176, %v1176
      %v1185 = vpack.c.bf16 %v1177, %v1177
      %v1186 = vpack.c.bf16 %v1178, %v1178
      %v1187 = vpack.c.bf16 %v1179, %v1179
      %v1188 = vpack.c.bf16 %v1180, %v1180
      %v1197 = vunpack.c.l.b16 %v1181
      %v1198 = vunpack.c.l.b16 %v1182
      %v1199 = vunpack.c.l.b16 %v1183
      %v1200 = vunpack.c.l.b16 %v1184
      %v1201 = vunpack.c.l.b16 %v1185
      %v1202 = vunpack.c.l.b16 %v1186
      %v1203 = vunpack.c.l.b16 %v1187
      %v1204 = vunpack.c.l.b16 %v1188
      %v1205 = vpack.c.b16 %v1197, %v1197
      %v1206 = vpack.c.b16 %v1198, %v1198
      %v1207 = vpack.c.b16 %v1199, %v1199
      %v1208 = vpack.c.b16 %v1200, %v1200
      %v1209 = vpack.c.b16 %v1201, %v1201
      %v1210 = vpack.c.b16 %v1202, %v1202
      %v1211 = vpack.c.b16 %v1203, %v1203
      %v1212 = vpack.c.b16 %v1204, %v1204
      %v1214 = vshrl.u32 %v1205, 16
      %v1216 = vrot.slane %v1214, 7
      %v1217 = vshll.u32 %v1205, 16
      %v1219 = vor.u32 %v1216, %v1217
      %v1220 = vrot.slane %v1216, 4
      %v1222 = vshrl.u32 %v1206, 16
      %v1224 = vrot.slane %v1222, 7
      %v1225 = vshll.u32 %v1206, 16
      %v1227 = vor.u32 %v1224, %v1225
      %v1228 = vrot.slane %v1224, 4
      %v1230 = vshrl.u32 %v1207, 16
      %v1232 = vrot.slane %v1230, 7
      %v1233 = vshll.u32 %v1207, 16
      %v1235 = vor.u32 %v1232, %v1233
      %v1236 = vrot.slane %v1232, 4
      %v1238 = vshrl.u32 %v1208, 16
      %v1240 = vrot.slane %v1238, 7
      %v1241 = vshll.u32 %v1208, 16
      %v1243 = vor.u32 %v1240, %v1241
      %v1244 = vrot.slane %v1240, 4
      %v1246 = vshrl.u32 %v1209, 16
      %v1248 = vrot.slane %v1246, 7
      %v1249 = vshll.u32 %v1209, 16
      %v1251 = vor.u32 %v1248, %v1249
      %v1252 = vrot.slane %v1248, 4
      %v1254 = vshrl.u32 %v1210, 16
      %v1256 = vrot.slane %v1254, 7
      %v1257 = vshll.u32 %v1210, 16
      %v1259 = vor.u32 %v1256, %v1257
      %v1260 = vrot.slane %v1256, 4
      %v1262 = vshrl.u32 %v1211, 16
      %v1264 = vrot.slane %v1262, 7
      %v1265 = vshll.u32 %v1211, 16
      %v1267 = vor.u32 %v1264, %v1265
      %v1268 = vrot.slane %v1264, 4
      %v1270 = vshrl.u32 %v1212, 16
      %v1272 = vrot.slane %v1270, 7
      %v1273 = vshll.u32 %v1212, 16
      %v1275 = vor.u32 %v1272, %v1273
      %v1276 = vrot.slane %v1272, 4
      %s1293 = scalar_lea.vmem [#allocation5], 8
      %v1294 = vld [vmem:[%s1293] sm:$0xf]
      %v1295 = vsel %vm597, %v1219, %v1294
      %1296 = vst [vmem:[%s1293] sm:$0xf] %v1295
      %v1297 = vld [vmem:[%s1293 + $0x4] sm:$0x1]
      %v1298 = vsel %vm399, %v1220, %v1297
      %1299 = vst [vmem:[%s1293 + $0x4] sm:$0x1] %v1298
      %v1300 = vld [vmem:[%s1293 + $0x8] sm:$0xf]
      %v1301 = vsel %vm597, %v1227, %v1300
      %1302 = vst [vmem:[%s1293 + $0x8] sm:$0xf] %v1301
      %v1303 = vld [vmem:[%s1293 + $0xc] sm:$0x1]
      %v1304 = vsel %vm399, %v1228, %v1303
      %1305 = vst [vmem:[%s1293 + $0xc] sm:$0x1] %v1304
      %v1306 = vld [vmem:[%s1293 + $0x10] sm:$0xf]
      %v1307 = vsel %vm597, %v1235, %v1306
      %1308 = vst [vmem:[%s1293 + $0x10] sm:$0xf] %v1307
      %v1309 = vld [vmem:[%s1293 + $0x14] sm:$0x1]
      %v1310 = vsel %vm399, %v1236, %v1309
      %1311 = vst [vmem:[%s1293 + $0x14] sm:$0x1] %v1310
      %v1312 = vld [vmem:[%s1293 + $0x18] sm:$0xf]
      %v1313 = vsel %vm597, %v1243, %v1312
      %1314 = vst [vmem:[%s1293 + $0x18] sm:$0xf] %v1313
      %v1315 = vld [vmem:[%s1293 + $0x1c] sm:$0x1]
      %v1316 = vsel %vm399, %v1244, %v1315
      %1317 = vst [vmem:[%s1293 + $0x1c] sm:$0x1] %v1316
      %v1318 = vld [vmem:[%s1293 + $0x20] sm:$0xf]
      %v1319 = vsel %vm597, %v1251, %v1318
      %1320 = vst [vmem:[%s1293 + $0x20] sm:$0xf] %v1319
      %v1321 = vld [vmem:[%s1293 + $0x24] sm:$0x1]
      %v1322 = vsel %vm399, %v1252, %v1321
      %1323 = vst [vmem:[%s1293 + $0x24] sm:$0x1] %v1322
      %v1324 = vld [vmem:[%s1293 + $0x28] sm:$0xf]
      %v1325 = vsel %vm597, %v1259, %v1324
      %1326 = vst [vmem:[%s1293 + $0x28] sm:$0xf] %v1325
      %v1327 = vld [vmem:[%s1293 + $0x2c] sm:$0x1]
      %v1328 = vsel %vm399, %v1260, %v1327
      %1329 = vst [vmem:[%s1293 + $0x2c] sm:$0x1] %v1328
      %v1330 = vld [vmem:[%s1293 + $0x30] sm:$0xf]
      %v1331 = vsel %vm597, %v1267, %v1330
      %1332 = vst [vmem:[%s1293 + $0x30] sm:$0xf] %v1331
      %v1333 = vld [vmem:[%s1293 + $0x34] sm:$0x1]
      %v1334 = vsel %vm399, %v1268, %v1333
      %1335 = vst [vmem:[%s1293 + $0x34] sm:$0x1] %v1334
      %v1336 = vld [vmem:[%s1293 + $0x38] sm:$0xf]
      %v1337 = vsel %vm597, %v1275, %v1336
      %1338 = vst [vmem:[%s1293 + $0x38] sm:$0xf] %v1337
      %v1339 = vld [vmem:[%s1293 + $0x3c] sm:$0x1]
      %v1340 = vsel %vm399, %v1276, %v1339
      %1341 = vst [vmem:[%s1293 + $0x3c] sm:$0x1] %v1340
      %v1342 = vld [vmem:[#allocation5] sm:$0xf]
      %v1343 = vld [vmem:[#allocation5 + $0x8] sm:$0xf]
      %v1344 = vld [vmem:[#allocation5 + $0x10] sm:$0xf]
      %v1345 = vld [vmem:[#allocation5 + $0x18] sm:$0xf]
      %v1346 = vld [vmem:[#allocation5 + $0x20] sm:$0xf]
      %v1347 = vld [vmem:[#allocation5 + $0x28] sm:$0xf]
      %v1348 = vld [vmem:[#allocation5 + $0x30] sm:$0xf]
      %v1349 = vld [vmem:[#allocation5 + $0x38] sm:$0xf]
      %v1350 = vld [vmem:[%s6] sm:$0xf]
      %v1351 = vld [vmem:[%s6 + $0x4] sm:$0xf]
      %v1352 = vld [vmem:[%s6 + $0x8] sm:$0xf]
      %v1353 = vld [vmem:[%s6 + $0xc] sm:$0xf]
      %v1354 = vld [vmem:[%s6 + $0x10] sm:$0xf]
      %v1355 = vld [vmem:[%s6 + $0x14] sm:$0xf]
      %v1356 = vld [vmem:[%s6 + $0x18] sm:$0xf]
      %v1357 = vld [vmem:[%s6 + $0x1c] sm:$0xf]
      %v1358 = vld [vmem:[%s6 + $0x20] sm:$0xf]
      %v1359 = vld [vmem:[%s6 + $0x24] sm:$0xf]
      %v1360 = vld [vmem:[%s6 + $0x28] sm:$0xf]
      %v1361 = vld [vmem:[%s6 + $0x2c] sm:$0xf]
      %v1362 = vld [vmem:[%s6 + $0x30] sm:$0xf]
      %v1363 = vld [vmem:[%s6 + $0x34] sm:$0xf]
      %v1364 = vld [vmem:[%s6 + $0x38] sm:$0xf]
      %v1365 = vld [vmem:[%s6 + $0x3c] sm:$0xf]
      %v1374 = vunpack.c.l.b16 %v1342
      %v1375 = vunpack.c.l.b16 %v1343
      %v1376 = vunpack.c.l.b16 %v1344
      %v1377 = vunpack.c.l.b16 %v1345
      %v1378 = vunpack.c.l.b16 %v1346
      %v1379 = vunpack.c.l.b16 %v1347
      %v1380 = vunpack.c.l.b16 %v1348
      %v1381 = vunpack.c.l.b16 %v1349
      %v1382 = vpack.c.b16 %v1375, %v1374
      %v1383 = vpack.c.b16 %v1377, %v1376
      %v1384 = vpack.c.b16 %v1379, %v1378
      %v1385 = vpack.c.b16 %v1381, %v1380
      %v1406 = vunpack.c.l.b16 %v1350
      %v1407 = vunpack.c.l.b16 %v1351
      %v1408 = vunpack.c.l.b16 %v1352
      %v1409 = vunpack.c.l.b16 %v1353
      %v1410 = vunpack.c.l.b16 %v1354
      %v1411 = vunpack.c.l.b16 %v1355
      %v1412 = vunpack.c.l.b16 %v1356
      %v1413 = vunpack.c.l.b16 %v1357
      %v1414 = vunpack.c.l.b16 %v1358
      %v1415 = vunpack.c.l.b16 %v1359
      %v1416 = vunpack.c.l.b16 %v1360
      %v1417 = vunpack.c.l.b16 %v1361
      %v1418 = vunpack.c.l.b16 %v1362
      %v1419 = vunpack.c.l.b16 %v1363
      %v1420 = vunpack.c.l.b16 %v1364
      %v1421 = vunpack.c.l.b16 %v1365
      %v1422 = vpack.c.b16 %v1407, %v1406
      %v1423 = vpack.c.b16 %v1409, %v1408
      %v1424 = vpack.c.b16 %v1411, %v1410
      %v1425 = vpack.c.b16 %v1413, %v1412
      %v1426 = vpack.c.b16 %v1415, %v1414
      %v1427 = vpack.c.b16 %v1417, %v1416
      %v1428 = vpack.c.b16 %v1419, %v1418
      %v1429 = vpack.c.b16 %v1421, %v1420
      %1438 = vmatprep.subr.bf16.mxu0 0
      %1439 = vmatpush1.bf16.msra.mxu0 %v1422
      %1440 = vmatprep.subr.bf16.mxu0 0
      %1441 = vmatpush1.bf16.msra.mxu0 %v1423
      %1442 = vmatprep.subr.bf16.mxu0 0
      %1443 = vmatpush1.bf16.msra.mxu0 %v1424
      %1444 = vmatprep.subr.bf16.mxu0 0
      %1445 = vmatpush1.bf16.msra.mxu0 %v1425
      %1446 = vmatprep.subr.bf16.mxu0 0
      %1447 = vmatpush1.bf16.msra.mxu0 %v1426
      %1448 = vmatprep.subr.bf16.mxu0 0
      %1449 = vmatpush1.bf16.msra.mxu0 %v1427
      %1450 = vmatprep.subr.bf16.mxu0 0
      %1451 = vmatpush1.bf16.msra.mxu0 %v1428
      %1452 = vmatprep.subr.bf16.mxu0 0
      %1453 = vmatpush1.bf16.msra.mxu0 %v1429
      %1454 = vmatprep.subr.bf16.mxu0 0
      %1455 = vmatpush1.bf16.msra.mxu0 0
      %1456 = vmatprep.subr.bf16.mxu0 0
      %1457 = vmatpush1.bf16.msra.mxu0 0
      %1458 = vmatprep.subr.bf16.mxu0 0
      %1459 = vmatpush1.bf16.msra.mxu0 0
      %1460 = vmatprep.subr.bf16.mxu0 0
      %1461 = vmatpush1.bf16.msra.mxu0 0
      %1462 = vmatprep.subr.bf16.mxu0 0
      %1463 = vmatpush1.bf16.msra.mxu0 0
      %1464 = vmatprep.subr.bf16.mxu0 0
      %1465 = vmatpush1.bf16.msra.mxu0 0
      %1466 = vmatprep.subr.bf16.mxu0 0
      %1467 = vmatpush1.bf16.msra.mxu0 0
      %1468 = vmatprep.subr.bf16.mxu0 0
      %1469 = vmatpush1.bf16.msra.mxu0 0
      %1470 = vmatprep.mubr.bf16.mxu0 0
      %1471 = vmatmul.mubr.bf16.gmra.mrb[0].mxu0 %v1382
      %v1472 = vpop.f32.mrb[0].mxu0
      %v1473 = vadd.f32 0.0, %v1472
      %v1474 = vpop.f32.mrb[0].mxu0
      %v1475 = vpop.f32.mrb[0].mxu0
      %v1476 = vadd.f32 0.0, %v1475
      %v1477 = vpop.f32.mrb[0].mxu0
      %1478 = vmatprep.mubr.bf16.mxu0 0
      %1479 = vmatmul.mubr.bf16.gmra.mrb[0].mxu0 %v1383
      %v1480 = vpop.f32.mrb[0].mxu0
      %v1481 = vadd.f32 0.0, %v1480
      %v1482 = vpop.f32.mrb[0].mxu0
      %v1483 = vpop.f32.mrb[0].mxu0
      %v1484 = vadd.f32 0.0, %v1483
      %v1485 = vpop.f32.mrb[0].mxu0
      %1486 = vmatprep.mubr.bf16.mxu0 0
      %1487 = vmatmul.mubr.bf16.gmra.mrb[0].mxu0 %v1384
      %v1488 = vpop.f32.mrb[0].mxu0
      %v1489 = vadd.f32 0.0, %v1488
      %v1490 = vpop.f32.mrb[0].mxu0
      %v1491 = vpop.f32.mrb[0].mxu0
      %v1492 = vadd.f32 0.0, %v1491
      %v1493 = vpop.f32.mrb[0].mxu0
      %1494 = vmatprep.mubr.bf16.mxu0 0
      %1495 = vmatmul.mubr.bf16.gmra.mrb[0].mxu0 %v1385
      %v1496 = vpop.f32.mrb[0].mxu0
      %v1497 = vadd.f32 0.0, %v1496
      %v1498 = vpop.f32.mrb[0].mxu0
      %v1499 = vpop.f32.mrb[0].mxu0
      %v1500 = vadd.f32 0.0, %v1499
      %v1501 = vpop.f32.mrb[0].mxu0
      %1502 = vdwg.mxu0
      %1503 = vst [vmem:[#allocation6] sm:$0xff] %v1473
      %1504 = vst [vmem:[#allocation6 + $0x8] sm:$0xff] %v1476
      %1505 = vst [vmem:[#allocation6 + $0x10] sm:$0xff] %v1481
      %1506 = vst [vmem:[#allocation6 + $0x18] sm:$0xff] %v1484
      %1507 = vst [vmem:[#allocation6 + $0x20] sm:$0xff] %v1489
      %1508 = vst [vmem:[#allocation6 + $0x28] sm:$0xff] %v1492
      %1509 = vst [vmem:[#allocation6 + $0x30] sm:$0xff] %v1497
      %1510 = vst [vmem:[#allocation6 + $0x38] sm:$0xff] %v1500
      %v1511 = vld [vmem:[#allocation4] sm:$0xf]
      %v1512 = vld [vmem:[#allocation4 + $0x4] sm:$0x1]
      %v1513 = vld [vmem:[#allocation4 + $0x8] sm:$0xf]
      %v1514 = vld [vmem:[#allocation4 + $0xc] sm:$0x1]
      %v1515 = vld [vmem:[#allocation4 + $0x10] sm:$0xf]
      %v1516 = vld [vmem:[#allocation4 + $0x14] sm:$0x1]
      %v1517 = vld [vmem:[#allocation4 + $0x18] sm:$0xf]
      %v1518 = vld [vmem:[#allocation4 + $0x1c] sm:$0x1]
      %v1519 = vld [vmem:[#allocation4 + $0x20] sm:$0xf]
      %v1520 = vld [vmem:[#allocation4 + $0x24] sm:$0x1]
      %v1521 = vld [vmem:[#allocation4 + $0x28] sm:$0xf]
      %v1522 = vld [vmem:[#allocation4 + $0x2c] sm:$0x1]
      %v1523 = vld [vmem:[#allocation4 + $0x30] sm:$0xf]
      %v1524 = vld [vmem:[#allocation4 + $0x34] sm:$0x1]
      %v1525 = vld [vmem:[#allocation4 + $0x38] sm:$0xf]
      %v1526 = vld [vmem:[#allocation4 + $0x3c] sm:$0x1]
      %vm1527 = vsmask.f32 3328
      %vm1528 = vsmask.f32 7440
      %vm1529 = vmor %vm1527, %vm1528
      %v1531 = vshrl.u32 %v1511, 16
      %v1533 = vrot.slane %v1531, 4
      %v1534 = vshll.u32 %v1511, 16
      %v1536 = vrot.slane %v1534, 5
      %v1537 = vor.u32 %v1533, %v1536
      %v1538 = vrot.slane %v1537, 4
      %v1540 = vshll.u32 %v1512, 16
      %v1542 = vrot.slane %v1540, 5
      %v1543 = vsel %vm1529, %v1538, %v1542
      %v1545 = vshrl.u32 %v1513, 16
      %v1547 = vrot.slane %v1545, 4
      %v1548 = vshll.u32 %v1513, 16
      %v1550 = vrot.slane %v1548, 5
      %v1551 = vor.u32 %v1547, %v1550
      %v1552 = vrot.slane %v1551, 4
      %v1554 = vshll.u32 %v1514, 16
      %v1556 = vrot.slane %v1554, 5
      %v1557 = vsel %vm1529, %v1552, %v1556
      %v1559 = vshrl.u32 %v1515, 16
      %v1561 = vrot.slane %v1559, 4
      %v1562 = vshll.u32 %v1515, 16
      %v1564 = vrot.slane %v1562, 5
      %v1565 = vor.u32 %v1561, %v1564
      %v1566 = vrot.slane %v1565, 4
      %v1568 = vshll.u32 %v1516, 16
      %v1570 = vrot.slane %v1568, 5
      %v1571 = vsel %vm1529, %v1566, %v1570
      %v1573 = vshrl.u32 %v1517, 16
      %v1575 = vrot.slane %v1573, 4
      %v1576 = vshll.u32 %v1517, 16
      %v1578 = vrot.slane %v1576, 5
      %v1579 = vor.u32 %v1575, %v1578
      %v1580 = vrot.slane %v1579, 4
      %v1582 = vshll.u32 %v1518, 16
      %v1584 = vrot.slane %v1582, 5
      %v1585 = vsel %vm1529, %v1580, %v1584
      %v1587 = vshrl.u32 %v1519, 16
      %v1589 = vrot.slane %v1587, 4
      %v1590 = vshll.u32 %v1519, 16
      %v1592 = vrot.slane %v1590, 5
      %v1593 = vor.u32 %v1589, %v1592
      %v1594 = vrot.slane %v1593, 4
      %v1596 = vshll.u32 %v1520, 16
      %v1598 = vrot.slane %v1596, 5
      %v1599 = vsel %vm1529, %v1594, %v1598
      %v1601 = vshrl.u32 %v1521, 16
      %v1603 = vrot.slane %v1601, 4
      %v1604 = vshll.u32 %v1521, 16
      %v1606 = vrot.slane %v1604, 5
      %v1607 = vor.u32 %v1603, %v1606
      %v1608 = vrot.slane %v1607, 4
      %v1610 = vshll.u32 %v1522, 16
      %v1612 = vrot.slane %v1610, 5
      %v1613 = vsel %vm1529, %v1608, %v1612
      %v1615 = vshrl.u32 %v1523, 16
      %v1617 = vrot.slane %v1615, 4
      %v1618 = vshll.u32 %v1523, 16
      %v1620 = vrot.slane %v1618, 5
      %v1621 = vor.u32 %v1617, %v1620
      %v1622 = vrot.slane %v1621, 4
      %v1624 = vshll.u32 %v1524, 16
      %v1626 = vrot.slane %v1624, 5
      %v1627 = vsel %vm1529, %v1622, %v1626
      %v1629 = vshrl.u32 %v1525, 16
      %v1631 = vrot.slane %v1629, 4
      %v1632 = vshll.u32 %v1525, 16
      %v1634 = vrot.slane %v1632, 5
      %v1635 = vor.u32 %v1631, %v1634
      %v1636 = vrot.slane %v1635, 4
      %v1638 = vshll.u32 %v1526, 16
      %v1640 = vrot.slane %v1638, 5
      %v1641 = vsel %vm1529, %v1636, %v1640
      %s1642 = scalar_lea.vmem %s6, 64
      %v1643 = vld [vmem:[%s1642] sm:$0xf]
      %v1644 = vld [vmem:[%s1642 + $0x4] sm:$0xf]
      %v1645 = vld [vmem:[%s1642 + $0x8] sm:$0xf]
      %v1646 = vld [vmem:[%s1642 + $0xc] sm:$0xf]
      %v1647 = vld [vmem:[%s1642 + $0x10] sm:$0xf]
      %v1648 = vld [vmem:[%s1642 + $0x14] sm:$0xf]
      %v1649 = vld [vmem:[%s1642 + $0x18] sm:$0xf]
      %v1650 = vld [vmem:[%s1642 + $0x1c] sm:$0xf]
      %v1651 = vld [vmem:[%s1642 + $0x20] sm:$0xf]
      %v1652 = vld [vmem:[%s1642 + $0x24] sm:$0xf]
      %v1653 = vld [vmem:[%s1642 + $0x28] sm:$0xf]
      %v1654 = vld [vmem:[%s1642 + $0x2c] sm:$0xf]
      %v1655 = vld [vmem:[%s1642 + $0x30] sm:$0xf]
      %v1656 = vld [vmem:[%s1642 + $0x34] sm:$0xf]
      %v1657 = vld [vmem:[%s1642 + $0x38] sm:$0xf]
      %v1658 = vld [vmem:[%s1642 + $0x3c] sm:$0xf]
      %v1659 = vunpack.c.l.b16 %v1543
      %v1660 = vunpack.c.l.b16 %v1557
      %v1661 = vunpack.c.l.b16 %v1571
      %v1662 = vunpack.c.l.b16 %v1585
      %v1663 = vunpack.c.l.b16 %v1599
      %v1664 = vunpack.c.l.b16 %v1613
      %v1665 = vunpack.c.l.b16 %v1627
      %v1666 = vunpack.c.l.b16 %v1641
      %v1667 = vpack.c.b16 %v1660, %v1659
      %v1668 = vpack.c.b16 %v1662, %v1661
      %v1669 = vpack.c.b16 %v1664, %v1663
      %v1670 = vpack.c.b16 %v1666, %v1665
      %v1691 = vunpack.c.l.b16 %v1643
      %v1692 = vunpack.c.l.b16 %v1644
      %v1693 = vunpack.c.l.b16 %v1645
      %v1694 = vunpack.c.l.b16 %v1646
      %v1695 = vunpack.c.l.b16 %v1647
      %v1696 = vunpack.c.l.b16 %v1648
      %v1697 = vunpack.c.l.b16 %v1649
      %v1698 = vunpack.c.l.b16 %v1650
      %v1699 = vunpack.c.l.b16 %v1651
      %v1700 = vunpack.c.l.b16 %v1652
      %v1701 = vunpack.c.l.b16 %v1653
      %v1702 = vunpack.c.l.b16 %v1654
      %v1703 = vunpack.c.l.b16 %v1655
      %v1704 = vunpack.c.l.b16 %v1656
      %v1705 = vunpack.c.l.b16 %v1657
      %v1706 = vunpack.c.l.b16 %v1658
      %v1707 = vpack.c.b16 %v1692, %v1691
      %v1708 = vpack.c.b16 %v1694, %v1693
      %v1709 = vpack.c.b16 %v1696, %v1695
      %v1710 = vpack.c.b16 %v1698, %v1697
      %v1711 = vpack.c.b16 %v1700, %v1699
      %v1712 = vpack.c.b16 %v1702, %v1701
      %v1713 = vpack.c.b16 %v1704, %v1703
      %v1714 = vpack.c.b16 %v1706, %v1705
      %1723 = vmatprep.subr.bf16.mxu0 0
      %1724 = vmatpush1.bf16.msra.mxu0 %v1707
      %1725 = vmatprep.subr.bf16.mxu0 0
      %1726 = vmatpush1.bf16.msra.mxu0 %v1708
      %1727 = vmatprep.subr.bf16.mxu0 0
      %1728 = vmatpush1.bf16.msra.mxu0 %v1709
      %1729 = vmatprep.subr.bf16.mxu0 0
      %1730 = vmatpush1.bf16.msra.mxu0 %v1710
      %1731 = vmatprep.subr.bf16.mxu0 0
      %1732 = vmatpush1.bf16.msra.mxu0 %v1711
      %1733 = vmatprep.subr.bf16.mxu0 0
      %1734 = vmatpush1.bf16.msra.mxu0 %v1712
      %1735 = vmatprep.subr.bf16.mxu0 0
      %1736 = vmatpush1.bf16.msra.mxu0 %v1713
      %1737 = vmatprep.subr.bf16.mxu0 0
      %1738 = vmatpush1.bf16.msra.mxu0 %v1714
      %1739 = vmatprep.subr.bf16.mxu0 0
      %1740 = vmatpush1.bf16.msra.mxu0 0
      %1741 = vmatprep.subr.bf16.mxu0 0
      %1742 = vmatpush1.bf16.msra.mxu0 0
      %1743 = vmatprep.subr.bf16.mxu0 0
      %1744 = vmatpush1.bf16.msra.mxu0 0
      %1745 = vmatprep.subr.bf16.mxu0 0
      %1746 = vmatpush1.bf16.msra.mxu0 0
      %1747 = vmatprep.subr.bf16.mxu0 0
      %1748 = vmatpush1.bf16.msra.mxu0 0
      %1749 = vmatprep.subr.bf16.mxu0 0
      %1750 = vmatpush1.bf16.msra.mxu0 0
      %1751 = vmatprep.subr.bf16.mxu0 0
      %1752 = vmatpush1.bf16.msra.mxu0 0
      %1753 = vmatprep.subr.bf16.mxu0 0
      %1754 = vmatpush1.bf16.msra.mxu0 0
      %1755 = vmatprep.mubr.bf16.mxu0 0
      %1756 = vmatmul.mubr.bf16.gmra.mrb[0].mxu0 %v1667
      %v1757 = vpop.f32.mrb[0].mxu0
      %v1758 = vadd.f32 0.0, %v1757
      %v1759 = vpop.f32.mrb[0].mxu0
      %v1760 = vpop.f32.mrb[0].mxu0
      %v1761 = vadd.f32 0.0, %v1760
      %v1762 = vpop.f32.mrb[0].mxu0
      %1763 = vmatprep.mubr.bf16.mxu0 0
      %1764 = vmatmul.mubr.bf16.gmra.mrb[0].mxu0 %v1668
      %v1765 = vpop.f32.mrb[0].mxu0
      %v1766 = vadd.f32 0.0, %v1765
      %v1767 = vpop.f32.mrb[0].mxu0
      %v1768 = vpop.f32.mrb[0].mxu0
      %v1769 = vadd.f32 0.0, %v1768
      %v1770 = vpop.f32.mrb[0].mxu0
      %1771 = vmatprep.mubr.bf16.mxu0 0
      %1772 = vmatmul.mubr.bf16.gmra.mrb[0].mxu0 %v1669
      %v1773 = vpop.f32.mrb[0].mxu0
      %v1774 = vadd.f32 0.0, %v1773
      %v1775 = vpop.f32.mrb[0].mxu0
      %v1776 = vpop.f32.mrb[0].mxu0
      %v1777 = vadd.f32 0.0, %v1776
      %v1778 = vpop.f32.mrb[0].mxu0
      %1779 = vmatprep.mubr.bf16.mxu0 0
      %1780 = vmatmul.mubr.bf16.gmra.mrb[0].mxu0 %v1670
      %v1781 = vpop.f32.mrb[0].mxu0
      %v1782 = vadd.f32 0.0, %v1781
      %v1783 = vpop.f32.mrb[0].mxu0
      %v1784 = vpop.f32.mrb[0].mxu0
      %v1785 = vadd.f32 0.0, %v1784
      %v1786 = vpop.f32.mrb[0].mxu0
      %1787 = vdwg.mxu0
      %v1788 = vld [vmem:[#allocation6] sm:$0xff]
      %v1789 = vld [vmem:[#allocation6 + $0x8] sm:$0xff]
      %v1790 = vld [vmem:[#allocation6 + $0x10] sm:$0xff]
      %v1791 = vld [vmem:[#allocation6 + $0x18] sm:$0xff]
      %v1792 = vld [vmem:[#allocation6 + $0x20] sm:$0xff]
      %v1793 = vld [vmem:[#allocation6 + $0x28] sm:$0xff]
      %v1794 = vld [vmem:[#allocation6 + $0x30] sm:$0xff]
      %v1795 = vld [vmem:[#allocation6 + $0x38] sm:$0xff]
      %v1796 = vadd.f32 %v1788, %v1758
      %v1797 = vadd.f32 %v1789, %v1761
      %v1798 = vadd.f32 %v1790, %v1766
      %v1799 = vadd.f32 %v1791, %v1769
      %v1800 = vadd.f32 %v1792, %v1774
      %v1801 = vadd.f32 %v1793, %v1777
      %v1802 = vadd.f32 %v1794, %v1782
      %v1803 = vadd.f32 %v1795, %v1785
      %1804 = vst [vmem:[#allocation6] sm:$0xff] %v1796
      %1805 = vst [vmem:[#allocation6 + $0x8] sm:$0xff] %v1797
      %1806 = vst [vmem:[#allocation6 + $0x10] sm:$0xff] %v1798
      %1807 = vst [vmem:[#allocation6 + $0x18] sm:$0xff] %v1799
      %1808 = vst [vmem:[#allocation6 + $0x20] sm:$0xff] %v1800
      %1809 = vst [vmem:[#allocation6 + $0x28] sm:$0xff] %v1801
      %1810 = vst [vmem:[#allocation6 + $0x30] sm:$0xff] %v1802
      %1811 = vst [vmem:[#allocation6 + $0x38] sm:$0xff] %v1803
      %v1812 = vld [vmem:[#allocation5] sm:$0xf]
      %v1813 = vld [vmem:[#allocation5 + $0x4] sm:$0x1]
      %v1814 = vld [vmem:[#allocation5 + $0x8] sm:$0xf]
      %v1815 = vld [vmem:[#allocation5 + $0xc] sm:$0x1]
      %v1816 = vld [vmem:[#allocation5 + $0x10] sm:$0xf]
      %v1817 = vld [vmem:[#allocation5 + $0x14] sm:$0x1]
      %v1818 = vld [vmem:[#allocation5 + $0x18] sm:$0xf]
      %v1819 = vld [vmem:[#allocation5 + $0x1c] sm:$0x1]
      %v1820 = vld [vmem:[#allocation5 + $0x20] sm:$0xf]
      %v1821 = vld [vmem:[#allocation5 + $0x24] sm:$0x1]
      %v1822 = vld [vmem:[#allocation5 + $0x28] sm:$0xf]
      %v1823 = vld [vmem:[#allocation5 + $0x2c] sm:$0x1]
      %v1824 = vld [vmem:[#allocation5 + $0x30] sm:$0xf]
      %v1825 = vld [vmem:[#allocation5 + $0x34] sm:$0x1]
      %v1826 = vld [vmem:[#allocation5 + $0x38] sm:$0xf]
      %v1827 = vld [vmem:[#allocation5 + $0x3c] sm:$0x1]
      %v1829 = vshrl.u32 %v1812, 16
      %v1831 = vrot.slane %v1829, 4
      %v1832 = vshll.u32 %v1812, 16
      %v1834 = vrot.slane %v1832, 5
      %v1835 = vor.u32 %v1831, %v1834
      %v1836 = vrot.slane %v1835, 4
      %v1838 = vshll.u32 %v1813, 16
      %v1840 = vrot.slane %v1838, 5
      %v1841 = vsel %vm1529, %v1836, %v1840
      %v1843 = vshrl.u32 %v1814, 16
      %v1845 = vrot.slane %v1843, 4
      %v1846 = vshll.u32 %v1814, 16
      %v1848 = vrot.slane %v1846, 5
      %v1849 = vor.u32 %v1845, %v1848
      %v1850 = vrot.slane %v1849, 4
      %v1852 = vshll.u32 %v1815, 16
      %v1854 = vrot.slane %v1852, 5
      %v1855 = vsel %vm1529, %v1850, %v1854
      %v1857 = vshrl.u32 %v1816, 16
      %v1859 = vrot.slane %v1857, 4
      %v1860 = vshll.u32 %v1816, 16
      %v1862 = vrot.slane %v1860, 5
      %v1863 = vor.u32 %v1859, %v1862
      %v1864 = vrot.slane %v1863, 4
      %v1866 = vshll.u32 %v1817, 16
      %v1868 = vrot.slane %v1866, 5
      %v1869 = vsel %vm1529, %v1864, %v1868
      %v1871 = vshrl.u32 %v1818, 16
      %v1873 = vrot.slane %v1871, 4
      %v1874 = vshll.u32 %v1818, 16
      %v1876 = vrot.slane %v1874, 5
      %v1877 = vor.u32 %v1873, %v1876
      %v1878 = vrot.slane %v1877, 4
      %v1880 = vshll.u32 %v1819, 16
      %v1882 = vrot.slane %v1880, 5
      %v1883 = vsel %vm1529, %v1878, %v1882
      %v1885 = vshrl.u32 %v1820, 16
      %v1887 = vrot.slane %v1885, 4
      %v1888 = vshll.u32 %v1820, 16
      %v1890 = vrot.slane %v1888, 5
      %v1891 = vor.u32 %v1887, %v1890
      %v1892 = vrot.slane %v1891, 4
      %v1894 = vshll.u32 %v1821, 16
      %v1896 = vrot.slane %v1894, 5
      %v1897 = vsel %vm1529, %v1892, %v1896
      %v1899 = vshrl.u32 %v1822, 16
      %v1901 = vrot.slane %v1899, 4
      %v1902 = vshll.u32 %v1822, 16
      %v1904 = vrot.slane %v1902, 5
      %v1905 = vor.u32 %v1901, %v1904
      %v1906 = vrot.slane %v1905, 4
      %v1908 = vshll.u32 %v1823, 16
      %v1910 = vrot.slane %v1908, 5
      %v1911 = vsel %vm1529, %v1906, %v1910
      %v1913 = vshrl.u32 %v1824, 16
      %v1915 = vrot.slane %v1913, 4
      %v1916 = vshll.u32 %v1824, 16
      %v1918 = vrot.slane %v1916, 5
      %v1919 = vor.u32 %v1915, %v1918
      %v1920 = vrot.slane %v1919, 4
      %v1922 = vshll.u32 %v1825, 16
      %v1924 = vrot.slane %v1922, 5
      %v1925 = vsel %vm1529, %v1920, %v1924
      %v1927 = vshrl.u32 %v1826, 16
      %v1929 = vrot.slane %v1927, 4
      %v1930 = vshll.u32 %v1826, 16
      %v1932 = vrot.slane %v1930, 5
      %v1933 = vor.u32 %v1929, %v1932
      %v1934 = vrot.slane %v1933, 4
      %v1936 = vshll.u32 %v1827, 16
      %v1938 = vrot.slane %v1936, 5
      %v1939 = vsel %vm1529, %v1934, %v1938
      %s1940 = scalar_lea.vmem %s6, 128
      %v1941 = vld [vmem:[%s1940] sm:$0xf]
      %v1942 = vld [vmem:[%s1940 + $0x4] sm:$0xf]
      %v1943 = vld [vmem:[%s1940 + $0x8] sm:$0xf]
      %v1944 = vld [vmem:[%s1940 + $0xc] sm:$0xf]
      %v1945 = vld [vmem:[%s1940 + $0x10] sm:$0xf]
      %v1946 = vld [vmem:[%s1940 + $0x14] sm:$0xf]
      %v1947 = vld [vmem:[%s1940 + $0x18] sm:$0xf]
      %v1948 = vld [vmem:[%s1940 + $0x1c] sm:$0xf]
      %v1949 = vld [vmem:[%s1940 + $0x20] sm:$0xf]
      %v1950 = vld [vmem:[%s1940 + $0x24] sm:$0xf]
      %v1951 = vld [vmem:[%s1940 + $0x28] sm:$0xf]
      %v1952 = vld [vmem:[%s1940 + $0x2c] sm:$0xf]
      %v1953 = vld [vmem:[%s1940 + $0x30] sm:$0xf]
      %v1954 = vld [vmem:[%s1940 + $0x34] sm:$0xf]
      %v1955 = vld [vmem:[%s1940 + $0x38] sm:$0xf]
      %v1956 = vld [vmem:[%s1940 + $0x3c] sm:$0xf]
      %v1957 = vunpack.c.l.b16 %v1841
      %v1958 = vunpack.c.l.b16 %v1855
      %v1959 = vunpack.c.l.b16 %v1869
      %v1960 = vunpack.c.l.b16 %v1883
      %v1961 = vunpack.c.l.b16 %v1897
      %v1962 = vunpack.c.l.b16 %v1911
      %v1963 = vunpack.c.l.b16 %v1925
      %v1964 = vunpack.c.l.b16 %v1939
      %v1965 = vpack.c.b16 %v1958, %v1957
      %v1966 = vpack.c.b16 %v1960, %v1959
      %v1967 = vpack.c.b16 %v1962, %v1961
      %v1968 = vpack.c.b16 %v1964, %v1963
      %v1989 = vunpack.c.l.b16 %v1941
      %v1990 = vunpack.c.l.b16 %v1942
      %v1991 = vunpack.c.l.b16 %v1943
      %v1992 = vunpack.c.l.b16 %v1944
      %v1993 = vunpack.c.l.b16 %v1945
      %v1994 = vunpack.c.l.b16 %v1946
      %v1995 = vunpack.c.l.b16 %v1947
      %v1996 = vunpack.c.l.b16 %v1948
      %v1997 = vunpack.c.l.b16 %v1949
      %v1998 = vunpack.c.l.b16 %v1950
      %v1999 = vunpack.c.l.b16 %v1951
      %v2000 = vunpack.c.l.b16 %v1952
      %v2001 = vunpack.c.l.b16 %v1953
      %v2002 = vunpack.c.l.b16 %v1954
      %v2003 = vunpack.c.l.b16 %v1955
      %v2004 = vunpack.c.l.b16 %v1956
      %v2005 = vpack.c.b16 %v1990, %v1989
      %v2006 = vpack.c.b16 %v1992, %v1991
      %v2007 = vpack.c.b16 %v1994, %v1993
      %v2008 = vpack.c.b16 %v1996, %v1995
      %v2009 = vpack.c.b16 %v1998, %v1997
      %v2010 = vpack.c.b16 %v2000, %v1999
      %v2011 = vpack.c.b16 %v2002, %v2001
      %v2012 = vpack.c.b16 %v2004, %v2003
      %2021 = vmatprep.subr.bf16.mxu0 0
      %2022 = vmatpush1.bf16.msra.mxu0 %v2005
      %2023 = vmatprep.subr.bf16.mxu0 0
      %2024 = vmatpush1.bf16.msra.mxu0 %v2006
      %2025 = vmatprep.subr.bf16.mxu0 0
      %2026 = vmatpush1.bf16.msra.mxu0 %v2007
      %2027 = vmatprep.subr.bf16.mxu0 0
      %2028 = vmatpush1.bf16.msra.mxu0 %v2008
      %2029 = vmatprep.subr.bf16.mxu0 0
      %2030 = vmatpush1.bf16.msra.mxu0 %v2009
      %2031 = vmatprep.subr.bf16.mxu0 0
      %2032 = vmatpush1.bf16.msra.mxu0 %v2010
      %2033 = vmatprep.subr.bf16.mxu0 0
      %2034 = vmatpush1.bf16.msra.mxu0 %v2011
      %2035 = vmatprep.subr.bf16.mxu0 0
      %2036 = vmatpush1.bf16.msra.mxu0 %v2012
      %2037 = vmatprep.subr.bf16.mxu0 0
      %2038 = vmatpush1.bf16.msra.mxu0 0
      %2039 = vmatprep.subr.bf16.mxu0 0
      %2040 = vmatpush1.bf16.msra.mxu0 0
      %2041 = vmatprep.subr.bf16.mxu0 0
      %2042 = vmatpush1.bf16.msra.mxu0 0
      %2043 = vmatprep.subr.bf16.mxu0 0
      %2044 = vmatpush1.bf16.msra.mxu0 0
      %2045 = vmatprep.subr.bf16.mxu0 0
      %2046 = vmatpush1.bf16.msra.mxu0 0
      %2047 = vmatprep.subr.bf16.mxu0 0
      %2048 = vmatpush1.bf16.msra.mxu0 0
      %2049 = vmatprep.subr.bf16.mxu0 0
      %2050 = vmatpush1.bf16.msra.mxu0 0
      %2051 = vmatprep.subr.bf16.mxu0 0
      %2052 = vmatpush1.bf16.msra.mxu0 0
      %2053 = vmatprep.mubr.bf16.mxu0 0
      %2054 = vmatmul.mubr.bf16.gmra.mrb[0].mxu0 %v1965
      %v2055 = vpop.f32.mrb[0].mxu0
      %v2056 = vadd.f32 0.0, %v2055
      %v2057 = vpop.f32.mrb[0].mxu0
      %v2058 = vpop.f32.mrb[0].mxu0
      %v2059 = vadd.f32 0.0, %v2058
      %v2060 = vpop.f32.mrb[0].mxu0
      %2061 = vmatprep.mubr.bf16.mxu0 0
      %2062 = vmatmul.mubr.bf16.gmra.mrb[0].mxu0 %v1966
      %v2063 = vpop.f32.mrb[0].mxu0
      %v2064 = vadd.f32 0.0, %v2063
      %v2065 = vpop.f32.mrb[0].mxu0
      %v2066 = vpop.f32.mrb[0].mxu0
      %v2067 = vadd.f32 0.0, %v2066
      %v2068 = vpop.f32.mrb[0].mxu0
      %2069 = vmatprep.mubr.bf16.mxu0 0
      %2070 = vmatmul.mubr.bf16.gmra.mrb[0].mxu0 %v1967
      %v2071 = vpop.f32.mrb[0].mxu0
      %v2072 = vadd.f32 0.0, %v2071
      %v2073 = vpop.f32.mrb[0].mxu0
      %v2074 = vpop.f32.mrb[0].mxu0
      %v2075 = vadd.f32 0.0, %v2074
      %v2076 = vpop.f32.mrb[0].mxu0
      %2077 = vmatprep.mubr.bf16.mxu0 0
      %2078 = vmatmul.mubr.bf16.gmra.mrb[0].mxu0 %v1968
      %v2079 = vpop.f32.mrb[0].mxu0
      %v2080 = vadd.f32 0.0, %v2079
      %v2081 = vpop.f32.mrb[0].mxu0
      %v2082 = vpop.f32.mrb[0].mxu0
      %v2083 = vadd.f32 0.0, %v2082
      %v2084 = vpop.f32.mrb[0].mxu0
      %2085 = vdwg.mxu0
      %v2086 = vld [vmem:[#allocation6] sm:$0xff]
      %v2087 = vld [vmem:[#allocation6 + $0x8] sm:$0xff]
      %v2088 = vld [vmem:[#allocation6 + $0x10] sm:$0xff]
      %v2089 = vld [vmem:[#allocation6 + $0x18] sm:$0xff]
      %v2090 = vld [vmem:[#allocation6 + $0x20] sm:$0xff]
      %v2091 = vld [vmem:[#allocation6 + $0x28] sm:$0xff]
      %v2092 = vld [vmem:[#allocation6 + $0x30] sm:$0xff]
      %v2093 = vld [vmem:[#allocation6 + $0x38] sm:$0xff]
      %v2094 = vadd.f32 %v2086, %v2056
      %v2095 = vadd.f32 %v2087, %v2059
      %v2096 = vadd.f32 %v2088, %v2064
      %v2097 = vadd.f32 %v2089, %v2067
      %v2098 = vadd.f32 %v2090, %v2072
      %v2099 = vadd.f32 %v2091, %v2075
      %v2100 = vadd.f32 %v2092, %v2080
      %v2101 = vadd.f32 %v2093, %v2083
      %2102 = vst [vmem:[#allocation6] sm:$0xff] %v2094
      %2103 = vst [vmem:[#allocation6 + $0x8] sm:$0xff] %v2095
      %2104 = vst [vmem:[#allocation6 + $0x10] sm:$0xff] %v2096
      %2105 = vst [vmem:[#allocation6 + $0x18] sm:$0xff] %v2097
      %2106 = vst [vmem:[#allocation6 + $0x20] sm:$0xff] %v2098
      %2107 = vst [vmem:[#allocation6 + $0x28] sm:$0xff] %v2099
      %2108 = vst [vmem:[#allocation6 + $0x30] sm:$0xff] %v2100
      %2109 = vst [vmem:[#allocation6 + $0x38] sm:$0xff] %v2101
      %v2110 = vld [vmem:[%s829] sm:$0xf]
      %v2111 = vld [vmem:[%s829 + $0x8] sm:$0xf]
      %v2112 = vld [vmem:[%s829 + $0x10] sm:$0xf]
      %v2113 = vld [vmem:[%s829 + $0x18] sm:$0xf]
      %v2114 = vld [vmem:[%s829 + $0x20] sm:$0xf]
      %v2115 = vld [vmem:[%s829 + $0x28] sm:$0xf]
      %v2116 = vld [vmem:[%s829 + $0x30] sm:$0xf]
      %v2117 = vld [vmem:[%s829 + $0x38] sm:$0xf]
      %s2118 = scalar_lea.vmem %s6, 192
      %v2119 = vld [vmem:[%s2118] sm:$0xf]
      %v2120 = vld [vmem:[%s2118 + $0x4] sm:$0xf]
      %v2121 = vld [vmem:[%s2118 + $0x8] sm:$0xf]
      %v2122 = vld [vmem:[%s2118 + $0xc] sm:$0xf]
      %v2123 = vld [vmem:[%s2118 + $0x10] sm:$0xf]
      %v2124 = vld [vmem:[%s2118 + $0x14] sm:$0xf]
      %v2125 = vld [vmem:[%s2118 + $0x18] sm:$0xf]
      %v2126 = vld [vmem:[%s2118 + $0x1c] sm:$0xf]
      %v2127 = vld [vmem:[%s2118 + $0x20] sm:$0xf]
      %v2128 = vld [vmem:[%s2118 + $0x24] sm:$0xf]
      %v2129 = vld [vmem:[%s2118 + $0x28] sm:$0xf]
      %v2130 = vld [vmem:[%s2118 + $0x2c] sm:$0xf]
      %v2131 = vld [vmem:[%s2118 + $0x30] sm:$0xf]
      %v2132 = vld [vmem:[%s2118 + $0x34] sm:$0xf]
      %v2133 = vld [vmem:[%s2118 + $0x38] sm:$0xf]
      %v2134 = vld [vmem:[%s2118 + $0x3c] sm:$0xf]
      %v2143 = vunpack.c.l.b16 %v2110
      %v2144 = vunpack.c.l.b16 %v2111
      %v2145 = vunpack.c.l.b16 %v2112
      %v2146 = vunpack.c.l.b16 %v2113
      %v2147 = vunpack.c.l.b16 %v2114
      %v2148 = vunpack.c.l.b16 %v2115
      %v2149 = vunpack.c.l.b16 %v2116
      %v2150 = vunpack.c.l.b16 %v2117
      %v2151 = vpack.c.b16 %v2144, %v2143
      %v2152 = vpack.c.b16 %v2146, %v2145
      %v2153 = vpack.c.b16 %v2148, %v2147
      %v2154 = vpack.c.b16 %v2150, %v2149
      %v2175 = vunpack.c.l.b16 %v2119
      %v2176 = vunpack.c.l.b16 %v2120
      %v2177 = vunpack.c.l.b16 %v2121
      %v2178 = vunpack.c.l.b16 %v2122
      %v2179 = vunpack.c.l.b16 %v2123
      %v2180 = vunpack.c.l.b16 %v2124
      %v2181 = vunpack.c.l.b16 %v2125
      %v2182 = vunpack.c.l.b16 %v2126
      %v2183 = vunpack.c.l.b16 %v2127
      %v2184 = vunpack.c.l.b16 %v2128
      %v2185 = vunpack.c.l.b16 %v2129
      %v2186 = vunpack.c.l.b16 %v2130
      %v2187 = vunpack.c.l.b16 %v2131
      %v2188 = vunpack.c.l.b16 %v2132
      %v2189 = vunpack.c.l.b16 %v2133
      %v2190 = vunpack.c.l.b16 %v2134
      %v2191 = vpack.c.b16 %v2176, %v2175
      %v2192 = vpack.c.b16 %v2178, %v2177
      %v2193 = vpack.c.b16 %v2180, %v2179
      %v2194 = vpack.c.b16 %v2182, %v2181
      %v2195 = vpack.c.b16 %v2184, %v2183
      %v2196 = vpack.c.b16 %v2186, %v2185
      %v2197 = vpack.c.b16 %v2188, %v2187
      %v2198 = vpack.c.b16 %v2190, %v2189
      %2207 = vmatprep.subr.bf16.mxu0 0
      %2208 = vmatpush1.bf16.msra.mxu0 %v2191
      %2209 = vmatprep.subr.bf16.mxu0 0
      %2210 = vmatpush1.bf16.msra.mxu0 %v2192
      %2211 = vmatprep.subr.bf16.mxu0 0
      %2212 = vmatpush1.bf16.msra.mxu0 %v2193
      %2213 = vmatprep.subr.bf16.mxu0 0
      %2214 = vmatpush1.bf16.msra.mxu0 %v2194
      %2215 = vmatprep.subr.bf16.mxu0 0
      %2216 = vmatpush1.bf16.msra.mxu0 %v2195
      %2217 = vmatprep.subr.bf16.mxu0 0
      %2218 = vmatpush1.bf16.msra.mxu0 %v2196
      %2219 = vmatprep.subr.bf16.mxu0 0
      %2220 = vmatpush1.bf16.msra.mxu0 %v2197
      %2221 = vmatprep.subr.bf16.mxu0 0
      %2222 = vmatpush1.bf16.msra.mxu0 %v2198
      %2223 = vmatprep.subr.bf16.mxu0 0
      %2224 = vmatpush1.bf16.msra.mxu0 0
      %2225 = vmatprep.subr.bf16.mxu0 0
      %2226 = vmatpush1.bf16.msra.mxu0 0
      %2227 = vmatprep.subr.bf16.mxu0 0
      %2228 = vmatpush1.bf16.msra.mxu0 0
      %2229 = vmatprep.subr.bf16.mxu0 0
      %2230 = vmatpush1.bf16.msra.mxu0 0
      %2231 = vmatprep.subr.bf16.mxu0 0
      %2232 = vmatpush1.bf16.msra.mxu0 0
      %2233 = vmatprep.subr.bf16.mxu0 0
      %2234 = vmatpush1.bf16.msra.mxu0 0
      %2235 = vmatprep.subr.bf16.mxu0 0
      %2236 = vmatpush1.bf16.msra.mxu0 0
      %2237 = vmatprep.subr.bf16.mxu0 0
      %2238 = vmatpush1.bf16.msra.mxu0 0
      %2239 = vmatprep.mubr.bf16.mxu0 0
      %2240 = vmatmul.mubr.bf16.gmra.mrb[0].mxu0 %v2151
      %v2241 = vpop.f32.mrb[0].mxu0
      %v2242 = vadd.f32 0.0, %v2241
      %v2243 = vpop.f32.mrb[0].mxu0
      %v2244 = vpop.f32.mrb[0].mxu0
      %v2245 = vadd.f32 0.0, %v2244
      %v2246 = vpop.f32.mrb[0].mxu0
      %2247 = vmatprep.mubr.bf16.mxu0 0
      %2248 = vmatmul.mubr.bf16.gmra.mrb[0].mxu0 %v2152
      %v2249 = vpop.f32.mrb[0].mxu0
      %v2250 = vadd.f32 0.0, %v2249
      %v2251 = vpop.f32.mrb[0].mxu0
      %v2252 = vpop.f32.mrb[0].mxu0
      %v2253 = vadd.f32 0.0, %v2252
      %v2254 = vpop.f32.mrb[0].mxu0
      %2255 = vmatprep.mubr.bf16.mxu0 0
      %2256 = vmatmul.mubr.bf16.gmra.mrb[0].mxu0 %v2153
      %v2257 = vpop.f32.mrb[0].mxu0
      %v2258 = vadd.f32 0.0, %v2257
      %v2259 = vpop.f32.mrb[0].mxu0
      %v2260 = vpop.f32.mrb[0].mxu0
      %v2261 = vadd.f32 0.0, %v2260
      %v2262 = vpop.f32.mrb[0].mxu0
      %2263 = vmatprep.mubr.bf16.mxu0 0
      %2264 = vmatmul.mubr.bf16.gmra.mrb[0].mxu0 %v2154
      %v2265 = vpop.f32.mrb[0].mxu0
      %v2266 = vadd.f32 0.0, %v2265
      %v2267 = vpop.f32.mrb[0].mxu0
      %v2268 = vpop.f32.mrb[0].mxu0
      %v2269 = vadd.f32 0.0, %v2268
      %v2270 = vpop.f32.mrb[0].mxu0
      %2271 = vdwg.mxu0
      %v2272 = vld [vmem:[#allocation6] sm:$0xff]
      %v2273 = vld [vmem:[#allocation6 + $0x8] sm:$0xff]
      %v2274 = vld [vmem:[#allocation6 + $0x10] sm:$0xff]
      %v2275 = vld [vmem:[#allocation6 + $0x18] sm:$0xff]
      %v2276 = vld [vmem:[#allocation6 + $0x20] sm:$0xff]
      %v2277 = vld [vmem:[#allocation6 + $0x28] sm:$0xff]
      %v2278 = vld [vmem:[#allocation6 + $0x30] sm:$0xff]
      %v2279 = vld [vmem:[#allocation6 + $0x38] sm:$0xff]
      %v2280 = vadd.f32 %v2272, %v2242
      %v2281 = vadd.f32 %v2273, %v2245
      %v2282 = vadd.f32 %v2274, %v2250
      %v2283 = vadd.f32 %v2275, %v2253
      %v2284 = vadd.f32 %v2276, %v2258
      %v2285 = vadd.f32 %v2277, %v2261
      %v2286 = vadd.f32 %v2278, %v2266
      %v2287 = vadd.f32 %v2279, %v2269
      %2288 = vst [vmem:[#allocation6] sm:$0xff] %v2280
      %2289 = vst [vmem:[#allocation6 + $0x8] sm:$0xff] %v2281
      %2290 = vst [vmem:[#allocation6 + $0x10] sm:$0xff] %v2282
      %2291 = vst [vmem:[#allocation6 + $0x18] sm:$0xff] %v2283
      %2292 = vst [vmem:[#allocation6 + $0x20] sm:$0xff] %v2284
      %2293 = vst [vmem:[#allocation6 + $0x28] sm:$0xff] %v2285
      %2294 = vst [vmem:[#allocation6 + $0x30] sm:$0xff] %v2286
      %2295 = vst [vmem:[#allocation6 + $0x38] sm:$0xff] %v2287
      %v2296 = vld [vmem:[%s594] sm:$0xf]
      %v2297 = vld [vmem:[%s594 + $0x4] sm:$0x1]
      %v2298 = vld [vmem:[%s594 + $0x8] sm:$0xf]
      %v2299 = vld [vmem:[%s594 + $0xc] sm:$0x1]
      %v2300 = vld [vmem:[%s594 + $0x10] sm:$0xf]
      %v2301 = vld [vmem:[%s594 + $0x14] sm:$0x1]
      %v2302 = vld [vmem:[%s594 + $0x18] sm:$0xf]
      %v2303 = vld [vmem:[%s594 + $0x1c] sm:$0x1]
      %v2304 = vld [vmem:[%s594 + $0x20] sm:$0xf]
      %v2305 = vld [vmem:[%s594 + $0x24] sm:$0x1]
      %v2306 = vld [vmem:[%s594 + $0x28] sm:$0xf]
      %v2307 = vld [vmem:[%s594 + $0x2c] sm:$0x1]
      %v2308 = vld [vmem:[%s594 + $0x30] sm:$0xf]
      %v2309 = vld [vmem:[%s594 + $0x34] sm:$0x1]
      %v2310 = vld [vmem:[%s594 + $0x38] sm:$0xf]
      %v2311 = vld [vmem:[%s594 + $0x3c] sm:$0x1]
      %v2313 = vshrl.u32 %v2296, 16
      %v2315 = vrot.slane %v2313, 4
      %v2316 = vshll.u32 %v2296, 16
      %v2318 = vrot.slane %v2316, 5
      %v2319 = vor.u32 %v2315, %v2318
      %v2320 = vrot.slane %v2319, 4
      %v2322 = vshll.u32 %v2297, 16
      %v2324 = vrot.slane %v2322, 5
      %v2325 = vsel %vm1529, %v2320, %v2324
      %v2327 = vshrl.u32 %v2298, 16
      %v2329 = vrot.slane %v2327, 4
      %v2330 = vshll.u32 %v2298, 16
      %v2332 = vrot.slane %v2330, 5
      %v2333 = vor.u32 %v2329, %v2332
      %v2334 = vrot.slane %v2333, 4
      %v2336 = vshll.u32 %v2299, 16
      %v2338 = vrot.slane %v2336, 5
      %v2339 = vsel %vm1529, %v2334, %v2338
      %v2341 = vshrl.u32 %v2300, 16
      %v2343 = vrot.slane %v2341, 4
      %v2344 = vshll.u32 %v2300, 16
      %v2346 = vrot.slane %v2344, 5
      %v2347 = vor.u32 %v2343, %v2346
      %v2348 = vrot.slane %v2347, 4
      %v2350 = vshll.u32 %v2301, 16
      %v2352 = vrot.slane %v2350, 5
      %v2353 = vsel %vm1529, %v2348, %v2352
      %v2355 = vshrl.u32 %v2302, 16
      %v2357 = vrot.slane %v2355, 4
      %v2358 = vshll.u32 %v2302, 16
      %v2360 = vrot.slane %v2358, 5
      %v2361 = vor.u32 %v2357, %v2360
      %v2362 = vrot.slane %v2361, 4
      %v2364 = vshll.u32 %v2303, 16
      %v2366 = vrot.slane %v2364, 5
      %v2367 = vsel %vm1529, %v2362, %v2366
      %v2369 = vshrl.u32 %v2304, 16
      %v2371 = vrot.slane %v2369, 4
      %v2372 = vshll.u32 %v2304, 16
      %v2374 = vrot.slane %v2372, 5
      %v2375 = vor.u32 %v2371, %v2374
      %v2376 = vrot.slane %v2375, 4
      %v2378 = vshll.u32 %v2305, 16
      %v2380 = vrot.slane %v2378, 5
      %v2381 = vsel %vm1529, %v2376, %v2380
      %v2383 = vshrl.u32 %v2306, 16
      %v2385 = vrot.slane %v2383, 4
      %v2386 = vshll.u32 %v2306, 16
      %v2388 = vrot.slane %v2386, 5
      %v2389 = vor.u32 %v2385, %v2388
      %v2390 = vrot.slane %v2389, 4
      %v2392 = vshll.u32 %v2307, 16
      %v2394 = vrot.slane %v2392, 5
      %v2395 = vsel %vm1529, %v2390, %v2394
      %v2397 = vshrl.u32 %v2308, 16
      %v2399 = vrot.slane %v2397, 4
      %v2400 = vshll.u32 %v2308, 16
      %v2402 = vrot.slane %v2400, 5
      %v2403 = vor.u32 %v2399, %v2402
      %v2404 = vrot.slane %v2403, 4
      %v2406 = vshll.u32 %v2309, 16
      %v2408 = vrot.slane %v2406, 5
      %v2409 = vsel %vm1529, %v2404, %v2408
      %v2411 = vshrl.u32 %v2310, 16
      %v2413 = vrot.slane %v2411, 4
      %v2414 = vshll.u32 %v2310, 16
      %v2416 = vrot.slane %v2414, 5
      %v2417 = vor.u32 %v2413, %v2416
      %v2418 = vrot.slane %v2417, 4
      %v2420 = vshll.u32 %v2311, 16
      %v2422 = vrot.slane %v2420, 5
      %v2423 = vsel %vm1529, %v2418, %v2422
      %s2424 = scalar_lea.vmem %s6, 256
      %v2425 = vld [vmem:[%s2424] sm:$0xf]
      %v2426 = vld [vmem:[%s2424 + $0x4] sm:$0xf]
      %v2427 = vld [vmem:[%s2424 + $0x8] sm:$0xf]
      %v2428 = vld [vmem:[%s2424 + $0xc] sm:$0xf]
      %v2429 = vld [vmem:[%s2424 + $0x10] sm:$0xf]
      %v2430 = vld [vmem:[%s2424 + $0x14] sm:$0xf]
      %v2431 = vld [vmem:[%s2424 + $0x18] sm:$0xf]
      %v2432 = vld [vmem:[%s2424 + $0x1c] sm:$0xf]
      %v2433 = vld [vmem:[%s2424 + $0x20] sm:$0xf]
      %v2434 = vld [vmem:[%s2424 + $0x24] sm:$0xf]
      %v2435 = vld [vmem:[%s2424 + $0x28] sm:$0xf]
      %v2436 = vld [vmem:[%s2424 + $0x2c] sm:$0xf]
      %v2437 = vld [vmem:[%s2424 + $0x30] sm:$0xf]
      %v2438 = vld [vmem:[%s2424 + $0x34] sm:$0xf]
      %v2439 = vld [vmem:[%s2424 + $0x38] sm:$0xf]
      %v2440 = vld [vmem:[%s2424 + $0x3c] sm:$0xf]
      %v2441 = vunpack.c.l.b16 %v2325
      %v2442 = vunpack.c.l.b16 %v2339
      %v2443 = vunpack.c.l.b16 %v2353
      %v2444 = vunpack.c.l.b16 %v2367
      %v2445 = vunpack.c.l.b16 %v2381
      %v2446 = vunpack.c.l.b16 %v2395
      %v2447 = vunpack.c.l.b16 %v2409
      %v2448 = vunpack.c.l.b16 %v2423
      %v2449 = vpack.c.b16 %v2442, %v2441
      %v2450 = vpack.c.b16 %v2444, %v2443
      %v2451 = vpack.c.b16 %v2446, %v2445
      %v2452 = vpack.c.b16 %v2448, %v2447
      %v2473 = vunpack.c.l.b16 %v2425
      %v2474 = vunpack.c.l.b16 %v2426
      %v2475 = vunpack.c.l.b16 %v2427
      %v2476 = vunpack.c.l.b16 %v2428
      %v2477 = vunpack.c.l.b16 %v2429
      %v2478 = vunpack.c.l.b16 %v2430
      %v2479 = vunpack.c.l.b16 %v2431
      %v2480 = vunpack.c.l.b16 %v2432
      %v2481 = vunpack.c.l.b16 %v2433
      %v2482 = vunpack.c.l.b16 %v2434
      %v2483 = vunpack.c.l.b16 %v2435
      %v2484 = vunpack.c.l.b16 %v2436
      %v2485 = vunpack.c.l.b16 %v2437
      %v2486 = vunpack.c.l.b16 %v2438
      %v2487 = vunpack.c.l.b16 %v2439
      %v2488 = vunpack.c.l.b16 %v2440
      %v2489 = vpack.c.b16 %v2474, %v2473
      %v2490 = vpack.c.b16 %v2476, %v2475
      %v2491 = vpack.c.b16 %v2478, %v2477
      %v2492 = vpack.c.b16 %v2480, %v2479
      %v2493 = vpack.c.b16 %v2482, %v2481
      %v2494 = vpack.c.b16 %v2484, %v2483
      %v2495 = vpack.c.b16 %v2486, %v2485
      %v2496 = vpack.c.b16 %v2488, %v2487
      %2505 = vmatprep.subr.bf16.mxu0 0
      %2506 = vmatpush1.bf16.msra.mxu0 %v2489
      %2507 = vmatprep.subr.bf16.mxu0 0
      %2508 = vmatpush1.bf16.msra.mxu0 %v2490
      %2509 = vmatprep.subr.bf16.mxu0 0
      %2510 = vmatpush1.bf16.msra.mxu0 %v2491
      %2511 = vmatprep.subr.bf16.mxu0 0
      %2512 = vmatpush1.bf16.msra.mxu0 %v2492
      %2513 = vmatprep.subr.bf16.mxu0 0
      %2514 = vmatpush1.bf16.msra.mxu0 %v2493
      %2515 = vmatprep.subr.bf16.mxu0 0
      %2516 = vmatpush1.bf16.msra.mxu0 %v2494
      %2517 = vmatprep.subr.bf16.mxu0 0
      %2518 = vmatpush1.bf16.msra.mxu0 %v2495
      %2519 = vmatprep.subr.bf16.mxu0 0
      %2520 = vmatpush1.bf16.msra.mxu0 %v2496
      %2521 = vmatprep.subr.bf16.mxu0 0
      %2522 = vmatpush1.bf16.msra.mxu0 0
      %2523 = vmatprep.subr.bf16.mxu0 0
      %2524 = vmatpush1.bf16.msra.mxu0 0
      %2525 = vmatprep.subr.bf16.mxu0 0
      %2526 = vmatpush1.bf16.msra.mxu0 0
      %2527 = vmatprep.subr.bf16.mxu0 0
      %2528 = vmatpush1.bf16.msra.mxu0 0
      %2529 = vmatprep.subr.bf16.mxu0 0
      %2530 = vmatpush1.bf16.msra.mxu0 0
      %2531 = vmatprep.subr.bf16.mxu0 0
      %2532 = vmatpush1.bf16.msra.mxu0 0
      %2533 = vmatprep.subr.bf16.mxu0 0
      %2534 = vmatpush1.bf16.msra.mxu0 0
      %2535 = vmatprep.subr.bf16.mxu0 0
      %2536 = vmatpush1.bf16.msra.mxu0 0
      %2537 = vmatprep.mubr.bf16.mxu0 0
      %2538 = vmatmul.mubr.bf16.gmra.mrb[0].mxu0 %v2449
      %v2539 = vpop.f32.mrb[0].mxu0
      %v2540 = vadd.f32 0.0, %v2539
      %v2541 = vpop.f32.mrb[0].mxu0
      %v2542 = vpop.f32.mrb[0].mxu0
      %v2543 = vadd.f32 0.0, %v2542
      %v2544 = vpop.f32.mrb[0].mxu0
      %2545 = vmatprep.mubr.bf16.mxu0 0
      %2546 = vmatmul.mubr.bf16.gmra.mrb[0].mxu0 %v2450
      %v2547 = vpop.f32.mrb[0].mxu0
      %v2548 = vadd.f32 0.0, %v2547
      %v2549 = vpop.f32.mrb[0].mxu0
      %v2550 = vpop.f32.mrb[0].mxu0
      %v2551 = vadd.f32 0.0, %v2550
      %v2552 = vpop.f32.mrb[0].mxu0
      %2553 = vmatprep.mubr.bf16.mxu0 0
      %2554 = vmatmul.mubr.bf16.gmra.mrb[0].mxu0 %v2451
      %v2555 = vpop.f32.mrb[0].mxu0
      %v2556 = vadd.f32 0.0, %v2555
      %v2557 = vpop.f32.mrb[0].mxu0
      %v2558 = vpop.f32.mrb[0].mxu0
      %v2559 = vadd.f32 0.0, %v2558
      %v2560 = vpop.f32.mrb[0].mxu0
      %2561 = vmatprep.mubr.bf16.mxu0 0
      %2562 = vmatmul.mubr.bf16.gmra.mrb[0].mxu0 %v2452
      %v2563 = vpop.f32.mrb[0].mxu0
      %v2564 = vadd.f32 0.0, %v2563
      %v2565 = vpop.f32.mrb[0].mxu0
      %v2566 = vpop.f32.mrb[0].mxu0
      %v2567 = vadd.f32 0.0, %v2566
      %v2568 = vpop.f32.mrb[0].mxu0
      %2569 = vdwg.mxu0
      %v2570 = vld [vmem:[#allocation6] sm:$0xff]
      %v2571 = vld [vmem:[#allocation6 + $0x8] sm:$0xff]
      %v2572 = vld [vmem:[#allocation6 + $0x10] sm:$0xff]
      %v2573 = vld [vmem:[#allocation6 + $0x18] sm:$0xff]
      %v2574 = vld [vmem:[#allocation6 + $0x20] sm:$0xff]
      %v2575 = vld [vmem:[#allocation6 + $0x28] sm:$0xff]
      %v2576 = vld [vmem:[#allocation6 + $0x30] sm:$0xff]
      %v2577 = vld [vmem:[#allocation6 + $0x38] sm:$0xff]
      %v2578 = vadd.f32 %v2570, %v2540
      %v2579 = vadd.f32 %v2571, %v2543
      %v2580 = vadd.f32 %v2572, %v2548
      %v2581 = vadd.f32 %v2573, %v2551
      %v2582 = vadd.f32 %v2574, %v2556
      %v2583 = vadd.f32 %v2575, %v2559
      %v2584 = vadd.f32 %v2576, %v2564
      %v2585 = vadd.f32 %v2577, %v2567
      %2586 = vst [vmem:[#allocation6] sm:$0xff] %v2578
      %2587 = vst [vmem:[#allocation6 + $0x8] sm:$0xff] %v2579
      %2588 = vst [vmem:[#allocation6 + $0x10] sm:$0xff] %v2580
      %2589 = vst [vmem:[#allocation6 + $0x18] sm:$0xff] %v2581
      %2590 = vst [vmem:[#allocation6 + $0x20] sm:$0xff] %v2582
      %2591 = vst [vmem:[#allocation6 + $0x28] sm:$0xff] %v2583
      %2592 = vst [vmem:[#allocation6 + $0x30] sm:$0xff] %v2584
      %2593 = vst [vmem:[#allocation6 + $0x38] sm:$0xff] %v2585
      %v2594 = vld [vmem:[%s829] sm:$0xf]
      %v2595 = vld [vmem:[%s829 + $0x4] sm:$0x1]
      %v2596 = vld [vmem:[%s829 + $0x8] sm:$0xf]
      %v2597 = vld [vmem:[%s829 + $0xc] sm:$0x1]
      %v2598 = vld [vmem:[%s829 + $0x10] sm:$0xf]
      %v2599 = vld [vmem:[%s829 + $0x14] sm:$0x1]
      %v2600 = vld [vmem:[%s829 + $0x18] sm:$0xf]
      %v2601 = vld [vmem:[%s829 + $0x1c] sm:$0x1]
      %v2602 = vld [vmem:[%s829 + $0x20] sm:$0xf]
      %v2603 = vld [vmem:[%s829 + $0x24] sm:$0x1]
      %v2604 = vld [vmem:[%s829 + $0x28] sm:$0xf]
      %v2605 = vld [vmem:[%s829 + $0x2c] sm:$0x1]
      %v2606 = vld [vmem:[%s829 + $0x30] sm:$0xf]
      %v2607 = vld [vmem:[%s829 + $0x34] sm:$0x1]
      %v2608 = vld [vmem:[%s829 + $0x38] sm:$0xf]
      %v2609 = vld [vmem:[%s829 + $0x3c] sm:$0x1]
      %v2611 = vshrl.u32 %v2594, 16
      %v2613 = vrot.slane %v2611, 4
      %v2614 = vshll.u32 %v2594, 16
      %v2616 = vrot.slane %v2614, 5
      %v2617 = vor.u32 %v2613, %v2616
      %v2618 = vrot.slane %v2617, 4
      %v2620 = vshll.u32 %v2595, 16
      %v2622 = vrot.slane %v2620, 5
      %v2623 = vsel %vm1529, %v2618, %v2622
      %v2625 = vshrl.u32 %v2596, 16
      %v2627 = vrot.slane %v2625, 4
      %v2628 = vshll.u32 %v2596, 16
      %v2630 = vrot.slane %v2628, 5
      %v2631 = vor.u32 %v2627, %v2630
      %v2632 = vrot.slane %v2631, 4
      %v2634 = vshll.u32 %v2597, 16
      %v2636 = vrot.slane %v2634, 5
      %v2637 = vsel %vm1529, %v2632, %v2636
      %v2639 = vshrl.u32 %v2598, 16
      %v2641 = vrot.slane %v2639, 4
      %v2642 = vshll.u32 %v2598, 16
      %v2644 = vrot.slane %v2642, 5
      %v2645 = vor.u32 %v2641, %v2644
      %v2646 = vrot.slane %v2645, 4
      %v2648 = vshll.u32 %v2599, 16
      %v2650 = vrot.slane %v2648, 5
      %v2651 = vsel %vm1529, %v2646, %v2650
      %v2653 = vshrl.u32 %v2600, 16
      %v2655 = vrot.slane %v2653, 4
      %v2656 = vshll.u32 %v2600, 16
      %v2658 = vrot.slane %v2656, 5
      %v2659 = vor.u32 %v2655, %v2658
      %v2660 = vrot.slane %v2659, 4
      %v2662 = vshll.u32 %v2601, 16
      %v2664 = vrot.slane %v2662, 5
      %v2665 = vsel %vm1529, %v2660, %v2664
      %v2667 = vshrl.u32 %v2602, 16
      %v2669 = vrot.slane %v2667, 4
      %v2670 = vshll.u32 %v2602, 16
      %v2672 = vrot.slane %v2670, 5
      %v2673 = vor.u32 %v2669, %v2672
      %v2674 = vrot.slane %v2673, 4
      %v2676 = vshll.u32 %v2603, 16
      %v2678 = vrot.slane %v2676, 5
      %v2679 = vsel %vm1529, %v2674, %v2678
      %v2681 = vshrl.u32 %v2604, 16
      %v2683 = vrot.slane %v2681, 4
      %v2684 = vshll.u32 %v2604, 16
      %v2686 = vrot.slane %v2684, 5
      %v2687 = vor.u32 %v2683, %v2686
      %v2688 = vrot.slane %v2687, 4
      %v2690 = vshll.u32 %v2605, 16
      %v2692 = vrot.slane %v2690, 5
      %v2693 = vsel %vm1529, %v2688, %v2692
      %v2695 = vshrl.u32 %v2606, 16
      %v2697 = vrot.slane %v2695, 4
      %v2698 = vshll.u32 %v2606, 16
      %v2700 = vrot.slane %v2698, 5
      %v2701 = vor.u32 %v2697, %v2700
      %v2702 = vrot.slane %v2701, 4
      %v2704 = vshll.u32 %v2607, 16
      %v2706 = vrot.slane %v2704, 5
      %v2707 = vsel %vm1529, %v2702, %v2706
      %v2709 = vshrl.u32 %v2608, 16
      %v2711 = vrot.slane %v2709, 4
      %v2712 = vshll.u32 %v2608, 16
      %v2714 = vrot.slane %v2712, 5
      %v2715 = vor.u32 %v2711, %v2714
      %v2716 = vrot.slane %v2715, 4
      %v2718 = vshll.u32 %v2609, 16
      %v2720 = vrot.slane %v2718, 5
      %v2721 = vsel %vm1529, %v2716, %v2720
      %s2722 = scalar_lea.vmem %s6, 320
      %v2723 = vld [vmem:[%s2722] sm:$0xf]
      %v2724 = vld [vmem:[%s2722 + $0x4] sm:$0xf]
      %v2725 = vld [vmem:[%s2722 + $0x8] sm:$0xf]
      %v2726 = vld [vmem:[%s2722 + $0xc] sm:$0xf]
      %v2727 = vld [vmem:[%s2722 + $0x10] sm:$0xf]
      %v2728 = vld [vmem:[%s2722 + $0x14] sm:$0xf]
      %v2729 = vld [vmem:[%s2722 + $0x18] sm:$0xf]
      %v2730 = vld [vmem:[%s2722 + $0x1c] sm:$0xf]
      %v2731 = vld [vmem:[%s2722 + $0x20] sm:$0xf]
      %v2732 = vld [vmem:[%s2722 + $0x24] sm:$0xf]
      %v2733 = vld [vmem:[%s2722 + $0x28] sm:$0xf]
      %v2734 = vld [vmem:[%s2722 + $0x2c] sm:$0xf]
      %v2735 = vld [vmem:[%s2722 + $0x30] sm:$0xf]
      %v2736 = vld [vmem:[%s2722 + $0x34] sm:$0xf]
      %v2737 = vld [vmem:[%s2722 + $0x38] sm:$0xf]
      %v2738 = vld [vmem:[%s2722 + $0x3c] sm:$0xf]
      %v2739 = vunpack.c.l.b16 %v2623
      %v2740 = vunpack.c.l.b16 %v2637
      %v2741 = vunpack.c.l.b16 %v2651
      %v2742 = vunpack.c.l.b16 %v2665
      %v2743 = vunpack.c.l.b16 %v2679
      %v2744 = vunpack.c.l.b16 %v2693
      %v2745 = vunpack.c.l.b16 %v2707
      %v2746 = vunpack.c.l.b16 %v2721
      %v2747 = vpack.c.b16 %v2740, %v2739
      %v2748 = vpack.c.b16 %v2742, %v2741
      %v2749 = vpack.c.b16 %v2744, %v2743
      %v2750 = vpack.c.b16 %v2746, %v2745
      %v2771 = vunpack.c.l.b16 %v2723
      %v2772 = vunpack.c.l.b16 %v2724
      %v2773 = vunpack.c.l.b16 %v2725
      %v2774 = vunpack.c.l.b16 %v2726
      %v2775 = vunpack.c.l.b16 %v2727
      %v2776 = vunpack.c.l.b16 %v2728
      %v2777 = vunpack.c.l.b16 %v2729
      %v2778 = vunpack.c.l.b16 %v2730
      %v2779 = vunpack.c.l.b16 %v2731
      %v2780 = vunpack.c.l.b16 %v2732
      %v2781 = vunpack.c.l.b16 %v2733
      %v2782 = vunpack.c.l.b16 %v2734
      %v2783 = vunpack.c.l.b16 %v2735
      %v2784 = vunpack.c.l.b16 %v2736
      %v2785 = vunpack.c.l.b16 %v2737
      %v2786 = vunpack.c.l.b16 %v2738
      %v2787 = vpack.c.b16 %v2772, %v2771
      %v2788 = vpack.c.b16 %v2774, %v2773
      %v2789 = vpack.c.b16 %v2776, %v2775
      %v2790 = vpack.c.b16 %v2778, %v2777
      %v2791 = vpack.c.b16 %v2780, %v2779
      %v2792 = vpack.c.b16 %v2782, %v2781
      %v2793 = vpack.c.b16 %v2784, %v2783
      %v2794 = vpack.c.b16 %v2786, %v2785
      %2803 = vmatprep.subr.bf16.mxu0 0
      %2804 = vmatpush1.bf16.msra.mxu0 %v2787
      %2805 = vmatprep.subr.bf16.mxu0 0
      %2806 = vmatpush1.bf16.msra.mxu0 %v2788
      %2807 = vmatprep.subr.bf16.mxu0 0
      %2808 = vmatpush1.bf16.msra.mxu0 %v2789
      %2809 = vmatprep.subr.bf16.mxu0 0
      %2810 = vmatpush1.bf16.msra.mxu0 %v2790
      %2811 = vmatprep.subr.bf16.mxu0 0
      %2812 = vmatpush1.bf16.msra.mxu0 %v2791
      %2813 = vmatprep.subr.bf16.mxu0 0
      %2814 = vmatpush1.bf16.msra.mxu0 %v2792
      %2815 = vmatprep.subr.bf16.mxu0 0
      %2816 = vmatpush1.bf16.msra.mxu0 %v2793
      %2817 = vmatprep.subr.bf16.mxu0 0
      %2818 = vmatpush1.bf16.msra.mxu0 %v2794
      %2819 = vmatprep.subr.bf16.mxu0 0
      %2820 = vmatpush1.bf16.msra.mxu0 0
      %2821 = vmatprep.subr.bf16.mxu0 0
      %2822 = vmatpush1.bf16.msra.mxu0 0
      %2823 = vmatprep.subr.bf16.mxu0 0
      %2824 = vmatpush1.bf16.msra.mxu0 0
      %2825 = vmatprep.subr.bf16.mxu0 0
      %2826 = vmatpush1.bf16.msra.mxu0 0
      %2827 = vmatprep.subr.bf16.mxu0 0
      %2828 = vmatpush1.bf16.msra.mxu0 0
      %2829 = vmatprep.subr.bf16.mxu0 0
      %2830 = vmatpush1.bf16.msra.mxu0 0
      %2831 = vmatprep.subr.bf16.mxu0 0
      %2832 = vmatpush1.bf16.msra.mxu0 0
      %2833 = vmatprep.subr.bf16.mxu0 0
      %2834 = vmatpush1.bf16.msra.mxu0 0
      %2835 = vmatprep.mubr.bf16.mxu0 0
      %2836 = vmatmul.mubr.bf16.gmra.mrb[0].mxu0 %v2747
      %v2837 = vpop.f32.mrb[0].mxu0
      %v2838 = vadd.f32 0.0, %v2837
      %v2839 = vpop.f32.mrb[0].mxu0
      %v2840 = vpop.f32.mrb[0].mxu0
      %v2841 = vadd.f32 0.0, %v2840
      %v2842 = vpop.f32.mrb[0].mxu0
      %2843 = vmatprep.mubr.bf16.mxu0 0
      %2844 = vmatmul.mubr.bf16.gmra.mrb[0].mxu0 %v2748
      %v2845 = vpop.f32.mrb[0].mxu0
      %v2846 = vadd.f32 0.0, %v2845
      %v2847 = vpop.f32.mrb[0].mxu0
      %v2848 = vpop.f32.mrb[0].mxu0
      %v2849 = vadd.f32 0.0, %v2848
      %v2850 = vpop.f32.mrb[0].mxu0
      %2851 = vmatprep.mubr.bf16.mxu0 0
      %2852 = vmatmul.mubr.bf16.gmra.mrb[0].mxu0 %v2749
      %v2853 = vpop.f32.mrb[0].mxu0
      %v2854 = vadd.f32 0.0, %v2853
      %v2855 = vpop.f32.mrb[0].mxu0
      %v2856 = vpop.f32.mrb[0].mxu0
      %v2857 = vadd.f32 0.0, %v2856
      %v2858 = vpop.f32.mrb[0].mxu0
      %2859 = vmatprep.mubr.bf16.mxu0 0
      %2860 = vmatmul.mubr.bf16.gmra.mrb[0].mxu0 %v2750
      %v2861 = vpop.f32.mrb[0].mxu0
      %v2862 = vadd.f32 0.0, %v2861
      %v2863 = vpop.f32.mrb[0].mxu0
      %v2864 = vpop.f32.mrb[0].mxu0
      %v2865 = vadd.f32 0.0, %v2864
      %v2866 = vpop.f32.mrb[0].mxu0
      %2867 = vdwg.mxu0
      %v2868 = vld [vmem:[#allocation6] sm:$0xff]
      %v2869 = vld [vmem:[#allocation6 + $0x8] sm:$0xff]
      %v2870 = vld [vmem:[#allocation6 + $0x10] sm:$0xff]
      %v2871 = vld [vmem:[#allocation6 + $0x18] sm:$0xff]
      %v2872 = vld [vmem:[#allocation6 + $0x20] sm:$0xff]
      %v2873 = vld [vmem:[#allocation6 + $0x28] sm:$0xff]
      %v2874 = vld [vmem:[#allocation6 + $0x30] sm:$0xff]
      %v2875 = vld [vmem:[#allocation6 + $0x38] sm:$0xff]
      %v2876 = vadd.f32 %v2868, %v2838
      %v2877 = vadd.f32 %v2869, %v2841
      %v2878 = vadd.f32 %v2870, %v2846
      %v2879 = vadd.f32 %v2871, %v2849
      %v2880 = vadd.f32 %v2872, %v2854
      %v2881 = vadd.f32 %v2873, %v2857
      %v2882 = vadd.f32 %v2874, %v2862
      %v2883 = vadd.f32 %v2875, %v2865
      %2884 = vst [vmem:[#allocation6] sm:$0xff] %v2876
      %2885 = vst [vmem:[#allocation6 + $0x8] sm:$0xff] %v2877
      %2886 = vst [vmem:[#allocation6 + $0x10] sm:$0xff] %v2878
      %2887 = vst [vmem:[#allocation6 + $0x18] sm:$0xff] %v2879
      %2888 = vst [vmem:[#allocation6 + $0x20] sm:$0xff] %v2880
      %2889 = vst [vmem:[#allocation6 + $0x28] sm:$0xff] %v2881
      %2890 = vst [vmem:[#allocation6 + $0x30] sm:$0xff] %v2882
      %2891 = vst [vmem:[#allocation6 + $0x38] sm:$0xff] %v2883
      %v2892 = vld [vmem:[%s1293] sm:$0xf]
      %v2893 = vld [vmem:[%s1293 + $0x8] sm:$0xf]
      %v2894 = vld [vmem:[%s1293 + $0x10] sm:$0xf]
      %v2895 = vld [vmem:[%s1293 + $0x18] sm:$0xf]
      %v2896 = vld [vmem:[%s1293 + $0x20] sm:$0xf]
      %v2897 = vld [vmem:[%s1293 + $0x28] sm:$0xf]
      %v2898 = vld [vmem:[%s1293 + $0x30] sm:$0xf]
      %v2899 = vld [vmem:[%s1293 + $0x38] sm:$0xf]
      %s2900 = scalar_lea.vmem %s6, 384
      %v2901 = vld [vmem:[%s2900] sm:$0xf]
      %v2902 = vld [vmem:[%s2900 + $0x4] sm:$0xf]
      %v2903 = vld [vmem:[%s2900 + $0x8] sm:$0xf]
      %v2904 = vld [vmem:[%s2900 + $0xc] sm:$0xf]
      %v2905 = vld [vmem:[%s2900 + $0x10] sm:$0xf]
      %v2906 = vld [vmem:[%s2900 + $0x14] sm:$0xf]
      %v2907 = vld [vmem:[%s2900 + $0x18] sm:$0xf]
      %v2908 = vld [vmem:[%s2900 + $0x1c] sm:$0xf]
      %v2909 = vld [vmem:[%s2900 + $0x20] sm:$0xf]
      %v2910 = vld [vmem:[%s2900 + $0x24] sm:$0xf]
      %v2911 = vld [vmem:[%s2900 + $0x28] sm:$0xf]
      %v2912 = vld [vmem:[%s2900 + $0x2c] sm:$0xf]
      %v2913 = vld [vmem:[%s2900 + $0x30] sm:$0xf]
      %v2914 = vld [vmem:[%s2900 + $0x34] sm:$0xf]
      %v2915 = vld [vmem:[%s2900 + $0x38] sm:$0xf]
      %v2916 = vld [vmem:[%s2900 + $0x3c] sm:$0xf]
      %v2925 = vunpack.c.l.b16 %v2892
      %v2926 = vunpack.c.l.b16 %v2893
      %v2927 = vunpack.c.l.b16 %v2894
      %v2928 = vunpack.c.l.b16 %v2895
      %v2929 = vunpack.c.l.b16 %v2896
      %v2930 = vunpack.c.l.b16 %v2897
      %v2931 = vunpack.c.l.b16 %v2898
      %v2932 = vunpack.c.l.b16 %v2899
      %v2933 = vpack.c.b16 %v2926, %v2925
      %v2934 = vpack.c.b16 %v2928, %v2927
      %v2935 = vpack.c.b16 %v2930, %v2929
      %v2936 = vpack.c.b16 %v2932, %v2931
      %v2957 = vunpack.c.l.b16 %v2901
      %v2958 = vunpack.c.l.b16 %v2902
      %v2959 = vunpack.c.l.b16 %v2903
      %v2960 = vunpack.c.l.b16 %v2904
      %v2961 = vunpack.c.l.b16 %v2905
      %v2962 = vunpack.c.l.b16 %v2906
      %v2963 = vunpack.c.l.b16 %v2907
      %v2964 = vunpack.c.l.b16 %v2908
      %v2965 = vunpack.c.l.b16 %v2909
      %v2966 = vunpack.c.l.b16 %v2910
      %v2967 = vunpack.c.l.b16 %v2911
      %v2968 = vunpack.c.l.b16 %v2912
      %v2969 = vunpack.c.l.b16 %v2913
      %v2970 = vunpack.c.l.b16 %v2914
      %v2971 = vunpack.c.l.b16 %v2915
      %v2972 = vunpack.c.l.b16 %v2916
      %v2973 = vpack.c.b16 %v2958, %v2957
      %v2974 = vpack.c.b16 %v2960, %v2959
      %v2975 = vpack.c.b16 %v2962, %v2961
      %v2976 = vpack.c.b16 %v2964, %v2963
      %v2977 = vpack.c.b16 %v2966, %v2965
      %v2978 = vpack.c.b16 %v2968, %v2967
      %v2979 = vpack.c.b16 %v2970, %v2969
      %v2980 = vpack.c.b16 %v2972, %v2971
      %2989 = vmatprep.subr.bf16.mxu0 0
      %2990 = vmatpush1.bf16.msra.mxu0 %v2973
      %2991 = vmatprep.subr.bf16.mxu0 0
      %2992 = vmatpush1.bf16.msra.mxu0 %v2974
      %2993 = vmatprep.subr.bf16.mxu0 0
      %2994 = vmatpush1.bf16.msra.mxu0 %v2975
      %2995 = vmatprep.subr.bf16.mxu0 0
      %2996 = vmatpush1.bf16.msra.mxu0 %v2976
      %2997 = vmatprep.subr.bf16.mxu0 0
      %2998 = vmatpush1.bf16.msra.mxu0 %v2977
      %2999 = vmatprep.subr.bf16.mxu0 0
      %3000 = vmatpush1.bf16.msra.mxu0 %v2978
      %3001 = vmatprep.subr.bf16.mxu0 0
      %3002 = vmatpush1.bf16.msra.mxu0 %v2979
      %3003 = vmatprep.subr.bf16.mxu0 0
      %3004 = vmatpush1.bf16.msra.mxu0 %v2980
      %3005 = vmatprep.subr.bf16.mxu0 0
      %3006 = vmatpush1.bf16.msra.mxu0 0
      %3007 = vmatprep.subr.bf16.mxu0 0
      %3008 = vmatpush1.bf16.msra.mxu0 0
      %3009 = vmatprep.subr.bf16.mxu0 0
      %3010 = vmatpush1.bf16.msra.mxu0 0
      %3011 = vmatprep.subr.bf16.mxu0 0
      %3012 = vmatpush1.bf16.msra.mxu0 0
      %3013 = vmatprep.subr.bf16.mxu0 0
      %3014 = vmatpush1.bf16.msra.mxu0 0
      %3015 = vmatprep.subr.bf16.mxu0 0
      %3016 = vmatpush1.bf16.msra.mxu0 0
      %3017 = vmatprep.subr.bf16.mxu0 0
      %3018 = vmatpush1.bf16.msra.mxu0 0
      %3019 = vmatprep.subr.bf16.mxu0 0
      %3020 = vmatpush1.bf16.msra.mxu0 0
      %3021 = vmatprep.mubr.bf16.mxu0 0
      %3022 = vmatmul.mubr.bf16.gmra.mrb[0].mxu0 %v2933
      %v3023 = vpop.f32.mrb[0].mxu0
      %v3024 = vadd.f32 0.0, %v3023
      %v3025 = vpop.f32.mrb[0].mxu0
      %v3026 = vpop.f32.mrb[0].mxu0
      %v3027 = vadd.f32 0.0, %v3026
      %v3028 = vpop.f32.mrb[0].mxu0
      %3029 = vmatprep.mubr.bf16.mxu0 0
      %3030 = vmatmul.mubr.bf16.gmra.mrb[0].mxu0 %v2934
      %v3031 = vpop.f32.mrb[0].mxu0
      %v3032 = vadd.f32 0.0, %v3031
      %v3033 = vpop.f32.mrb[0].mxu0
      %v3034 = vpop.f32.mrb[0].mxu0
      %v3035 = vadd.f32 0.0, %v3034
      %v3036 = vpop.f32.mrb[0].mxu0
      %3037 = vmatprep.mubr.bf16.mxu0 0
      %3038 = vmatmul.mubr.bf16.gmra.mrb[0].mxu0 %v2935
      %v3039 = vpop.f32.mrb[0].mxu0
      %v3040 = vadd.f32 0.0, %v3039
      %v3041 = vpop.f32.mrb[0].mxu0
      %v3042 = vpop.f32.mrb[0].mxu0
      %v3043 = vadd.f32 0.0, %v3042
      %v3044 = vpop.f32.mrb[0].mxu0
      %3045 = vmatprep.mubr.bf16.mxu0 0
      %3046 = vmatmul.mubr.bf16.gmra.mrb[0].mxu0 %v2936
      %v3047 = vpop.f32.mrb[0].mxu0
      %v3048 = vadd.f32 0.0, %v3047
      %v3049 = vpop.f32.mrb[0].mxu0
      %v3050 = vpop.f32.mrb[0].mxu0
      %v3051 = vadd.f32 0.0, %v3050
      %v3052 = vpop.f32.mrb[0].mxu0
      %3053 = vdwg.mxu0
      %v3054 = vld [vmem:[#allocation6] sm:$0xff]
      %v3055 = vld [vmem:[#allocation6 + $0x8] sm:$0xff]
      %v3056 = vld [vmem:[#allocation6 + $0x10] sm:$0xff]
      %v3057 = vld [vmem:[#allocation6 + $0x18] sm:$0xff]
      %v3058 = vld [vmem:[#allocation6 + $0x20] sm:$0xff]
      %v3059 = vld [vmem:[#allocation6 + $0x28] sm:$0xff]
      %v3060 = vld [vmem:[#allocation6 + $0x30] sm:$0xff]
      %v3061 = vld [vmem:[#allocation6 + $0x38] sm:$0xff]
      %v3062 = vadd.f32 %v3054, %v3024
      %v3063 = vadd.f32 %v3055, %v3027
      %v3064 = vadd.f32 %v3056, %v3032
      %v3065 = vadd.f32 %v3057, %v3035
      %v3066 = vadd.f32 %v3058, %v3040
      %v3067 = vadd.f32 %v3059, %v3043
      %v3068 = vadd.f32 %v3060, %v3048
      %v3069 = vadd.f32 %v3061, %v3051
      %3070 = vst [vmem:[#allocation6] sm:$0xff] %v3062
      %3071 = vst [vmem:[#allocation6 + $0x8] sm:$0xff] %v3063
      %3072 = vst [vmem:[#allocation6 + $0x10] sm:$0xff] %v3064
      %3073 = vst [vmem:[#allocation6 + $0x18] sm:$0xff] %v3065
      %3074 = vst [vmem:[#allocation6 + $0x20] sm:$0xff] %v3066
      %3075 = vst [vmem:[#allocation6 + $0x28] sm:$0xff] %v3067
      %3076 = vst [vmem:[#allocation6 + $0x30] sm:$0xff] %v3068
      %3077 = vst [vmem:[#allocation6 + $0x38] sm:$0xff] %v3069
      %v3078 = vld [vmem:[%s1061] sm:$0xf]
      %v3079 = vld [vmem:[%s1061 + $0x4] sm:$0x1]
      %v3080 = vld [vmem:[%s1061 + $0x8] sm:$0xf]
      %v3081 = vld [vmem:[%s1061 + $0xc] sm:$0x1]
      %v3082 = vld [vmem:[%s1061 + $0x10] sm:$0xf]
      %v3083 = vld [vmem:[%s1061 + $0x14] sm:$0x1]
      %v3084 = vld [vmem:[%s1061 + $0x18] sm:$0xf]
      %v3085 = vld [vmem:[%s1061 + $0x1c] sm:$0x1]
      %v3086 = vld [vmem:[%s1061 + $0x20] sm:$0xf]
      %v3087 = vld [vmem:[%s1061 + $0x24] sm:$0x1]
      %v3088 = vld [vmem:[%s1061 + $0x28] sm:$0xf]
      %v3089 = vld [vmem:[%s1061 + $0x2c] sm:$0x1]
      %v3090 = vld [vmem:[%s1061 + $0x30] sm:$0xf]
      %v3091 = vld [vmem:[%s1061 + $0x34] sm:$0x1]
      %v3092 = vld [vmem:[%s1061 + $0x38] sm:$0xf]
      %v3093 = vld [vmem:[%s1061 + $0x3c] sm:$0x1]
      %v3095 = vshrl.u32 %v3078, 16
      %v3097 = vrot.slane %v3095, 4
      %v3098 = vshll.u32 %v3078, 16
      %v3100 = vrot.slane %v3098, 5
      %v3101 = vor.u32 %v3097, %v3100
      %v3102 = vrot.slane %v3101, 4
      %v3104 = vshll.u32 %v3079, 16
      %v3106 = vrot.slane %v3104, 5
      %v3107 = vsel %vm1529, %v3102, %v3106
      %v3109 = vshrl.u32 %v3080, 16
      %v3111 = vrot.slane %v3109, 4
      %v3112 = vshll.u32 %v3080, 16
      %v3114 = vrot.slane %v3112, 5
      %v3115 = vor.u32 %v3111, %v3114
      %v3116 = vrot.slane %v3115, 4
      %v3118 = vshll.u32 %v3081, 16
      %v3120 = vrot.slane %v3118, 5
      %v3121 = vsel %vm1529, %v3116, %v3120
      %v3123 = vshrl.u32 %v3082, 16
      %v3125 = vrot.slane %v3123, 4
      %v3126 = vshll.u32 %v3082, 16
      %v3128 = vrot.slane %v3126, 5
      %v3129 = vor.u32 %v3125, %v3128
      %v3130 = vrot.slane %v3129, 4
      %v3132 = vshll.u32 %v3083, 16
      %v3134 = vrot.slane %v3132, 5
      %v3135 = vsel %vm1529, %v3130, %v3134
      %v3137 = vshrl.u32 %v3084, 16
      %v3139 = vrot.slane %v3137, 4
      %v3140 = vshll.u32 %v3084, 16
      %v3142 = vrot.slane %v3140, 5
      %v3143 = vor.u32 %v3139, %v3142
      %v3144 = vrot.slane %v3143, 4
      %v3146 = vshll.u32 %v3085, 16
      %v3148 = vrot.slane %v3146, 5
      %v3149 = vsel %vm1529, %v3144, %v3148
      %v3151 = vshrl.u32 %v3086, 16
      %v3153 = vrot.slane %v3151, 4
      %v3154 = vshll.u32 %v3086, 16
      %v3156 = vrot.slane %v3154, 5
      %v3157 = vor.u32 %v3153, %v3156
      %v3158 = vrot.slane %v3157, 4
      %v3160 = vshll.u32 %v3087, 16
      %v3162 = vrot.slane %v3160, 5
      %v3163 = vsel %vm1529, %v3158, %v3162
      %v3165 = vshrl.u32 %v3088, 16
      %v3167 = vrot.slane %v3165, 4
      %v3168 = vshll.u32 %v3088, 16
      %v3170 = vrot.slane %v3168, 5
      %v3171 = vor.u32 %v3167, %v3170
      %v3172 = vrot.slane %v3171, 4
      %v3174 = vshll.u32 %v3089, 16
      %v3176 = vrot.slane %v3174, 5
      %v3177 = vsel %vm1529, %v3172, %v3176
      %v3179 = vshrl.u32 %v3090, 16
      %v3181 = vrot.slane %v3179, 4
      %v3182 = vshll.u32 %v3090, 16
      %v3184 = vrot.slane %v3182, 5
      %v3185 = vor.u32 %v3181, %v3184
      %v3186 = vrot.slane %v3185, 4
      %v3188 = vshll.u32 %v3091, 16
      %v3190 = vrot.slane %v3188, 5
      %v3191 = vsel %vm1529, %v3186, %v3190
      %v3193 = vshrl.u32 %v3092, 16
      %v3195 = vrot.slane %v3193, 4
      %v3196 = vshll.u32 %v3092, 16
      %v3198 = vrot.slane %v3196, 5
      %v3199 = vor.u32 %v3195, %v3198
      %v3200 = vrot.slane %v3199, 4
      %v3202 = vshll.u32 %v3093, 16
      %v3204 = vrot.slane %v3202, 5
      %v3205 = vsel %vm1529, %v3200, %v3204
      %s3206 = scalar_lea.vmem %s6, 448
      %v3207 = vld [vmem:[%s3206] sm:$0xf]
      %v3208 = vld [vmem:[%s3206 + $0x4] sm:$0xf]
      %v3209 = vld [vmem:[%s3206 + $0x8] sm:$0xf]
      %v3210 = vld [vmem:[%s3206 + $0xc] sm:$0xf]
      %v3211 = vld [vmem:[%s3206 + $0x10] sm:$0xf]
      %v3212 = vld [vmem:[%s3206 + $0x14] sm:$0xf]
      %v3213 = vld [vmem:[%s3206 + $0x18] sm:$0xf]
      %v3214 = vld [vmem:[%s3206 + $0x1c] sm:$0xf]
      %v3215 = vld [vmem:[%s3206 + $0x20] sm:$0xf]
      %v3216 = vld [vmem:[%s3206 + $0x24] sm:$0xf]
      %v3217 = vld [vmem:[%s3206 + $0x28] sm:$0xf]
      %v3218 = vld [vmem:[%s3206 + $0x2c] sm:$0xf]
      %v3219 = vld [vmem:[%s3206 + $0x30] sm:$0xf]
      %v3220 = vld [vmem:[%s3206 + $0x34] sm:$0xf]
      %v3221 = vld [vmem:[%s3206 + $0x38] sm:$0xf]
      %v3222 = vld [vmem:[%s3206 + $0x3c] sm:$0xf]
      %v3223 = vunpack.c.l.b16 %v3107
      %v3224 = vunpack.c.l.b16 %v3121
      %v3225 = vunpack.c.l.b16 %v3135
      %v3226 = vunpack.c.l.b16 %v3149
      %v3227 = vunpack.c.l.b16 %v3163
      %v3228 = vunpack.c.l.b16 %v3177
      %v3229 = vunpack.c.l.b16 %v3191
      %v3230 = vunpack.c.l.b16 %v3205
      %v3231 = vpack.c.b16 %v3224, %v3223
      %v3232 = vpack.c.b16 %v3226, %v3225
      %v3233 = vpack.c.b16 %v3228, %v3227
      %v3234 = vpack.c.b16 %v3230, %v3229
      %v3255 = vunpack.c.l.b16 %v3207
      %v3256 = vunpack.c.l.b16 %v3208
      %v3257 = vunpack.c.l.b16 %v3209
      %v3258 = vunpack.c.l.b16 %v3210
      %v3259 = vunpack.c.l.b16 %v3211
      %v3260 = vunpack.c.l.b16 %v3212
      %v3261 = vunpack.c.l.b16 %v3213
      %v3262 = vunpack.c.l.b16 %v3214
      %v3263 = vunpack.c.l.b16 %v3215
      %v3264 = vunpack.c.l.b16 %v3216
      %v3265 = vunpack.c.l.b16 %v3217
      %v3266 = vunpack.c.l.b16 %v3218
      %v3267 = vunpack.c.l.b16 %v3219
      %v3268 = vunpack.c.l.b16 %v3220
      %v3269 = vunpack.c.l.b16 %v3221
      %v3270 = vunpack.c.l.b16 %v3222
      %v3271 = vpack.c.b16 %v3256, %v3255
      %v3272 = vpack.c.b16 %v3258, %v3257
      %v3273 = vpack.c.b16 %v3260, %v3259
      %v3274 = vpack.c.b16 %v3262, %v3261
      %v3275 = vpack.c.b16 %v3264, %v3263
      %v3276 = vpack.c.b16 %v3266, %v3265
      %v3277 = vpack.c.b16 %v3268, %v3267
      %v3278 = vpack.c.b16 %v3270, %v3269
      %3287 = vmatprep.subr.bf16.mxu0 0
      %3288 = vmatpush1.bf16.msra.mxu0 %v3271
      %3289 = vmatprep.subr.bf16.mxu0 0
      %3290 = vmatpush1.bf16.msra.mxu0 %v3272
      %3291 = vmatprep.subr.bf16.mxu0 0
      %3292 = vmatpush1.bf16.msra.mxu0 %v3273
      %3293 = vmatprep.subr.bf16.mxu0 0
      %3294 = vmatpush1.bf16.msra.mxu0 %v3274
      %3295 = vmatprep.subr.bf16.mxu0 0
      %3296 = vmatpush1.bf16.msra.mxu0 %v3275
      %3297 = vmatprep.subr.bf16.mxu0 0
      %3298 = vmatpush1.bf16.msra.mxu0 %v3276
      %3299 = vmatprep.subr.bf16.mxu0 0
      %3300 = vmatpush1.bf16.msra.mxu0 %v3277
      %3301 = vmatprep.subr.bf16.mxu0 0
      %3302 = vmatpush1.bf16.msra.mxu0 %v3278
      %3303 = vmatprep.subr.bf16.mxu0 0
      %3304 = vmatpush1.bf16.msra.mxu0 0
      %3305 = vmatprep.subr.bf16.mxu0 0
      %3306 = vmatpush1.bf16.msra.mxu0 0
      %3307 = vmatprep.subr.bf16.mxu0 0
      %3308 = vmatpush1.bf16.msra.mxu0 0
      %3309 = vmatprep.subr.bf16.mxu0 0
      %3310 = vmatpush1.bf16.msra.mxu0 0
      %3311 = vmatprep.subr.bf16.mxu0 0
      %3312 = vmatpush1.bf16.msra.mxu0 0
      %3313 = vmatprep.subr.bf16.mxu0 0
      %3314 = vmatpush1.bf16.msra.mxu0 0
      %3315 = vmatprep.subr.bf16.mxu0 0
      %3316 = vmatpush1.bf16.msra.mxu0 0
      %3317 = vmatprep.subr.bf16.mxu0 0
      %3318 = vmatpush1.bf16.msra.mxu0 0
      %3319 = vmatprep.mubr.bf16.mxu0 0
      %3320 = vmatmul.mubr.bf16.gmra.mrb[0].mxu0 %v3231
      %v3321 = vpop.f32.mrb[0].mxu0
      %v3322 = vadd.f32 0.0, %v3321
      %v3323 = vpop.f32.mrb[0].mxu0
      %v3324 = vpop.f32.mrb[0].mxu0
      %v3325 = vadd.f32 0.0, %v3324
      %v3326 = vpop.f32.mrb[0].mxu0
      %3327 = vmatprep.mubr.bf16.mxu0 0
      %3328 = vmatmul.mubr.bf16.gmra.mrb[0].mxu0 %v3232
      %v3329 = vpop.f32.mrb[0].mxu0
      %v3330 = vadd.f32 0.0, %v3329
      %v3331 = vpop.f32.mrb[0].mxu0
      %v3332 = vpop.f32.mrb[0].mxu0
      %v3333 = vadd.f32 0.0, %v3332
      %v3334 = vpop.f32.mrb[0].mxu0
      %3335 = vmatprep.mubr.bf16.mxu0 0
      %3336 = vmatmul.mubr.bf16.gmra.mrb[0].mxu0 %v3233
      %v3337 = vpop.f32.mrb[0].mxu0
      %v3338 = vadd.f32 0.0, %v3337
      %v3339 = vpop.f32.mrb[0].mxu0
      %v3340 = vpop.f32.mrb[0].mxu0
      %v3341 = vadd.f32 0.0, %v3340
      %v3342 = vpop.f32.mrb[0].mxu0
      %3343 = vmatprep.mubr.bf16.mxu0 0
      %3344 = vmatmul.mubr.bf16.gmra.mrb[0].mxu0 %v3234
      %v3345 = vpop.f32.mrb[0].mxu0
      %v3346 = vadd.f32 0.0, %v3345
      %v3347 = vpop.f32.mrb[0].mxu0
      %v3348 = vpop.f32.mrb[0].mxu0
      %v3349 = vadd.f32 0.0, %v3348
      %v3350 = vpop.f32.mrb[0].mxu0
      %3351 = vdwg.mxu0
      %v3352 = vld [vmem:[#allocation6] sm:$0xff]
      %v3353 = vld [vmem:[#allocation6 + $0x8] sm:$0xff]
      %v3354 = vld [vmem:[#allocation6 + $0x10] sm:$0xff]
      %v3355 = vld [vmem:[#allocation6 + $0x18] sm:$0xff]
      %v3356 = vld [vmem:[#allocation6 + $0x20] sm:$0xff]
      %v3357 = vld [vmem:[#allocation6 + $0x28] sm:$0xff]
      %v3358 = vld [vmem:[#allocation6 + $0x30] sm:$0xff]
      %v3359 = vld [vmem:[#allocation6 + $0x38] sm:$0xff]
      %v3360 = vadd.f32 %v3352, %v3322
      %v3361 = vadd.f32 %v3353, %v3325
      %v3362 = vadd.f32 %v3354, %v3330
      %v3363 = vadd.f32 %v3355, %v3333
      %v3364 = vadd.f32 %v3356, %v3338
      %v3365 = vadd.f32 %v3357, %v3341
      %v3366 = vadd.f32 %v3358, %v3346
      %v3367 = vadd.f32 %v3359, %v3349
      %3368 = vst [vmem:[#allocation6] sm:$0xff] %v3360
      %3369 = vst [vmem:[#allocation6 + $0x8] sm:$0xff] %v3361
      %3370 = vst [vmem:[#allocation6 + $0x10] sm:$0xff] %v3362
      %3371 = vst [vmem:[#allocation6 + $0x18] sm:$0xff] %v3363
      %3372 = vst [vmem:[#allocation6 + $0x20] sm:$0xff] %v3364
      %3373 = vst [vmem:[#allocation6 + $0x28] sm:$0xff] %v3365
      %3374 = vst [vmem:[#allocation6 + $0x30] sm:$0xff] %v3366
      %3375 = vst [vmem:[#allocation6 + $0x38] sm:$0xff] %v3367
      %v3376 = vld [vmem:[%s1293] sm:$0xf]
      %v3377 = vld [vmem:[%s1293 + $0x4] sm:$0x1]
      %v3378 = vld [vmem:[%s1293 + $0x8] sm:$0xf]
      %v3379 = vld [vmem:[%s1293 + $0xc] sm:$0x1]
      %v3380 = vld [vmem:[%s1293 + $0x10] sm:$0xf]
      %v3381 = vld [vmem:[%s1293 + $0x14] sm:$0x1]
      %v3382 = vld [vmem:[%s1293 + $0x18] sm:$0xf]
      %v3383 = vld [vmem:[%s1293 + $0x1c] sm:$0x1]
      %v3384 = vld [vmem:[%s1293 + $0x20] sm:$0xf]
      %v3385 = vld [vmem:[%s1293 + $0x24] sm:$0x1]
      %v3386 = vld [vmem:[%s1293 + $0x28] sm:$0xf]
      %v3387 = vld [vmem:[%s1293 + $0x2c] sm:$0x1]
      %v3388 = vld [vmem:[%s1293 + $0x30] sm:$0xf]
      %v3389 = vld [vmem:[%s1293 + $0x34] sm:$0x1]
      %v3390 = vld [vmem:[%s1293 + $0x38] sm:$0xf]
      %v3391 = vld [vmem:[%s1293 + $0x3c] sm:$0x1]
      %v3393 = vshrl.u32 %v3376, 16
      %v3395 = vrot.slane %v3393, 4
      %v3396 = vshll.u32 %v3376, 16
      %v3398 = vrot.slane %v3396, 5
      %v3399 = vor.u32 %v3395, %v3398
      %v3400 = vrot.slane %v3399, 4
      %v3402 = vshll.u32 %v3377, 16
      %v3404 = vrot.slane %v3402, 5
      %v3405 = vsel %vm1529, %v3400, %v3404
      %v3407 = vshrl.u32 %v3378, 16
      %v3409 = vrot.slane %v3407, 4
      %v3410 = vshll.u32 %v3378, 16
      %v3412 = vrot.slane %v3410, 5
      %v3413 = vor.u32 %v3409, %v3412
      %v3414 = vrot.slane %v3413, 4
      %v3416 = vshll.u32 %v3379, 16
      %v3418 = vrot.slane %v3416, 5
      %v3419 = vsel %vm1529, %v3414, %v3418
      %v3421 = vshrl.u32 %v3380, 16
      %v3423 = vrot.slane %v3421, 4
      %v3424 = vshll.u32 %v3380, 16
      %v3426 = vrot.slane %v3424, 5
      %v3427 = vor.u32 %v3423, %v3426
      %v3428 = vrot.slane %v3427, 4
      %v3430 = vshll.u32 %v3381, 16
      %v3432 = vrot.slane %v3430, 5
      %v3433 = vsel %vm1529, %v3428, %v3432
      %v3435 = vshrl.u32 %v3382, 16
      %v3437 = vrot.slane %v3435, 4
      %v3438 = vshll.u32 %v3382, 16
      %v3440 = vrot.slane %v3438, 5
      %v3441 = vor.u32 %v3437, %v3440
      %v3442 = vrot.slane %v3441, 4
      %v3444 = vshll.u32 %v3383, 16
      %v3446 = vrot.slane %v3444, 5
      %v3447 = vsel %vm1529, %v3442, %v3446
      %v3449 = vshrl.u32 %v3384, 16
      %v3451 = vrot.slane %v3449, 4
      %v3452 = vshll.u32 %v3384, 16
      %v3454 = vrot.slane %v3452, 5
      %v3455 = vor.u32 %v3451, %v3454
      %v3456 = vrot.slane %v3455, 4
      %v3458 = vshll.u32 %v3385, 16
      %v3460 = vrot.slane %v3458, 5
      %v3461 = vsel %vm1529, %v3456, %v3460
      %v3463 = vshrl.u32 %v3386, 16
      %v3465 = vrot.slane %v3463, 4
      %v3466 = vshll.u32 %v3386, 16
      %v3468 = vrot.slane %v3466, 5
      %v3469 = vor.u32 %v3465, %v3468
      %v3470 = vrot.slane %v3469, 4
      %v3472 = vshll.u32 %v3387, 16
      %v3474 = vrot.slane %v3472, 5
      %v3475 = vsel %vm1529, %v3470, %v3474
      %v3477 = vshrl.u32 %v3388, 16
      %v3479 = vrot.slane %v3477, 4
      %v3480 = vshll.u32 %v3388, 16
      %v3482 = vrot.slane %v3480, 5
      %v3483 = vor.u32 %v3479, %v3482
      %v3484 = vrot.slane %v3483, 4
      %v3486 = vshll.u32 %v3389, 16
      %v3488 = vrot.slane %v3486, 5
      %v3489 = vsel %vm1529, %v3484, %v3488
      %v3491 = vshrl.u32 %v3390, 16
      %v3493 = vrot.slane %v3491, 4
      %v3494 = vshll.u32 %v3390, 16
      %v3496 = vrot.slane %v3494, 5
      %v3497 = vor.u32 %v3493, %v3496
      %v3498 = vrot.slane %v3497, 4
      %v3500 = vshll.u32 %v3391, 16
      %v3502 = vrot.slane %v3500, 5
      %v3503 = vsel %vm1529, %v3498, %v3502
      %s3504 = scalar_lea.vmem %s6, 512
      %v3505 = vld [vmem:[%s3504] sm:$0xf]
      %v3506 = vld [vmem:[%s3504 + $0x4] sm:$0xf]
      %v3507 = vld [vmem:[%s3504 + $0x8] sm:$0xf]
      %v3508 = vld [vmem:[%s3504 + $0xc] sm:$0xf]
      %v3509 = vld [vmem:[%s3504 + $0x10] sm:$0xf]
      %v3510 = vld [vmem:[%s3504 + $0x14] sm:$0xf]
      %v3511 = vld [vmem:[%s3504 + $0x18] sm:$0xf]
      %v3512 = vld [vmem:[%s3504 + $0x1c] sm:$0xf]
      %v3513 = vld [vmem:[%s3504 + $0x20] sm:$0xf]
      %v3514 = vld [vmem:[%s3504 + $0x24] sm:$0xf]
      %v3515 = vld [vmem:[%s3504 + $0x28] sm:$0xf]
      %v3516 = vld [vmem:[%s3504 + $0x2c] sm:$0xf]
      %v3517 = vld [vmem:[%s3504 + $0x30] sm:$0xf]
      %v3518 = vld [vmem:[%s3504 + $0x34] sm:$0xf]
      %v3519 = vld [vmem:[%s3504 + $0x38] sm:$0xf]
      %v3520 = vld [vmem:[%s3504 + $0x3c] sm:$0xf]
      %v3521 = vunpack.c.l.b16 %v3405
      %v3522 = vunpack.c.l.b16 %v3419
      %v3523 = vunpack.c.l.b16 %v3433
      %v3524 = vunpack.c.l.b16 %v3447
      %v3525 = vunpack.c.l.b16 %v3461
      %v3526 = vunpack.c.l.b16 %v3475
      %v3527 = vunpack.c.l.b16 %v3489
      %v3528 = vunpack.c.l.b16 %v3503
      %v3529 = vpack.c.b16 %v3522, %v3521
      %v3530 = vpack.c.b16 %v3524, %v3523
      %v3531 = vpack.c.b16 %v3526, %v3525
      %v3532 = vpack.c.b16 %v3528, %v3527
      %v3553 = vunpack.c.l.b16 %v3505
      %v3554 = vunpack.c.l.b16 %v3506
      %v3555 = vunpack.c.l.b16 %v3507
      %v3556 = vunpack.c.l.b16 %v3508
      %v3557 = vunpack.c.l.b16 %v3509
      %v3558 = vunpack.c.l.b16 %v3510
      %v3559 = vunpack.c.l.b16 %v3511
      %v3560 = vunpack.c.l.b16 %v3512
      %v3561 = vunpack.c.l.b16 %v3513
      %v3562 = vunpack.c.l.b16 %v3514
      %v3563 = vunpack.c.l.b16 %v3515
      %v3564 = vunpack.c.l.b16 %v3516
      %v3565 = vunpack.c.l.b16 %v3517
      %v3566 = vunpack.c.l.b16 %v3518
      %v3567 = vunpack.c.l.b16 %v3519
      %v3568 = vunpack.c.l.b16 %v3520
      %v3569 = vpack.c.b16 %v3554, %v3553
      %v3570 = vpack.c.b16 %v3556, %v3555
      %v3571 = vpack.c.b16 %v3558, %v3557
      %v3572 = vpack.c.b16 %v3560, %v3559
      %v3573 = vpack.c.b16 %v3562, %v3561
      %v3574 = vpack.c.b16 %v3564, %v3563
      %v3575 = vpack.c.b16 %v3566, %v3565
      %v3576 = vpack.c.b16 %v3568, %v3567
      %3585 = vmatprep.subr.bf16.mxu0 0
      %3586 = vmatpush1.bf16.msra.mxu0 %v3569
      %3587 = vmatprep.subr.bf16.mxu0 0
      %3588 = vmatpush1.bf16.msra.mxu0 %v3570
      %3589 = vmatprep.subr.bf16.mxu0 0
      %3590 = vmatpush1.bf16.msra.mxu0 %v3571
      %3591 = vmatprep.subr.bf16.mxu0 0
      %3592 = vmatpush1.bf16.msra.mxu0 %v3572
      %3593 = vmatprep.subr.bf16.mxu0 0
      %3594 = vmatpush1.bf16.msra.mxu0 %v3573
      %3595 = vmatprep.subr.bf16.mxu0 0
      %3596 = vmatpush1.bf16.msra.mxu0 %v3574
      %3597 = vmatprep.subr.bf16.mxu0 0
      %3598 = vmatpush1.bf16.msra.mxu0 %v3575
      %3599 = vmatprep.subr.bf16.mxu0 0
      %3600 = vmatpush1.bf16.msra.mxu0 %v3576
      %3601 = vmatprep.subr.bf16.mxu0 0
      %3602 = vmatpush1.bf16.msra.mxu0 0
      %3603 = vmatprep.subr.bf16.mxu0 0
      %3604 = vmatpush1.bf16.msra.mxu0 0
      %3605 = vmatprep.subr.bf16.mxu0 0
      %3606 = vmatpush1.bf16.msra.mxu0 0
      %3607 = vmatprep.subr.bf16.mxu0 0
      %3608 = vmatpush1.bf16.msra.mxu0 0
      %3609 = vmatprep.subr.bf16.mxu0 0
      %3610 = vmatpush1.bf16.msra.mxu0 0
      %3611 = vmatprep.subr.bf16.mxu0 0
      %3612 = vmatpush1.bf16.msra.mxu0 0
      %3613 = vmatprep.subr.bf16.mxu0 0
      %3614 = vmatpush1.bf16.msra.mxu0 0
      %3615 = vmatprep.subr.bf16.mxu0 0
      %3616 = vmatpush1.bf16.msra.mxu0 0
      %3617 = vmatprep.mubr.bf16.mxu0 0
      %3618 = vmatmul.mubr.bf16.gmra.mrb[0].mxu0 %v3529
      %v3619 = vpop.f32.mrb[0].mxu0
      %v3620 = vadd.f32 0.0, %v3619
      %v3621 = vpop.f32.mrb[0].mxu0
      %v3622 = vpop.f32.mrb[0].mxu0
      %v3623 = vadd.f32 0.0, %v3622
      %v3624 = vpop.f32.mrb[0].mxu0
      %3625 = vmatprep.mubr.bf16.mxu0 0
      %3626 = vmatmul.mubr.bf16.gmra.mrb[0].mxu0 %v3530
      %v3627 = vpop.f32.mrb[0].mxu0
      %v3628 = vadd.f32 0.0, %v3627
      %v3629 = vpop.f32.mrb[0].mxu0
      %v3630 = vpop.f32.mrb[0].mxu0
      %v3631 = vadd.f32 0.0, %v3630
      %v3632 = vpop.f32.mrb[0].mxu0
      %3633 = vmatprep.mubr.bf16.mxu0 0
      %3634 = vmatmul.mubr.bf16.gmra.mrb[0].mxu0 %v3531
      %v3635 = vpop.f32.mrb[0].mxu0
      %v3636 = vadd.f32 0.0, %v3635
      %v3637 = vpop.f32.mrb[0].mxu0
      %v3638 = vpop.f32.mrb[0].mxu0
      %v3639 = vadd.f32 0.0, %v3638
      %v3640 = vpop.f32.mrb[0].mxu0
      %3641 = vmatprep.mubr.bf16.mxu0 0
      %3642 = vmatmul.mubr.bf16.gmra.mrb[0].mxu0 %v3532
      %v3643 = vpop.f32.mrb[0].mxu0
      %v3644 = vadd.f32 0.0, %v3643
      %v3645 = vpop.f32.mrb[0].mxu0
      %v3646 = vpop.f32.mrb[0].mxu0
      %v3647 = vadd.f32 0.0, %v3646
      %v3648 = vpop.f32.mrb[0].mxu0
      %3649 = vdwg.mxu0
      %v3650 = vld [vmem:[#allocation6] sm:$0xff]
      %v3651 = vld [vmem:[#allocation6 + $0x8] sm:$0xff]
      %v3652 = vld [vmem:[#allocation6 + $0x10] sm:$0xff]
      %v3653 = vld [vmem:[#allocation6 + $0x18] sm:$0xff]
      %v3654 = vld [vmem:[#allocation6 + $0x20] sm:$0xff]
      %v3655 = vld [vmem:[#allocation6 + $0x28] sm:$0xff]
      %v3656 = vld [vmem:[#allocation6 + $0x30] sm:$0xff]
      %v3657 = vld [vmem:[#allocation6 + $0x38] sm:$0xff]
      %v3658 = vadd.f32 %v3650, %v3620
      %v3659 = vadd.f32 %v3651, %v3623
      %v3660 = vadd.f32 %v3652, %v3628
      %v3661 = vadd.f32 %v3653, %v3631
      %v3662 = vadd.f32 %v3654, %v3636
      %v3663 = vadd.f32 %v3655, %v3639
      %v3664 = vadd.f32 %v3656, %v3644
      %v3665 = vadd.f32 %v3657, %v3647
      %3666 = vst [vmem:[#allocation6] sm:$0xff] %v3658
      %3667 = vst [vmem:[#allocation6 + $0x8] sm:$0xff] %v3659
      %3668 = vst [vmem:[#allocation6 + $0x10] sm:$0xff] %v3660
      %3669 = vst [vmem:[#allocation6 + $0x18] sm:$0xff] %v3661
      %3670 = vst [vmem:[#allocation6 + $0x20] sm:$0xff] %v3662
      %3671 = vst [vmem:[#allocation6 + $0x28] sm:$0xff] %v3663
      %3672 = vst [vmem:[#allocation6 + $0x30] sm:$0xff] %v3664
      %3673 = vst [vmem:[#allocation6 + $0x38] sm:$0xff] %v3665
      %v3674 = vld [vmem:[#allocation6] sm:$0xff]
      %v3675 = vld [vmem:[#allocation6 + $0x8] sm:$0xff]
      %v3676 = vld [vmem:[#allocation6 + $0x10] sm:$0xff]
      %v3677 = vld [vmem:[#allocation6 + $0x18] sm:$0xff]
      %v3678 = vld [vmem:[#allocation6 + $0x20] sm:$0xff]
      %v3679 = vld [vmem:[#allocation6 + $0x28] sm:$0xff]
      %v3680 = vld [vmem:[#allocation6 + $0x30] sm:$0xff]
      %v3681 = vld [vmem:[#allocation6 + $0x38] sm:$0xff]
      %v3682 = vld [vmem:[%s7] sm:$0x1]
      %v3684 = vlaneseq
      %v3685 = vshrl.u32 %v3684, 7
      %v3686 = vsub.s32 0, %v3685
      %v3687 = vrot.slane %v3682, %v3686
      %v3689 = vmul.f32 %v3674, %v3687
      %v3690 = vmul.f32 %v3675, %v3687
      %v3691 = vmul.f32 %v3676, %v3687
      %v3692 = vmul.f32 %v3677, %v3687
      %v3693 = vmul.f32 %v3678, %v3687
      %v3694 = vmul.f32 %v3679, %v3687
      %v3695 = vmul.f32 %v3680, %v3687
      %v3696 = vmul.f32 %v3681, %v3687
      %v3697 = vld [vmem:[%s8] sm:$0x1]
      %v3699 = vlaneseq
      %v3700 = vshrl.u32 %v3699, 7
      %v3701 = vsub.s32 0, %v3700
      %v3702 = vrot.slane %v3697, %v3701
      %v3704 = vadd.f32 %v3689, %v3702
      %v3705 = vadd.f32 %v3690, %v3702
      %v3706 = vadd.f32 %v3691, %v3702
      %v3707 = vadd.f32 %v3692, %v3702
      %v3708 = vadd.f32 %v3693, %v3702
      %v3709 = vadd.f32 %v3694, %v3702
      %v3710 = vadd.f32 %v3695, %v3702
      %v3711 = vadd.f32 %v3696, %v3702
      %v3712 = vmax.f32 %v3704, 0.0
      %v3713 = vmax.f32 %v3705, 0.0
      %v3714 = vmax.f32 %v3706, 0.0
      %v3715 = vmax.f32 %v3707, 0.0
      %v3716 = vmax.f32 %v3708, 0.0
      %v3717 = vmax.f32 %v3709, 0.0
      %v3718 = vmax.f32 %v3710, 0.0
      %v3719 = vmax.f32 %v3711, 0.0
      %v3720 = vpack.c.bf16 %v3712, %v3712
      %v3721 = vpack.c.bf16 %v3713, %v3713
      %v3722 = vpack.c.bf16 %v3714, %v3714
      %v3723 = vpack.c.bf16 %v3715, %v3715
      %v3724 = vpack.c.bf16 %v3716, %v3716
      %v3725 = vpack.c.bf16 %v3717, %v3717
      %v3726 = vpack.c.bf16 %v3718, %v3718
      %v3727 = vpack.c.bf16 %v3719, %v3719
      %3728 = vst [vmem:[%s392] sm:$0xf] %v3720
      %3729 = vst [vmem:[%s392 + $0x4] sm:$0xf] %v3721
      %3730 = vst [vmem:[%s392 + $0x8] sm:$0xf] %v3722
      %3731 = vst [vmem:[%s392 + $0xc] sm:$0xf] %v3723
      %3732 = vst [vmem:[%s392 + $0x10] sm:$0xf] %v3724
      %3733 = vst [vmem:[%s392 + $0x14] sm:$0xf] %v3725
      %3734 = vst [vmem:[%s392 + $0x18] sm:$0xf] %v3726
      %3735 = vst [vmem:[%s392 + $0x1c] sm:$0xf] %v3727
      %p3736 = scmp.lt.s32.totalorder %s20, 1
      %s3737 = scalar_select %p3736, %s20, 1
      %s3738 = smul.addr %s3737, 8
      %s3739 = smul.addr %s3738, 4
      %s3740 = scalar_lea.vmem %s9, %s3739
      // Predicated region
      $region57: #{preact_block_nhwc.2} parent=55 // pred_check
        %p3741 = pneg %p247
      $region58: #{preact_block_nhwc.2} parent=55 // pred_check_branch
        %3743 = sbr.rel (%p3741) target = $region60
      $region59: #{preact_block_nhwc.2} parent=55 // pred_region
        _
      $region60: #{preact_block_nhwc.2} parent=55 // pred_fallthru
        _
    $region56: #{preact_block_nhwc.2} parent=5 // pred_fallthru
      _
    %p3744 = scmp.le.s32.totalorder 2, %s15
    // Predicated region
    $region61: #{preact_block_nhwc.2} parent=5 // pred_check
      %p3745 = pneg %p3744
    $region62: #{preact_block_nhwc.2} parent=5 // pred_check_branch
      %3747 = sbr.rel (%p3745) target = $region64
    $region63: #{preact_block_nhwc.2} parent=5 // pred_region
      %s3748 = ssub.s32 %s15, 2
      // Predicated region
      $region65: #{preact_block_nhwc.2} parent=63 // pred_check
        %p3749 = pneg %p253
      $region66: #{preact_block_nhwc.2} parent=63 // pred_check_branch
        %3751 = sbr.rel (%p3749) target = $region68
      $region67: #{preact_block_nhwc.2} parent=63 // pred_region
        %p3752 = scmp.lt.s32.totalorder %s21, 1
        %s3753 = scalar_select %p3752, %s21, 1
        %s3754 = smul.addr %s3753, 8
        %s3755 = smul.addr %s3754, 4
        %s3756 = scalar_lea.vmem %s9, %s3755
      $region68: #{preact_block_nhwc.2} parent=63 // pred_fallthru
        _
    $region64: #{preact_block_nhwc.2} parent=5 // pred_fallthru
      _
  $region6: #{preact_block_nhwc.2} parent=0 // loop_footer
    %s19 = sadd.s32 1, %s15
  $region7: #{preact_block_nhwc.2} parent=0 // loop_footer_branch
    %14 = sbr.rel target = $region3
  $region8: #{preact_block_nhwc.2} parent=0 // loop_exit
    _

</llo_original>
